<compile_context>
chip_gen: v7x
topology: tpu7x:2x2x1
jax: 0.10.0
libtpu: 0.0.40
codegen_flags: <defaults>
</compile_context>

<pallas_src>
import jax
import jax.numpy as jnp
from jax import lax
from jax.experimental import pallas as pl
from jax.experimental.pallas import tpu as pltpu

# --- hyperparameters from the PyTorch module ---
N_EMBD = 64
BLOCK_SIZE = 36
N_HEADS = 4
N_LAYERS = 5
VOCAB_SIZE = 128                    # synthetic stand-in for tokenizer.get_vocab_size()
HEAD_SIZE = N_EMBD // N_HEADS
FF_DIM = 4 * N_EMBD
LN_EPS = 1e-5
SCORE_SCALE = float(N_EMBD) ** 0.5  # bug-compatible: reference multiplies by C**0.5
NEG_BIAS = -1e30                    # additive mask bias (safer than -inf + where)


def _layernorm(v, g, b):
    mu = jnp.mean(v, axis=-1, keepdims=True)
    var = jnp.mean((v - mu) ** 2, axis=-1, keepdims=True)
    return (v - mu) * lax.rsqrt(var + LN_EPS) * g + b


def _bf16(x):
    return x.astype(jnp.bfloat16)


def _make_kernel(T):
    """Fused (5 blocks + lm_head) kernel for one batch element of length T."""
    D, H, HS = N_EMBD, N_HEADS, HEAD_SIZE

    def kernel(tok_ref, pos_ref, bias_ref,
               ln1g_ref, ln1b_ref, wqkv_ref, wproj_ref, bproj_ref,
               ln2g_ref, ln2b_ref, w1_ref, b1_ref, w2_ref, b2_ref,
               lmw_ref, lmb_ref, out_ref):
        x = tok_ref[...] + pos_ref[...]           # (T, D) f32 — fused embedding add
        bias = bias_ref[...]                      # (T, T) f32 additive causal bias

        for l in range(N_LAYERS):                 # static unroll; static weight indexing
            # ---------------- multi-head causal self-attention ----------------
            xn = _layernorm(x, ln1g_ref[l], ln1b_ref[l])            # (T, D) f32
            # Single fused QKV projection: (T,64) @ (64,192), f32 accumulation.
            qkv = jnp.dot(_bf16(xn), wqkv_ref[l],
                          preferred_element_type=jnp.float32)       # (T, 3D) f32

            heads = []
            for h in range(H):                    # static unroll over heads
                q = qkv[:, h * HS:(h + 1) * HS] * SCORE_SCALE        # scale q, not scores
                k = qkv[:, D + h * HS:D + (h + 1) * HS]
                v = qkv[:, 2 * D + h * HS:2 * D + (h + 1) * HS]
                s = jnp.einsum('qe,ke->qk', _bf16(q), _bf16(k),
                               preferred_element_type=jnp.float32) + bias  # (T, T)
                s = s - jnp.max(s, axis=-1, keepdims=True)
                p = jnp.exp(s)
                # softmax divide -> EUP approximate reciprocal (frees the VALU path)
                p = p * pl.reciprocal(jnp.sum(p, axis=-1, keepdims=True),
                                      approx=True)
                # attention dropout (p=0.3) is identity at inference
                heads.append(jnp.dot(_bf16(p), _bf16(v),
                                     preferred_element_type=jnp.float32))  # (T, HS)

            # Output projection as ONE K=64 contraction on the concatenated heads.
            o = jnp.concatenate(heads, axis=-1)                      # (T, D) f32
            sa = jnp.dot(_bf16(o), wproj_ref[l],
                         preferred_element_type=jnp.float32) + bproj_ref[l]
            x = x + sa                                               # residual 1

            # ---------------------- feed-forward (ReLU) ----------------------
            xn2 = _layernorm(x, ln2g_ref[l], ln2b_ref[l])
            h1 = jnp.dot(_bf16(xn2), w1_ref[l],
                         preferred_element_type=jnp.float32) + b1_ref[l]
            h1 = jnp.maximum(h1, 0.0)
            x = x + jnp.dot(_bf16(h1), w2_ref[l],
                            preferred_element_type=jnp.float32) + b2_ref[l]  # residual 2
            # FFN dropout (p=0.3) is identity at inference

        # ---------------- lm_head fused into the same kernel ----------------
        # (T, 64) @ (64, 128): 128-wide lane-dense output, unmasked stores.
        out_ref[...] = jnp.dot(_bf16(x), lmw_ref[...],
                               preferred_element_type=jnp.float32) + lmb_ref[...]

    return kernel


@jax.jit
def mtg_forward(params, idx):
    """Forward pass of MTGCardGenerator with targets=None -> returns logits (B,T,V)."""
    B, T = idx.shape
    D = N_EMBD
    # Embedding gather stays in JAX glue; the (tok + pos) add happens in-kernel.
    # TODO(synk): move the gather in-kernel via scalar-prefetched idx if launch-bound.
    tok = jnp.take(params['tok_emb'], idx, axis=0)                   # (B, T, D) f32
    pos = params['pos_emb'][:T]                                      # (T, D) f32
    rows = lax.broadcasted_iota(jnp.int32, (T, T), 0)
    cols = lax.broadcasted_iota(jnp.int32, (T, T), 1)
    bias = jnp.where(cols <= rows, 0.0, NEG_BIAS).astype(jnp.float32)  # (T, T)

    def full_spec(arr):
        nd = arr.ndim
        return pl.BlockSpec(arr.shape, lambda b, _nd=nd: (0,) * _nd)

    weights = (params['ln1_g'], params['ln1_b'],
               params['wqkv'], params['wproj'], params['bproj'],
               params['ln2_g'], params['ln2_b'],
               params['w1'], params['b1'], params['w2'], params['b2'],
               params['lm_w'], params['lm_b'])

    in_specs = ([pl.BlockSpec((None, T, D), lambda b: (b, 0, 0)),    # tok: one batch/step
                 full_spec(pos), full_spec(bias)]
                + [full_spec(w) for w in weights])                   # weights resident

    logits = pl.pallas_call(
        _make_kernel(T),
        grid=(B,),
        out_shape=jax.ShapeDtypeStruct((B, T, VOCAB_SIZE), jnp.float32),
        in_specs=in_specs,
        out_specs=pl.BlockSpec((None, T, VOCAB_SIZE), lambda b: (b, 0, 0)),
        compiler_params=pltpu.CompilerParams(
            dimension_semantics=("parallel",)),    # shards batch across TCs on v7x
    )(tok, pos, bias, *weights)
    return logits
    # TODO(synk): cross-entropy loss path (targets != None) and autoregressive
    # generate() sampling (torch.multinomial) are not part of this kernel.


def init_params(key):
    kit = iter(jax.random.split(key, 32))

    def nrm(shape, scale=0.02, dtype=jnp.float32):
        return (scale * jax.random.normal(next(kit), shape)).astype(dtype)

    L, D, F = N_LAYERS, N_EMBD, FF_DIM
    bf = jnp.bfloat16
    return {
        'tok_emb': nrm((VOCAB_SIZE, D)),
        'pos_emb': nrm((BLOCK_SIZE, D)),
        # Fused QKV weight, (in=D, out=3*D): columns ordered
        # [q_h0..q_h3 | k_h0..k_h3 | v_h0..v_h3], HEAD_SIZE cols per head.
        'wqkv': nrm((L, D, 3 * D), dtype=bf),
        # Attention output projection (in=D, out=D), rows ordered by head.
        'wproj': nrm((L, D, D), dtype=bf),
        'bproj': jnp.zeros((L, 1, D), jnp.float32),
        'ln1_g': jnp.ones((L, 1, D), jnp.float32),
        'ln1_b': jnp.zeros((L, 1, D), jnp.float32),
        'ln2_g': jnp.ones((L, 1, D), jnp.float32),
        'ln2_b': jnp.zeros((L, 1, D), jnp.float32),
        # FFN / lm_head weights stored (in, out) so y = x @ W + b.
        'w1': nrm((L, D, F), dtype=bf),
        'b1': jnp.zeros((L, 1, F), jnp.float32),
        'w2': nrm((L, F, D), dtype=bf),
        'b2': jnp.zeros((L, 1, D), jnp.float32),
        'lm_w': nrm((D, VOCAB_SIZE), dtype=bf),
        'lm_b': jnp.zeros((1, VOCAB_SIZE), jnp.float32),
    }


if __name__ == "__main__":
    key = jax.random.PRNGKey(0)
    pkey, ikey = jax.random.split(key)
    params = init_params(pkey)

    B, T = 2, 8                      # T <= block_size (36)
    idx = jax.random.randint(ikey, (B, T), 0, VOCAB_SIZE, dtype=jnp.int32)

    logits = mtg_forward(params, idx)
    jax.block_until_ready(logits)
    assert logits.shape == (B, T, VOCAB_SIZE)
    assert bool(jnp.isfinite(logits).all())
    print("KERNEL_OK")
</pallas_src>

<mosaic_0001>
module attributes {stable_mosaic.version = 11 : i64} {
  func.func @kernel(%arg0: i32, %arg1: memref<1x8x64xf32, #tpu.memory_space<vmem>>, %arg2: memref<8x64xf32, #tpu.memory_space<vmem>>, %arg3: memref<8x8xf32, #tpu.memory_space<vmem>>, %arg4: memref<5x1x64xf32, #tpu.memory_space<vmem>>, %arg5: memref<5x1x64xf32, #tpu.memory_space<vmem>>, %arg6: memref<5x64x192xbf16, #tpu.memory_space<vmem>>, %arg7: memref<5x64x64xbf16, #tpu.memory_space<vmem>>, %arg8: memref<5x1x64xf32, #tpu.memory_space<vmem>>, %arg9: memref<5x1x64xf32, #tpu.memory_space<vmem>>, %arg10: memref<5x1x64xf32, #tpu.memory_space<vmem>>, %arg11: memref<5x64x256xbf16, #tpu.memory_space<vmem>>, %arg12: memref<5x1x256xf32, #tpu.memory_space<vmem>>, %arg13: memref<5x256x64xbf16, #tpu.memory_space<vmem>>, %arg14: memref<5x1x64xf32, #tpu.memory_space<vmem>>, %arg15: memref<64x128xbf16, #tpu.memory_space<vmem>>, %arg16: memref<1x128xf32, #tpu.memory_space<vmem>>, %arg17: memref<1x8x128xf32, #tpu.memory_space<vmem>>) attributes {dimension_semantics = [#tpu.dimension_semantics<parallel>], iteration_bounds = array<i64: 2>, scalar_prefetch = 0 : i64, scratch_operands = 0 : i64, tpu.core_type = #tpu.core_type<tc>, window_params = [{transform_indices = @transform_0, window_bounds = array<i64: 1, 8, 64>}, {pipeline_mode = #tpu.pipeline_mode<synchronous>, transform_indices = @transform_1, window_bounds = array<i64: 8, 64>}, {pipeline_mode = #tpu.pipeline_mode<synchronous>, transform_indices = @transform_2, window_bounds = array<i64: 8, 8>}, {pipeline_mode = #tpu.pipeline_mode<synchronous>, transform_indices = @transform_3, window_bounds = array<i64: 5, 1, 64>}, {pipeline_mode = #tpu.pipeline_mode<synchronous>, transform_indices = @transform_4, window_bounds = array<i64: 5, 1, 64>}, {pipeline_mode = #tpu.pipeline_mode<synchronous>, transform_indices = @transform_5, window_bounds = array<i64: 5, 64, 192>}, {pipeline_mode = #tpu.pipeline_mode<synchronous>, transform_indices = @transform_6, window_bounds = array<i64: 5, 64, 64>}, {pipeline_mode = #tpu.pipeline_mode<synchronous>, transform_indices = @transform_7, window_bounds = array<i64: 5, 1, 64>}, {pipeline_mode = #tpu.pipeline_mode<synchronous>, transform_indices = @transform_8, window_bounds = array<i64: 5, 1, 64>}, {pipeline_mode = #tpu.pipeline_mode<synchronous>, transform_indices = @transform_9, window_bounds = array<i64: 5, 1, 64>}, {pipeline_mode = #tpu.pipeline_mode<synchronous>, transform_indices = @transform_10, window_bounds = array<i64: 5, 64, 256>}, {pipeline_mode = #tpu.pipeline_mode<synchronous>, transform_indices = @transform_11, window_bounds = array<i64: 5, 1, 256>}, {pipeline_mode = #tpu.pipeline_mode<synchronous>, transform_indices = @transform_12, window_bounds = array<i64: 5, 256, 64>}, {pipeline_mode = #tpu.pipeline_mode<synchronous>, transform_indices = @transform_13, window_bounds = array<i64: 5, 1, 64>}, {pipeline_mode = #tpu.pipeline_mode<synchronous>, transform_indices = @transform_14, window_bounds = array<i64: 64, 128>}, {pipeline_mode = #tpu.pipeline_mode<synchronous>, transform_indices = @transform_15, window_bounds = array<i64: 1, 128>}, {transform_indices = @transform_16, window_bounds = array<i64: 1, 8, 128>}]} {
    %c0 = arith.constant 0 : index
    %c0_0 = arith.constant 0 : index
    %c0_1 = arith.constant 0 : index
    %0 = vector.load %arg1[%c0, %c0_0, %c0_1] : memref<1x8x64xf32, #tpu.memory_space<vmem>>, vector<1x8x64xf32>
    %1 = vector.shape_cast %0 : vector<1x8x64xf32> to vector<8x64xf32>
    %c0_2 = arith.constant 0 : index
    %c0_3 = arith.constant 0 : index
    %2 = vector.load %arg2[%c0_2, %c0_3] : memref<8x64xf32, #tpu.memory_space<vmem>>, vector<8x64xf32>
    %3 = arith.addf %1, %2 : vector<8x64xf32>
    %c0_4 = arith.constant 0 : index
    %c0_5 = arith.constant 0 : index
    %4 = vector.load %arg3[%c0_4, %c0_5] : memref<8x8xf32, #tpu.memory_space<vmem>>, vector<8x8xf32>
    %c0_6 = arith.constant 0 : index
    %c0_7 = arith.constant 0 : index
    %c0_8 = arith.constant 0 : index
    %5 = vector.load %arg4[%c0_6, %c0_7, %c0_8] : memref<5x1x64xf32, #tpu.memory_space<vmem>>, vector<1x1x64xf32>
    %6 = vector.shape_cast %5 : vector<1x1x64xf32> to vector<1x64xf32>
    %c0_9 = arith.constant 0 : index
    %c0_10 = arith.constant 0 : index
    %c0_11 = arith.constant 0 : index
    %7 = vector.load %arg5[%c0_9, %c0_10, %c0_11] : memref<5x1x64xf32, #tpu.memory_space<vmem>>, vector<1x1x64xf32>
    %8 = vector.shape_cast %7 : vector<1x1x64xf32> to vector<1x64xf32>
    %cst = arith.constant dense<0.000000e+00> : vector<8xf32>
    %9 = vector.multi_reduction <add>, %3, %cst [1] : vector<8x64xf32> to vector<8xf32>
    %10 = vector.shape_cast %9 : vector<8xf32> to vector<8x1xf32>
    %cst_12 = arith.constant 6.400000e+01 : f32
    %11 = vector.broadcast %cst_12 : f32 to vector<8x1xf32>
    %12 = arith.divf %10, %11 : vector<8x1xf32>
    %13 = vector.broadcast %12 : vector<8x1xf32> to vector<8x64xf32>
    %14 = arith.subf %3, %13 : vector<8x64xf32>
    %15 = arith.mulf %14, %14 : vector<8x64xf32>
    %cst_13 = arith.constant dense<0.000000e+00> : vector<8xf32>
    %16 = vector.multi_reduction <add>, %15, %cst_13 [1] : vector<8x64xf32> to vector<8xf32>
    %17 = vector.shape_cast %16 : vector<8xf32> to vector<8x1xf32>
    %cst_14 = arith.constant 6.400000e+01 : f32
    %18 = vector.broadcast %cst_14 : f32 to vector<8x1xf32>
    %19 = arith.divf %17, %18 : vector<8x1xf32>
    %20 = vector.broadcast %12 : vector<8x1xf32> to vector<8x64xf32>
    %21 = arith.subf %3, %20 : vector<8x64xf32>
    %cst_15 = arith.constant 9.99999974E-6 : f32
    %22 = vector.broadcast %cst_15 : f32 to vector<8x1xf32>
    %23 = arith.addf %19, %22 : vector<8x1xf32>
    %24 = math.rsqrt %23 : vector<8x1xf32>
    %25 = vector.broadcast %24 : vector<8x1xf32> to vector<8x64xf32>
    %26 = arith.mulf %21, %25 : vector<8x64xf32>
    %27 = vector.broadcast %6 : vector<1x64xf32> to vector<8x64xf32>
    %28 = arith.mulf %26, %27 : vector<8x64xf32>
    %29 = vector.broadcast %8 : vector<1x64xf32> to vector<8x64xf32>
    %30 = arith.addf %28, %29 : vector<8x64xf32>
    %31 = arith.truncf %30 : vector<8x64xf32> to vector<8x64xbf16>
    %c0_16 = arith.constant 0 : index
    %c0_17 = arith.constant 0 : index
    %c0_18 = arith.constant 0 : index
    %32 = vector.load %arg6[%c0_16, %c0_17, %c0_18] : memref<5x64x192xbf16, #tpu.memory_space<vmem>>, vector<1x64x192xbf16>
    %33 = vector.shape_cast %32 : vector<1x64x192xbf16> to vector<64x192xbf16>
    %cst_19 = arith.constant dense<0.000000e+00> : vector<8x192xf32>
    %34 = tpu.matmul %31, %33, %cst_19 {dimension_numbers = #tpu.dot_dimension_numbers<[1], [0], [0], [1], [0, 0, 1, 1], [], []>} : vector<8x64xbf16>, vector<64x192xbf16>, vector<8x192xf32> -> vector<8x192xf32>
    %35 = vector.extract_strided_slice %34 {offsets = [0, 0], sizes = [8, 16], strides = [1, 1]} : vector<8x192xf32> to vector<8x16xf32>
    %cst_20 = arith.constant 8.000000e+00 : f32
    %36 = vector.broadcast %cst_20 : f32 to vector<8x16xf32>
    %37 = arith.mulf %35, %36 : vector<8x16xf32>
    %38 = vector.extract_strided_slice %34 {offsets = [0, 64], sizes = [8, 16], strides = [1, 1]} : vector<8x192xf32> to vector<8x16xf32>
    %39 = vector.extract_strided_slice %34 {offsets = [0, 128], sizes = [8, 16], strides = [1, 1]} : vector<8x192xf32> to vector<8x16xf32>
    %40 = arith.truncf %37 : vector<8x16xf32> to vector<8x16xbf16>
    %41 = arith.truncf %38 : vector<8x16xf32> to vector<8x16xbf16>
    "tpu.trace_start"() <{level = 10 : i32, message = "qe,ke->qk"}> : () -> ()
    %cst_21 = arith.constant dense<0.000000e+00> : vector<8x8xf32>
    %42 = tpu.matmul %40, %41, %cst_21 {dimension_numbers = #tpu.dot_dimension_numbers<[1], [1], [0], [0], [0, 0, 1, 0], [], []>} : vector<8x16xbf16>, vector<8x16xbf16>, vector<8x8xf32> -> vector<8x8xf32>
    "tpu.trace_stop"() : () -> ()
    %43 = arith.addf %42, %4 : vector<8x8xf32>
    %cst_22 = arith.constant dense<0xFF800000> : vector<8xf32>
    %44 = vector.multi_reduction <maximumf>, %43, %cst_22 [1] : vector<8x8xf32> to vector<8xf32>
    %45 = vector.shape_cast %44 : vector<8xf32> to vector<8x1xf32>
    %46 = vector.broadcast %45 : vector<8x1xf32> to vector<8x8xf32>
    %47 = arith.subf %43, %46 : vector<8x8xf32>
    %48 = math.exp %47 : vector<8x8xf32>
    %cst_23 = arith.constant dense<0.000000e+00> : vector<8xf32>
    %49 = vector.multi_reduction <add>, %48, %cst_23 [1] : vector<8x8xf32> to vector<8xf32>
    %50 = vector.shape_cast %49 : vector<8xf32> to vector<8x1xf32>
    %51 = tpu.reciprocal %50 {approx = true} : vector<8x1xf32> -> vector<8x1xf32>
    %52 = vector.broadcast %51 : vector<8x1xf32> to vector<8x8xf32>
    %53 = arith.mulf %48, %52 : vector<8x8xf32>
    %54 = arith.truncf %53 : vector<8x8xf32> to vector<8x8xbf16>
    %55 = arith.truncf %39 : vector<8x16xf32> to vector<8x16xbf16>
    %cst_24 = arith.constant dense<0.000000e+00> : vector<8x16xf32>
    %56 = tpu.matmul %54, %55, %cst_24 {dimension_numbers = #tpu.dot_dimension_numbers<[1], [0], [0], [1], [0, 0, 1, 1], [], []>} : vector<8x8xbf16>, vector<8x16xbf16>, vector<8x16xf32> -> vector<8x16xf32>
    %57 = vector.extract_strided_slice %34 {offsets = [0, 16], sizes = [8, 16], strides = [1, 1]} : vector<8x192xf32> to vector<8x16xf32>
    %cst_25 = arith.constant 8.000000e+00 : f32
    %58 = vector.broadcast %cst_25 : f32 to vector<8x16xf32>
    %59 = arith.mulf %57, %58 : vector<8x16xf32>
    %60 = vector.extract_strided_slice %34 {offsets = [0, 80], sizes = [8, 16], strides = [1, 1]} : vector<8x192xf32> to vector<8x16xf32>
    %61 = vector.extract_strided_slice %34 {offsets = [0, 144], sizes = [8, 16], strides = [1, 1]} : vector<8x192xf32> to vector<8x16xf32>
    %62 = arith.truncf %59 : vector<8x16xf32> to vector<8x16xbf16>
    %63 = arith.truncf %60 : vector<8x16xf32> to vector<8x16xbf16>
    "tpu.trace_start"() <{level = 10 : i32, message = "qe,ke->qk"}> : () -> ()
    %cst_26 = arith.constant dense<0.000000e+00> : vector<8x8xf32>
    %64 = tpu.matmul %62, %63, %cst_26 {dimension_numbers = #tpu.dot_dimension_numbers<[1], [1], [0], [0], [0, 0, 1, 0], [], []>} : vector<8x16xbf16>, vector<8x16xbf16>, vector<8x8xf32> -> vector<8x8xf32>
    "tpu.trace_stop"() : () -> ()
    %65 = arith.addf %64, %4 : vector<8x8xf32>
    %cst_27 = arith.constant dense<0xFF800000> : vector<8xf32>
    %66 = vector.multi_reduction <maximumf>, %65, %cst_27 [1] : vector<8x8xf32> to vector<8xf32>
    %67 = vector.shape_cast %66 : vector<8xf32> to vector<8x1xf32>
    %68 = vector.broadcast %67 : vector<8x1xf32> to vector<8x8xf32>
    %69 = arith.subf %65, %68 : vector<8x8xf32>
    %70 = math.exp %69 : vector<8x8xf32>
    %cst_28 = arith.constant dense<0.000000e+00> : vector<8xf32>
    %71 = vector.multi_reduction <add>, %70, %cst_28 [1] : vector<8x8xf32> to vector<8xf32>
    %72 = vector.shape_cast %71 : vector<8xf32> to vector<8x1xf32>
    %73 = tpu.reciprocal %72 {approx = true} : vector<8x1xf32> -> vector<8x1xf32>
    %74 = vector.broadcast %73 : vector<8x1xf32> to vector<8x8xf32>
    %75 = arith.mulf %70, %74 : vector<8x8xf32>
    %76 = arith.truncf %75 : vector<8x8xf32> to vector<8x8xbf16>
    %77 = arith.truncf %61 : vector<8x16xf32> to vector<8x16xbf16>
    %cst_29 = arith.constant dense<0.000000e+00> : vector<8x16xf32>
    %78 = tpu.matmul %76, %77, %cst_29 {dimension_numbers = #tpu.dot_dimension_numbers<[1], [0], [0], [1], [0, 0, 1, 1], [], []>} : vector<8x8xbf16>, vector<8x16xbf16>, vector<8x16xf32> -> vector<8x16xf32>
    %79 = vector.extract_strided_slice %34 {offsets = [0, 32], sizes = [8, 16], strides = [1, 1]} : vector<8x192xf32> to vector<8x16xf32>
    %cst_30 = arith.constant 8.000000e+00 : f32
    %80 = vector.broadcast %cst_30 : f32 to vector<8x16xf32>
    %81 = arith.mulf %79, %80 : vector<8x16xf32>
    %82 = vector.extract_strided_slice %34 {offsets = [0, 96], sizes = [8, 16], strides = [1, 1]} : vector<8x192xf32> to vector<8x16xf32>
    %83 = vector.extract_strided_slice %34 {offsets = [0, 160], sizes = [8, 16], strides = [1, 1]} : vector<8x192xf32> to vector<8x16xf32>
    %84 = arith.truncf %81 : vector<8x16xf32> to vector<8x16xbf16>
    %85 = arith.truncf %82 : vector<8x16xf32> to vector<8x16xbf16>
    "tpu.trace_start"() <{level = 10 : i32, message = "qe,ke->qk"}> : () -> ()
    %cst_31 = arith.constant dense<0.000000e+00> : vector<8x8xf32>
    %86 = tpu.matmul %84, %85, %cst_31 {dimension_numbers = #tpu.dot_dimension_numbers<[1], [1], [0], [0], [0, 0, 1, 0], [], []>} : vector<8x16xbf16>, vector<8x16xbf16>, vector<8x8xf32> -> vector<8x8xf32>
    "tpu.trace_stop"() : () -> ()
    %87 = arith.addf %86, %4 : vector<8x8xf32>
    %cst_32 = arith.constant dense<0xFF800000> : vector<8xf32>
    %88 = vector.multi_reduction <maximumf>, %87, %cst_32 [1] : vector<8x8xf32> to vector<8xf32>
    %89 = vector.shape_cast %88 : vector<8xf32> to vector<8x1xf32>
    %90 = vector.broadcast %89 : vector<8x1xf32> to vector<8x8xf32>
    %91 = arith.subf %87, %90 : vector<8x8xf32>
    %92 = math.exp %91 : vector<8x8xf32>
    %cst_33 = arith.constant dense<0.000000e+00> : vector<8xf32>
    %93 = vector.multi_reduction <add>, %92, %cst_33 [1] : vector<8x8xf32> to vector<8xf32>
    %94 = vector.shape_cast %93 : vector<8xf32> to vector<8x1xf32>
    %95 = tpu.reciprocal %94 {approx = true} : vector<8x1xf32> -> vector<8x1xf32>
    %96 = vector.broadcast %95 : vector<8x1xf32> to vector<8x8xf32>
    %97 = arith.mulf %92, %96 : vector<8x8xf32>
    %98 = arith.truncf %97 : vector<8x8xf32> to vector<8x8xbf16>
    %99 = arith.truncf %83 : vector<8x16xf32> to vector<8x16xbf16>
    %cst_34 = arith.constant dense<0.000000e+00> : vector<8x16xf32>
    %100 = tpu.matmul %98, %99, %cst_34 {dimension_numbers = #tpu.dot_dimension_numbers<[1], [0], [0], [1], [0, 0, 1, 1], [], []>} : vector<8x8xbf16>, vector<8x16xbf16>, vector<8x16xf32> -> vector<8x16xf32>
    %101 = vector.extract_strided_slice %34 {offsets = [0, 48], sizes = [8, 16], strides = [1, 1]} : vector<8x192xf32> to vector<8x16xf32>
    %cst_35 = arith.constant 8.000000e+00 : f32
    %102 = vector.broadcast %cst_35 : f32 to vector<8x16xf32>
    %103 = arith.mulf %101, %102 : vector<8x16xf32>
    %104 = vector.extract_strided_slice %34 {offsets = [0, 112], sizes = [8, 16], strides = [1, 1]} : vector<8x192xf32> to vector<8x16xf32>
    %105 = vector.extract_strided_slice %34 {offsets = [0, 176], sizes = [8, 16], strides = [1, 1]} : vector<8x192xf32> to vector<8x16xf32>
    %106 = arith.truncf %103 : vector<8x16xf32> to vector<8x16xbf16>
    %107 = arith.truncf %104 : vector<8x16xf32> to vector<8x16xbf16>
    "tpu.trace_start"() <{level = 10 : i32, message = "qe,ke->qk"}> : () -> ()
    %cst_36 = arith.constant dense<0.000000e+00> : vector<8x8xf32>
    %108 = tpu.matmul %106, %107, %cst_36 {dimension_numbers = #tpu.dot_dimension_numbers<[1], [1], [0], [0], [0, 0, 1, 0], [], []>} : vector<8x16xbf16>, vector<8x16xbf16>, vector<8x8xf32> -> vector<8x8xf32>
    "tpu.trace_stop"() : () -> ()
    %109 = arith.addf %108, %4 : vector<8x8xf32>
    %cst_37 = arith.constant dense<0xFF800000> : vector<8xf32>
    %110 = vector.multi_reduction <maximumf>, %109, %cst_37 [1] : vector<8x8xf32> to vector<8xf32>
    %111 = vector.shape_cast %110 : vector<8xf32> to vector<8x1xf32>
    %112 = vector.broadcast %111 : vector<8x1xf32> to vector<8x8xf32>
    %113 = arith.subf %109, %112 : vector<8x8xf32>
    %114 = math.exp %113 : vector<8x8xf32>
    %cst_38 = arith.constant dense<0.000000e+00> : vector<8xf32>
    %115 = vector.multi_reduction <add>, %114, %cst_38 [1] : vector<8x8xf32> to vector<8xf32>
    %116 = vector.shape_cast %115 : vector<8xf32> to vector<8x1xf32>
    %117 = tpu.reciprocal %116 {approx = true} : vector<8x1xf32> -> vector<8x1xf32>
    %118 = vector.broadcast %117 : vector<8x1xf32> to vector<8x8xf32>
    %119 = arith.mulf %114, %118 : vector<8x8xf32>
    %120 = arith.truncf %119 : vector<8x8xf32> to vector<8x8xbf16>
    %121 = arith.truncf %105 : vector<8x16xf32> to vector<8x16xbf16>
    %cst_39 = arith.constant dense<0.000000e+00> : vector<8x16xf32>
    %122 = tpu.matmul %120, %121, %cst_39 {dimension_numbers = #tpu.dot_dimension_numbers<[1], [0], [0], [1], [0, 0, 1, 1], [], []>} : vector<8x8xbf16>, vector<8x16xbf16>, vector<8x16xf32> -> vector<8x16xf32>
    %123 = tpu.concatenate %56, %78, %100, %122 in 1 : vector<8x16xf32>, vector<8x16xf32>, vector<8x16xf32>, vector<8x16xf32> -> vector<8x64xf32>
    %124 = arith.truncf %123 : vector<8x64xf32> to vector<8x64xbf16>
    %c0_40 = arith.constant 0 : index
    %c0_41 = arith.constant 0 : index
    %c0_42 = arith.constant 0 : index
    %125 = vector.load %arg7[%c0_40, %c0_41, %c0_42] : memref<5x64x64xbf16, #tpu.memory_space<vmem>>, vector<1x64x64xbf16>
    %126 = vector.shape_cast %125 : vector<1x64x64xbf16> to vector<64x64xbf16>
    %cst_43 = arith.constant dense<0.000000e+00> : vector<8x64xf32>
    %127 = tpu.matmul %124, %126, %cst_43 {dimension_numbers = #tpu.dot_dimension_numbers<[1], [0], [0], [1], [0, 0, 1, 1], [], []>} : vector<8x64xbf16>, vector<64x64xbf16>, vector<8x64xf32> -> vector<8x64xf32>
    %c0_44 = arith.constant 0 : index
    %c0_45 = arith.constant 0 : index
    %c0_46 = arith.constant 0 : index
    %128 = vector.load %arg8[%c0_44, %c0_45, %c0_46] : memref<5x1x64xf32, #tpu.memory_space<vmem>>, vector<1x1x64xf32>
    %129 = vector.shape_cast %128 : vector<1x1x64xf32> to vector<1x64xf32>
    %130 = vector.broadcast %129 : vector<1x64xf32> to vector<8x64xf32>
    %131 = arith.addf %127, %130 : vector<8x64xf32>
    %132 = arith.addf %3, %131 : vector<8x64xf32>
    %c0_47 = arith.constant 0 : index
    %c0_48 = arith.constant 0 : index
    %c0_49 = arith.constant 0 : index
    %133 = vector.load %arg9[%c0_47, %c0_48, %c0_49] : memref<5x1x64xf32, #tpu.memory_space<vmem>>, vector<1x1x64xf32>
    %134 = vector.shape_cast %133 : vector<1x1x64xf32> to vector<1x64xf32>
    %c0_50 = arith.constant 0 : index
    %c0_51 = arith.constant 0 : index
    %c0_52 = arith.constant 0 : index
    %135 = vector.load %arg10[%c0_50, %c0_51, %c0_52] : memref<5x1x64xf32, #tpu.memory_space<vmem>>, vector<1x1x64xf32>
    %136 = vector.shape_cast %135 : vector<1x1x64xf32> to vector<1x64xf32>
    %cst_53 = arith.constant dense<0.000000e+00> : vector<8xf32>
    %137 = vector.multi_reduction <add>, %132, %cst_53 [1] : vector<8x64xf32> to vector<8xf32>
    %138 = vector.shape_cast %137 : vector<8xf32> to vector<8x1xf32>
    %cst_54 = arith.constant 6.400000e+01 : f32
    %139 = vector.broadcast %cst_54 : f32 to vector<8x1xf32>
    %140 = arith.divf %138, %139 : vector<8x1xf32>
    %141 = vector.broadcast %140 : vector<8x1xf32> to vector<8x64xf32>
    %142 = arith.subf %132, %141 : vector<8x64xf32>
    %143 = arith.mulf %142, %142 : vector<8x64xf32>
    %cst_55 = arith.constant dense<0.000000e+00> : vector<8xf32>
    %144 = vector.multi_reduction <add>, %143, %cst_55 [1] : vector<8x64xf32> to vector<8xf32>
    %145 = vector.shape_cast %144 : vector<8xf32> to vector<8x1xf32>
    %cst_56 = arith.constant 6.400000e+01 : f32
    %146 = vector.broadcast %cst_56 : f32 to vector<8x1xf32>
    %147 = arith.divf %145, %146 : vector<8x1xf32>
    %148 = vector.broadcast %140 : vector<8x1xf32> to vector<8x64xf32>
    %149 = arith.subf %132, %148 : vector<8x64xf32>
    %cst_57 = arith.constant 9.99999974E-6 : f32
    %150 = vector.broadcast %cst_57 : f32 to vector<8x1xf32>
    %151 = arith.addf %147, %150 : vector<8x1xf32>
    %152 = math.rsqrt %151 : vector<8x1xf32>
    %153 = vector.broadcast %152 : vector<8x1xf32> to vector<8x64xf32>
    %154 = arith.mulf %149, %153 : vector<8x64xf32>
    %155 = vector.broadcast %134 : vector<1x64xf32> to vector<8x64xf32>
    %156 = arith.mulf %154, %155 : vector<8x64xf32>
    %157 = vector.broadcast %136 : vector<1x64xf32> to vector<8x64xf32>
    %158 = arith.addf %156, %157 : vector<8x64xf32>
    %159 = arith.truncf %158 : vector<8x64xf32> to vector<8x64xbf16>
    %c0_58 = arith.constant 0 : index
    %c0_59 = arith.constant 0 : index
    %c0_60 = arith.constant 0 : index
    %160 = vector.load %arg11[%c0_58, %c0_59, %c0_60] : memref<5x64x256xbf16, #tpu.memory_space<vmem>>, vector<1x64x256xbf16>
    %161 = vector.shape_cast %160 : vector<1x64x256xbf16> to vector<64x256xbf16>
    %cst_61 = arith.constant dense<0.000000e+00> : vector<8x256xf32>
    %162 = tpu.matmul %159, %161, %cst_61 {dimension_numbers = #tpu.dot_dimension_numbers<[1], [0], [0], [1], [0, 0, 1, 1], [], []>} : vector<8x64xbf16>, vector<64x256xbf16>, vector<8x256xf32> -> vector<8x256xf32>
    %c0_62 = arith.constant 0 : index
    %c0_63 = arith.constant 0 : index
    %c0_64 = arith.constant 0 : index
    %163 = vector.load %arg12[%c0_62, %c0_63, %c0_64] : memref<5x1x256xf32, #tpu.memory_space<vmem>>, vector<1x1x256xf32>
    %164 = vector.shape_cast %163 : vector<1x1x256xf32> to vector<1x256xf32>
    %165 = vector.broadcast %164 : vector<1x256xf32> to vector<8x256xf32>
    %166 = arith.addf %162, %165 : vector<8x256xf32>
    %cst_65 = arith.constant 0.000000e+00 : f32
    %167 = vector.broadcast %cst_65 : f32 to vector<8x256xf32>
    %168 = arith.maximumf %166, %167 : vector<8x256xf32>
    %169 = arith.truncf %168 : vector<8x256xf32> to vector<8x256xbf16>
    %c0_66 = arith.constant 0 : index
    %c0_67 = arith.constant 0 : index
    %c0_68 = arith.constant 0 : index
    %170 = vector.load %arg13[%c0_66, %c0_67, %c0_68] : memref<5x256x64xbf16, #tpu.memory_space<vmem>>, vector<1x256x64xbf16>
    %171 = vector.shape_cast %170 : vector<1x256x64xbf16> to vector<256x64xbf16>
    %cst_69 = arith.constant dense<0.000000e+00> : vector<8x64xf32>
    %172 = tpu.matmul %169, %171, %cst_69 {dimension_numbers = #tpu.dot_dimension_numbers<[1], [0], [0], [1], [0, 0, 1, 1], [], []>} : vector<8x256xbf16>, vector<256x64xbf16>, vector<8x64xf32> -> vector<8x64xf32>
    %173 = arith.addf %132, %172 : vector<8x64xf32>
    %c0_70 = arith.constant 0 : index
    %c0_71 = arith.constant 0 : index
    %c0_72 = arith.constant 0 : index
    %174 = vector.load %arg14[%c0_70, %c0_71, %c0_72] : memref<5x1x64xf32, #tpu.memory_space<vmem>>, vector<1x1x64xf32>
    %175 = vector.shape_cast %174 : vector<1x1x64xf32> to vector<1x64xf32>
    %176 = vector.broadcast %175 : vector<1x64xf32> to vector<8x64xf32>
    %177 = arith.addf %173, %176 : vector<8x64xf32>
    %c1 = arith.constant 1 : index
    %c0_73 = arith.constant 0 : index
    %c0_74 = arith.constant 0 : index
    %178 = vector.load %arg4[%c1, %c0_73, %c0_74] : memref<5x1x64xf32, #tpu.memory_space<vmem>>, vector<1x1x64xf32>
    %179 = vector.shape_cast %178 : vector<1x1x64xf32> to vector<1x64xf32>
    %c1_75 = arith.constant 1 : index
    %c0_76 = arith.constant 0 : index
    %c0_77 = arith.constant 0 : index
    %180 = vector.load %arg5[%c1_75, %c0_76, %c0_77] : memref<5x1x64xf32, #tpu.memory_space<vmem>>, vector<1x1x64xf32>
    %181 = vector.shape_cast %180 : vector<1x1x64xf32> to vector<1x64xf32>
    %cst_78 = arith.constant dense<0.000000e+00> : vector<8xf32>
    %182 = vector.multi_reduction <add>, %177, %cst_78 [1] : vector<8x64xf32> to vector<8xf32>
    %183 = vector.shape_cast %182 : vector<8xf32> to vector<8x1xf32>
    %cst_79 = arith.constant 6.400000e+01 : f32
    %184 = vector.broadcast %cst_79 : f32 to vector<8x1xf32>
    %185 = arith.divf %183, %184 : vector<8x1xf32>
    %186 = vector.broadcast %185 : vector<8x1xf32> to vector<8x64xf32>
    %187 = arith.subf %177, %186 : vector<8x64xf32>
    %188 = arith.mulf %187, %187 : vector<8x64xf32>
    %cst_80 = arith.constant dense<0.000000e+00> : vector<8xf32>
    %189 = vector.multi_reduction <add>, %188, %cst_80 [1] : vector<8x64xf32> to vector<8xf32>
    %190 = vector.shape_cast %189 : vector<8xf32> to vector<8x1xf32>
    %cst_81 = arith.constant 6.400000e+01 : f32
    %191 = vector.broadcast %cst_81 : f32 to vector<8x1xf32>
    %192 = arith.divf %190, %191 : vector<8x1xf32>
    %193 = vector.broadcast %185 : vector<8x1xf32> to vector<8x64xf32>
    %194 = arith.subf %177, %193 : vector<8x64xf32>
    %cst_82 = arith.constant 9.99999974E-6 : f32
    %195 = vector.broadcast %cst_82 : f32 to vector<8x1xf32>
    %196 = arith.addf %192, %195 : vector<8x1xf32>
    %197 = math.rsqrt %196 : vector<8x1xf32>
    %198 = vector.broadcast %197 : vector<8x1xf32> to vector<8x64xf32>
    %199 = arith.mulf %194, %198 : vector<8x64xf32>
    %200 = vector.broadcast %179 : vector<1x64xf32> to vector<8x64xf32>
    %201 = arith.mulf %199, %200 : vector<8x64xf32>
    %202 = vector.broadcast %181 : vector<1x64xf32> to vector<8x64xf32>
    %203 = arith.addf %201, %202 : vector<8x64xf32>
    %204 = arith.truncf %203 : vector<8x64xf32> to vector<8x64xbf16>
    %c1_83 = arith.constant 1 : index
    %c0_84 = arith.constant 0 : index
    %c0_85 = arith.constant 0 : index
    %205 = vector.load %arg6[%c1_83, %c0_84, %c0_85] : memref<5x64x192xbf16, #tpu.memory_space<vmem>>, vector<1x64x192xbf16>
    %206 = vector.shape_cast %205 : vector<1x64x192xbf16> to vector<64x192xbf16>
    %cst_86 = arith.constant dense<0.000000e+00> : vector<8x192xf32>
    %207 = tpu.matmul %204, %206, %cst_86 {dimension_numbers = #tpu.dot_dimension_numbers<[1], [0], [0], [1], [0, 0, 1, 1], [], []>} : vector<8x64xbf16>, vector<64x192xbf16>, vector<8x192xf32> -> vector<8x192xf32>
    %208 = vector.extract_strided_slice %207 {offsets = [0, 0], sizes = [8, 16], strides = [1, 1]} : vector<8x192xf32> to vector<8x16xf32>
    %cst_87 = arith.constant 8.000000e+00 : f32
    %209 = vector.broadcast %cst_87 : f32 to vector<8x16xf32>
    %210 = arith.mulf %208, %209 : vector<8x16xf32>
    %211 = vector.extract_strided_slice %207 {offsets = [0, 64], sizes = [8, 16], strides = [1, 1]} : vector<8x192xf32> to vector<8x16xf32>
    %212 = vector.extract_strided_slice %207 {offsets = [0, 128], sizes = [8, 16], strides = [1, 1]} : vector<8x192xf32> to vector<8x16xf32>
    %213 = arith.truncf %210 : vector<8x16xf32> to vector<8x16xbf16>
    %214 = arith.truncf %211 : vector<8x16xf32> to vector<8x16xbf16>
    "tpu.trace_start"() <{level = 10 : i32, message = "qe,ke->qk"}> : () -> ()
    %cst_88 = arith.constant dense<0.000000e+00> : vector<8x8xf32>
    %215 = tpu.matmul %213, %214, %cst_88 {dimension_numbers = #tpu.dot_dimension_numbers<[1], [1], [0], [0], [0, 0, 1, 0], [], []>} : vector<8x16xbf16>, vector<8x16xbf16>, vector<8x8xf32> -> vector<8x8xf32>
    "tpu.trace_stop"() : () -> ()
    %216 = arith.addf %215, %4 : vector<8x8xf32>
    %cst_89 = arith.constant dense<0xFF800000> : vector<8xf32>
    %217 = vector.multi_reduction <maximumf>, %216, %cst_89 [1] : vector<8x8xf32> to vector<8xf32>
    %218 = vector.shape_cast %217 : vector<8xf32> to vector<8x1xf32>
    %219 = vector.broadcast %218 : vector<8x1xf32> to vector<8x8xf32>
    %220 = arith.subf %216, %219 : vector<8x8xf32>
    %221 = math.exp %220 : vector<8x8xf32>
    %cst_90 = arith.constant dense<0.000000e+00> : vector<8xf32>
    %222 = vector.multi_reduction <add>, %221, %cst_90 [1] : vector<8x8xf32> to vector<8xf32>
    %223 = vector.shape_cast %222 : vector<8xf32> to vector<8x1xf32>
    %224 = tpu.reciprocal %223 {approx = true} : vector<8x1xf32> -> vector<8x1xf32>
    %225 = vector.broadcast %224 : vector<8x1xf32> to vector<8x8xf32>
    %226 = arith.mulf %221, %225 : vector<8x8xf32>
    %227 = arith.truncf %226 : vector<8x8xf32> to vector<8x8xbf16>
    %228 = arith.truncf %212 : vector<8x16xf32> to vector<8x16xbf16>
    %cst_91 = arith.constant dense<0.000000e+00> : vector<8x16xf32>
    %229 = tpu.matmul %227, %228, %cst_91 {dimension_numbers = #tpu.dot_dimension_numbers<[1], [0], [0], [1], [0, 0, 1, 1], [], []>} : vector<8x8xbf16>, vector<8x16xbf16>, vector<8x16xf32> -> vector<8x16xf32>
    %230 = vector.extract_strided_slice %207 {offsets = [0, 16], sizes = [8, 16], strides = [1, 1]} : vector<8x192xf32> to vector<8x16xf32>
    %cst_92 = arith.constant 8.000000e+00 : f32
    %231 = vector.broadcast %cst_92 : f32 to vector<8x16xf32>
    %232 = arith.mulf %230, %231 : vector<8x16xf32>
    %233 = vector.extract_strided_slice %207 {offsets = [0, 80], sizes = [8, 16], strides = [1, 1]} : vector<8x192xf32> to vector<8x16xf32>
    %234 = vector.extract_strided_slice %207 {offsets = [0, 144], sizes = [8, 16], strides = [1, 1]} : vector<8x192xf32> to vector<8x16xf32>
    %235 = arith.truncf %232 : vector<8x16xf32> to vector<8x16xbf16>
    %236 = arith.truncf %233 : vector<8x16xf32> to vector<8x16xbf16>
    "tpu.trace_start"() <{level = 10 : i32, message = "qe,ke->qk"}> : () -> ()
    %cst_93 = arith.constant dense<0.000000e+00> : vector<8x8xf32>
    %237 = tpu.matmul %235, %236, %cst_93 {dimension_numbers = #tpu.dot_dimension_numbers<[1], [1], [0], [0], [0, 0, 1, 0], [], []>} : vector<8x16xbf16>, vector<8x16xbf16>, vector<8x8xf32> -> vector<8x8xf32>
    "tpu.trace_stop"() : () -> ()
    %238 = arith.addf %237, %4 : vector<8x8xf32>
    %cst_94 = arith.constant dense<0xFF800000> : vector<8xf32>
    %239 = vector.multi_reduction <maximumf>, %238, %cst_94 [1] : vector<8x8xf32> to vector<8xf32>
    %240 = vector.shape_cast %239 : vector<8xf32> to vector<8x1xf32>
    %241 = vector.broadcast %240 : vector<8x1xf32> to vector<8x8xf32>
    %242 = arith.subf %238, %241 : vector<8x8xf32>
    %243 = math.exp %242 : vector<8x8xf32>
    %cst_95 = arith.constant dense<0.000000e+00> : vector<8xf32>
    %244 = vector.multi_reduction <add>, %243, %cst_95 [1] : vector<8x8xf32> to vector<8xf32>
    %245 = vector.shape_cast %244 : vector<8xf32> to vector<8x1xf32>
    %246 = tpu.reciprocal %245 {approx = true} : vector<8x1xf32> -> vector<8x1xf32>
    %247 = vector.broadcast %246 : vector<8x1xf32> to vector<8x8xf32>
    %248 = arith.mulf %243, %247 : vector<8x8xf32>
    %249 = arith.truncf %248 : vector<8x8xf32> to vector<8x8xbf16>
    %250 = arith.truncf %234 : vector<8x16xf32> to vector<8x16xbf16>
    %cst_96 = arith.constant dense<0.000000e+00> : vector<8x16xf32>
    %251 = tpu.matmul %249, %250, %cst_96 {dimension_numbers = #tpu.dot_dimension_numbers<[1], [0], [0], [1], [0, 0, 1, 1], [], []>} : vector<8x8xbf16>, vector<8x16xbf16>, vector<8x16xf32> -> vector<8x16xf32>
    %252 = vector.extract_strided_slice %207 {offsets = [0, 32], sizes = [8, 16], strides = [1, 1]} : vector<8x192xf32> to vector<8x16xf32>
    %cst_97 = arith.constant 8.000000e+00 : f32
    %253 = vector.broadcast %cst_97 : f32 to vector<8x16xf32>
    %254 = arith.mulf %252, %253 : vector<8x16xf32>
    %255 = vector.extract_strided_slice %207 {offsets = [0, 96], sizes = [8, 16], strides = [1, 1]} : vector<8x192xf32> to vector<8x16xf32>
    %256 = vector.extract_strided_slice %207 {offsets = [0, 160], sizes = [8, 16], strides = [1, 1]} : vector<8x192xf32> to vector<8x16xf32>
    %257 = arith.truncf %254 : vector<8x16xf32> to vector<8x16xbf16>
    %258 = arith.truncf %255 : vector<8x16xf32> to vector<8x16xbf16>
    "tpu.trace_start"() <{level = 10 : i32, message = "qe,ke->qk"}> : () -> ()
    %cst_98 = arith.constant dense<0.000000e+00> : vector<8x8xf32>
    %259 = tpu.matmul %257, %258, %cst_98 {dimension_numbers = #tpu.dot_dimension_numbers<[1], [1], [0], [0], [0, 0, 1, 0], [], []>} : vector<8x16xbf16>, vector<8x16xbf16>, vector<8x8xf32> -> vector<8x8xf32>
    "tpu.trace_stop"() : () -> ()
    %260 = arith.addf %259, %4 : vector<8x8xf32>
    %cst_99 = arith.constant dense<0xFF800000> : vector<8xf32>
    %261 = vector.multi_reduction <maximumf>, %260, %cst_99 [1] : vector<8x8xf32> to vector<8xf32>
    %262 = vector.shape_cast %261 : vector<8xf32> to vector<8x1xf32>
    %263 = vector.broadcast %262 : vector<8x1xf32> to vector<8x8xf32>
    %264 = arith.subf %260, %263 : vector<8x8xf32>
    %265 = math.exp %264 : vector<8x8xf32>
    %cst_100 = arith.constant dense<0.000000e+00> : vector<8xf32>
    %266 = vector.multi_reduction <add>, %265, %cst_100 [1] : vector<8x8xf32> to vector<8xf32>
    %267 = vector.shape_cast %266 : vector<8xf32> to vector<8x1xf32>
    %268 = tpu.reciprocal %267 {approx = true} : vector<8x1xf32> -> vector<8x1xf32>
    %269 = vector.broadcast %268 : vector<8x1xf32> to vector<8x8xf32>
    %270 = arith.mulf %265, %269 : vector<8x8xf32>
    %271 = arith.truncf %270 : vector<8x8xf32> to vector<8x8xbf16>
    %272 = arith.truncf %256 : vector<8x16xf32> to vector<8x16xbf16>
    %cst_101 = arith.constant dense<0.000000e+00> : vector<8x16xf32>
    %273 = tpu.matmul %271, %272, %cst_101 {dimension_numbers = #tpu.dot_dimension_numbers<[1], [0], [0], [1], [0, 0, 1, 1], [], []>} : vector<8x8xbf16>, vector<8x16xbf16>, vector<8x16xf32> -> vector<8x16xf32>
    %274 = vector.extract_strided_slice %207 {offsets = [0, 48], sizes = [8, 16], strides = [1, 1]} : vector<8x192xf32> to vector<8x16xf32>
    %cst_102 = arith.constant 8.000000e+00 : f32
    %275 = vector.broadcast %cst_102 : f32 to vector<8x16xf32>
    %276 = arith.mulf %274, %275 : vector<8x16xf32>
    %277 = vector.extract_strided_slice %207 {offsets = [0, 112], sizes = [8, 16], strides = [1, 1]} : vector<8x192xf32> to vector<8x16xf32>
    %278 = vector.extract_strided_slice %207 {offsets = [0, 176], sizes = [8, 16], strides = [1, 1]} : vector<8x192xf32> to vector<8x16xf32>
    %279 = arith.truncf %276 : vector<8x16xf32> to vector<8x16xbf16>
    %280 = arith.truncf %277 : vector<8x16xf32> to vector<8x16xbf16>
    "tpu.trace_start"() <{level = 10 : i32, message = "qe,ke->qk"}> : () -> ()
    %cst_103 = arith.constant dense<0.000000e+00> : vector<8x8xf32>
    %281 = tpu.matmul %279, %280, %cst_103 {dimension_numbers = #tpu.dot_dimension_numbers<[1], [1], [0], [0], [0, 0, 1, 0], [], []>} : vector<8x16xbf16>, vector<8x16xbf16>, vector<8x8xf32> -> vector<8x8xf32>
    "tpu.trace_stop"() : () -> ()
    %282 = arith.addf %281, %4 : vector<8x8xf32>
    %cst_104 = arith.constant dense<0xFF800000> : vector<8xf32>
    %283 = vector.multi_reduction <maximumf>, %282, %cst_104 [1] : vector<8x8xf32> to vector<8xf32>
    %284 = vector.shape_cast %283 : vector<8xf32> to vector<8x1xf32>
    %285 = vector.broadcast %284 : vector<8x1xf32> to vector<8x8xf32>
    %286 = arith.subf %282, %285 : vector<8x8xf32>
    %287 = math.exp %286 : vector<8x8xf32>
    %cst_105 = arith.constant dense<0.000000e+00> : vector<8xf32>
    %288 = vector.multi_reduction <add>, %287, %cst_105 [1] : vector<8x8xf32> to vector<8xf32>
    %289 = vector.shape_cast %288 : vector<8xf32> to vector<8x1xf32>
    %290 = tpu.reciprocal %289 {approx = true} : vector<8x1xf32> -> vector<8x1xf32>
    %291 = vector.broadcast %290 : vector<8x1xf32> to vector<8x8xf32>
    %292 = arith.mulf %287, %291 : vector<8x8xf32>
    %293 = arith.truncf %292 : vector<8x8xf32> to vector<8x8xbf16>
    %294 = arith.truncf %278 : vector<8x16xf32> to vector<8x16xbf16>
    %cst_106 = arith.constant dense<0.000000e+00> : vector<8x16xf32>
    %295 = tpu.matmul %293, %294, %cst_106 {dimension_numbers = #tpu.dot_dimension_numbers<[1], [0], [0], [1], [0, 0, 1, 1], [], []>} : vector<8x8xbf16>, vector<8x16xbf16>, vector<8x16xf32> -> vector<8x16xf32>
    %296 = tpu.concatenate %229, %251, %273, %295 in 1 : vector<8x16xf32>, vector<8x16xf32>, vector<8x16xf32>, vector<8x16xf32> -> vector<8x64xf32>
    %297 = arith.truncf %296 : vector<8x64xf32> to vector<8x64xbf16>
    %c1_107 = arith.constant 1 : index
    %c0_108 = arith.constant 0 : index
    %c0_109 = arith.constant 0 : index
    %298 = vector.load %arg7[%c1_107, %c0_108, %c0_109] : memref<5x64x64xbf16, #tpu.memory_space<vmem>>, vector<1x64x64xbf16>
    %299 = vector.shape_cast %298 : vector<1x64x64xbf16> to vector<64x64xbf16>
    %cst_110 = arith.constant dense<0.000000e+00> : vector<8x64xf32>
    %300 = tpu.matmul %297, %299, %cst_110 {dimension_numbers = #tpu.dot_dimension_numbers<[1], [0], [0], [1], [0, 0, 1, 1], [], []>} : vector<8x64xbf16>, vector<64x64xbf16>, vector<8x64xf32> -> vector<8x64xf32>
    %c1_111 = arith.constant 1 : index
    %c0_112 = arith.constant 0 : index
    %c0_113 = arith.constant 0 : index
    %301 = vector.load %arg8[%c1_111, %c0_112, %c0_113] : memref<5x1x64xf32, #tpu.memory_space<vmem>>, vector<1x1x64xf32>
    %302 = vector.shape_cast %301 : vector<1x1x64xf32> to vector<1x64xf32>
    %303 = vector.broadcast %302 : vector<1x64xf32> to vector<8x64xf32>
    %304 = arith.addf %300, %303 : vector<8x64xf32>
    %305 = arith.addf %177, %304 : vector<8x64xf32>
    %c1_114 = arith.constant 1 : index
    %c0_115 = arith.constant 0 : index
    %c0_116 = arith.constant 0 : index
    %306 = vector.load %arg9[%c1_114, %c0_115, %c0_116] : memref<5x1x64xf32, #tpu.memory_space<vmem>>, vector<1x1x64xf32>
    %307 = vector.shape_cast %306 : vector<1x1x64xf32> to vector<1x64xf32>
    %c1_117 = arith.constant 1 : index
    %c0_118 = arith.constant 0 : index
    %c0_119 = arith.constant 0 : index
    %308 = vector.load %arg10[%c1_117, %c0_118, %c0_119] : memref<5x1x64xf32, #tpu.memory_space<vmem>>, vector<1x1x64xf32>
    %309 = vector.shape_cast %308 : vector<1x1x64xf32> to vector<1x64xf32>
    %cst_120 = arith.constant dense<0.000000e+00> : vector<8xf32>
    %310 = vector.multi_reduction <add>, %305, %cst_120 [1] : vector<8x64xf32> to vector<8xf32>
    %311 = vector.shape_cast %310 : vector<8xf32> to vector<8x1xf32>
    %cst_121 = arith.constant 6.400000e+01 : f32
    %312 = vector.broadcast %cst_121 : f32 to vector<8x1xf32>
    %313 = arith.divf %311, %312 : vector<8x1xf32>
    %314 = vector.broadcast %313 : vector<8x1xf32> to vector<8x64xf32>
    %315 = arith.subf %305, %314 : vector<8x64xf32>
    %316 = arith.mulf %315, %315 : vector<8x64xf32>
    %cst_122 = arith.constant dense<0.000000e+00> : vector<8xf32>
    %317 = vector.multi_reduction <add>, %316, %cst_122 [1] : vector<8x64xf32> to vector<8xf32>
    %318 = vector.shape_cast %317 : vector<8xf32> to vector<8x1xf32>
    %cst_123 = arith.constant 6.400000e+01 : f32
    %319 = vector.broadcast %cst_123 : f32 to vector<8x1xf32>
    %320 = arith.divf %318, %319 : vector<8x1xf32>
    %321 = vector.broadcast %313 : vector<8x1xf32> to vector<8x64xf32>
    %322 = arith.subf %305, %321 : vector<8x64xf32>
    %cst_124 = arith.constant 9.99999974E-6 : f32
    %323 = vector.broadcast %cst_124 : f32 to vector<8x1xf32>
    %324 = arith.addf %320, %323 : vector<8x1xf32>
    %325 = math.rsqrt %324 : vector<8x1xf32>
    %326 = vector.broadcast %325 : vector<8x1xf32> to vector<8x64xf32>
    %327 = arith.mulf %322, %326 : vector<8x64xf32>
    %328 = vector.broadcast %307 : vector<1x64xf32> to vector<8x64xf32>
    %329 = arith.mulf %327, %328 : vector<8x64xf32>
    %330 = vector.broadcast %309 : vector<1x64xf32> to vector<8x64xf32>
    %331 = arith.addf %329, %330 : vector<8x64xf32>
    %332 = arith.truncf %331 : vector<8x64xf32> to vector<8x64xbf16>
    %c1_125 = arith.constant 1 : index
    %c0_126 = arith.constant 0 : index
    %c0_127 = arith.constant 0 : index
    %333 = vector.load %arg11[%c1_125, %c0_126, %c0_127] : memref<5x64x256xbf16, #tpu.memory_space<vmem>>, vector<1x64x256xbf16>
    %334 = vector.shape_cast %333 : vector<1x64x256xbf16> to vector<64x256xbf16>
    %cst_128 = arith.constant dense<0.000000e+00> : vector<8x256xf32>
    %335 = tpu.matmul %332, %334, %cst_128 {dimension_numbers = #tpu.dot_dimension_numbers<[1], [0], [0], [1], [0, 0, 1, 1], [], []>} : vector<8x64xbf16>, vector<64x256xbf16>, vector<8x256xf32> -> vector<8x256xf32>
    %c1_129 = arith.constant 1 : index
    %c0_130 = arith.constant 0 : index
    %c0_131 = arith.constant 0 : index
    %336 = vector.load %arg12[%c1_129, %c0_130, %c0_131] : memref<5x1x256xf32, #tpu.memory_space<vmem>>, vector<1x1x256xf32>
    %337 = vector.shape_cast %336 : vector<1x1x256xf32> to vector<1x256xf32>
    %338 = vector.broadcast %337 : vector<1x256xf32> to vector<8x256xf32>
    %339 = arith.addf %335, %338 : vector<8x256xf32>
    %cst_132 = arith.constant 0.000000e+00 : f32
    %340 = vector.broadcast %cst_132 : f32 to vector<8x256xf32>
    %341 = arith.maximumf %339, %340 : vector<8x256xf32>
    %342 = arith.truncf %341 : vector<8x256xf32> to vector<8x256xbf16>
    %c1_133 = arith.constant 1 : index
    %c0_134 = arith.constant 0 : index
    %c0_135 = arith.constant 0 : index
    %343 = vector.load %arg13[%c1_133, %c0_134, %c0_135] : memref<5x256x64xbf16, #tpu.memory_space<vmem>>, vector<1x256x64xbf16>
    %344 = vector.shape_cast %343 : vector<1x256x64xbf16> to vector<256x64xbf16>
    %cst_136 = arith.constant dense<0.000000e+00> : vector<8x64xf32>
    %345 = tpu.matmul %342, %344, %cst_136 {dimension_numbers = #tpu.dot_dimension_numbers<[1], [0], [0], [1], [0, 0, 1, 1], [], []>} : vector<8x256xbf16>, vector<256x64xbf16>, vector<8x64xf32> -> vector<8x64xf32>
    %346 = arith.addf %305, %345 : vector<8x64xf32>
    %c1_137 = arith.constant 1 : index
    %c0_138 = arith.constant 0 : index
    %c0_139 = arith.constant 0 : index
    %347 = vector.load %arg14[%c1_137, %c0_138, %c0_139] : memref<5x1x64xf32, #tpu.memory_space<vmem>>, vector<1x1x64xf32>
    %348 = vector.shape_cast %347 : vector<1x1x64xf32> to vector<1x64xf32>
    %349 = vector.broadcast %348 : vector<1x64xf32> to vector<8x64xf32>
    %350 = arith.addf %346, %349 : vector<8x64xf32>
    %c2 = arith.constant 2 : index
    %c0_140 = arith.constant 0 : index
    %c0_141 = arith.constant 0 : index
    %351 = vector.load %arg4[%c2, %c0_140, %c0_141] : memref<5x1x64xf32, #tpu.memory_space<vmem>>, vector<1x1x64xf32>
    %352 = vector.shape_cast %351 : vector<1x1x64xf32> to vector<1x64xf32>
    %c2_142 = arith.constant 2 : index
    %c0_143 = arith.constant 0 : index
    %c0_144 = arith.constant 0 : index
    %353 = vector.load %arg5[%c2_142, %c0_143, %c0_144] : memref<5x1x64xf32, #tpu.memory_space<vmem>>, vector<1x1x64xf32>
    %354 = vector.shape_cast %353 : vector<1x1x64xf32> to vector<1x64xf32>
    %cst_145 = arith.constant dense<0.000000e+00> : vector<8xf32>
    %355 = vector.multi_reduction <add>, %350, %cst_145 [1] : vector<8x64xf32> to vector<8xf32>
    %356 = vector.shape_cast %355 : vector<8xf32> to vector<8x1xf32>
    %cst_146 = arith.constant 6.400000e+01 : f32
    %357 = vector.broadcast %cst_146 : f32 to vector<8x1xf32>
    %358 = arith.divf %356, %357 : vector<8x1xf32>
    %359 = vector.broadcast %358 : vector<8x1xf32> to vector<8x64xf32>
    %360 = arith.subf %350, %359 : vector<8x64xf32>
    %361 = arith.mulf %360, %360 : vector<8x64xf32>
    %cst_147 = arith.constant dense<0.000000e+00> : vector<8xf32>
    %362 = vector.multi_reduction <add>, %361, %cst_147 [1] : vector<8x64xf32> to vector<8xf32>
    %363 = vector.shape_cast %362 : vector<8xf32> to vector<8x1xf32>
    %cst_148 = arith.constant 6.400000e+01 : f32
    %364 = vector.broadcast %cst_148 : f32 to vector<8x1xf32>
    %365 = arith.divf %363, %364 : vector<8x1xf32>
    %366 = vector.broadcast %358 : vector<8x1xf32> to vector<8x64xf32>
    %367 = arith.subf %350, %366 : vector<8x64xf32>
    %cst_149 = arith.constant 9.99999974E-6 : f32
    %368 = vector.broadcast %cst_149 : f32 to vector<8x1xf32>
    %369 = arith.addf %365, %368 : vector<8x1xf32>
    %370 = math.rsqrt %369 : vector<8x1xf32>
    %371 = vector.broadcast %370 : vector<8x1xf32> to vector<8x64xf32>
    %372 = arith.mulf %367, %371 : vector<8x64xf32>
    %373 = vector.broadcast %352 : vector<1x64xf32> to vector<8x64xf32>
    %374 = arith.mulf %372, %373 : vector<8x64xf32>
    %375 = vector.broadcast %354 : vector<1x64xf32> to vector<8x64xf32>
    %376 = arith.addf %374, %375 : vector<8x64xf32>
    %377 = arith.truncf %376 : vector<8x64xf32> to vector<8x64xbf16>
    %c2_150 = arith.constant 2 : index
    %c0_151 = arith.constant 0 : index
    %c0_152 = arith.constant 0 : index
    %378 = vector.load %arg6[%c2_150, %c0_151, %c0_152] : memref<5x64x192xbf16, #tpu.memory_space<vmem>>, vector<1x64x192xbf16>
    %379 = vector.shape_cast %378 : vector<1x64x192xbf16> to vector<64x192xbf16>
    %cst_153 = arith.constant dense<0.000000e+00> : vector<8x192xf32>
    %380 = tpu.matmul %377, %379, %cst_153 {dimension_numbers = #tpu.dot_dimension_numbers<[1], [0], [0], [1], [0, 0, 1, 1], [], []>} : vector<8x64xbf16>, vector<64x192xbf16>, vector<8x192xf32> -> vector<8x192xf32>
    %381 = vector.extract_strided_slice %380 {offsets = [0, 0], sizes = [8, 16], strides = [1, 1]} : vector<8x192xf32> to vector<8x16xf32>
    %cst_154 = arith.constant 8.000000e+00 : f32
    %382 = vector.broadcast %cst_154 : f32 to vector<8x16xf32>
    %383 = arith.mulf %381, %382 : vector<8x16xf32>
    %384 = vector.extract_strided_slice %380 {offsets = [0, 64], sizes = [8, 16], strides = [1, 1]} : vector<8x192xf32> to vector<8x16xf32>
    %385 = vector.extract_strided_slice %380 {offsets = [0, 128], sizes = [8, 16], strides = [1, 1]} : vector<8x192xf32> to vector<8x16xf32>
    %386 = arith.truncf %383 : vector<8x16xf32> to vector<8x16xbf16>
    %387 = arith.truncf %384 : vector<8x16xf32> to vector<8x16xbf16>
    "tpu.trace_start"() <{level = 10 : i32, message = "qe,ke->qk"}> : () -> ()
    %cst_155 = arith.constant dense<0.000000e+00> : vector<8x8xf32>
    %388 = tpu.matmul %386, %387, %cst_155 {dimension_numbers = #tpu.dot_dimension_numbers<[1], [1], [0], [0], [0, 0, 1, 0], [], []>} : vector<8x16xbf16>, vector<8x16xbf16>, vector<8x8xf32> -> vector<8x8xf32>
    "tpu.trace_stop"() : () -> ()
    %389 = arith.addf %388, %4 : vector<8x8xf32>
    %cst_156 = arith.constant dense<0xFF800000> : vector<8xf32>
    %390 = vector.multi_reduction <maximumf>, %389, %cst_156 [1] : vector<8x8xf32> to vector<8xf32>
    %391 = vector.shape_cast %390 : vector<8xf32> to vector<8x1xf32>
    %392 = vector.broadcast %391 : vector<8x1xf32> to vector<8x8xf32>
    %393 = arith.subf %389, %392 : vector<8x8xf32>
    %394 = math.exp %393 : vector<8x8xf32>
    %cst_157 = arith.constant dense<0.000000e+00> : vector<8xf32>
    %395 = vector.multi_reduction <add>, %394, %cst_157 [1] : vector<8x8xf32> to vector<8xf32>
    %396 = vector.shape_cast %395 : vector<8xf32> to vector<8x1xf32>
    %397 = tpu.reciprocal %396 {approx = true} : vector<8x1xf32> -> vector<8x1xf32>
    %398 = vector.broadcast %397 : vector<8x1xf32> to vector<8x8xf32>
    %399 = arith.mulf %394, %398 : vector<8x8xf32>
    %400 = arith.truncf %399 : vector<8x8xf32> to vector<8x8xbf16>
    %401 = arith.truncf %385 : vector<8x16xf32> to vector<8x16xbf16>
    %cst_158 = arith.constant dense<0.000000e+00> : vector<8x16xf32>
    %402 = tpu.matmul %400, %401, %cst_158 {dimension_numbers = #tpu.dot_dimension_numbers<[1], [0], [0], [1], [0, 0, 1, 1], [], []>} : vector<8x8xbf16>, vector<8x16xbf16>, vector<8x16xf32> -> vector<8x16xf32>
    %403 = vector.extract_strided_slice %380 {offsets = [0, 16], sizes = [8, 16], strides = [1, 1]} : vector<8x192xf32> to vector<8x16xf32>
    %cst_159 = arith.constant 8.000000e+00 : f32
    %404 = vector.broadcast %cst_159 : f32 to vector<8x16xf32>
    %405 = arith.mulf %403, %404 : vector<8x16xf32>
    %406 = vector.extract_strided_slice %380 {offsets = [0, 80], sizes = [8, 16], strides = [1, 1]} : vector<8x192xf32> to vector<8x16xf32>
    %407 = vector.extract_strided_slice %380 {offsets = [0, 144], sizes = [8, 16], strides = [1, 1]} : vector<8x192xf32> to vector<8x16xf32>
    %408 = arith.truncf %405 : vector<8x16xf32> to vector<8x16xbf16>
    %409 = arith.truncf %406 : vector<8x16xf32> to vector<8x16xbf16>
    "tpu.trace_start"() <{level = 10 : i32, message = "qe,ke->qk"}> : () -> ()
    %cst_160 = arith.constant dense<0.000000e+00> : vector<8x8xf32>
    %410 = tpu.matmul %408, %409, %cst_160 {dimension_numbers = #tpu.dot_dimension_numbers<[1], [1], [0], [0], [0, 0, 1, 0], [], []>} : vector<8x16xbf16>, vector<8x16xbf16>, vector<8x8xf32> -> vector<8x8xf32>
    "tpu.trace_stop"() : () -> ()
    %411 = arith.addf %410, %4 : vector<8x8xf32>
    %cst_161 = arith.constant dense<0xFF800000> : vector<8xf32>
    %412 = vector.multi_reduction <maximumf>, %411, %cst_161 [1] : vector<8x8xf32> to vector<8xf32>
    %413 = vector.shape_cast %412 : vector<8xf32> to vector<8x1xf32>
    %414 = vector.broadcast %413 : vector<8x1xf32> to vector<8x8xf32>
    %415 = arith.subf %411, %414 : vector<8x8xf32>
    %416 = math.exp %415 : vector<8x8xf32>
    %cst_162 = arith.constant dense<0.000000e+00> : vector<8xf32>
    %417 = vector.multi_reduction <add>, %416, %cst_162 [1] : vector<8x8xf32> to vector<8xf32>
    %418 = vector.shape_cast %417 : vector<8xf32> to vector<8x1xf32>
    %419 = tpu.reciprocal %418 {approx = true} : vector<8x1xf32> -> vector<8x1xf32>
    %420 = vector.broadcast %419 : vector<8x1xf32> to vector<8x8xf32>
    %421 = arith.mulf %416, %420 : vector<8x8xf32>
    %422 = arith.truncf %421 : vector<8x8xf32> to vector<8x8xbf16>
    %423 = arith.truncf %407 : vector<8x16xf32> to vector<8x16xbf16>
    %cst_163 = arith.constant dense<0.000000e+00> : vector<8x16xf32>
    %424 = tpu.matmul %422, %423, %cst_163 {dimension_numbers = #tpu.dot_dimension_numbers<[1], [0], [0], [1], [0, 0, 1, 1], [], []>} : vector<8x8xbf16>, vector<8x16xbf16>, vector<8x16xf32> -> vector<8x16xf32>
    %425 = vector.extract_strided_slice %380 {offsets = [0, 32], sizes = [8, 16], strides = [1, 1]} : vector<8x192xf32> to vector<8x16xf32>
    %cst_164 = arith.constant 8.000000e+00 : f32
    %426 = vector.broadcast %cst_164 : f32 to vector<8x16xf32>
    %427 = arith.mulf %425, %426 : vector<8x16xf32>
    %428 = vector.extract_strided_slice %380 {offsets = [0, 96], sizes = [8, 16], strides = [1, 1]} : vector<8x192xf32> to vector<8x16xf32>
    %429 = vector.extract_strided_slice %380 {offsets = [0, 160], sizes = [8, 16], strides = [1, 1]} : vector<8x192xf32> to vector<8x16xf32>
    %430 = arith.truncf %427 : vector<8x16xf32> to vector<8x16xbf16>
    %431 = arith.truncf %428 : vector<8x16xf32> to vector<8x16xbf16>
    "tpu.trace_start"() <{level = 10 : i32, message = "qe,ke->qk"}> : () -> ()
    %cst_165 = arith.constant dense<0.000000e+00> : vector<8x8xf32>
    %432 = tpu.matmul %430, %431, %cst_165 {dimension_numbers = #tpu.dot_dimension_numbers<[1], [1], [0], [0], [0, 0, 1, 0], [], []>} : vector<8x16xbf16>, vector<8x16xbf16>, vector<8x8xf32> -> vector<8x8xf32>
    "tpu.trace_stop"() : () -> ()
    %433 = arith.addf %432, %4 : vector<8x8xf32>
    %cst_166 = arith.constant dense<0xFF800000> : vector<8xf32>
    %434 = vector.multi_reduction <maximumf>, %433, %cst_166 [1] : vector<8x8xf32> to vector<8xf32>
    %435 = vector.shape_cast %434 : vector<8xf32> to vector<8x1xf32>
    %436 = vector.broadcast %435 : vector<8x1xf32> to vector<8x8xf32>
    %437 = arith.subf %433, %436 : vector<8x8xf32>
    %438 = math.exp %437 : vector<8x8xf32>
    %cst_167 = arith.constant dense<0.000000e+00> : vector<8xf32>
    %439 = vector.multi_reduction <add>, %438, %cst_167 [1] : vector<8x8xf32> to vector<8xf32>
    %440 = vector.shape_cast %439 : vector<8xf32> to vector<8x1xf32>
    %441 = tpu.reciprocal %440 {approx = true} : vector<8x1xf32> -> vector<8x1xf32>
    %442 = vector.broadcast %441 : vector<8x1xf32> to vector<8x8xf32>
    %443 = arith.mulf %438, %442 : vector<8x8xf32>
    %444 = arith.truncf %443 : vector<8x8xf32> to vector<8x8xbf16>
    %445 = arith.truncf %429 : vector<8x16xf32> to vector<8x16xbf16>
    %cst_168 = arith.constant dense<0.000000e+00> : vector<8x16xf32>
    %446 = tpu.matmul %444, %445, %cst_168 {dimension_numbers = #tpu.dot_dimension_numbers<[1], [0], [0], [1], [0, 0, 1, 1], [], []>} : vector<8x8xbf16>, vector<8x16xbf16>, vector<8x16xf32> -> vector<8x16xf32>
    %447 = vector.extract_strided_slice %380 {offsets = [0, 48], sizes = [8, 16], strides = [1, 1]} : vector<8x192xf32> to vector<8x16xf32>
    %cst_169 = arith.constant 8.000000e+00 : f32
    %448 = vector.broadcast %cst_169 : f32 to vector<8x16xf32>
    %449 = arith.mulf %447, %448 : vector<8x16xf32>
    %450 = vector.extract_strided_slice %380 {offsets = [0, 112], sizes = [8, 16], strides = [1, 1]} : vector<8x192xf32> to vector<8x16xf32>
    %451 = vector.extract_strided_slice %380 {offsets = [0, 176], sizes = [8, 16], strides = [1, 1]} : vector<8x192xf32> to vector<8x16xf32>
    %452 = arith.truncf %449 : vector<8x16xf32> to vector<8x16xbf16>
    %453 = arith.truncf %450 : vector<8x16xf32> to vector<8x16xbf16>
    "tpu.trace_start"() <{level = 10 : i32, message = "qe,ke->qk"}> : () -> ()
    %cst_170 = arith.constant dense<0.000000e+00> : vector<8x8xf32>
    %454 = tpu.matmul %452, %453, %cst_170 {dimension_numbers = #tpu.dot_dimension_numbers<[1], [1], [0], [0], [0, 0, 1, 0], [], []>} : vector<8x16xbf16>, vector<8x16xbf16>, vector<8x8xf32> -> vector<8x8xf32>
    "tpu.trace_stop"() : () -> ()
    %455 = arith.addf %454, %4 : vector<8x8xf32>
    %cst_171 = arith.constant dense<0xFF800000> : vector<8xf32>
    %456 = vector.multi_reduction <maximumf>, %455, %cst_171 [1] : vector<8x8xf32> to vector<8xf32>
    %457 = vector.shape_cast %456 : vector<8xf32> to vector<8x1xf32>
    %458 = vector.broadcast %457 : vector<8x1xf32> to vector<8x8xf32>
    %459 = arith.subf %455, %458 : vector<8x8xf32>
    %460 = math.exp %459 : vector<8x8xf32>
    %cst_172 = arith.constant dense<0.000000e+00> : vector<8xf32>
    %461 = vector.multi_reduction <add>, %460, %cst_172 [1] : vector<8x8xf32> to vector<8xf32>
    %462 = vector.shape_cast %461 : vector<8xf32> to vector<8x1xf32>
    %463 = tpu.reciprocal %462 {approx = true} : vector<8x1xf32> -> vector<8x1xf32>
    %464 = vector.broadcast %463 : vector<8x1xf32> to vector<8x8xf32>
    %465 = arith.mulf %460, %464 : vector<8x8xf32>
    %466 = arith.truncf %465 : vector<8x8xf32> to vector<8x8xbf16>
    %467 = arith.truncf %451 : vector<8x16xf32> to vector<8x16xbf16>
    %cst_173 = arith.constant dense<0.000000e+00> : vector<8x16xf32>
    %468 = tpu.matmul %466, %467, %cst_173 {dimension_numbers = #tpu.dot_dimension_numbers<[1], [0], [0], [1], [0, 0, 1, 1], [], []>} : vector<8x8xbf16>, vector<8x16xbf16>, vector<8x16xf32> -> vector<8x16xf32>
    %469 = tpu.concatenate %402, %424, %446, %468 in 1 : vector<8x16xf32>, vector<8x16xf32>, vector<8x16xf32>, vector<8x16xf32> -> vector<8x64xf32>
    %470 = arith.truncf %469 : vector<8x64xf32> to vector<8x64xbf16>
    %c2_174 = arith.constant 2 : index
    %c0_175 = arith.constant 0 : index
    %c0_176 = arith.constant 0 : index
    %471 = vector.load %arg7[%c2_174, %c0_175, %c0_176] : memref<5x64x64xbf16, #tpu.memory_space<vmem>>, vector<1x64x64xbf16>
    %472 = vector.shape_cast %471 : vector<1x64x64xbf16> to vector<64x64xbf16>
    %cst_177 = arith.constant dense<0.000000e+00> : vector<8x64xf32>
    %473 = tpu.matmul %470, %472, %cst_177 {dimension_numbers = #tpu.dot_dimension_numbers<[1], [0], [0], [1], [0, 0, 1, 1], [], []>} : vector<8x64xbf16>, vector<64x64xbf16>, vector<8x64xf32> -> vector<8x64xf32>
    %c2_178 = arith.constant 2 : index
    %c0_179 = arith.constant 0 : index
    %c0_180 = arith.constant 0 : index
    %474 = vector.load %arg8[%c2_178, %c0_179, %c0_180] : memref<5x1x64xf32, #tpu.memory_space<vmem>>, vector<1x1x64xf32>
    %475 = vector.shape_cast %474 : vector<1x1x64xf32> to vector<1x64xf32>
    %476 = vector.broadcast %475 : vector<1x64xf32> to vector<8x64xf32>
    %477 = arith.addf %473, %476 : vector<8x64xf32>
    %478 = arith.addf %350, %477 : vector<8x64xf32>
    %c2_181 = arith.constant 2 : index
    %c0_182 = arith.constant 0 : index
    %c0_183 = arith.constant 0 : index
    %479 = vector.load %arg9[%c2_181, %c0_182, %c0_183] : memref<5x1x64xf32, #tpu.memory_space<vmem>>, vector<1x1x64xf32>
    %480 = vector.shape_cast %479 : vector<1x1x64xf32> to vector<1x64xf32>
    %c2_184 = arith.constant 2 : index
    %c0_185 = arith.constant 0 : index
    %c0_186 = arith.constant 0 : index
    %481 = vector.load %arg10[%c2_184, %c0_185, %c0_186] : memref<5x1x64xf32, #tpu.memory_space<vmem>>, vector<1x1x64xf32>
    %482 = vector.shape_cast %481 : vector<1x1x64xf32> to vector<1x64xf32>
    %cst_187 = arith.constant dense<0.000000e+00> : vector<8xf32>
    %483 = vector.multi_reduction <add>, %478, %cst_187 [1] : vector<8x64xf32> to vector<8xf32>
    %484 = vector.shape_cast %483 : vector<8xf32> to vector<8x1xf32>
    %cst_188 = arith.constant 6.400000e+01 : f32
    %485 = vector.broadcast %cst_188 : f32 to vector<8x1xf32>
    %486 = arith.divf %484, %485 : vector<8x1xf32>
    %487 = vector.broadcast %486 : vector<8x1xf32> to vector<8x64xf32>
    %488 = arith.subf %478, %487 : vector<8x64xf32>
    %489 = arith.mulf %488, %488 : vector<8x64xf32>
    %cst_189 = arith.constant dense<0.000000e+00> : vector<8xf32>
    %490 = vector.multi_reduction <add>, %489, %cst_189 [1] : vector<8x64xf32> to vector<8xf32>
    %491 = vector.shape_cast %490 : vector<8xf32> to vector<8x1xf32>
    %cst_190 = arith.constant 6.400000e+01 : f32
    %492 = vector.broadcast %cst_190 : f32 to vector<8x1xf32>
    %493 = arith.divf %491, %492 : vector<8x1xf32>
    %494 = vector.broadcast %486 : vector<8x1xf32> to vector<8x64xf32>
    %495 = arith.subf %478, %494 : vector<8x64xf32>
    %cst_191 = arith.constant 9.99999974E-6 : f32
    %496 = vector.broadcast %cst_191 : f32 to vector<8x1xf32>
    %497 = arith.addf %493, %496 : vector<8x1xf32>
    %498 = math.rsqrt %497 : vector<8x1xf32>
    %499 = vector.broadcast %498 : vector<8x1xf32> to vector<8x64xf32>
    %500 = arith.mulf %495, %499 : vector<8x64xf32>
    %501 = vector.broadcast %480 : vector<1x64xf32> to vector<8x64xf32>
    %502 = arith.mulf %500, %501 : vector<8x64xf32>
    %503 = vector.broadcast %482 : vector<1x64xf32> to vector<8x64xf32>
    %504 = arith.addf %502, %503 : vector<8x64xf32>
    %505 = arith.truncf %504 : vector<8x64xf32> to vector<8x64xbf16>
    %c2_192 = arith.constant 2 : index
    %c0_193 = arith.constant 0 : index
    %c0_194 = arith.constant 0 : index
    %506 = vector.load %arg11[%c2_192, %c0_193, %c0_194] : memref<5x64x256xbf16, #tpu.memory_space<vmem>>, vector<1x64x256xbf16>
    %507 = vector.shape_cast %506 : vector<1x64x256xbf16> to vector<64x256xbf16>
    %cst_195 = arith.constant dense<0.000000e+00> : vector<8x256xf32>
    %508 = tpu.matmul %505, %507, %cst_195 {dimension_numbers = #tpu.dot_dimension_numbers<[1], [0], [0], [1], [0, 0, 1, 1], [], []>} : vector<8x64xbf16>, vector<64x256xbf16>, vector<8x256xf32> -> vector<8x256xf32>
    %c2_196 = arith.constant 2 : index
    %c0_197 = arith.constant 0 : index
    %c0_198 = arith.constant 0 : index
    %509 = vector.load %arg12[%c2_196, %c0_197, %c0_198] : memref<5x1x256xf32, #tpu.memory_space<vmem>>, vector<1x1x256xf32>
    %510 = vector.shape_cast %509 : vector<1x1x256xf32> to vector<1x256xf32>
    %511 = vector.broadcast %510 : vector<1x256xf32> to vector<8x256xf32>
    %512 = arith.addf %508, %511 : vector<8x256xf32>
    %cst_199 = arith.constant 0.000000e+00 : f32
    %513 = vector.broadcast %cst_199 : f32 to vector<8x256xf32>
    %514 = arith.maximumf %512, %513 : vector<8x256xf32>
    %515 = arith.truncf %514 : vector<8x256xf32> to vector<8x256xbf16>
    %c2_200 = arith.constant 2 : index
    %c0_201 = arith.constant 0 : index
    %c0_202 = arith.constant 0 : index
    %516 = vector.load %arg13[%c2_200, %c0_201, %c0_202] : memref<5x256x64xbf16, #tpu.memory_space<vmem>>, vector<1x256x64xbf16>
    %517 = vector.shape_cast %516 : vector<1x256x64xbf16> to vector<256x64xbf16>
    %cst_203 = arith.constant dense<0.000000e+00> : vector<8x64xf32>
    %518 = tpu.matmul %515, %517, %cst_203 {dimension_numbers = #tpu.dot_dimension_numbers<[1], [0], [0], [1], [0, 0, 1, 1], [], []>} : vector<8x256xbf16>, vector<256x64xbf16>, vector<8x64xf32> -> vector<8x64xf32>
    %519 = arith.addf %478, %518 : vector<8x64xf32>
    %c2_204 = arith.constant 2 : index
    %c0_205 = arith.constant 0 : index
    %c0_206 = arith.constant 0 : index
    %520 = vector.load %arg14[%c2_204, %c0_205, %c0_206] : memref<5x1x64xf32, #tpu.memory_space<vmem>>, vector<1x1x64xf32>
    %521 = vector.shape_cast %520 : vector<1x1x64xf32> to vector<1x64xf32>
    %522 = vector.broadcast %521 : vector<1x64xf32> to vector<8x64xf32>
    %523 = arith.addf %519, %522 : vector<8x64xf32>
    %c3 = arith.constant 3 : index
    %c0_207 = arith.constant 0 : index
    %c0_208 = arith.constant 0 : index
    %524 = vector.load %arg4[%c3, %c0_207, %c0_208] : memref<5x1x64xf32, #tpu.memory_space<vmem>>, vector<1x1x64xf32>
    %525 = vector.shape_cast %524 : vector<1x1x64xf32> to vector<1x64xf32>
    %c3_209 = arith.constant 3 : index
    %c0_210 = arith.constant 0 : index
    %c0_211 = arith.constant 0 : index
    %526 = vector.load %arg5[%c3_209, %c0_210, %c0_211] : memref<5x1x64xf32, #tpu.memory_space<vmem>>, vector<1x1x64xf32>
    %527 = vector.shape_cast %526 : vector<1x1x64xf32> to vector<1x64xf32>
    %cst_212 = arith.constant dense<0.000000e+00> : vector<8xf32>
    %528 = vector.multi_reduction <add>, %523, %cst_212 [1] : vector<8x64xf32> to vector<8xf32>
    %529 = vector.shape_cast %528 : vector<8xf32> to vector<8x1xf32>
    %cst_213 = arith.constant 6.400000e+01 : f32
    %530 = vector.broadcast %cst_213 : f32 to vector<8x1xf32>
    %531 = arith.divf %529, %530 : vector<8x1xf32>
    %532 = vector.broadcast %531 : vector<8x1xf32> to vector<8x64xf32>
    %533 = arith.subf %523, %532 : vector<8x64xf32>
    %534 = arith.mulf %533, %533 : vector<8x64xf32>
    %cst_214 = arith.constant dense<0.000000e+00> : vector<8xf32>
    %535 = vector.multi_reduction <add>, %534, %cst_214 [1] : vector<8x64xf32> to vector<8xf32>
    %536 = vector.shape_cast %535 : vector<8xf32> to vector<8x1xf32>
    %cst_215 = arith.constant 6.400000e+01 : f32
    %537 = vector.broadcast %cst_215 : f32 to vector<8x1xf32>
    %538 = arith.divf %536, %537 : vector<8x1xf32>
    %539 = vector.broadcast %531 : vector<8x1xf32> to vector<8x64xf32>
    %540 = arith.subf %523, %539 : vector<8x64xf32>
    %cst_216 = arith.constant 9.99999974E-6 : f32
    %541 = vector.broadcast %cst_216 : f32 to vector<8x1xf32>
    %542 = arith.addf %538, %541 : vector<8x1xf32>
    %543 = math.rsqrt %542 : vector<8x1xf32>
    %544 = vector.broadcast %543 : vector<8x1xf32> to vector<8x64xf32>
    %545 = arith.mulf %540, %544 : vector<8x64xf32>
    %546 = vector.broadcast %525 : vector<1x64xf32> to vector<8x64xf32>
    %547 = arith.mulf %545, %546 : vector<8x64xf32>
    %548 = vector.broadcast %527 : vector<1x64xf32> to vector<8x64xf32>
    %549 = arith.addf %547, %548 : vector<8x64xf32>
    %550 = arith.truncf %549 : vector<8x64xf32> to vector<8x64xbf16>
    %c3_217 = arith.constant 3 : index
    %c0_218 = arith.constant 0 : index
    %c0_219 = arith.constant 0 : index
    %551 = vector.load %arg6[%c3_217, %c0_218, %c0_219] : memref<5x64x192xbf16, #tpu.memory_space<vmem>>, vector<1x64x192xbf16>
    %552 = vector.shape_cast %551 : vector<1x64x192xbf16> to vector<64x192xbf16>
    %cst_220 = arith.constant dense<0.000000e+00> : vector<8x192xf32>
    %553 = tpu.matmul %550, %552, %cst_220 {dimension_numbers = #tpu.dot_dimension_numbers<[1], [0], [0], [1], [0, 0, 1, 1], [], []>} : vector<8x64xbf16>, vector<64x192xbf16>, vector<8x192xf32> -> vector<8x192xf32>
    %554 = vector.extract_strided_slice %553 {offsets = [0, 0], sizes = [8, 16], strides = [1, 1]} : vector<8x192xf32> to vector<8x16xf32>
    %cst_221 = arith.constant 8.000000e+00 : f32
    %555 = vector.broadcast %cst_221 : f32 to vector<8x16xf32>
    %556 = arith.mulf %554, %555 : vector<8x16xf32>
    %557 = vector.extract_strided_slice %553 {offsets = [0, 64], sizes = [8, 16], strides = [1, 1]} : vector<8x192xf32> to vector<8x16xf32>
    %558 = vector.extract_strided_slice %553 {offsets = [0, 128], sizes = [8, 16], strides = [1, 1]} : vector<8x192xf32> to vector<8x16xf32>
    %559 = arith.truncf %556 : vector<8x16xf32> to vector<8x16xbf16>
    %560 = arith.truncf %557 : vector<8x16xf32> to vector<8x16xbf16>
    "tpu.trace_start"() <{level = 10 : i32, message = "qe,ke->qk"}> : () -> ()
    %cst_222 = arith.constant dense<0.000000e+00> : vector<8x8xf32>
    %561 = tpu.matmul %559, %560, %cst_222 {dimension_numbers = #tpu.dot_dimension_numbers<[1], [1], [0], [0], [0, 0, 1, 0], [], []>} : vector<8x16xbf16>, vector<8x16xbf16>, vector<8x8xf32> -> vector<8x8xf32>
    "tpu.trace_stop"() : () -> ()
    %562 = arith.addf %561, %4 : vector<8x8xf32>
    %cst_223 = arith.constant dense<0xFF800000> : vector<8xf32>
    %563 = vector.multi_reduction <maximumf>, %562, %cst_223 [1] : vector<8x8xf32> to vector<8xf32>
    %564 = vector.shape_cast %563 : vector<8xf32> to vector<8x1xf32>
    %565 = vector.broadcast %564 : vector<8x1xf32> to vector<8x8xf32>
    %566 = arith.subf %562, %565 : vector<8x8xf32>
    %567 = math.exp %566 : vector<8x8xf32>
    %cst_224 = arith.constant dense<0.000000e+00> : vector<8xf32>
    %568 = vector.multi_reduction <add>, %567, %cst_224 [1] : vector<8x8xf32> to vector<8xf32>
    %569 = vector.shape_cast %568 : vector<8xf32> to vector<8x1xf32>
    %570 = tpu.reciprocal %569 {approx = true} : vector<8x1xf32> -> vector<8x1xf32>
    %571 = vector.broadcast %570 : vector<8x1xf32> to vector<8x8xf32>
    %572 = arith.mulf %567, %571 : vector<8x8xf32>
    %573 = arith.truncf %572 : vector<8x8xf32> to vector<8x8xbf16>
    %574 = arith.truncf %558 : vector<8x16xf32> to vector<8x16xbf16>
    %cst_225 = arith.constant dense<0.000000e+00> : vector<8x16xf32>
    %575 = tpu.matmul %573, %574, %cst_225 {dimension_numbers = #tpu.dot_dimension_numbers<[1], [0], [0], [1], [0, 0, 1, 1], [], []>} : vector<8x8xbf16>, vector<8x16xbf16>, vector<8x16xf32> -> vector<8x16xf32>
    %576 = vector.extract_strided_slice %553 {offsets = [0, 16], sizes = [8, 16], strides = [1, 1]} : vector<8x192xf32> to vector<8x16xf32>
    %cst_226 = arith.constant 8.000000e+00 : f32
    %577 = vector.broadcast %cst_226 : f32 to vector<8x16xf32>
    %578 = arith.mulf %576, %577 : vector<8x16xf32>
    %579 = vector.extract_strided_slice %553 {offsets = [0, 80], sizes = [8, 16], strides = [1, 1]} : vector<8x192xf32> to vector<8x16xf32>
    %580 = vector.extract_strided_slice %553 {offsets = [0, 144], sizes = [8, 16], strides = [1, 1]} : vector<8x192xf32> to vector<8x16xf32>
    %581 = arith.truncf %578 : vector<8x16xf32> to vector<8x16xbf16>
    %582 = arith.truncf %579 : vector<8x16xf32> to vector<8x16xbf16>
    "tpu.trace_start"() <{level = 10 : i32, message = "qe,ke->qk"}> : () -> ()
    %cst_227 = arith.constant dense<0.000000e+00> : vector<8x8xf32>
    %583 = tpu.matmul %581, %582, %cst_227 {dimension_numbers = #tpu.dot_dimension_numbers<[1], [1], [0], [0], [0, 0, 1, 0], [], []>} : vector<8x16xbf16>, vector<8x16xbf16>, vector<8x8xf32> -> vector<8x8xf32>
    "tpu.trace_stop"() : () -> ()
    %584 = arith.addf %583, %4 : vector<8x8xf32>
    %cst_228 = arith.constant dense<0xFF800000> : vector<8xf32>
    %585 = vector.multi_reduction <maximumf>, %584, %cst_228 [1] : vector<8x8xf32> to vector<8xf32>
    %586 = vector.shape_cast %585 : vector<8xf32> to vector<8x1xf32>
    %587 = vector.broadcast %586 : vector<8x1xf32> to vector<8x8xf32>
    %588 = arith.subf %584, %587 : vector<8x8xf32>
    %589 = math.exp %588 : vector<8x8xf32>
    %cst_229 = arith.constant dense<0.000000e+00> : vector<8xf32>
    %590 = vector.multi_reduction <add>, %589, %cst_229 [1] : vector<8x8xf32> to vector<8xf32>
    %591 = vector.shape_cast %590 : vector<8xf32> to vector<8x1xf32>
    %592 = tpu.reciprocal %591 {approx = true} : vector<8x1xf32> -> vector<8x1xf32>
    %593 = vector.broadcast %592 : vector<8x1xf32> to vector<8x8xf32>
    %594 = arith.mulf %589, %593 : vector<8x8xf32>
    %595 = arith.truncf %594 : vector<8x8xf32> to vector<8x8xbf16>
    %596 = arith.truncf %580 : vector<8x16xf32> to vector<8x16xbf16>
    %cst_230 = arith.constant dense<0.000000e+00> : vector<8x16xf32>
    %597 = tpu.matmul %595, %596, %cst_230 {dimension_numbers = #tpu.dot_dimension_numbers<[1], [0], [0], [1], [0, 0, 1, 1], [], []>} : vector<8x8xbf16>, vector<8x16xbf16>, vector<8x16xf32> -> vector<8x16xf32>
    %598 = vector.extract_strided_slice %553 {offsets = [0, 32], sizes = [8, 16], strides = [1, 1]} : vector<8x192xf32> to vector<8x16xf32>
    %cst_231 = arith.constant 8.000000e+00 : f32
    %599 = vector.broadcast %cst_231 : f32 to vector<8x16xf32>
    %600 = arith.mulf %598, %599 : vector<8x16xf32>
    %601 = vector.extract_strided_slice %553 {offsets = [0, 96], sizes = [8, 16], strides = [1, 1]} : vector<8x192xf32> to vector<8x16xf32>
    %602 = vector.extract_strided_slice %553 {offsets = [0, 160], sizes = [8, 16], strides = [1, 1]} : vector<8x192xf32> to vector<8x16xf32>
    %603 = arith.truncf %600 : vector<8x16xf32> to vector<8x16xbf16>
    %604 = arith.truncf %601 : vector<8x16xf32> to vector<8x16xbf16>
    "tpu.trace_start"() <{level = 10 : i32, message = "qe,ke->qk"}> : () -> ()
    %cst_232 = arith.constant dense<0.000000e+00> : vector<8x8xf32>
    %605 = tpu.matmul %603, %604, %cst_232 {dimension_numbers = #tpu.dot_dimension_numbers<[1], [1], [0], [0], [0, 0, 1, 0], [], []>} : vector<8x16xbf16>, vector<8x16xbf16>, vector<8x8xf32> -> vector<8x8xf32>
    "tpu.trace_stop"() : () -> ()
    %606 = arith.addf %605, %4 : vector<8x8xf32>
    %cst_233 = arith.constant dense<0xFF800000> : vector<8xf32>
    %607 = vector.multi_reduction <maximumf>, %606, %cst_233 [1] : vector<8x8xf32> to vector<8xf32>
    %608 = vector.shape_cast %607 : vector<8xf32> to vector<8x1xf32>
    %609 = vector.broadcast %608 : vector<8x1xf32> to vector<8x8xf32>
    %610 = arith.subf %606, %609 : vector<8x8xf32>
    %611 = math.exp %610 : vector<8x8xf32>
    %cst_234 = arith.constant dense<0.000000e+00> : vector<8xf32>
    %612 = vector.multi_reduction <add>, %611, %cst_234 [1] : vector<8x8xf32> to vector<8xf32>
    %613 = vector.shape_cast %612 : vector<8xf32> to vector<8x1xf32>
    %614 = tpu.reciprocal %613 {approx = true} : vector<8x1xf32> -> vector<8x1xf32>
    %615 = vector.broadcast %614 : vector<8x1xf32> to vector<8x8xf32>
    %616 = arith.mulf %611, %615 : vector<8x8xf32>
    %617 = arith.truncf %616 : vector<8x8xf32> to vector<8x8xbf16>
    %618 = arith.truncf %602 : vector<8x16xf32> to vector<8x16xbf16>
    %cst_235 = arith.constant dense<0.000000e+00> : vector<8x16xf32>
    %619 = tpu.matmul %617, %618, %cst_235 {dimension_numbers = #tpu.dot_dimension_numbers<[1], [0], [0], [1], [0, 0, 1, 1], [], []>} : vector<8x8xbf16>, vector<8x16xbf16>, vector<8x16xf32> -> vector<8x16xf32>
    %620 = vector.extract_strided_slice %553 {offsets = [0, 48], sizes = [8, 16], strides = [1, 1]} : vector<8x192xf32> to vector<8x16xf32>
    %cst_236 = arith.constant 8.000000e+00 : f32
    %621 = vector.broadcast %cst_236 : f32 to vector<8x16xf32>
    %622 = arith.mulf %620, %621 : vector<8x16xf32>
    %623 = vector.extract_strided_slice %553 {offsets = [0, 112], sizes = [8, 16], strides = [1, 1]} : vector<8x192xf32> to vector<8x16xf32>
    %624 = vector.extract_strided_slice %553 {offsets = [0, 176], sizes = [8, 16], strides = [1, 1]} : vector<8x192xf32> to vector<8x16xf32>
    %625 = arith.truncf %622 : vector<8x16xf32> to vector<8x16xbf16>
    %626 = arith.truncf %623 : vector<8x16xf32> to vector<8x16xbf16>
    "tpu.trace_start"() <{level = 10 : i32, message = "qe,ke->qk"}> : () -> ()
    %cst_237 = arith.constant dense<0.000000e+00> : vector<8x8xf32>
    %627 = tpu.matmul %625, %626, %cst_237 {dimension_numbers = #tpu.dot_dimension_numbers<[1], [1], [0], [0], [0, 0, 1, 0], [], []>} : vector<8x16xbf16>, vector<8x16xbf16>, vector<8x8xf32> -> vector<8x8xf32>
    "tpu.trace_stop"() : () -> ()
    %628 = arith.addf %627, %4 : vector<8x8xf32>
    %cst_238 = arith.constant dense<0xFF800000> : vector<8xf32>
    %629 = vector.multi_reduction <maximumf>, %628, %cst_238 [1] : vector<8x8xf32> to vector<8xf32>
    %630 = vector.shape_cast %629 : vector<8xf32> to vector<8x1xf32>
    %631 = vector.broadcast %630 : vector<8x1xf32> to vector<8x8xf32>
    %632 = arith.subf %628, %631 : vector<8x8xf32>
    %633 = math.exp %632 : vector<8x8xf32>
    %cst_239 = arith.constant dense<0.000000e+00> : vector<8xf32>
    %634 = vector.multi_reduction <add>, %633, %cst_239 [1] : vector<8x8xf32> to vector<8xf32>
    %635 = vector.shape_cast %634 : vector<8xf32> to vector<8x1xf32>
    %636 = tpu.reciprocal %635 {approx = true} : vector<8x1xf32> -> vector<8x1xf32>
    %637 = vector.broadcast %636 : vector<8x1xf32> to vector<8x8xf32>
    %638 = arith.mulf %633, %637 : vector<8x8xf32>
    %639 = arith.truncf %638 : vector<8x8xf32> to vector<8x8xbf16>
    %640 = arith.truncf %624 : vector<8x16xf32> to vector<8x16xbf16>
    %cst_240 = arith.constant dense<0.000000e+00> : vector<8x16xf32>
    %641 = tpu.matmul %639, %640, %cst_240 {dimension_numbers = #tpu.dot_dimension_numbers<[1], [0], [0], [1], [0, 0, 1, 1], [], []>} : vector<8x8xbf16>, vector<8x16xbf16>, vector<8x16xf32> -> vector<8x16xf32>
    %642 = tpu.concatenate %575, %597, %619, %641 in 1 : vector<8x16xf32>, vector<8x16xf32>, vector<8x16xf32>, vector<8x16xf32> -> vector<8x64xf32>
    %643 = arith.truncf %642 : vector<8x64xf32> to vector<8x64xbf16>
    %c3_241 = arith.constant 3 : index
    %c0_242 = arith.constant 0 : index
    %c0_243 = arith.constant 0 : index
    %644 = vector.load %arg7[%c3_241, %c0_242, %c0_243] : memref<5x64x64xbf16, #tpu.memory_space<vmem>>, vector<1x64x64xbf16>
    %645 = vector.shape_cast %644 : vector<1x64x64xbf16> to vector<64x64xbf16>
    %cst_244 = arith.constant dense<0.000000e+00> : vector<8x64xf32>
    %646 = tpu.matmul %643, %645, %cst_244 {dimension_numbers = #tpu.dot_dimension_numbers<[1], [0], [0], [1], [0, 0, 1, 1], [], []>} : vector<8x64xbf16>, vector<64x64xbf16>, vector<8x64xf32> -> vector<8x64xf32>
    %c3_245 = arith.constant 3 : index
    %c0_246 = arith.constant 0 : index
    %c0_247 = arith.constant 0 : index
    %647 = vector.load %arg8[%c3_245, %c0_246, %c0_247] : memref<5x1x64xf32, #tpu.memory_space<vmem>>, vector<1x1x64xf32>
    %648 = vector.shape_cast %647 : vector<1x1x64xf32> to vector<1x64xf32>
    %649 = vector.broadcast %648 : vector<1x64xf32> to vector<8x64xf32>
    %650 = arith.addf %646, %649 : vector<8x64xf32>
    %651 = arith.addf %523, %650 : vector<8x64xf32>
    %c3_248 = arith.constant 3 : index
    %c0_249 = arith.constant 0 : index
    %c0_250 = arith.constant 0 : index
    %652 = vector.load %arg9[%c3_248, %c0_249, %c0_250] : memref<5x1x64xf32, #tpu.memory_space<vmem>>, vector<1x1x64xf32>
    %653 = vector.shape_cast %652 : vector<1x1x64xf32> to vector<1x64xf32>
    %c3_251 = arith.constant 3 : index
    %c0_252 = arith.constant 0 : index
    %c0_253 = arith.constant 0 : index
    %654 = vector.load %arg10[%c3_251, %c0_252, %c0_253] : memref<5x1x64xf32, #tpu.memory_space<vmem>>, vector<1x1x64xf32>
    %655 = vector.shape_cast %654 : vector<1x1x64xf32> to vector<1x64xf32>
    %cst_254 = arith.constant dense<0.000000e+00> : vector<8xf32>
    %656 = vector.multi_reduction <add>, %651, %cst_254 [1] : vector<8x64xf32> to vector<8xf32>
    %657 = vector.shape_cast %656 : vector<8xf32> to vector<8x1xf32>
    %cst_255 = arith.constant 6.400000e+01 : f32
    %658 = vector.broadcast %cst_255 : f32 to vector<8x1xf32>
    %659 = arith.divf %657, %658 : vector<8x1xf32>
    %660 = vector.broadcast %659 : vector<8x1xf32> to vector<8x64xf32>
    %661 = arith.subf %651, %660 : vector<8x64xf32>
    %662 = arith.mulf %661, %661 : vector<8x64xf32>
    %cst_256 = arith.constant dense<0.000000e+00> : vector<8xf32>
    %663 = vector.multi_reduction <add>, %662, %cst_256 [1] : vector<8x64xf32> to vector<8xf32>
    %664 = vector.shape_cast %663 : vector<8xf32> to vector<8x1xf32>
    %cst_257 = arith.constant 6.400000e+01 : f32
    %665 = vector.broadcast %cst_257 : f32 to vector<8x1xf32>
    %666 = arith.divf %664, %665 : vector<8x1xf32>
    %667 = vector.broadcast %659 : vector<8x1xf32> to vector<8x64xf32>
    %668 = arith.subf %651, %667 : vector<8x64xf32>
    %cst_258 = arith.constant 9.99999974E-6 : f32
    %669 = vector.broadcast %cst_258 : f32 to vector<8x1xf32>
    %670 = arith.addf %666, %669 : vector<8x1xf32>
    %671 = math.rsqrt %670 : vector<8x1xf32>
    %672 = vector.broadcast %671 : vector<8x1xf32> to vector<8x64xf32>
    %673 = arith.mulf %668, %672 : vector<8x64xf32>
    %674 = vector.broadcast %653 : vector<1x64xf32> to vector<8x64xf32>
    %675 = arith.mulf %673, %674 : vector<8x64xf32>
    %676 = vector.broadcast %655 : vector<1x64xf32> to vector<8x64xf32>
    %677 = arith.addf %675, %676 : vector<8x64xf32>
    %678 = arith.truncf %677 : vector<8x64xf32> to vector<8x64xbf16>
    %c3_259 = arith.constant 3 : index
    %c0_260 = arith.constant 0 : index
    %c0_261 = arith.constant 0 : index
    %679 = vector.load %arg11[%c3_259, %c0_260, %c0_261] : memref<5x64x256xbf16, #tpu.memory_space<vmem>>, vector<1x64x256xbf16>
    %680 = vector.shape_cast %679 : vector<1x64x256xbf16> to vector<64x256xbf16>
    %cst_262 = arith.constant dense<0.000000e+00> : vector<8x256xf32>
    %681 = tpu.matmul %678, %680, %cst_262 {dimension_numbers = #tpu.dot_dimension_numbers<[1], [0], [0], [1], [0, 0, 1, 1], [], []>} : vector<8x64xbf16>, vector<64x256xbf16>, vector<8x256xf32> -> vector<8x256xf32>
    %c3_263 = arith.constant 3 : index
    %c0_264 = arith.constant 0 : index
    %c0_265 = arith.constant 0 : index
    %682 = vector.load %arg12[%c3_263, %c0_264, %c0_265] : memref<5x1x256xf32, #tpu.memory_space<vmem>>, vector<1x1x256xf32>
    %683 = vector.shape_cast %682 : vector<1x1x256xf32> to vector<1x256xf32>
    %684 = vector.broadcast %683 : vector<1x256xf32> to vector<8x256xf32>
    %685 = arith.addf %681, %684 : vector<8x256xf32>
    %cst_266 = arith.constant 0.000000e+00 : f32
    %686 = vector.broadcast %cst_266 : f32 to vector<8x256xf32>
    %687 = arith.maximumf %685, %686 : vector<8x256xf32>
    %688 = arith.truncf %687 : vector<8x256xf32> to vector<8x256xbf16>
    %c3_267 = arith.constant 3 : index
    %c0_268 = arith.constant 0 : index
    %c0_269 = arith.constant 0 : index
    %689 = vector.load %arg13[%c3_267, %c0_268, %c0_269] : memref<5x256x64xbf16, #tpu.memory_space<vmem>>, vector<1x256x64xbf16>
    %690 = vector.shape_cast %689 : vector<1x256x64xbf16> to vector<256x64xbf16>
    %cst_270 = arith.constant dense<0.000000e+00> : vector<8x64xf32>
    %691 = tpu.matmul %688, %690, %cst_270 {dimension_numbers = #tpu.dot_dimension_numbers<[1], [0], [0], [1], [0, 0, 1, 1], [], []>} : vector<8x256xbf16>, vector<256x64xbf16>, vector<8x64xf32> -> vector<8x64xf32>
    %692 = arith.addf %651, %691 : vector<8x64xf32>
    %c3_271 = arith.constant 3 : index
    %c0_272 = arith.constant 0 : index
    %c0_273 = arith.constant 0 : index
    %693 = vector.load %arg14[%c3_271, %c0_272, %c0_273] : memref<5x1x64xf32, #tpu.memory_space<vmem>>, vector<1x1x64xf32>
    %694 = vector.shape_cast %693 : vector<1x1x64xf32> to vector<1x64xf32>
    %695 = vector.broadcast %694 : vector<1x64xf32> to vector<8x64xf32>
    %696 = arith.addf %692, %695 : vector<8x64xf32>
    %c4 = arith.constant 4 : index
    %c0_274 = arith.constant 0 : index
    %c0_275 = arith.constant 0 : index
    %697 = vector.load %arg4[%c4, %c0_274, %c0_275] : memref<5x1x64xf32, #tpu.memory_space<vmem>>, vector<1x1x64xf32>
    %698 = vector.shape_cast %697 : vector<1x1x64xf32> to vector<1x64xf32>
    %c4_276 = arith.constant 4 : index
    %c0_277 = arith.constant 0 : index
    %c0_278 = arith.constant 0 : index
    %699 = vector.load %arg5[%c4_276, %c0_277, %c0_278] : memref<5x1x64xf32, #tpu.memory_space<vmem>>, vector<1x1x64xf32>
    %700 = vector.shape_cast %699 : vector<1x1x64xf32> to vector<1x64xf32>
    %cst_279 = arith.constant dense<0.000000e+00> : vector<8xf32>
    %701 = vector.multi_reduction <add>, %696, %cst_279 [1] : vector<8x64xf32> to vector<8xf32>
    %702 = vector.shape_cast %701 : vector<8xf32> to vector<8x1xf32>
    %cst_280 = arith.constant 6.400000e+01 : f32
    %703 = vector.broadcast %cst_280 : f32 to vector<8x1xf32>
    %704 = arith.divf %702, %703 : vector<8x1xf32>
    %705 = vector.broadcast %704 : vector<8x1xf32> to vector<8x64xf32>
    %706 = arith.subf %696, %705 : vector<8x64xf32>
    %707 = arith.mulf %706, %706 : vector<8x64xf32>
    %cst_281 = arith.constant dense<0.000000e+00> : vector<8xf32>
    %708 = vector.multi_reduction <add>, %707, %cst_281 [1] : vector<8x64xf32> to vector<8xf32>
    %709 = vector.shape_cast %708 : vector<8xf32> to vector<8x1xf32>
    %cst_282 = arith.constant 6.400000e+01 : f32
    %710 = vector.broadcast %cst_282 : f32 to vector<8x1xf32>
    %711 = arith.divf %709, %710 : vector<8x1xf32>
    %712 = vector.broadcast %704 : vector<8x1xf32> to vector<8x64xf32>
    %713 = arith.subf %696, %712 : vector<8x64xf32>
    %cst_283 = arith.constant 9.99999974E-6 : f32
    %714 = vector.broadcast %cst_283 : f32 to vector<8x1xf32>
    %715 = arith.addf %711, %714 : vector<8x1xf32>
    %716 = math.rsqrt %715 : vector<8x1xf32>
    %717 = vector.broadcast %716 : vector<8x1xf32> to vector<8x64xf32>
    %718 = arith.mulf %713, %717 : vector<8x64xf32>
    %719 = vector.broadcast %698 : vector<1x64xf32> to vector<8x64xf32>
    %720 = arith.mulf %718, %719 : vector<8x64xf32>
    %721 = vector.broadcast %700 : vector<1x64xf32> to vector<8x64xf32>
    %722 = arith.addf %720, %721 : vector<8x64xf32>
    %723 = arith.truncf %722 : vector<8x64xf32> to vector<8x64xbf16>
    %c4_284 = arith.constant 4 : index
    %c0_285 = arith.constant 0 : index
    %c0_286 = arith.constant 0 : index
    %724 = vector.load %arg6[%c4_284, %c0_285, %c0_286] : memref<5x64x192xbf16, #tpu.memory_space<vmem>>, vector<1x64x192xbf16>
    %725 = vector.shape_cast %724 : vector<1x64x192xbf16> to vector<64x192xbf16>
    %cst_287 = arith.constant dense<0.000000e+00> : vector<8x192xf32>
    %726 = tpu.matmul %723, %725, %cst_287 {dimension_numbers = #tpu.dot_dimension_numbers<[1], [0], [0], [1], [0, 0, 1, 1], [], []>} : vector<8x64xbf16>, vector<64x192xbf16>, vector<8x192xf32> -> vector<8x192xf32>
    %727 = vector.extract_strided_slice %726 {offsets = [0, 0], sizes = [8, 16], strides = [1, 1]} : vector<8x192xf32> to vector<8x16xf32>
    %cst_288 = arith.constant 8.000000e+00 : f32
    %728 = vector.broadcast %cst_288 : f32 to vector<8x16xf32>
    %729 = arith.mulf %727, %728 : vector<8x16xf32>
    %730 = vector.extract_strided_slice %726 {offsets = [0, 64], sizes = [8, 16], strides = [1, 1]} : vector<8x192xf32> to vector<8x16xf32>
    %731 = vector.extract_strided_slice %726 {offsets = [0, 128], sizes = [8, 16], strides = [1, 1]} : vector<8x192xf32> to vector<8x16xf32>
    %732 = arith.truncf %729 : vector<8x16xf32> to vector<8x16xbf16>
    %733 = arith.truncf %730 : vector<8x16xf32> to vector<8x16xbf16>
    "tpu.trace_start"() <{level = 10 : i32, message = "qe,ke->qk"}> : () -> ()
    %cst_289 = arith.constant dense<0.000000e+00> : vector<8x8xf32>
    %734 = tpu.matmul %732, %733, %cst_289 {dimension_numbers = #tpu.dot_dimension_numbers<[1], [1], [0], [0], [0, 0, 1, 0], [], []>} : vector<8x16xbf16>, vector<8x16xbf16>, vector<8x8xf32> -> vector<8x8xf32>
    "tpu.trace_stop"() : () -> ()
    %735 = arith.addf %734, %4 : vector<8x8xf32>
    %cst_290 = arith.constant dense<0xFF800000> : vector<8xf32>
    %736 = vector.multi_reduction <maximumf>, %735, %cst_290 [1] : vector<8x8xf32> to vector<8xf32>
    %737 = vector.shape_cast %736 : vector<8xf32> to vector<8x1xf32>
    %738 = vector.broadcast %737 : vector<8x1xf32> to vector<8x8xf32>
    %739 = arith.subf %735, %738 : vector<8x8xf32>
    %740 = math.exp %739 : vector<8x8xf32>
    %cst_291 = arith.constant dense<0.000000e+00> : vector<8xf32>
    %741 = vector.multi_reduction <add>, %740, %cst_291 [1] : vector<8x8xf32> to vector<8xf32>
    %742 = vector.shape_cast %741 : vector<8xf32> to vector<8x1xf32>
    %743 = tpu.reciprocal %742 {approx = true} : vector<8x1xf32> -> vector<8x1xf32>
    %744 = vector.broadcast %743 : vector<8x1xf32> to vector<8x8xf32>
    %745 = arith.mulf %740, %744 : vector<8x8xf32>
    %746 = arith.truncf %745 : vector<8x8xf32> to vector<8x8xbf16>
    %747 = arith.truncf %731 : vector<8x16xf32> to vector<8x16xbf16>
    %cst_292 = arith.constant dense<0.000000e+00> : vector<8x16xf32>
    %748 = tpu.matmul %746, %747, %cst_292 {dimension_numbers = #tpu.dot_dimension_numbers<[1], [0], [0], [1], [0, 0, 1, 1], [], []>} : vector<8x8xbf16>, vector<8x16xbf16>, vector<8x16xf32> -> vector<8x16xf32>
    %749 = vector.extract_strided_slice %726 {offsets = [0, 16], sizes = [8, 16], strides = [1, 1]} : vector<8x192xf32> to vector<8x16xf32>
    %cst_293 = arith.constant 8.000000e+00 : f32
    %750 = vector.broadcast %cst_293 : f32 to vector<8x16xf32>
    %751 = arith.mulf %749, %750 : vector<8x16xf32>
    %752 = vector.extract_strided_slice %726 {offsets = [0, 80], sizes = [8, 16], strides = [1, 1]} : vector<8x192xf32> to vector<8x16xf32>
    %753 = vector.extract_strided_slice %726 {offsets = [0, 144], sizes = [8, 16], strides = [1, 1]} : vector<8x192xf32> to vector<8x16xf32>
    %754 = arith.truncf %751 : vector<8x16xf32> to vector<8x16xbf16>
    %755 = arith.truncf %752 : vector<8x16xf32> to vector<8x16xbf16>
    "tpu.trace_start"() <{level = 10 : i32, message = "qe,ke->qk"}> : () -> ()
    %cst_294 = arith.constant dense<0.000000e+00> : vector<8x8xf32>
    %756 = tpu.matmul %754, %755, %cst_294 {dimension_numbers = #tpu.dot_dimension_numbers<[1], [1], [0], [0], [0, 0, 1, 0], [], []>} : vector<8x16xbf16>, vector<8x16xbf16>, vector<8x8xf32> -> vector<8x8xf32>
    "tpu.trace_stop"() : () -> ()
    %757 = arith.addf %756, %4 : vector<8x8xf32>
    %cst_295 = arith.constant dense<0xFF800000> : vector<8xf32>
    %758 = vector.multi_reduction <maximumf>, %757, %cst_295 [1] : vector<8x8xf32> to vector<8xf32>
    %759 = vector.shape_cast %758 : vector<8xf32> to vector<8x1xf32>
    %760 = vector.broadcast %759 : vector<8x1xf32> to vector<8x8xf32>
    %761 = arith.subf %757, %760 : vector<8x8xf32>
    %762 = math.exp %761 : vector<8x8xf32>
    %cst_296 = arith.constant dense<0.000000e+00> : vector<8xf32>
    %763 = vector.multi_reduction <add>, %762, %cst_296 [1] : vector<8x8xf32> to vector<8xf32>
    %764 = vector.shape_cast %763 : vector<8xf32> to vector<8x1xf32>
    %765 = tpu.reciprocal %764 {approx = true} : vector<8x1xf32> -> vector<8x1xf32>
    %766 = vector.broadcast %765 : vector<8x1xf32> to vector<8x8xf32>
    %767 = arith.mulf %762, %766 : vector<8x8xf32>
    %768 = arith.truncf %767 : vector<8x8xf32> to vector<8x8xbf16>
    %769 = arith.truncf %753 : vector<8x16xf32> to vector<8x16xbf16>
    %cst_297 = arith.constant dense<0.000000e+00> : vector<8x16xf32>
    %770 = tpu.matmul %768, %769, %cst_297 {dimension_numbers = #tpu.dot_dimension_numbers<[1], [0], [0], [1], [0, 0, 1, 1], [], []>} : vector<8x8xbf16>, vector<8x16xbf16>, vector<8x16xf32> -> vector<8x16xf32>
    %771 = vector.extract_strided_slice %726 {offsets = [0, 32], sizes = [8, 16], strides = [1, 1]} : vector<8x192xf32> to vector<8x16xf32>
    %cst_298 = arith.constant 8.000000e+00 : f32
    %772 = vector.broadcast %cst_298 : f32 to vector<8x16xf32>
    %773 = arith.mulf %771, %772 : vector<8x16xf32>
    %774 = vector.extract_strided_slice %726 {offsets = [0, 96], sizes = [8, 16], strides = [1, 1]} : vector<8x192xf32> to vector<8x16xf32>
    %775 = vector.extract_strided_slice %726 {offsets = [0, 160], sizes = [8, 16], strides = [1, 1]} : vector<8x192xf32> to vector<8x16xf32>
    %776 = arith.truncf %773 : vector<8x16xf32> to vector<8x16xbf16>
    %777 = arith.truncf %774 : vector<8x16xf32> to vector<8x16xbf16>
    "tpu.trace_start"() <{level = 10 : i32, message = "qe,ke->qk"}> : () -> ()
    %cst_299 = arith.constant dense<0.000000e+00> : vector<8x8xf32>
    %778 = tpu.matmul %776, %777, %cst_299 {dimension_numbers = #tpu.dot_dimension_numbers<[1], [1], [0], [0], [0, 0, 1, 0], [], []>} : vector<8x16xbf16>, vector<8x16xbf16>, vector<8x8xf32> -> vector<8x8xf32>
    "tpu.trace_stop"() : () -> ()
    %779 = arith.addf %778, %4 : vector<8x8xf32>
    %cst_300 = arith.constant dense<0xFF800000> : vector<8xf32>
    %780 = vector.multi_reduction <maximumf>, %779, %cst_300 [1] : vector<8x8xf32> to vector<8xf32>
    %781 = vector.shape_cast %780 : vector<8xf32> to vector<8x1xf32>
    %782 = vector.broadcast %781 : vector<8x1xf32> to vector<8x8xf32>
    %783 = arith.subf %779, %782 : vector<8x8xf32>
    %784 = math.exp %783 : vector<8x8xf32>
    %cst_301 = arith.constant dense<0.000000e+00> : vector<8xf32>
    %785 = vector.multi_reduction <add>, %784, %cst_301 [1] : vector<8x8xf32> to vector<8xf32>
    %786 = vector.shape_cast %785 : vector<8xf32> to vector<8x1xf32>
    %787 = tpu.reciprocal %786 {approx = true} : vector<8x1xf32> -> vector<8x1xf32>
    %788 = vector.broadcast %787 : vector<8x1xf32> to vector<8x8xf32>
    %789 = arith.mulf %784, %788 : vector<8x8xf32>
    %790 = arith.truncf %789 : vector<8x8xf32> to vector<8x8xbf16>
    %791 = arith.truncf %775 : vector<8x16xf32> to vector<8x16xbf16>
    %cst_302 = arith.constant dense<0.000000e+00> : vector<8x16xf32>
    %792 = tpu.matmul %790, %791, %cst_302 {dimension_numbers = #tpu.dot_dimension_numbers<[1], [0], [0], [1], [0, 0, 1, 1], [], []>} : vector<8x8xbf16>, vector<8x16xbf16>, vector<8x16xf32> -> vector<8x16xf32>
    %793 = vector.extract_strided_slice %726 {offsets = [0, 48], sizes = [8, 16], strides = [1, 1]} : vector<8x192xf32> to vector<8x16xf32>
    %cst_303 = arith.constant 8.000000e+00 : f32
    %794 = vector.broadcast %cst_303 : f32 to vector<8x16xf32>
    %795 = arith.mulf %793, %794 : vector<8x16xf32>
    %796 = vector.extract_strided_slice %726 {offsets = [0, 112], sizes = [8, 16], strides = [1, 1]} : vector<8x192xf32> to vector<8x16xf32>
    %797 = vector.extract_strided_slice %726 {offsets = [0, 176], sizes = [8, 16], strides = [1, 1]} : vector<8x192xf32> to vector<8x16xf32>
    %798 = arith.truncf %795 : vector<8x16xf32> to vector<8x16xbf16>
    %799 = arith.truncf %796 : vector<8x16xf32> to vector<8x16xbf16>
    "tpu.trace_start"() <{level = 10 : i32, message = "qe,ke->qk"}> : () -> ()
    %cst_304 = arith.constant dense<0.000000e+00> : vector<8x8xf32>
    %800 = tpu.matmul %798, %799, %cst_304 {dimension_numbers = #tpu.dot_dimension_numbers<[1], [1], [0], [0], [0, 0, 1, 0], [], []>} : vector<8x16xbf16>, vector<8x16xbf16>, vector<8x8xf32> -> vector<8x8xf32>
    "tpu.trace_stop"() : () -> ()
    %801 = arith.addf %800, %4 : vector<8x8xf32>
    %cst_305 = arith.constant dense<0xFF800000> : vector<8xf32>
    %802 = vector.multi_reduction <maximumf>, %801, %cst_305 [1] : vector<8x8xf32> to vector<8xf32>
    %803 = vector.shape_cast %802 : vector<8xf32> to vector<8x1xf32>
    %804 = vector.broadcast %803 : vector<8x1xf32> to vector<8x8xf32>
    %805 = arith.subf %801, %804 : vector<8x8xf32>
    %806 = math.exp %805 : vector<8x8xf32>
    %cst_306 = arith.constant dense<0.000000e+00> : vector<8xf32>
    %807 = vector.multi_reduction <add>, %806, %cst_306 [1] : vector<8x8xf32> to vector<8xf32>
    %808 = vector.shape_cast %807 : vector<8xf32> to vector<8x1xf32>
    %809 = tpu.reciprocal %808 {approx = true} : vector<8x1xf32> -> vector<8x1xf32>
    %810 = vector.broadcast %809 : vector<8x1xf32> to vector<8x8xf32>
    %811 = arith.mulf %806, %810 : vector<8x8xf32>
    %812 = arith.truncf %811 : vector<8x8xf32> to vector<8x8xbf16>
    %813 = arith.truncf %797 : vector<8x16xf32> to vector<8x16xbf16>
    %cst_307 = arith.constant dense<0.000000e+00> : vector<8x16xf32>
    %814 = tpu.matmul %812, %813, %cst_307 {dimension_numbers = #tpu.dot_dimension_numbers<[1], [0], [0], [1], [0, 0, 1, 1], [], []>} : vector<8x8xbf16>, vector<8x16xbf16>, vector<8x16xf32> -> vector<8x16xf32>
    %815 = tpu.concatenate %748, %770, %792, %814 in 1 : vector<8x16xf32>, vector<8x16xf32>, vector<8x16xf32>, vector<8x16xf32> -> vector<8x64xf32>
    %816 = arith.truncf %815 : vector<8x64xf32> to vector<8x64xbf16>
    %c4_308 = arith.constant 4 : index
    %c0_309 = arith.constant 0 : index
    %c0_310 = arith.constant 0 : index
    %817 = vector.load %arg7[%c4_308, %c0_309, %c0_310] : memref<5x64x64xbf16, #tpu.memory_space<vmem>>, vector<1x64x64xbf16>
    %818 = vector.shape_cast %817 : vector<1x64x64xbf16> to vector<64x64xbf16>
    %cst_311 = arith.constant dense<0.000000e+00> : vector<8x64xf32>
    %819 = tpu.matmul %816, %818, %cst_311 {dimension_numbers = #tpu.dot_dimension_numbers<[1], [0], [0], [1], [0, 0, 1, 1], [], []>} : vector<8x64xbf16>, vector<64x64xbf16>, vector<8x64xf32> -> vector<8x64xf32>
    %c4_312 = arith.constant 4 : index
    %c0_313 = arith.constant 0 : index
    %c0_314 = arith.constant 0 : index
    %820 = vector.load %arg8[%c4_312, %c0_313, %c0_314] : memref<5x1x64xf32, #tpu.memory_space<vmem>>, vector<1x1x64xf32>
    %821 = vector.shape_cast %820 : vector<1x1x64xf32> to vector<1x64xf32>
    %822 = vector.broadcast %821 : vector<1x64xf32> to vector<8x64xf32>
    %823 = arith.addf %819, %822 : vector<8x64xf32>
    %824 = arith.addf %696, %823 : vector<8x64xf32>
    %c4_315 = arith.constant 4 : index
    %c0_316 = arith.constant 0 : index
    %c0_317 = arith.constant 0 : index
    %825 = vector.load %arg9[%c4_315, %c0_316, %c0_317] : memref<5x1x64xf32, #tpu.memory_space<vmem>>, vector<1x1x64xf32>
    %826 = vector.shape_cast %825 : vector<1x1x64xf32> to vector<1x64xf32>
    %c4_318 = arith.constant 4 : index
    %c0_319 = arith.constant 0 : index
    %c0_320 = arith.constant 0 : index
    %827 = vector.load %arg10[%c4_318, %c0_319, %c0_320] : memref<5x1x64xf32, #tpu.memory_space<vmem>>, vector<1x1x64xf32>
    %828 = vector.shape_cast %827 : vector<1x1x64xf32> to vector<1x64xf32>
    %cst_321 = arith.constant dense<0.000000e+00> : vector<8xf32>
    %829 = vector.multi_reduction <add>, %824, %cst_321 [1] : vector<8x64xf32> to vector<8xf32>
    %830 = vector.shape_cast %829 : vector<8xf32> to vector<8x1xf32>
    %cst_322 = arith.constant 6.400000e+01 : f32
    %831 = vector.broadcast %cst_322 : f32 to vector<8x1xf32>
    %832 = arith.divf %830, %831 : vector<8x1xf32>
    %833 = vector.broadcast %832 : vector<8x1xf32> to vector<8x64xf32>
    %834 = arith.subf %824, %833 : vector<8x64xf32>
    %835 = arith.mulf %834, %834 : vector<8x64xf32>
    %cst_323 = arith.constant dense<0.000000e+00> : vector<8xf32>
    %836 = vector.multi_reduction <add>, %835, %cst_323 [1] : vector<8x64xf32> to vector<8xf32>
    %837 = vector.shape_cast %836 : vector<8xf32> to vector<8x1xf32>
    %cst_324 = arith.constant 6.400000e+01 : f32
    %838 = vector.broadcast %cst_324 : f32 to vector<8x1xf32>
    %839 = arith.divf %837, %838 : vector<8x1xf32>
    %840 = vector.broadcast %832 : vector<8x1xf32> to vector<8x64xf32>
    %841 = arith.subf %824, %840 : vector<8x64xf32>
    %cst_325 = arith.constant 9.99999974E-6 : f32
    %842 = vector.broadcast %cst_325 : f32 to vector<8x1xf32>
    %843 = arith.addf %839, %842 : vector<8x1xf32>
    %844 = math.rsqrt %843 : vector<8x1xf32>
    %845 = vector.broadcast %844 : vector<8x1xf32> to vector<8x64xf32>
    %846 = arith.mulf %841, %845 : vector<8x64xf32>
    %847 = vector.broadcast %826 : vector<1x64xf32> to vector<8x64xf32>
    %848 = arith.mulf %846, %847 : vector<8x64xf32>
    %849 = vector.broadcast %828 : vector<1x64xf32> to vector<8x64xf32>
    %850 = arith.addf %848, %849 : vector<8x64xf32>
    %851 = arith.truncf %850 : vector<8x64xf32> to vector<8x64xbf16>
    %c4_326 = arith.constant 4 : index
    %c0_327 = arith.constant 0 : index
    %c0_328 = arith.constant 0 : index
    %852 = vector.load %arg11[%c4_326, %c0_327, %c0_328] : memref<5x64x256xbf16, #tpu.memory_space<vmem>>, vector<1x64x256xbf16>
    %853 = vector.shape_cast %852 : vector<1x64x256xbf16> to vector<64x256xbf16>
    %cst_329 = arith.constant dense<0.000000e+00> : vector<8x256xf32>
    %854 = tpu.matmul %851, %853, %cst_329 {dimension_numbers = #tpu.dot_dimension_numbers<[1], [0], [0], [1], [0, 0, 1, 1], [], []>} : vector<8x64xbf16>, vector<64x256xbf16>, vector<8x256xf32> -> vector<8x256xf32>
    %c4_330 = arith.constant 4 : index
    %c0_331 = arith.constant 0 : index
    %c0_332 = arith.constant 0 : index
    %855 = vector.load %arg12[%c4_330, %c0_331, %c0_332] : memref<5x1x256xf32, #tpu.memory_space<vmem>>, vector<1x1x256xf32>
    %856 = vector.shape_cast %855 : vector<1x1x256xf32> to vector<1x256xf32>
    %857 = vector.broadcast %856 : vector<1x256xf32> to vector<8x256xf32>
    %858 = arith.addf %854, %857 : vector<8x256xf32>
    %cst_333 = arith.constant 0.000000e+00 : f32
    %859 = vector.broadcast %cst_333 : f32 to vector<8x256xf32>
    %860 = arith.maximumf %858, %859 : vector<8x256xf32>
    %861 = arith.truncf %860 : vector<8x256xf32> to vector<8x256xbf16>
    %c4_334 = arith.constant 4 : index
    %c0_335 = arith.constant 0 : index
    %c0_336 = arith.constant 0 : index
    %862 = vector.load %arg13[%c4_334, %c0_335, %c0_336] : memref<5x256x64xbf16, #tpu.memory_space<vmem>>, vector<1x256x64xbf16>
    %863 = vector.shape_cast %862 : vector<1x256x64xbf16> to vector<256x64xbf16>
    %cst_337 = arith.constant dense<0.000000e+00> : vector<8x64xf32>
    %864 = tpu.matmul %861, %863, %cst_337 {dimension_numbers = #tpu.dot_dimension_numbers<[1], [0], [0], [1], [0, 0, 1, 1], [], []>} : vector<8x256xbf16>, vector<256x64xbf16>, vector<8x64xf32> -> vector<8x64xf32>
    %865 = arith.addf %824, %864 : vector<8x64xf32>
    %c4_338 = arith.constant 4 : index
    %c0_339 = arith.constant 0 : index
    %c0_340 = arith.constant 0 : index
    %866 = vector.load %arg14[%c4_338, %c0_339, %c0_340] : memref<5x1x64xf32, #tpu.memory_space<vmem>>, vector<1x1x64xf32>
    %867 = vector.shape_cast %866 : vector<1x1x64xf32> to vector<1x64xf32>
    %868 = vector.broadcast %867 : vector<1x64xf32> to vector<8x64xf32>
    %869 = arith.addf %865, %868 : vector<8x64xf32>
    %870 = arith.truncf %869 : vector<8x64xf32> to vector<8x64xbf16>
    %c0_341 = arith.constant 0 : index
    %c0_342 = arith.constant 0 : index
    %871 = vector.load %arg15[%c0_341, %c0_342] : memref<64x128xbf16, #tpu.memory_space<vmem>>, vector<64x128xbf16>
    %cst_343 = arith.constant dense<0.000000e+00> : vector<8x128xf32>
    %872 = tpu.matmul %870, %871, %cst_343 {dimension_numbers = #tpu.dot_dimension_numbers<[1], [0], [0], [1], [0, 0, 1, 1], [], []>} : vector<8x64xbf16>, vector<64x128xbf16>, vector<8x128xf32> -> vector<8x128xf32>
    %c0_344 = arith.constant 0 : index
    %c0_345 = arith.constant 0 : index
    %873 = vector.load %arg16[%c0_344, %c0_345] : memref<1x128xf32, #tpu.memory_space<vmem>>, vector<1x128xf32>
    %874 = vector.broadcast %873 : vector<1x128xf32> to vector<8x128xf32>
    %875 = arith.addf %872, %874 : vector<8x128xf32>
    %c0_346 = arith.constant 0 : index
    %c0_347 = arith.constant 0 : index
    %c0_348 = arith.constant 0 : index
    %876 = vector.load %arg17[%c0_346, %c0_347, %c0_348] : memref<1x8x128xf32, #tpu.memory_space<vmem>>, vector<1x8x128xf32>
    %877 = vector.shape_cast %876 : vector<1x8x128xf32> to vector<8x128xf32>
    %878 = vector.shape_cast %875 : vector<8x128xf32> to vector<1x8x128xf32>
    tpu.vector_store %arg17[%c0_346, %c0_347, %c0_348], %878 {strides = array<i32>} : memref<1x8x128xf32, #tpu.memory_space<vmem>>, vector<1x8x128xf32>,
    return
  }
  func.func @transform_0(%arg0: i32) -> (i32, i32, i32) {
    %c0_i32 = arith.constant 0 : i32
    %c0_i32_0 = arith.constant 0 : i32
    %c0_i32_1 = arith.constant 0 : i32
    return %arg0, %c0_i32, %c0_i32_0 : i32, i32, i32
  }
  func.func @transform_1(%arg0: i32) -> (i32, i32) {
    %c0_i32 = arith.constant 0 : i32
    %c0_i32_0 = arith.constant 0 : i32
    %c0_i32_1 = arith.constant 0 : i32
    return %c0_i32, %c0_i32_0 : i32, i32
  }
  func.func @transform_2(%arg0: i32) -> (i32, i32) {
    %c0_i32 = arith.constant 0 : i32
    %c0_i32_0 = arith.constant 0 : i32
    %c0_i32_1 = arith.constant 0 : i32
    return %c0_i32, %c0_i32_0 : i32, i32
  }
  func.func @transform_3(%arg0: i32) -> (i32, i32, i32) {
    %c0_i32 = arith.constant 0 : i32
    %c0_i32_0 = arith.constant 0 : i32
    %c0_i32_1 = arith.constant 0 : i32
    %c0_i32_2 = arith.constant 0 : i32
    return %c0_i32, %c0_i32_0, %c0_i32_1 : i32, i32, i32
  }
  func.func @transform_4(%arg0: i32) -> (i32, i32, i32) {
    %c0_i32 = arith.constant 0 : i32
    %c0_i32_0 = arith.constant 0 : i32
    %c0_i32_1 = arith.constant 0 : i32
    %c0_i32_2 = arith.constant 0 : i32
    return %c0_i32, %c0_i32_0, %c0_i32_1 : i32, i32, i32
  }
  func.func @transform_5(%arg0: i32) -> (i32, i32, i32) {
    %c0_i32 = arith.constant 0 : i32
    %c0_i32_0 = arith.constant 0 : i32
    %c0_i32_1 = arith.constant 0 : i32
    %c0_i32_2 = arith.constant 0 : i32
    return %c0_i32, %c0_i32_0, %c0_i32_1 : i32, i32, i32
  }
  func.func @transform_6(%arg0: i32) -> (i32, i32, i32) {
    %c0_i32 = arith.constant 0 : i32
    %c0_i32_0 = arith.constant 0 : i32
    %c0_i32_1 = arith.constant 0 : i32
    %c0_i32_2 = arith.constant 0 : i32
    return %c0_i32, %c0_i32_0, %c0_i32_1 : i32, i32, i32
  }
  func.func @transform_7(%arg0: i32) -> (i32, i32, i32) {
    %c0_i32 = arith.constant 0 : i32
    %c0_i32_0 = arith.constant 0 : i32
    %c0_i32_1 = arith.constant 0 : i32
    %c0_i32_2 = arith.constant 0 : i32
    return %c0_i32, %c0_i32_0, %c0_i32_1 : i32, i32, i32
  }
  func.func @transform_8(%arg0: i32) -> (i32, i32, i32) {
    %c0_i32 = arith.constant 0 : i32
    %c0_i32_0 = arith.constant 0 : i32
    %c0_i32_1 = arith.constant 0 : i32
    %c0_i32_2 = arith.constant 0 : i32
    return %c0_i32, %c0_i32_0, %c0_i32_1 : i32, i32, i32
  }
  func.func @transform_9(%arg0: i32) -> (i32, i32, i32) {
    %c0_i32 = arith.constant 0 : i32
    %c0_i32_0 = arith.constant 0 : i32
    %c0_i32_1 = arith.constant 0 : i32
    %c0_i32_2 = arith.constant 0 : i32
    return %c0_i32, %c0_i32_0, %c0_i32_1 : i32, i32, i32
  }
  func.func @transform_10(%arg0: i32) -> (i32, i32, i32) {
    %c0_i32 = arith.constant 0 : i32
    %c0_i32_0 = arith.constant 0 : i32
    %c0_i32_1 = arith.constant 0 : i32
    %c0_i32_2 = arith.constant 0 : i32
    return %c0_i32, %c0_i32_0, %c0_i32_1 : i32, i32, i32
  }
  func.func @transform_11(%arg0: i32) -> (i32, i32, i32) {
    %c0_i32 = arith.constant 0 : i32
    %c0_i32_0 = arith.constant 0 : i32
    %c0_i32_1 = arith.constant 0 : i32
    %c0_i32_2 = arith.constant 0 : i32
    return %c0_i32, %c0_i32_0, %c0_i32_1 : i32, i32, i32
  }
  func.func @transform_12(%arg0: i32) -> (i32, i32, i32) {
    %c0_i32 = arith.constant 0 : i32
    %c0_i32_0 = arith.constant 0 : i32
    %c0_i32_1 = arith.constant 0 : i32
    %c0_i32_2 = arith.constant 0 : i32
    return %c0_i32, %c0_i32_0, %c0_i32_1 : i32, i32, i32
  }
  func.func @transform_13(%arg0: i32) -> (i32, i32, i32) {
    %c0_i32 = arith.constant 0 : i32
    %c0_i32_0 = arith.constant 0 : i32
    %c0_i32_1 = arith.constant 0 : i32
    %c0_i32_2 = arith.constant 0 : i32
    return %c0_i32, %c0_i32_0, %c0_i32_1 : i32, i32, i32
  }
  func.func @transform_14(%arg0: i32) -> (i32, i32) {
    %c0_i32 = arith.constant 0 : i32
    %c0_i32_0 = arith.constant 0 : i32
    %c0_i32_1 = arith.constant 0 : i32
    return %c0_i32, %c0_i32_0 : i32, i32
  }
  func.func @transform_15(%arg0: i32) -> (i32, i32) {
    %c0_i32 = arith.constant 0 : i32
    %c0_i32_0 = arith.constant 0 : i32
    %c0_i32_1 = arith.constant 0 : i32
    return %c0_i32, %c0_i32_0 : i32, i32
  }
  func.func @transform_16(%arg0: i32) -> (i32, i32, i32) {
    %c0_i32 = arith.constant 0 : i32
    %c0_i32_0 = arith.constant 0 : i32
    %c0_i32_1 = arith.constant 0 : i32
    return %arg0, %c0_i32, %c0_i32_0 : i32, i32, i32
  }
}

</mosaic_0001>

<llo_original>
// kernel: mtg_forward.1
$region0: #{mtg_forward.1}
  #allocation0 [shape = 'u32[]', space=smem, size = 0x4, offset = 0x4, fixed_abs, tag = 'smem constant byte address 0x4 - core index']
  #allocation1 [shape = 'u32[144,128]{1,0:T(1,128)}', space=vmem, size = 0x12000, scoped, tag = 'internal scratch']
  %s0 = inlined_call_operand.vmem [shape: f32[2,8,64], index: 0, kind: input, shape index: {}]
  %s1 = inlined_call_operand.vmem [shape: f32[8,64], index: 1, kind: input, shape index: {}]
  %s2 = inlined_call_operand.vmem [shape: f32[8,8], index: 2, kind: input, shape index: {}]
  %s3 = inlined_call_operand.vmem [shape: f32[5,1,64], index: 3, kind: input, shape index: {}]
  %s4 = inlined_call_operand.vmem [shape: f32[5,1,64], index: 4, kind: input, shape index: {}]
  %s5 = inlined_call_operand.vmem [shape: bf16[5,64,192], index: 5, kind: input, shape index: {}]
  %s6 = inlined_call_operand.vmem [shape: bf16[5,64,64], index: 6, kind: input, shape index: {}]
  %s7 = inlined_call_operand.vmem [shape: f32[5,1,64], index: 7, kind: input, shape index: {}]
  %s8 = inlined_call_operand.vmem [shape: f32[5,1,64], index: 8, kind: input, shape index: {}]
  %s9 = inlined_call_operand.vmem [shape: f32[5,1,64], index: 9, kind: input, shape index: {}]
  %s10 = inlined_call_operand.vmem [shape: bf16[5,64,256], index: 10, kind: input, shape index: {}]
  %s11 = inlined_call_operand.vmem [shape: f32[5,1,256], index: 11, kind: input, shape index: {}]
  %s12 = inlined_call_operand.vmem [shape: bf16[5,256,64], index: 12, kind: input, shape index: {}]
  %s13 = inlined_call_operand.vmem [shape: f32[5,1,64], index: 13, kind: input, shape index: {}]
  %s14 = inlined_call_operand.vmem [shape: bf16[64,128], index: 14, kind: input, shape index: {}]
  %s15 = inlined_call_operand.vmem [shape: f32[1,128], index: 15, kind: input, shape index: {}]
  %s16 = inlined_call_operand.hbm [shape: f32[2,8,128], index: 16, kind: output, shape index: {}]
  %s17 = sld [smem:[#allocation0]]
  $region97: #{mtg_forward.1} parent=0
    _
  %s19 = ssub.s32 1, %s17
  %s20 = scalar_select 0, %s19, %s17
  $region1: #{mtg_forward.1} parent=0
    #allocation2 [shape = 'u8[8192]{0}', space=vmem, size = 0x2000, scoped, tag = 'output window, operand 0']
    #allocation3 [shape = 's32[2]{0}', space=sflag, size = 0x8, scoped, tag = 'scoped memory for mtg_forward.1']
    %21 = vsyncpa [#allocation3], 0
    %s22 = scalar_lea.sflag [#allocation3], 1
    %23 = vsyncpa %s22, 0
    loop: start=0, step=1, limit=4
    $region2: #{mtg_forward.1} parent=1 // loop_pre_header
      _
    $region3: #{mtg_forward.1} parent=1 // loop_header
      %s25 = sphi 0, %s29
      %p26 = scmp.ge.s32.totalorder %s25, 4
      %s35 = sphi 0, %s37
      %s38 = sphi 0, %s35
      %s39 = sphi 0, %s38
      %s55 = sphi 0, %s39
      %s59 = sphi 0, %s59
      %s61 = sphi 0, %s59
      %s62 = sphi 0, %s61
      %s76 = sphi 0, %s62
      %s80 = sphi 0, %s80
      %s82 = sphi 0, %s80
      %s83 = sphi 0, %s82
      %s97 = sphi 0, %s83
      %s101 = sphi 0, %s101
      %s103 = sphi 0, %s101
      %s104 = sphi 0, %s103
      %s118 = sphi 0, %s104
      %s122 = sphi 0, %s122
      %s124 = sphi 0, %s122
      %s125 = sphi 0, %s124
      %s139 = sphi 0, %s125
      %s143 = sphi 0, %s143
      %s145 = sphi 0, %s143
      %s146 = sphi 0, %s145
      %s160 = sphi 0, %s146
      %s164 = sphi 0, %s164
      %s166 = sphi 0, %s164
      %s167 = sphi 0, %s166
      %s181 = sphi 0, %s167
      %s185 = sphi 0, %s185
      %s187 = sphi 0, %s185
      %s188 = sphi 0, %s187
      %s202 = sphi 0, %s188
      %s206 = sphi 0, %s206
      %s208 = sphi 0, %s206
      %s209 = sphi 0, %s208
      %s223 = sphi 0, %s209
      %s227 = sphi 0, %s227
      %s229 = sphi 0, %s227
      %s230 = sphi 0, %s229
      %s244 = sphi 0, %s230
      %s248 = sphi 0, %s248
      %s250 = sphi 0, %s248
      %s251 = sphi 0, %s250
      %s265 = sphi 0, %s251
      %s269 = sphi 0, %s269
      %s271 = sphi 0, %s269
      %s272 = sphi 0, %s271
      %s286 = sphi 0, %s272
      %s290 = sphi 0, %s290
      %s292 = sphi 0, %s290
      %s293 = sphi 0, %s292
      %s307 = sphi 0, %s293
      %s311 = sphi 0, %s311
      %s313 = sphi 0, %s311
      %s314 = sphi 0, %s313
      %s328 = sphi 0, %s314
      %s332 = sphi 0, %s332
      %s334 = sphi 0, %s332
      %s335 = sphi 0, %s334
      %s349 = sphi 0, %s335
      %s353 = sphi 0, %s353
      %s355 = sphi 0, %s353
      %s356 = sphi 0, %s355
      %s370 = sphi 0, %s356
      %s376 = sphi 0, %s378
      %s379 = sphi 0, %s376
      %s380 = sphi 0, %s379
      %s396 = sphi 0, %s380
    $region4: #{mtg_forward.1} parent=1 // loop_header_branch
      %28 = sbr.rel (%p26) target = $region8
    $region5: #{mtg_forward.1} parent=1 // loop_body
      %s30 = ssub.s32 %s25, 1
      %s31 = ssub.s32 %s25, 2
      %s32 = sadd.s32 %s25, 1
      %s33 = ssub.s32 %s25, %s32
      %p34 = scmp.eq.s32.totalorder %s33, 0
      %s36 = sadd.s32 %s35, 1
      %s37 = scalar_select %p34, %s35, %s36
      %p40 = pneg %p34
      %p41 = scmp.eq.s32.totalorder %s25, 1
      %p42 = por %p40, %p41
      %p43 = scmp.ne.s32.totalorder %s35, %s38
      %p44 = scmp.eq.s32.totalorder %s25, 0
      %p45 = por %p43, %p44
      %p46 = scmp.ne.s32.totalorder %s35, %s38
      %p47 = scmp.eq.s32.totalorder %s30, 1
      %p48 = por %p46, %p47
      %p49 = scmp.ne.s32.totalorder %s38, %s39
      %p50 = scmp.eq.s32.totalorder %s30, 0
      %p51 = por %p49, %p50
      %p52 = scmp.ne.s32.totalorder %s38, %s39
      %p53 = scmp.eq.s32.totalorder %s31, 1
      %p54 = por %p52, %p53
      %p56 = scmp.ne.s32.totalorder %s39, %s55
      %p57 = scmp.eq.s32.totalorder %s31, 0
      %p58 = por %p56, %p57
      %s60 = sadd.s32 %s59, 1
      %p63 = scmp.eq.s32.totalorder %s25, 1
      %p64 = scmp.ne.s32.totalorder %s59, %s61
      %p65 = scmp.eq.s32.totalorder %s25, 0
      %p66 = por %p64, %p65
      %p67 = scmp.ne.s32.totalorder %s59, %s61
      %p68 = scmp.eq.s32.totalorder %s30, 1
      %p69 = por %p67, %p68
      %p70 = scmp.ne.s32.totalorder %s61, %s62
      %p71 = scmp.eq.s32.totalorder %s30, 0
      %p72 = por %p70, %p71
      %p73 = scmp.ne.s32.totalorder %s61, %s62
      %p74 = scmp.eq.s32.totalorder %s31, 1
      %p75 = por %p73, %p74
      %p77 = scmp.ne.s32.totalorder %s62, %s76
      %p78 = scmp.eq.s32.totalorder %s31, 0
      %p79 = por %p77, %p78
      %s81 = sadd.s32 %s80, 1
      %p84 = scmp.eq.s32.totalorder %s25, 1
      %p85 = scmp.ne.s32.totalorder %s80, %s82
      %p86 = scmp.eq.s32.totalorder %s25, 0
      %p87 = por %p85, %p86
      %p88 = scmp.ne.s32.totalorder %s80, %s82
      %p89 = scmp.eq.s32.totalorder %s30, 1
      %p90 = por %p88, %p89
      %p91 = scmp.ne.s32.totalorder %s82, %s83
      %p92 = scmp.eq.s32.totalorder %s30, 0
      %p93 = por %p91, %p92
      %p94 = scmp.ne.s32.totalorder %s82, %s83
      %p95 = scmp.eq.s32.totalorder %s31, 1
      %p96 = por %p94, %p95
      %p98 = scmp.ne.s32.totalorder %s83, %s97
      %p99 = scmp.eq.s32.totalorder %s31, 0
      %p100 = por %p98, %p99
      %s102 = sadd.s32 %s101, 1
      %p105 = scmp.eq.s32.totalorder %s25, 1
      %p106 = scmp.ne.s32.totalorder %s101, %s103
      %p107 = scmp.eq.s32.totalorder %s25, 0
      %p108 = por %p106, %p107
      %p109 = scmp.ne.s32.totalorder %s101, %s103
      %p110 = scmp.eq.s32.totalorder %s30, 1
      %p111 = por %p109, %p110
      %p112 = scmp.ne.s32.totalorder %s103, %s104
      %p113 = scmp.eq.s32.totalorder %s30, 0
      %p114 = por %p112, %p113
      %p115 = scmp.ne.s32.totalorder %s103, %s104
      %p116 = scmp.eq.s32.totalorder %s31, 1
      %p117 = por %p115, %p116
      %p119 = scmp.ne.s32.totalorder %s104, %s118
      %p120 = scmp.eq.s32.totalorder %s31, 0
      %p121 = por %p119, %p120
      %s123 = sadd.s32 %s122, 1
      %p126 = scmp.eq.s32.totalorder %s25, 1
      %p127 = scmp.ne.s32.totalorder %s122, %s124
      %p128 = scmp.eq.s32.totalorder %s25, 0
      %p129 = por %p127, %p128
      %p130 = scmp.ne.s32.totalorder %s122, %s124
      %p131 = scmp.eq.s32.totalorder %s30, 1
      %p132 = por %p130, %p131
      %p133 = scmp.ne.s32.totalorder %s124, %s125
      %p134 = scmp.eq.s32.totalorder %s30, 0
      %p135 = por %p133, %p134
      %p136 = scmp.ne.s32.totalorder %s124, %s125
      %p137 = scmp.eq.s32.totalorder %s31, 1
      %p138 = por %p136, %p137
      %p140 = scmp.ne.s32.totalorder %s125, %s139
      %p141 = scmp.eq.s32.totalorder %s31, 0
      %p142 = por %p140, %p141
      %s144 = sadd.s32 %s143, 1
      %p147 = scmp.eq.s32.totalorder %s25, 1
      %p148 = scmp.ne.s32.totalorder %s143, %s145
      %p149 = scmp.eq.s32.totalorder %s25, 0
      %p150 = por %p148, %p149
      %p151 = scmp.ne.s32.totalorder %s143, %s145
      %p152 = scmp.eq.s32.totalorder %s30, 1
      %p153 = por %p151, %p152
      %p154 = scmp.ne.s32.totalorder %s145, %s146
      %p155 = scmp.eq.s32.totalorder %s30, 0
      %p156 = por %p154, %p155
      %p157 = scmp.ne.s32.totalorder %s145, %s146
      %p158 = scmp.eq.s32.totalorder %s31, 1
      %p159 = por %p157, %p158
      %p161 = scmp.ne.s32.totalorder %s146, %s160
      %p162 = scmp.eq.s32.totalorder %s31, 0
      %p163 = por %p161, %p162
      %s165 = sadd.s32 %s164, 1
      %p168 = scmp.eq.s32.totalorder %s25, 1
      %p169 = scmp.ne.s32.totalorder %s164, %s166
      %p170 = scmp.eq.s32.totalorder %s25, 0
      %p171 = por %p169, %p170
      %p172 = scmp.ne.s32.totalorder %s164, %s166
      %p173 = scmp.eq.s32.totalorder %s30, 1
      %p174 = por %p172, %p173
      %p175 = scmp.ne.s32.totalorder %s166, %s167
      %p176 = scmp.eq.s32.totalorder %s30, 0
      %p177 = por %p175, %p176
      %p178 = scmp.ne.s32.totalorder %s166, %s167
      %p179 = scmp.eq.s32.totalorder %s31, 1
      %p180 = por %p178, %p179
      %p182 = scmp.ne.s32.totalorder %s167, %s181
      %p183 = scmp.eq.s32.totalorder %s31, 0
      %p184 = por %p182, %p183
      %s186 = sadd.s32 %s185, 1
      %p189 = scmp.eq.s32.totalorder %s25, 1
      %p190 = scmp.ne.s32.totalorder %s185, %s187
      %p191 = scmp.eq.s32.totalorder %s25, 0
      %p192 = por %p190, %p191
      %p193 = scmp.ne.s32.totalorder %s185, %s187
      %p194 = scmp.eq.s32.totalorder %s30, 1
      %p195 = por %p193, %p194
      %p196 = scmp.ne.s32.totalorder %s187, %s188
      %p197 = scmp.eq.s32.totalorder %s30, 0
      %p198 = por %p196, %p197
      %p199 = scmp.ne.s32.totalorder %s187, %s188
      %p200 = scmp.eq.s32.totalorder %s31, 1
      %p201 = por %p199, %p200
      %p203 = scmp.ne.s32.totalorder %s188, %s202
      %p204 = scmp.eq.s32.totalorder %s31, 0
      %p205 = por %p203, %p204
      %s207 = sadd.s32 %s206, 1
      %p210 = scmp.eq.s32.totalorder %s25, 1
      %p211 = scmp.ne.s32.totalorder %s206, %s208
      %p212 = scmp.eq.s32.totalorder %s25, 0
      %p213 = por %p211, %p212
      %p214 = scmp.ne.s32.totalorder %s206, %s208
      %p215 = scmp.eq.s32.totalorder %s30, 1
      %p216 = por %p214, %p215
      %p217 = scmp.ne.s32.totalorder %s208, %s209
      %p218 = scmp.eq.s32.totalorder %s30, 0
      %p219 = por %p217, %p218
      %p220 = scmp.ne.s32.totalorder %s208, %s209
      %p221 = scmp.eq.s32.totalorder %s31, 1
      %p222 = por %p220, %p221
      %p224 = scmp.ne.s32.totalorder %s209, %s223
      %p225 = scmp.eq.s32.totalorder %s31, 0
      %p226 = por %p224, %p225
      %s228 = sadd.s32 %s227, 1
      %p231 = scmp.eq.s32.totalorder %s25, 1
      %p232 = scmp.ne.s32.totalorder %s227, %s229
      %p233 = scmp.eq.s32.totalorder %s25, 0
      %p234 = por %p232, %p233
      %p235 = scmp.ne.s32.totalorder %s227, %s229
      %p236 = scmp.eq.s32.totalorder %s30, 1
      %p237 = por %p235, %p236
      %p238 = scmp.ne.s32.totalorder %s229, %s230
      %p239 = scmp.eq.s32.totalorder %s30, 0
      %p240 = por %p238, %p239
      %p241 = scmp.ne.s32.totalorder %s229, %s230
      %p242 = scmp.eq.s32.totalorder %s31, 1
      %p243 = por %p241, %p242
      %p245 = scmp.ne.s32.totalorder %s230, %s244
      %p246 = scmp.eq.s32.totalorder %s31, 0
      %p247 = por %p245, %p246
      %s249 = sadd.s32 %s248, 1
      %p252 = scmp.eq.s32.totalorder %s25, 1
      %p253 = scmp.ne.s32.totalorder %s248, %s250
      %p254 = scmp.eq.s32.totalorder %s25, 0
      %p255 = por %p253, %p254
      %p256 = scmp.ne.s32.totalorder %s248, %s250
      %p257 = scmp.eq.s32.totalorder %s30, 1
      %p258 = por %p256, %p257
      %p259 = scmp.ne.s32.totalorder %s250, %s251
      %p260 = scmp.eq.s32.totalorder %s30, 0
      %p261 = por %p259, %p260
      %p262 = scmp.ne.s32.totalorder %s250, %s251
      %p263 = scmp.eq.s32.totalorder %s31, 1
      %p264 = por %p262, %p263
      %p266 = scmp.ne.s32.totalorder %s251, %s265
      %p267 = scmp.eq.s32.totalorder %s31, 0
      %p268 = por %p266, %p267
      %s270 = sadd.s32 %s269, 1
      %p273 = scmp.eq.s32.totalorder %s25, 1
      %p274 = scmp.ne.s32.totalorder %s269, %s271
      %p275 = scmp.eq.s32.totalorder %s25, 0
      %p276 = por %p274, %p275
      %p277 = scmp.ne.s32.totalorder %s269, %s271
      %p278 = scmp.eq.s32.totalorder %s30, 1
      %p279 = por %p277, %p278
      %p280 = scmp.ne.s32.totalorder %s271, %s272
      %p281 = scmp.eq.s32.totalorder %s30, 0
      %p282 = por %p280, %p281
      %p283 = scmp.ne.s32.totalorder %s271, %s272
      %p284 = scmp.eq.s32.totalorder %s31, 1
      %p285 = por %p283, %p284
      %p287 = scmp.ne.s32.totalorder %s272, %s286
      %p288 = scmp.eq.s32.totalorder %s31, 0
      %p289 = por %p287, %p288
      %s291 = sadd.s32 %s290, 1
      %p294 = scmp.eq.s32.totalorder %s25, 1
      %p295 = scmp.ne.s32.totalorder %s290, %s292
      %p296 = scmp.eq.s32.totalorder %s25, 0
      %p297 = por %p295, %p296
      %p298 = scmp.ne.s32.totalorder %s290, %s292
      %p299 = scmp.eq.s32.totalorder %s30, 1
      %p300 = por %p298, %p299
      %p301 = scmp.ne.s32.totalorder %s292, %s293
      %p302 = scmp.eq.s32.totalorder %s30, 0
      %p303 = por %p301, %p302
      %p304 = scmp.ne.s32.totalorder %s292, %s293
      %p305 = scmp.eq.s32.totalorder %s31, 1
      %p306 = por %p304, %p305
      %p308 = scmp.ne.s32.totalorder %s293, %s307
      %p309 = scmp.eq.s32.totalorder %s31, 0
      %p310 = por %p308, %p309
      %s312 = sadd.s32 %s311, 1
      %p315 = scmp.eq.s32.totalorder %s25, 1
      %p316 = scmp.ne.s32.totalorder %s311, %s313
      %p317 = scmp.eq.s32.totalorder %s25, 0
      %p318 = por %p316, %p317
      %p319 = scmp.ne.s32.totalorder %s311, %s313
      %p320 = scmp.eq.s32.totalorder %s30, 1
      %p321 = por %p319, %p320
      %p322 = scmp.ne.s32.totalorder %s313, %s314
      %p323 = scmp.eq.s32.totalorder %s30, 0
      %p324 = por %p322, %p323
      %p325 = scmp.ne.s32.totalorder %s313, %s314
      %p326 = scmp.eq.s32.totalorder %s31, 1
      %p327 = por %p325, %p326
      %p329 = scmp.ne.s32.totalorder %s314, %s328
      %p330 = scmp.eq.s32.totalorder %s31, 0
      %p331 = por %p329, %p330
      %s333 = sadd.s32 %s332, 1
      %p336 = scmp.eq.s32.totalorder %s25, 1
      %p337 = scmp.ne.s32.totalorder %s332, %s334
      %p338 = scmp.eq.s32.totalorder %s25, 0
      %p339 = por %p337, %p338
      %p340 = scmp.ne.s32.totalorder %s332, %s334
      %p341 = scmp.eq.s32.totalorder %s30, 1
      %p342 = por %p340, %p341
      %p343 = scmp.ne.s32.totalorder %s334, %s335
      %p344 = scmp.eq.s32.totalorder %s30, 0
      %p345 = por %p343, %p344
      %p346 = scmp.ne.s32.totalorder %s334, %s335
      %p347 = scmp.eq.s32.totalorder %s31, 1
      %p348 = por %p346, %p347
      %p350 = scmp.ne.s32.totalorder %s335, %s349
      %p351 = scmp.eq.s32.totalorder %s31, 0
      %p352 = por %p350, %p351
      %s354 = sadd.s32 %s353, 1
      %p357 = scmp.eq.s32.totalorder %s25, 1
      %p358 = scmp.ne.s32.totalorder %s353, %s355
      %p359 = scmp.eq.s32.totalorder %s25, 0
      %p360 = por %p358, %p359
      %p361 = scmp.ne.s32.totalorder %s353, %s355
      %p362 = scmp.eq.s32.totalorder %s30, 1
      %p363 = por %p361, %p362
      %p364 = scmp.ne.s32.totalorder %s355, %s356
      %p365 = scmp.eq.s32.totalorder %s30, 0
      %p366 = por %p364, %p365
      %p367 = scmp.ne.s32.totalorder %s355, %s356
      %p368 = scmp.eq.s32.totalorder %s31, 1
      %p369 = por %p367, %p368
      %p371 = scmp.ne.s32.totalorder %s356, %s370
      %p372 = scmp.eq.s32.totalorder %s31, 0
      %p373 = por %p371, %p372
      %s374 = ssub.s32 %s25, %s32
      %p375 = scmp.eq.s32.totalorder %s374, 0
      %s377 = sadd.s32 %s376, 1
      %s378 = scalar_select %p375, %s376, %s377
      %p381 = pneg %p375
      %p382 = scmp.eq.s32.totalorder %s25, 1
      %p383 = por %p381, %p382
      %p384 = scmp.ne.s32.totalorder %s376, %s379
      %p385 = scmp.eq.s32.totalorder %s25, 0
      %p386 = por %p384, %p385
      %p387 = scmp.ne.s32.totalorder %s376, %s379
      %p388 = scmp.eq.s32.totalorder %s30, 1
      %p389 = por %p387, %p388
      %p390 = scmp.ne.s32.totalorder %s379, %s380
      %p391 = scmp.eq.s32.totalorder %s30, 0
      %p392 = por %p390, %p391
      %p393 = scmp.ne.s32.totalorder %s379, %s380
      %p394 = scmp.eq.s32.totalorder %s31, 1
      %p395 = por %p393, %p394
      %p397 = scmp.ne.s32.totalorder %s380, %s396
      %p398 = scmp.eq.s32.totalorder %s31, 0
      %p399 = por %p397, %p398
      %p400 = scmp.le.s32.totalorder 1, %s25
      %p401 = scmp.lt.s32.totalorder %s25, 3
      %p402 = pnand %p400, %p401
      %p403 = pneg %p402
      // Predicated region
      $region9: #{mtg_forward.1} parent=5 // pred_check
        _
      $region10: #{mtg_forward.1} parent=5 // pred_check_branch
        %405 = sbr.rel (%p402) target = $region12
      $region11: #{mtg_forward.1} parent=5 // pred_region
        %s406 = ssub.s32 %s25, 1
        // Predicated region
        $region13: #{mtg_forward.1} parent=11 // pred_check
          %p407 = pneg %p72
        $region14: #{mtg_forward.1} parent=11 // pred_check_branch
          %409 = sbr.rel (%p407) target = $region16
        $region15: #{mtg_forward.1} parent=11 // pred_region
          _
        $region16: #{mtg_forward.1} parent=11 // pred_fallthru
          _
        // Predicated region
        $region17: #{mtg_forward.1} parent=11 // pred_check
          %p410 = pneg %p93
        $region18: #{mtg_forward.1} parent=11 // pred_check_branch
          %412 = sbr.rel (%p410) target = $region20
        $region19: #{mtg_forward.1} parent=11 // pred_region
          _
        $region20: #{mtg_forward.1} parent=11 // pred_fallthru
          _
        // Predicated region
        $region21: #{mtg_forward.1} parent=11 // pred_check
          %p413 = pneg %p114
        $region22: #{mtg_forward.1} parent=11 // pred_check_branch
          %415 = sbr.rel (%p413) target = $region24
        $region23: #{mtg_forward.1} parent=11 // pred_region
          _
        $region24: #{mtg_forward.1} parent=11 // pred_fallthru
          _
        // Predicated region
        $region25: #{mtg_forward.1} parent=11 // pred_check
          %p416 = pneg %p135
        $region26: #{mtg_forward.1} parent=11 // pred_check_branch
          %418 = sbr.rel (%p416) target = $region28
        $region27: #{mtg_forward.1} parent=11 // pred_region
          _
        $region28: #{mtg_forward.1} parent=11 // pred_fallthru
          _
        // Predicated region
        $region29: #{mtg_forward.1} parent=11 // pred_check
          %p419 = pneg %p156
        $region30: #{mtg_forward.1} parent=11 // pred_check_branch
          %421 = sbr.rel (%p419) target = $region32
        $region31: #{mtg_forward.1} parent=11 // pred_region
          _
        $region32: #{mtg_forward.1} parent=11 // pred_fallthru
          _
        // Predicated region
        $region33: #{mtg_forward.1} parent=11 // pred_check
          %p422 = pneg %p177
        $region34: #{mtg_forward.1} parent=11 // pred_check_branch
          %424 = sbr.rel (%p422) target = $region36
        $region35: #{mtg_forward.1} parent=11 // pred_region
          _
        $region36: #{mtg_forward.1} parent=11 // pred_fallthru
          _
        // Predicated region
        $region37: #{mtg_forward.1} parent=11 // pred_check
          %p425 = pneg %p198
        $region38: #{mtg_forward.1} parent=11 // pred_check_branch
          %427 = sbr.rel (%p425) target = $region40
        $region39: #{mtg_forward.1} parent=11 // pred_region
          _
        $region40: #{mtg_forward.1} parent=11 // pred_fallthru
          _
        // Predicated region
        $region41: #{mtg_forward.1} parent=11 // pred_check
          %p428 = pneg %p219
        $region42: #{mtg_forward.1} parent=11 // pred_check_branch
          %430 = sbr.rel (%p428) target = $region44
        $region43: #{mtg_forward.1} parent=11 // pred_region
          _
        $region44: #{mtg_forward.1} parent=11 // pred_fallthru
          _
        // Predicated region
        $region45: #{mtg_forward.1} parent=11 // pred_check
          %p431 = pneg %p240
        $region46: #{mtg_forward.1} parent=11 // pred_check_branch
          %433 = sbr.rel (%p431) target = $region48
        $region47: #{mtg_forward.1} parent=11 // pred_region
          _
        $region48: #{mtg_forward.1} parent=11 // pred_fallthru
          _
        // Predicated region
        $region49: #{mtg_forward.1} parent=11 // pred_check
          %p434 = pneg %p261
        $region50: #{mtg_forward.1} parent=11 // pred_check_branch
          %436 = sbr.rel (%p434) target = $region52
        $region51: #{mtg_forward.1} parent=11 // pred_region
          _
        $region52: #{mtg_forward.1} parent=11 // pred_fallthru
          _
        // Predicated region
        $region53: #{mtg_forward.1} parent=11 // pred_check
          %p437 = pneg %p282
        $region54: #{mtg_forward.1} parent=11 // pred_check_branch
          %439 = sbr.rel (%p437) target = $region56
        $region55: #{mtg_forward.1} parent=11 // pred_region
          _
        $region56: #{mtg_forward.1} parent=11 // pred_fallthru
          _
        // Predicated region
        $region57: #{mtg_forward.1} parent=11 // pred_check
          %p440 = pneg %p303
        $region58: #{mtg_forward.1} parent=11 // pred_check_branch
          %442 = sbr.rel (%p440) target = $region60
        $region59: #{mtg_forward.1} parent=11 // pred_region
          _
        $region60: #{mtg_forward.1} parent=11 // pred_fallthru
          _
        // Predicated region
        $region61: #{mtg_forward.1} parent=11 // pred_check
          %p443 = pneg %p324
        $region62: #{mtg_forward.1} parent=11 // pred_check_branch
          %445 = sbr.rel (%p443) target = $region64
        $region63: #{mtg_forward.1} parent=11 // pred_region
          _
        $region64: #{mtg_forward.1} parent=11 // pred_fallthru
          _
        // Predicated region
        $region65: #{mtg_forward.1} parent=11 // pred_check
          %p446 = pneg %p345
        $region66: #{mtg_forward.1} parent=11 // pred_check_branch
          %448 = sbr.rel (%p446) target = $region68
        $region67: #{mtg_forward.1} parent=11 // pred_region
          _
        $region68: #{mtg_forward.1} parent=11 // pred_fallthru
          _
        // Predicated region
        $region69: #{mtg_forward.1} parent=11 // pred_check
          %p449 = pneg %p366
        $region70: #{mtg_forward.1} parent=11 // pred_check_branch
          %451 = sbr.rel (%p449) target = $region72
        $region71: #{mtg_forward.1} parent=11 // pred_region
          _
        $region72: #{mtg_forward.1} parent=11 // pred_fallthru
          _
      $region12: #{mtg_forward.1} parent=5 // pred_fallthru
        _
      %p452 = scmp.lt.s32.totalorder %s25, 2
      // Predicated region
      $region73: #{mtg_forward.1} parent=5 // pred_check
        %p453 = pneg %p452
      $region74: #{mtg_forward.1} parent=5 // pred_check_branch
        %455 = sbr.rel (%p453) target = $region76
      $region75: #{mtg_forward.1} parent=5 // pred_region
        // Predicated region
        $region77: #{mtg_forward.1} parent=75 // pred_check
          %p456 = pneg %p45
        $region78: #{mtg_forward.1} parent=75 // pred_check_branch
          %458 = sbr.rel (%p456) target = $region80
        $region79: #{mtg_forward.1} parent=75 // pred_region
          %p459 = scmp.lt.s32.totalorder %s25, 1
          %s460 = scalar_select %p459, %s25, 1
          %s461 = smul.addr %s460, 8
          %s462 = scalar_lea.vmem %s0, %s461
        $region80: #{mtg_forward.1} parent=75 // pred_fallthru
          _
      $region76: #{mtg_forward.1} parent=5 // pred_fallthru
        _
      %p463 = scmp.le.s32.totalorder 1, %s25
      %p464 = scmp.lt.s32.totalorder %s25, 3
      %p465 = pnand %p463, %p464
      %p466 = pneg %p465
      // Predicated region
      $region81: #{mtg_forward.1} parent=5 // pred_check
        _
      $region82: #{mtg_forward.1} parent=5 // pred_check_branch
        %468 = sbr.rel (%p465) target = $region84
      $region83: #{mtg_forward.1} parent=5 // pred_region
        %s469 = ssub.s32 %s25, 1
        %p470 = scmp.lt.s32.totalorder %s30, 1
        %s471 = scalar_select %p470, %s30, 1
        %s472 = smul.addr %s471, 8
        %s473 = scalar_lea.vmem %s0, %s472
        %p474 = pneg %p51
        %p475 = pneg %p48
        %p476 = pneg %p72
        %p477 = pneg %p69
        %p478 = pneg %p93
        %p479 = pneg %p90
        %p480 = pneg %p114
        %p481 = pneg %p111
        %p482 = pneg %p135
        %p483 = pneg %p132
        %p484 = pneg %p156
        %p485 = pneg %p153
        %p486 = pneg %p177
        %p487 = pneg %p174
        %p488 = pneg %p198
        %p489 = pneg %p195
        %p490 = pneg %p219
        %p491 = pneg %p216
        %p492 = pneg %p240
        %p493 = pneg %p237
        %p494 = pneg %p261
        %p495 = pneg %p258
        %p496 = pneg %p282
        %p497 = pneg %p279
        %p498 = pneg %p303
        %p499 = pneg %p300
        %p500 = pneg %p324
        %p501 = pneg %p321
        %p502 = pneg %p345
        %p503 = pneg %p342
        %p504 = pneg %p366
        %p505 = pneg %p363
        %p506 = pneg %p392
        %p507 = pneg %p389
        %s508 = sand.u32 %s379, 1
        %s509 = scalar_lea.sflag [#allocation3], %s508
        %s510 = sand.u32 %s379, 1
        %s511 = smul.addr %s510, 8
        %s512 = scalar_lea.vmem [#allocation2], %s511
        %p513 = scmp.lt.s32.totalorder %s30, 1
        %s514 = scalar_select %p513, %s30, 1
        %s515 = smul.addr %s514, 8
        %s516 = scalar_lea.vmem %s0, %s515
        %v518 = vld [vmem:[%s516] sm:$0xff]
        %v519 = vld [vmem:[%s1] sm:$0xff]
        %v520 = vadd.f32 %v518, %v519
        %v521 = vld [vmem:[%s2] sm:$0xff]
        %v522 = vld [vmem:[%s3] sm:$0x1]
        %v523 = vld [vmem:[%s4] sm:$0x1]
        %vm524 = vcmask 523264
        %v525 = vsel %vm524, %v520, 0.0
        %526 = vadd.xlane.f32.xlu0 %v525
        %v527 = vpop.xlane.xlu0 %526
        %v528 = vrcp.pop 64.0
        %v529 = vmul.f32 %v527, %v528
        %v530 = vsub.f32 %v520, %v529
        %v531 = vmul.f32 %v530, %v530
        %v532 = vsel %vm524, %v531, 0.0
        %533 = vadd.xlane.f32.xlu0 %v532
        %v534 = vpop.xlane.xlu0 %533
        %v535 = vmul.f32 %v534, %v528
        %v536 = vadd.f32 %v535, 1e-05
        %v537 = vrsqrt.pop %v536
        %v538 = vmul.f32 %v530, %v537
        %v540 = vlaneseq
        %v541 = vshrl.u32 %v540, 7
        %v542 = vsub.s32 0, %v541
        %v543 = vrot.slane %v522, %v542
        %v545 = vmul.f32 %v538, %v543
        %v547 = vlaneseq
        %v548 = vshrl.u32 %v547, 7
        %v549 = vsub.s32 0, %v548
        %v550 = vrot.slane %v523, %v549
        %v552 = vadd.f32 %v545, %v550
        %v553 = vpack.c.bf16 %v552, %v552
        %v554 = vld [vmem:[%s5] sm:$0xff]
        %v555 = vld [vmem:[%s5 + $0x8] sm:$0xff]
        %v556 = vld [vmem:[%s5 + $0x10] sm:$0xff]
        %v557 = vld [vmem:[%s5 + $0x18] sm:$0xff]
        %v558 = vld [vmem:[%s5 + $0x20] sm:$0xff]
        %v559 = vld [vmem:[%s5 + $0x28] sm:$0xff]
        %v560 = vld [vmem:[%s5 + $0x30] sm:$0xff]
        %v561 = vld [vmem:[%s5 + $0x38] sm:$0xff]
        %v570 = vunpack.c.l.b16 %v554
        %v571 = vunpack.c.h.b16 %v554
        %v572 = vunpack.c.l.b16 %v555
        %v573 = vunpack.c.h.b16 %v555
        %v574 = vunpack.c.l.b16 %v556
        %v575 = vunpack.c.h.b16 %v556
        %v576 = vunpack.c.l.b16 %v557
        %v577 = vunpack.c.h.b16 %v557
        %v578 = vunpack.c.l.b16 %v558
        %v579 = vunpack.c.h.b16 %v558
        %v580 = vunpack.c.l.b16 %v559
        %v581 = vunpack.c.h.b16 %v559
        %v582 = vunpack.c.l.b16 %v560
        %v583 = vunpack.c.h.b16 %v560
        %v584 = vunpack.c.l.b16 %v561
        %v585 = vunpack.c.h.b16 %v561
        %v586 = vpack.c.b16 %v572, %v570
        %v587 = vpack.c.b16 %v573, %v571
        %v588 = vpack.c.b16 %v576, %v574
        %v589 = vpack.c.b16 %v577, %v575
        %v590 = vpack.c.b16 %v580, %v578
        %v591 = vpack.c.b16 %v581, %v579
        %v592 = vpack.c.b16 %v584, %v582
        %v593 = vpack.c.b16 %v585, %v583
        %v603 = vsel %vm524, %v553, 0
        %605 = vmatprep.subr.bf16.mxu0 %v587
        %606 = vmatpush1.bf16.msra.mxu0 %v586
        %607 = vmatprep.subr.bf16.mxu0 %v589
        %608 = vmatpush1.bf16.msra.mxu0 %v588
        %609 = vmatprep.subr.bf16.mxu0 %v591
        %610 = vmatpush1.bf16.msra.mxu0 %v590
        %611 = vmatprep.subr.bf16.mxu0 %v593
        %612 = vmatpush1.bf16.msra.mxu0 %v592
        %613 = vmatprep.subr.bf16.mxu0 0
        %614 = vmatpush1.bf16.msra.mxu0 0
        %615 = vmatprep.subr.bf16.mxu0 0
        %616 = vmatpush1.bf16.msra.mxu0 0
        %617 = vmatprep.subr.bf16.mxu0 0
        %618 = vmatpush1.bf16.msra.mxu0 0
        %619 = vmatprep.subr.bf16.mxu0 0
        %620 = vmatpush1.bf16.msra.mxu0 0
        %621 = vmatprep.subr.bf16.mxu0 0
        %622 = vmatpush1.bf16.msra.mxu0 0
        %623 = vmatprep.subr.bf16.mxu0 0
        %624 = vmatpush1.bf16.msra.mxu0 0
        %625 = vmatprep.subr.bf16.mxu0 0
        %626 = vmatpush1.bf16.msra.mxu0 0
        %627 = vmatprep.subr.bf16.mxu0 0
        %628 = vmatpush1.bf16.msra.mxu0 0
        %629 = vmatprep.subr.bf16.mxu0 0
        %630 = vmatpush1.bf16.msra.mxu0 0
        %631 = vmatprep.subr.bf16.mxu0 0
        %632 = vmatpush1.bf16.msra.mxu0 0
        %633 = vmatprep.subr.bf16.mxu0 0
        %634 = vmatpush1.bf16.msra.mxu0 0
        %635 = vmatprep.subr.bf16.mxu0 0
        %636 = vmatpush1.bf16.msra.mxu0 0
        %637 = vmatprep.mubr.bf16.mxu0 0
        %638 = vmatmul.mubr.bf16.gmra.mrb[0].mxu0 %v603
        %v639 = vpop.f32.mrb[0].mxu0
        %v640 = vadd.f32 0.0, %v639
        %v641 = vpop.f32.mrb[0].mxu0
        %v642 = vadd.f32 0.0, %v641
        %v643 = vpop.f32.mrb[0].mxu0
        %v644 = vpop.f32.mrb[0].mxu0
        %645 = vdwg.mxu0
        %v646 = vmul.f32 %v640, 8.0
        %v647 = vpack.c.bf16 %v646, %v646
        %v648 = vpack.c.bf16 %v640, %v640
        %650 = vrot.lane.b32.xlu0 %v648, 64
        %v651 = vpop.permute.xlu0 %650
        %vm652 = vcmask 130048
        %v654 = vsel %vm652, %v647, 0
        %v657 = vsel %vm652, %v651, 0
        %659 = vmatprep.subr.bf16.mxu0 0
        %660 = vmatpush1.bf16.xpose.msra.mxu0 %v657
        %661 = vmatprep.subr.bf16.mxu0 0
        %662 = vmatpush1.bf16.xpose.msra.mxu0 0
        %663 = vmatprep.subr.bf16.mxu0 0
        %664 = vmatpush1.bf16.xpose.msra.mxu0 0
        %665 = vmatprep.subr.bf16.mxu0 0
        %666 = vmatpush1.bf16.xpose.msra.mxu0 0
        %667 = vmatprep.subr.bf16.mxu0 0
        %668 = vmatpush1.bf16.xpose.msra.mxu0 0
        %669 = vmatprep.subr.bf16.mxu0 0
        %670 = vmatpush1.bf16.xpose.msra.mxu0 0
        %671 = vmatprep.subr.bf16.mxu0 0
        %672 = vmatpush1.bf16.xpose.msra.mxu0 0
        %673 = vmatprep.subr.bf16.mxu0 0
        %674 = vmatpush1.bf16.xpose.msra.mxu0 0
        %675 = vmatprep.subr.bf16.mxu0 0
        %676 = vmatpush1.bf16.xpose.msra.mxu0 0
        %677 = vmatprep.subr.bf16.mxu0 0
        %678 = vmatpush1.bf16.xpose.msra.mxu0 0
        %679 = vmatprep.subr.bf16.mxu0 0
        %680 = vmatpush1.bf16.xpose.msra.mxu0 0
        %681 = vmatprep.subr.bf16.mxu0 0
        %682 = vmatpush1.bf16.xpose.msra.mxu0 0
        %683 = vmatprep.subr.bf16.mxu0 0
        %684 = vmatpush1.bf16.xpose.msra.mxu0 0
        %685 = vmatprep.subr.bf16.mxu0 0
        %686 = vmatpush1.bf16.xpose.msra.mxu0 0
        %687 = vmatprep.subr.bf16.mxu0 0
        %688 = vmatpush1.bf16.xpose.msra.mxu0 0
        %689 = vmatprep.subr.bf16.mxu0 0
        %690 = vmatpush1.bf16.xpose.msra.mxu0 0
        %691 = vmatprep.mubr.bf16.mxu0 0
        %692 = vmatmul.mubr.bf16.gmra.mrb[0].mxu0 %v654
        %v693 = vpop.f32.mrb[0].mxu0
        %v694 = vadd.f32 %v521, %v693
        %v695 = vpop.f32.mrb[0].mxu0
        %v696 = vpop.f32.mrb[0].mxu0
        %v697 = vpop.f32.mrb[0].mxu0
        %698 = vdwg.mxu0
        %vm699 = vcmask 64512
        %v700 = vsel %vm699, %v694, -inf
        %701 = vmax.xlane.f32.xlu0 %v700
        %v702 = vpop.xlane.xlu0 %701
        %v703 = vsub.f32 %v694, %v702
        %v704 = vmul.f32 %v703, 1.442695
        %v705 = vpow.pop %v704
        %v706 = vsel %vm699, %v705, 0.0
        %707 = vadd.xlane.f32.xlu0 %v706
        %v708 = vpop.xlane.xlu0 %707
        %v709 = vrcp.pop %v708
        %v710 = vmul.f32 %v705, %v709
        %v711 = vpack.c.bf16 %v710, %v710
        %v712 = vpack.c.bf16 %v642, %v642
        %v714 = vsel %vm699, %v711, 0
        %vm716 = vcmask 1043456
        %v718 = vsel %vm716, %v712, 0
        %720 = vmatprep.subr.bf16.mxu0 0
        %721 = vmatpush1.bf16.msra.mxu0 %v718
        %722 = vmatprep.subr.bf16.mxu0 0
        %723 = vmatpush1.bf16.msra.mxu0 0
        %724 = vmatprep.subr.bf16.mxu0 0
        %725 = vmatpush1.bf16.msra.mxu0 0
        %726 = vmatprep.subr.bf16.mxu0 0
        %727 = vmatpush1.bf16.msra.mxu0 0
        %728 = vmatprep.subr.bf16.mxu0 0
        %729 = vmatpush1.bf16.msra.mxu0 0
        %730 = vmatprep.subr.bf16.mxu0 0
        %731 = vmatpush1.bf16.msra.mxu0 0
        %732 = vmatprep.subr.bf16.mxu0 0
        %733 = vmatpush1.bf16.msra.mxu0 0
        %734 = vmatprep.subr.bf16.mxu0 0
        %735 = vmatpush1.bf16.msra.mxu0 0
        %736 = vmatprep.subr.bf16.mxu0 0
        %737 = vmatpush1.bf16.msra.mxu0 0
        %738 = vmatprep.subr.bf16.mxu0 0
        %739 = vmatpush1.bf16.msra.mxu0 0
        %740 = vmatprep.subr.bf16.mxu0 0
        %741 = vmatpush1.bf16.msra.mxu0 0
        %742 = vmatprep.subr.bf16.mxu0 0
        %743 = vmatpush1.bf16.msra.mxu0 0
        %744 = vmatprep.subr.bf16.mxu0 0
        %745 = vmatpush1.bf16.msra.mxu0 0
        %746 = vmatprep.subr.bf16.mxu0 0
        %747 = vmatpush1.bf16.msra.mxu0 0
        %748 = vmatprep.subr.bf16.mxu0 0
        %749 = vmatpush1.bf16.msra.mxu0 0
        %750 = vmatprep.subr.bf16.mxu0 0
        %751 = vmatpush1.bf16.msra.mxu0 0
        %752 = vmatprep.mubr.bf16.mxu0 0
        %753 = vmatmul.mubr.bf16.gmra.mrb[0].mxu0 %v714
        %v754 = vpop.f32.mrb[0].mxu0
        %v755 = vadd.f32 0.0, %v754
        %v756 = vpop.f32.mrb[0].mxu0
        %v757 = vpop.f32.mrb[0].mxu0
        %v758 = vpop.f32.mrb[0].mxu0
        %759 = vdwg.mxu0
        %761 = vrot.lane.b32.xlu0 %v647, 112
        %v762 = vpop.permute.xlu0 %761
        %763 = vrot.lane.b32.xlu0 %v648, 48
        %v764 = vpop.permute.xlu0 %763
        %v766 = vsel %vm652, %v762, 0
        %v769 = vsel %vm652, %v764, 0
        %771 = vmatprep.subr.bf16.mxu0 0
        %772 = vmatpush1.bf16.xpose.msra.mxu0 %v769
        %773 = vmatprep.subr.bf16.mxu0 0
        %774 = vmatpush1.bf16.xpose.msra.mxu0 0
        %775 = vmatprep.subr.bf16.mxu0 0
        %776 = vmatpush1.bf16.xpose.msra.mxu0 0
        %777 = vmatprep.subr.bf16.mxu0 0
        %778 = vmatpush1.bf16.xpose.msra.mxu0 0
        %779 = vmatprep.subr.bf16.mxu0 0
        %780 = vmatpush1.bf16.xpose.msra.mxu0 0
        %781 = vmatprep.subr.bf16.mxu0 0
        %782 = vmatpush1.bf16.xpose.msra.mxu0 0
        %783 = vmatprep.subr.bf16.mxu0 0
        %784 = vmatpush1.bf16.xpose.msra.mxu0 0
        %785 = vmatprep.subr.bf16.mxu0 0
        %786 = vmatpush1.bf16.xpose.msra.mxu0 0
        %787 = vmatprep.subr.bf16.mxu0 0
        %788 = vmatpush1.bf16.xpose.msra.mxu0 0
        %789 = vmatprep.subr.bf16.mxu0 0
        %790 = vmatpush1.bf16.xpose.msra.mxu0 0
        %791 = vmatprep.subr.bf16.mxu0 0
        %792 = vmatpush1.bf16.xpose.msra.mxu0 0
        %793 = vmatprep.subr.bf16.mxu0 0
        %794 = vmatpush1.bf16.xpose.msra.mxu0 0
        %795 = vmatprep.subr.bf16.mxu0 0
        %796 = vmatpush1.bf16.xpose.msra.mxu0 0
        %797 = vmatprep.subr.bf16.mxu0 0
        %798 = vmatpush1.bf16.xpose.msra.mxu0 0
        %799 = vmatprep.subr.bf16.mxu0 0
        %800 = vmatpush1.bf16.xpose.msra.mxu0 0
        %801 = vmatprep.subr.bf16.mxu0 0
        %802 = vmatpush1.bf16.xpose.msra.mxu0 0
        %803 = vmatprep.mubr.bf16.mxu0 0
        %804 = vmatmul.mubr.bf16.gmra.mrb[0].mxu0 %v766
        %v805 = vpop.f32.mrb[0].mxu0
        %v806 = vadd.f32 %v521, %v805
        %v807 = vpop.f32.mrb[0].mxu0
        %v808 = vpop.f32.mrb[0].mxu0
        %v809 = vpop.f32.mrb[0].mxu0
        %810 = vdwg.mxu0
        %v811 = vsel %vm699, %v806, -inf
        %812 = vmax.xlane.f32.xlu0 %v811
        %v813 = vpop.xlane.xlu0 %812
        %v814 = vsub.f32 %v806, %v813
        %v815 = vmul.f32 %v814, 1.442695
        %v816 = vpow.pop %v815
        %v817 = vsel %vm699, %v816, 0.0
        %818 = vadd.xlane.f32.xlu0 %v817
        %v819 = vpop.xlane.xlu0 %818
        %v820 = vrcp.pop %v819
        %v821 = vmul.f32 %v816, %v820
        %v822 = vpack.c.bf16 %v821, %v821
        %824 = vrot.lane.b32.xlu0 %v712, 112
        %v825 = vpop.permute.xlu0 %824
        %v827 = vsel %vm699, %v822, 0
        %v830 = vsel %vm716, %v825, 0
        %832 = vmatprep.subr.bf16.mxu0 0
        %833 = vmatpush1.bf16.msra.mxu0 %v830
        %834 = vmatprep.subr.bf16.mxu0 0
        %835 = vmatpush1.bf16.msra.mxu0 0
        %836 = vmatprep.subr.bf16.mxu0 0
        %837 = vmatpush1.bf16.msra.mxu0 0
        %838 = vmatprep.subr.bf16.mxu0 0
        %839 = vmatpush1.bf16.msra.mxu0 0
        %840 = vmatprep.subr.bf16.mxu0 0
        %841 = vmatpush1.bf16.msra.mxu0 0
        %842 = vmatprep.subr.bf16.mxu0 0
        %843 = vmatpush1.bf16.msra.mxu0 0
        %844 = vmatprep.subr.bf16.mxu0 0
        %845 = vmatpush1.bf16.msra.mxu0 0
        %846 = vmatprep.subr.bf16.mxu0 0
        %847 = vmatpush1.bf16.msra.mxu0 0
        %848 = vmatprep.subr.bf16.mxu0 0
        %849 = vmatpush1.bf16.msra.mxu0 0
        %850 = vmatprep.subr.bf16.mxu0 0
        %851 = vmatpush1.bf16.msra.mxu0 0
        %852 = vmatprep.subr.bf16.mxu0 0
        %853 = vmatpush1.bf16.msra.mxu0 0
        %854 = vmatprep.subr.bf16.mxu0 0
        %855 = vmatpush1.bf16.msra.mxu0 0
        %856 = vmatprep.subr.bf16.mxu0 0
        %857 = vmatpush1.bf16.msra.mxu0 0
        %858 = vmatprep.subr.bf16.mxu0 0
        %859 = vmatpush1.bf16.msra.mxu0 0
        %860 = vmatprep.subr.bf16.mxu0 0
        %861 = vmatpush1.bf16.msra.mxu0 0
        %862 = vmatprep.subr.bf16.mxu0 0
        %863 = vmatpush1.bf16.msra.mxu0 0
        %864 = vmatprep.mubr.bf16.mxu0 0
        %865 = vmatmul.mubr.bf16.gmra.mrb[0].mxu0 %v827
        %v866 = vpop.f32.mrb[0].mxu0
        %v867 = vadd.f32 0.0, %v866
        %v868 = vpop.f32.mrb[0].mxu0
        %v869 = vpop.f32.mrb[0].mxu0
        %v870 = vpop.f32.mrb[0].mxu0
        %871 = vdwg.mxu0
        %872 = vrot.lane.b32.xlu0 %v647, 96
        %v873 = vpop.permute.xlu0 %872
        %874 = vrot.lane.b32.xlu0 %v648, 32
        %v875 = vpop.permute.xlu0 %874
        %v877 = vsel %vm652, %v873, 0
        %v880 = vsel %vm652, %v875, 0
        %882 = vmatprep.subr.bf16.mxu0 0
        %883 = vmatpush1.bf16.xpose.msra.mxu0 %v880
        %884 = vmatprep.subr.bf16.mxu0 0
        %885 = vmatpush1.bf16.xpose.msra.mxu0 0
        %886 = vmatprep.subr.bf16.mxu0 0
        %887 = vmatpush1.bf16.xpose.msra.mxu0 0
        %888 = vmatprep.subr.bf16.mxu0 0
        %889 = vmatpush1.bf16.xpose.msra.mxu0 0
        %890 = vmatprep.subr.bf16.mxu0 0
        %891 = vmatpush1.bf16.xpose.msra.mxu0 0
        %892 = vmatprep.subr.bf16.mxu0 0
        %893 = vmatpush1.bf16.xpose.msra.mxu0 0
        %894 = vmatprep.subr.bf16.mxu0 0
        %895 = vmatpush1.bf16.xpose.msra.mxu0 0
        %896 = vmatprep.subr.bf16.mxu0 0
        %897 = vmatpush1.bf16.xpose.msra.mxu0 0
        %898 = vmatprep.subr.bf16.mxu0 0
        %899 = vmatpush1.bf16.xpose.msra.mxu0 0
        %900 = vmatprep.subr.bf16.mxu0 0
        %901 = vmatpush1.bf16.xpose.msra.mxu0 0
        %902 = vmatprep.subr.bf16.mxu0 0
        %903 = vmatpush1.bf16.xpose.msra.mxu0 0
        %904 = vmatprep.subr.bf16.mxu0 0
        %905 = vmatpush1.bf16.xpose.msra.mxu0 0
        %906 = vmatprep.subr.bf16.mxu0 0
        %907 = vmatpush1.bf16.xpose.msra.mxu0 0
        %908 = vmatprep.subr.bf16.mxu0 0
        %909 = vmatpush1.bf16.xpose.msra.mxu0 0
        %910 = vmatprep.subr.bf16.mxu0 0
        %911 = vmatpush1.bf16.xpose.msra.mxu0 0
        %912 = vmatprep.subr.bf16.mxu0 0
        %913 = vmatpush1.bf16.xpose.msra.mxu0 0
        %914 = vmatprep.mubr.bf16.mxu0 0
        %915 = vmatmul.mubr.bf16.gmra.mrb[0].mxu0 %v877
        %v916 = vpop.f32.mrb[0].mxu0
        %v917 = vadd.f32 %v521, %v916
        %v918 = vpop.f32.mrb[0].mxu0
        %v919 = vpop.f32.mrb[0].mxu0
        %v920 = vpop.f32.mrb[0].mxu0
        %921 = vdwg.mxu0
        %v922 = vsel %vm699, %v917, -inf
        %923 = vmax.xlane.f32.xlu0 %v922
        %v924 = vpop.xlane.xlu0 %923
        %v925 = vsub.f32 %v917, %v924
        %v926 = vmul.f32 %v925, 1.442695
        %v927 = vpow.pop %v926
        %v928 = vsel %vm699, %v927, 0.0
        %929 = vadd.xlane.f32.xlu0 %v928
        %v930 = vpop.xlane.xlu0 %929
        %v931 = vrcp.pop %v930
        %v932 = vmul.f32 %v927, %v931
        %v933 = vpack.c.bf16 %v932, %v932
        %934 = vrot.lane.b32.xlu0 %v712, 96
        %v935 = vpop.permute.xlu0 %934
        %v937 = vsel %vm699, %v933, 0
        %v940 = vsel %vm716, %v935, 0
        %942 = vmatprep.subr.bf16.mxu0 0
        %943 = vmatpush1.bf16.msra.mxu0 %v940
        %944 = vmatprep.subr.bf16.mxu0 0
        %945 = vmatpush1.bf16.msra.mxu0 0
        %946 = vmatprep.subr.bf16.mxu0 0
        %947 = vmatpush1.bf16.msra.mxu0 0
        %948 = vmatprep.subr.bf16.mxu0 0
        %949 = vmatpush1.bf16.msra.mxu0 0
        %950 = vmatprep.subr.bf16.mxu0 0
        %951 = vmatpush1.bf16.msra.mxu0 0
        %952 = vmatprep.subr.bf16.mxu0 0
        %953 = vmatpush1.bf16.msra.mxu0 0
        %954 = vmatprep.subr.bf16.mxu0 0
        %955 = vmatpush1.bf16.msra.mxu0 0
        %956 = vmatprep.subr.bf16.mxu0 0
        %957 = vmatpush1.bf16.msra.mxu0 0
        %958 = vmatprep.subr.bf16.mxu0 0
        %959 = vmatpush1.bf16.msra.mxu0 0
        %960 = vmatprep.subr.bf16.mxu0 0
        %961 = vmatpush1.bf16.msra.mxu0 0
        %962 = vmatprep.subr.bf16.mxu0 0
        %963 = vmatpush1.bf16.msra.mxu0 0
        %964 = vmatprep.subr.bf16.mxu0 0
        %965 = vmatpush1.bf16.msra.mxu0 0
        %966 = vmatprep.subr.bf16.mxu0 0
        %967 = vmatpush1.bf16.msra.mxu0 0
        %968 = vmatprep.subr.bf16.mxu0 0
        %969 = vmatpush1.bf16.msra.mxu0 0
        %970 = vmatprep.subr.bf16.mxu0 0
        %971 = vmatpush1.bf16.msra.mxu0 0
        %972 = vmatprep.subr.bf16.mxu0 0
        %973 = vmatpush1.bf16.msra.mxu0 0
        %974 = vmatprep.mubr.bf16.mxu0 0
        %975 = vmatmul.mubr.bf16.gmra.mrb[0].mxu0 %v937
        %v976 = vpop.f32.mrb[0].mxu0
        %v977 = vadd.f32 0.0, %v976
        %v978 = vpop.f32.mrb[0].mxu0
        %v979 = vpop.f32.mrb[0].mxu0
        %v980 = vpop.f32.mrb[0].mxu0
        %981 = vdwg.mxu0
        %982 = vrot.lane.b32.xlu0 %v647, 80
        %v983 = vpop.permute.xlu0 %982
        %984 = vrot.lane.b32.xlu0 %v648, 16
        %v985 = vpop.permute.xlu0 %984
        %v987 = vsel %vm652, %v983, 0
        %v990 = vsel %vm652, %v985, 0
        %992 = vmatprep.subr.bf16.mxu0 0
        %993 = vmatpush1.bf16.xpose.msra.mxu0 %v990
        %994 = vmatprep.subr.bf16.mxu0 0
        %995 = vmatpush1.bf16.xpose.msra.mxu0 0
        %996 = vmatprep.subr.bf16.mxu0 0
        %997 = vmatpush1.bf16.xpose.msra.mxu0 0
        %998 = vmatprep.subr.bf16.mxu0 0
        %999 = vmatpush1.bf16.xpose.msra.mxu0 0
        %1000 = vmatprep.subr.bf16.mxu0 0
        %1001 = vmatpush1.bf16.xpose.msra.mxu0 0
        %1002 = vmatprep.subr.bf16.mxu0 0
        %1003 = vmatpush1.bf16.xpose.msra.mxu0 0
        %1004 = vmatprep.subr.bf16.mxu0 0
        %1005 = vmatpush1.bf16.xpose.msra.mxu0 0
        %1006 = vmatprep.subr.bf16.mxu0 0
        %1007 = vmatpush1.bf16.xpose.msra.mxu0 0
        %1008 = vmatprep.subr.bf16.mxu0 0
        %1009 = vmatpush1.bf16.xpose.msra.mxu0 0
        %1010 = vmatprep.subr.bf16.mxu0 0
        %1011 = vmatpush1.bf16.xpose.msra.mxu0 0
        %1012 = vmatprep.subr.bf16.mxu0 0
        %1013 = vmatpush1.bf16.xpose.msra.mxu0 0
        %1014 = vmatprep.subr.bf16.mxu0 0
        %1015 = vmatpush1.bf16.xpose.msra.mxu0 0
        %1016 = vmatprep.subr.bf16.mxu0 0
        %1017 = vmatpush1.bf16.xpose.msra.mxu0 0
        %1018 = vmatprep.subr.bf16.mxu0 0
        %1019 = vmatpush1.bf16.xpose.msra.mxu0 0
        %1020 = vmatprep.subr.bf16.mxu0 0
        %1021 = vmatpush1.bf16.xpose.msra.mxu0 0
        %1022 = vmatprep.subr.bf16.mxu0 0
        %1023 = vmatpush1.bf16.xpose.msra.mxu0 0
        %1024 = vmatprep.mubr.bf16.mxu0 0
        %1025 = vmatmul.mubr.bf16.gmra.mrb[0].mxu0 %v987
        %v1026 = vpop.f32.mrb[0].mxu0
        %v1027 = vadd.f32 %v521, %v1026
        %v1028 = vpop.f32.mrb[0].mxu0
        %v1029 = vpop.f32.mrb[0].mxu0
        %v1030 = vpop.f32.mrb[0].mxu0
        %1031 = vdwg.mxu0
        %v1032 = vsel %vm699, %v1027, -inf
        %1033 = vmax.xlane.f32.xlu0 %v1032
        %v1034 = vpop.xlane.xlu0 %1033
        %v1035 = vsub.f32 %v1027, %v1034
        %v1036 = vmul.f32 %v1035, 1.442695
        %v1037 = vpow.pop %v1036
        %v1038 = vsel %vm699, %v1037, 0.0
        %1039 = vadd.xlane.f32.xlu0 %v1038
        %v1040 = vpop.xlane.xlu0 %1039
        %v1041 = vrcp.pop %v1040
        %v1042 = vmul.f32 %v1037, %v1041
        %v1043 = vpack.c.bf16 %v1042, %v1042
        %1044 = vrot.lane.b32.xlu0 %v712, 80
        %v1045 = vpop.permute.xlu0 %1044
        %v1047 = vsel %vm699, %v1043, 0
        %v1050 = vsel %vm716, %v1045, 0
        %1052 = vmatprep.subr.bf16.mxu0 0
        %1053 = vmatpush1.bf16.msra.mxu0 %v1050
        %1054 = vmatprep.subr.bf16.mxu0 0
        %1055 = vmatpush1.bf16.msra.mxu0 0
        %1056 = vmatprep.subr.bf16.mxu0 0
        %1057 = vmatpush1.bf16.msra.mxu0 0
        %1058 = vmatprep.subr.bf16.mxu0 0
        %1059 = vmatpush1.bf16.msra.mxu0 0
        %1060 = vmatprep.subr.bf16.mxu0 0
        %1061 = vmatpush1.bf16.msra.mxu0 0
        %1062 = vmatprep.subr.bf16.mxu0 0
        %1063 = vmatpush1.bf16.msra.mxu0 0
        %1064 = vmatprep.subr.bf16.mxu0 0
        %1065 = vmatpush1.bf16.msra.mxu0 0
        %1066 = vmatprep.subr.bf16.mxu0 0
        %1067 = vmatpush1.bf16.msra.mxu0 0
        %1068 = vmatprep.subr.bf16.mxu0 0
        %1069 = vmatpush1.bf16.msra.mxu0 0
        %1070 = vmatprep.subr.bf16.mxu0 0
        %1071 = vmatpush1.bf16.msra.mxu0 0
        %1072 = vmatprep.subr.bf16.mxu0 0
        %1073 = vmatpush1.bf16.msra.mxu0 0
        %1074 = vmatprep.subr.bf16.mxu0 0
        %1075 = vmatpush1.bf16.msra.mxu0 0
        %1076 = vmatprep.subr.bf16.mxu0 0
        %1077 = vmatpush1.bf16.msra.mxu0 0
        %1078 = vmatprep.subr.bf16.mxu0 0
        %1079 = vmatpush1.bf16.msra.mxu0 0
        %1080 = vmatprep.subr.bf16.mxu0 0
        %1081 = vmatpush1.bf16.msra.mxu0 0
        %1082 = vmatprep.subr.bf16.mxu0 0
        %1083 = vmatpush1.bf16.msra.mxu0 0
        %1084 = vmatprep.mubr.bf16.mxu0 0
        %1085 = vmatmul.mubr.bf16.gmra.mrb[0].mxu0 %v1047
        %v1086 = vpop.f32.mrb[0].mxu0
        %v1087 = vadd.f32 0.0, %v1086
        %v1088 = vpop.f32.mrb[0].mxu0
        %v1089 = vpop.f32.mrb[0].mxu0
        %v1090 = vpop.f32.mrb[0].mxu0
        %1091 = vdwg.mxu0
        %1093 = vrot.lane.b32.xlu0 %v867, 16
        %v1094 = vpop.permute.xlu0 %1093
        %1097 = vrot.lane.b32.xlu0 %v977, 32
        %v1098 = vpop.permute.xlu0 %1097
        %1101 = vrot.lane.b32.xlu0 %v1087, 48
        %v1102 = vpop.permute.xlu0 %1101
        %v1104 = vsel %vm652, %v755, %v1094
        %vm1105 = vcmask 261120
        %v1106 = vsel %vm1105, %v1104, %v1098
        %vm1107 = vcmask 392192
        %v1108 = vsel %vm1107, %v1106, %v1102
        %v1109 = vpack.c.bf16 %v1108, %v1108
        %v1110 = vld [vmem:[%s6] sm:$0xf]
        %v1111 = vld [vmem:[%s6 + $0x4] sm:$0xf]
        %v1112 = vld [vmem:[%s6 + $0x8] sm:$0xf]
        %v1113 = vld [vmem:[%s6 + $0xc] sm:$0xf]
        %v1114 = vld [vmem:[%s6 + $0x10] sm:$0xf]
        %v1115 = vld [vmem:[%s6 + $0x14] sm:$0xf]
        %v1116 = vld [vmem:[%s6 + $0x18] sm:$0xf]
        %v1117 = vld [vmem:[%s6 + $0x1c] sm:$0xf]
        %v1118 = vld [vmem:[%s7] sm:$0x1]
        %v1120 = vlaneseq
        %v1121 = vshrl.u32 %v1120, 7
        %v1122 = vsub.s32 0, %v1121
        %v1123 = vrot.slane %v1118, %v1122
        %v1133 = vunpack.c.l.b16 %v1110
        %v1134 = vunpack.c.l.b16 %v1111
        %v1135 = vunpack.c.l.b16 %v1112
        %v1136 = vunpack.c.l.b16 %v1113
        %v1137 = vunpack.c.l.b16 %v1114
        %v1138 = vunpack.c.l.b16 %v1115
        %v1139 = vunpack.c.l.b16 %v1116
        %v1140 = vunpack.c.l.b16 %v1117
        %v1141 = vpack.c.b16 %v1134, %v1133
        %v1142 = vpack.c.b16 %v1136, %v1135
        %v1143 = vpack.c.b16 %v1138, %v1137
        %v1144 = vpack.c.b16 %v1140, %v1139
        %v1150 = vsel %vm524, %v1109, 0
        %1152 = vmatprep.subr.bf16.mxu0 0
        %1153 = vmatpush1.bf16.msra.mxu0 %v1141
        %1154 = vmatprep.subr.bf16.mxu0 0
        %1155 = vmatpush1.bf16.msra.mxu0 %v1142
        %1156 = vmatprep.subr.bf16.mxu0 0
        %1157 = vmatpush1.bf16.msra.mxu0 %v1143
        %1158 = vmatprep.subr.bf16.mxu0 0
        %1159 = vmatpush1.bf16.msra.mxu0 %v1144
        %1160 = vmatprep.subr.bf16.mxu0 0
        %1161 = vmatpush1.bf16.msra.mxu0 0
        %1162 = vmatprep.subr.bf16.mxu0 0
        %1163 = vmatpush1.bf16.msra.mxu0 0
        %1164 = vmatprep.subr.bf16.mxu0 0
        %1165 = vmatpush1.bf16.msra.mxu0 0
        %1166 = vmatprep.subr.bf16.mxu0 0
        %1167 = vmatpush1.bf16.msra.mxu0 0
        %1168 = vmatprep.subr.bf16.mxu0 0
        %1169 = vmatpush1.bf16.msra.mxu0 0
        %1170 = vmatprep.subr.bf16.mxu0 0
        %1171 = vmatpush1.bf16.msra.mxu0 0
        %1172 = vmatprep.subr.bf16.mxu0 0
        %1173 = vmatpush1.bf16.msra.mxu0 0
        %1174 = vmatprep.subr.bf16.mxu0 0
        %1175 = vmatpush1.bf16.msra.mxu0 0
        %1176 = vmatprep.subr.bf16.mxu0 0
        %1177 = vmatpush1.bf16.msra.mxu0 0
        %1178 = vmatprep.subr.bf16.mxu0 0
        %1179 = vmatpush1.bf16.msra.mxu0 0
        %1180 = vmatprep.subr.bf16.mxu0 0
        %1181 = vmatpush1.bf16.msra.mxu0 0
        %1182 = vmatprep.subr.bf16.mxu0 0
        %1183 = vmatpush1.bf16.msra.mxu0 0
        %1184 = vmatprep.mubr.bf16.mxu0 0
        %1185 = vmatmul.mubr.bf16.gmra.mrb[0].mxu0 %v1150
        %v1186 = vpop.f32.mrb[0].mxu0
        %v1187 = vadd.f32 %v1123, %v1186
        %v1188 = vpop.f32.mrb[0].mxu0
        %v1189 = vpop.f32.mrb[0].mxu0
        %v1190 = vpop.f32.mrb[0].mxu0
        %1191 = vdwg.mxu0
        %v1192 = vadd.f32 %v520, %v1187
        %v1193 = vld [vmem:[%s8] sm:$0x1]
        %v1194 = vld [vmem:[%s9] sm:$0x1]
        %v1195 = vsel %vm524, %v1192, 0.0
        %1196 = vadd.xlane.f32.xlu0 %v1195
        %v1197 = vpop.xlane.xlu0 %1196
        %v1198 = vmul.f32 %v1197, %v528
        %v1199 = vsub.f32 %v1192, %v1198
        %v1200 = vmul.f32 %v1199, %v1199
        %v1201 = vsel %vm524, %v1200, 0.0
        %1202 = vadd.xlane.f32.xlu0 %v1201
        %v1203 = vpop.xlane.xlu0 %1202
        %v1204 = vmul.f32 %v1203, %v528
        %v1205 = vadd.f32 %v1204, 1e-05
        %v1206 = vrsqrt.pop %v1205
        %v1207 = vmul.f32 %v1199, %v1206
        %v1209 = vlaneseq
        %v1210 = vshrl.u32 %v1209, 7
        %v1211 = vsub.s32 0, %v1210
        %v1212 = vrot.slane %v1193, %v1211
        %v1214 = vmul.f32 %v1207, %v1212
        %v1216 = vlaneseq
        %v1217 = vshrl.u32 %v1216, 7
        %v1218 = vsub.s32 0, %v1217
        %v1219 = vrot.slane %v1194, %v1218
        %v1221 = vadd.f32 %v1214, %v1219
        %v1222 = vpack.c.bf16 %v1221, %v1221
        %v1223 = vld [vmem:[%s10] sm:$0xff]
        %v1224 = vld [vmem:[%s10 + $0x8] sm:$0xff]
        %v1225 = vld [vmem:[%s10 + $0x10] sm:$0xff]
        %v1226 = vld [vmem:[%s10 + $0x18] sm:$0xff]
        %v1227 = vld [vmem:[%s10 + $0x20] sm:$0xff]
        %v1228 = vld [vmem:[%s10 + $0x28] sm:$0xff]
        %v1229 = vld [vmem:[%s10 + $0x30] sm:$0xff]
        %v1230 = vld [vmem:[%s10 + $0x38] sm:$0xff]
        %v1231 = vld [vmem:[%s11] sm:$0x3]
        %v1233 = vlaneseq
        %v1234 = vshrl.u32 %v1233, 7
        %v1235 = vsub.s32 0, %v1234
        %v1236 = vrot.slane %v1231, %v1235
        %v1237 = vlaneseq
        %v1238 = vshrl.u32 %v1237, 7
        %v1239 = vsub.s32 1, %v1238
        %v1240 = vrot.slane %v1231, %v1239
        %v1251 = vunpack.c.l.b16 %v1223
        %v1252 = vunpack.c.h.b16 %v1223
        %v1253 = vunpack.c.l.b16 %v1224
        %v1254 = vunpack.c.h.b16 %v1224
        %v1255 = vunpack.c.l.b16 %v1225
        %v1256 = vunpack.c.h.b16 %v1225
        %v1257 = vunpack.c.l.b16 %v1226
        %v1258 = vunpack.c.h.b16 %v1226
        %v1259 = vunpack.c.l.b16 %v1227
        %v1260 = vunpack.c.h.b16 %v1227
        %v1261 = vunpack.c.l.b16 %v1228
        %v1262 = vunpack.c.h.b16 %v1228
        %v1263 = vunpack.c.l.b16 %v1229
        %v1264 = vunpack.c.h.b16 %v1229
        %v1265 = vunpack.c.l.b16 %v1230
        %v1266 = vunpack.c.h.b16 %v1230
        %v1267 = vpack.c.b16 %v1253, %v1251
        %v1268 = vpack.c.b16 %v1254, %v1252
        %v1269 = vpack.c.b16 %v1257, %v1255
        %v1270 = vpack.c.b16 %v1258, %v1256
        %v1271 = vpack.c.b16 %v1261, %v1259
        %v1272 = vpack.c.b16 %v1262, %v1260
        %v1273 = vpack.c.b16 %v1265, %v1263
        %v1274 = vpack.c.b16 %v1266, %v1264
        %v1284 = vsel %vm524, %v1222, 0
        %1286 = vmatprep.subr.bf16.mxu0 %v1268
        %1287 = vmatpush1.bf16.msra.mxu0 %v1267
        %1288 = vmatprep.subr.bf16.mxu0 %v1270
        %1289 = vmatpush1.bf16.msra.mxu0 %v1269
        %1290 = vmatprep.subr.bf16.mxu0 %v1272
        %1291 = vmatpush1.bf16.msra.mxu0 %v1271
        %1292 = vmatprep.subr.bf16.mxu0 %v1274
        %1293 = vmatpush1.bf16.msra.mxu0 %v1273
        %1294 = vmatprep.subr.bf16.mxu0 0
        %1295 = vmatpush1.bf16.msra.mxu0 0
        %1296 = vmatprep.subr.bf16.mxu0 0
        %1297 = vmatpush1.bf16.msra.mxu0 0
        %1298 = vmatprep.subr.bf16.mxu0 0
        %1299 = vmatpush1.bf16.msra.mxu0 0
        %1300 = vmatprep.subr.bf16.mxu0 0
        %1301 = vmatpush1.bf16.msra.mxu0 0
        %1302 = vmatprep.subr.bf16.mxu0 0
        %1303 = vmatpush1.bf16.msra.mxu0 0
        %1304 = vmatprep.subr.bf16.mxu0 0
        %1305 = vmatpush1.bf16.msra.mxu0 0
        %1306 = vmatprep.subr.bf16.mxu0 0
        %1307 = vmatpush1.bf16.msra.mxu0 0
        %1308 = vmatprep.subr.bf16.mxu0 0
        %1309 = vmatpush1.bf16.msra.mxu0 0
        %1310 = vmatprep.subr.bf16.mxu0 0
        %1311 = vmatpush1.bf16.msra.mxu0 0
        %1312 = vmatprep.subr.bf16.mxu0 0
        %1313 = vmatpush1.bf16.msra.mxu0 0
        %1314 = vmatprep.subr.bf16.mxu0 0
        %1315 = vmatpush1.bf16.msra.mxu0 0
        %1316 = vmatprep.subr.bf16.mxu0 0
        %1317 = vmatpush1.bf16.msra.mxu0 0
        %1318 = vmatprep.mubr.bf16.mxu0 0
        %1319 = vmatmul.mubr.bf16.gmra.mrb[0].mxu0 %v1284
        %v1320 = vpop.f32.mrb[0].mxu0
        %v1321 = vadd.f32 %v1236, %v1320
        %v1322 = vpop.f32.mrb[0].mxu0
        %v1323 = vadd.f32 %v1240, %v1322
        %v1324 = vpop.f32.mrb[0].mxu0
        %v1325 = vpop.f32.mrb[0].mxu0
        %1326 = vdwg.mxu0
        %v1327 = vmax.f32 %v1321, 0.0
        %v1328 = vmax.f32 %v1323, 0.0
        %v1329 = vpack.c.bf16 %v1327, %v1327
        %v1330 = vpack.c.bf16 %v1328, %v1328
        %v1331 = vld [vmem:[%s12] sm:$0xf]
        %v1332 = vld [vmem:[%s12 + $0x4] sm:$0xf]
        %v1333 = vld [vmem:[%s12 + $0x8] sm:$0xf]
        %v1334 = vld [vmem:[%s12 + $0xc] sm:$0xf]
        %v1335 = vld [vmem:[%s12 + $0x10] sm:$0xf]
        %v1336 = vld [vmem:[%s12 + $0x14] sm:$0xf]
        %v1337 = vld [vmem:[%s12 + $0x18] sm:$0xf]
        %v1338 = vld [vmem:[%s12 + $0x1c] sm:$0xf]
        %v1339 = vld [vmem:[%s12 + $0x20] sm:$0xf]
        %v1340 = vld [vmem:[%s12 + $0x24] sm:$0xf]
        %v1341 = vld [vmem:[%s12 + $0x28] sm:$0xf]
        %v1342 = vld [vmem:[%s12 + $0x2c] sm:$0xf]
        %v1343 = vld [vmem:[%s12 + $0x30] sm:$0xf]
        %v1344 = vld [vmem:[%s12 + $0x34] sm:$0xf]
        %v1345 = vld [vmem:[%s12 + $0x38] sm:$0xf]
        %v1346 = vld [vmem:[%s12 + $0x3c] sm:$0xf]
        %v1347 = vld [vmem:[%s12 + $0x40] sm:$0xf]
        %v1348 = vld [vmem:[%s12 + $0x44] sm:$0xf]
        %v1349 = vld [vmem:[%s12 + $0x48] sm:$0xf]
        %v1350 = vld [vmem:[%s12 + $0x4c] sm:$0xf]
        %v1351 = vld [vmem:[%s12 + $0x50] sm:$0xf]
        %v1352 = vld [vmem:[%s12 + $0x54] sm:$0xf]
        %v1353 = vld [vmem:[%s12 + $0x58] sm:$0xf]
        %v1354 = vld [vmem:[%s12 + $0x5c] sm:$0xf]
        %v1355 = vld [vmem:[%s12 + $0x60] sm:$0xf]
        %v1356 = vld [vmem:[%s12 + $0x64] sm:$0xf]
        %v1357 = vld [vmem:[%s12 + $0x68] sm:$0xf]
        %v1358 = vld [vmem:[%s12 + $0x6c] sm:$0xf]
        %v1359 = vld [vmem:[%s12 + $0x70] sm:$0xf]
        %v1360 = vld [vmem:[%s12 + $0x74] sm:$0xf]
        %v1361 = vld [vmem:[%s12 + $0x78] sm:$0xf]
        %v1362 = vld [vmem:[%s12 + $0x7c] sm:$0xf]
        %v1395 = vunpack.c.l.b16 %v1331
        %v1396 = vunpack.c.l.b16 %v1332
        %v1397 = vunpack.c.l.b16 %v1333
        %v1398 = vunpack.c.l.b16 %v1334
        %v1399 = vunpack.c.l.b16 %v1335
        %v1400 = vunpack.c.l.b16 %v1336
        %v1401 = vunpack.c.l.b16 %v1337
        %v1402 = vunpack.c.l.b16 %v1338
        %v1403 = vunpack.c.l.b16 %v1339
        %v1404 = vunpack.c.l.b16 %v1340
        %v1405 = vunpack.c.l.b16 %v1341
        %v1406 = vunpack.c.l.b16 %v1342
        %v1407 = vunpack.c.l.b16 %v1343
        %v1408 = vunpack.c.l.b16 %v1344
        %v1409 = vunpack.c.l.b16 %v1345
        %v1410 = vunpack.c.l.b16 %v1346
        %v1411 = vunpack.c.l.b16 %v1347
        %v1412 = vunpack.c.l.b16 %v1348
        %v1413 = vunpack.c.l.b16 %v1349
        %v1414 = vunpack.c.l.b16 %v1350
        %v1415 = vunpack.c.l.b16 %v1351
        %v1416 = vunpack.c.l.b16 %v1352
        %v1417 = vunpack.c.l.b16 %v1353
        %v1418 = vunpack.c.l.b16 %v1354
        %v1419 = vunpack.c.l.b16 %v1355
        %v1420 = vunpack.c.l.b16 %v1356
        %v1421 = vunpack.c.l.b16 %v1357
        %v1422 = vunpack.c.l.b16 %v1358
        %v1423 = vunpack.c.l.b16 %v1359
        %v1424 = vunpack.c.l.b16 %v1360
        %v1425 = vunpack.c.l.b16 %v1361
        %v1426 = vunpack.c.l.b16 %v1362
        %v1427 = vpack.c.b16 %v1396, %v1395
        %v1428 = vpack.c.b16 %v1398, %v1397
        %v1429 = vpack.c.b16 %v1400, %v1399
        %v1430 = vpack.c.b16 %v1402, %v1401
        %v1431 = vpack.c.b16 %v1404, %v1403
        %v1432 = vpack.c.b16 %v1406, %v1405
        %v1433 = vpack.c.b16 %v1408, %v1407
        %v1434 = vpack.c.b16 %v1410, %v1409
        %v1435 = vpack.c.b16 %v1412, %v1411
        %v1436 = vpack.c.b16 %v1414, %v1413
        %v1437 = vpack.c.b16 %v1416, %v1415
        %v1438 = vpack.c.b16 %v1418, %v1417
        %v1439 = vpack.c.b16 %v1420, %v1419
        %v1440 = vpack.c.b16 %v1422, %v1421
        %v1441 = vpack.c.b16 %v1424, %v1423
        %v1442 = vpack.c.b16 %v1426, %v1425
        %1459 = vmatprep.subr.bf16.mxu0 0
        %1460 = vmatpush1.bf16.msra.mxu0 %v1427
        %1461 = vmatprep.subr.bf16.mxu0 0
        %1462 = vmatpush1.bf16.msra.mxu0 %v1428
        %1463 = vmatprep.subr.bf16.mxu0 0
        %1464 = vmatpush1.bf16.msra.mxu0 %v1429
        %1465 = vmatprep.subr.bf16.mxu0 0
        %1466 = vmatpush1.bf16.msra.mxu0 %v1430
        %1467 = vmatprep.subr.bf16.mxu0 0
        %1468 = vmatpush1.bf16.msra.mxu0 %v1431
        %1469 = vmatprep.subr.bf16.mxu0 0
        %1470 = vmatpush1.bf16.msra.mxu0 %v1432
        %1471 = vmatprep.subr.bf16.mxu0 0
        %1472 = vmatpush1.bf16.msra.mxu0 %v1433
        %1473 = vmatprep.subr.bf16.mxu0 0
        %1474 = vmatpush1.bf16.msra.mxu0 %v1434
        %1475 = vmatprep.subr.bf16.mxu0 0
        %1476 = vmatpush1.bf16.msra.mxu0 %v1435
        %1477 = vmatprep.subr.bf16.mxu0 0
        %1478 = vmatpush1.bf16.msra.mxu0 %v1436
        %1479 = vmatprep.subr.bf16.mxu0 0
        %1480 = vmatpush1.bf16.msra.mxu0 %v1437
        %1481 = vmatprep.subr.bf16.mxu0 0
        %1482 = vmatpush1.bf16.msra.mxu0 %v1438
        %1483 = vmatprep.subr.bf16.mxu0 0
        %1484 = vmatpush1.bf16.msra.mxu0 %v1439
        %1485 = vmatprep.subr.bf16.mxu0 0
        %1486 = vmatpush1.bf16.msra.mxu0 %v1440
        %1487 = vmatprep.subr.bf16.mxu0 0
        %1488 = vmatpush1.bf16.msra.mxu0 %v1441
        %1489 = vmatprep.subr.bf16.mxu0 0
        %1490 = vmatpush1.bf16.msra.mxu0 %v1442
        %1491 = vmatprep.mubr.bf16.mxu0 %v1330
        %1492 = vmatmul.mubr.bf16.gmra.mrb[0].mxu0 %v1329
        %v1493 = vpop.f32.mrb[0].mxu0
        %v1494 = vadd.f32 0.0, %v1493
        %v1495 = vpop.f32.mrb[0].mxu0
        %v1496 = vpop.f32.mrb[0].mxu0
        %v1497 = vpop.f32.mrb[0].mxu0
        %1498 = vdwg.mxu0
        %v1499 = vadd.f32 %v1192, %v1494
        %v1500 = vld [vmem:[%s13] sm:$0x1]
        %v1502 = vlaneseq
        %v1503 = vshrl.u32 %v1502, 7
        %v1504 = vsub.s32 0, %v1503
        %v1505 = vrot.slane %v1500, %v1504
        %v1507 = vadd.f32 %v1499, %v1505
        %s1508 = scalar_lea.vmem %s3, 1
        %v1509 = vld [vmem:[%s1508] sm:$0x1]
        %s1510 = scalar_lea.vmem %s4, 1
        %v1511 = vld [vmem:[%s1510] sm:$0x1]
        %v1512 = vsel %vm524, %v1507, 0.0
        %1513 = vadd.xlane.f32.xlu0 %v1512
        %v1514 = vpop.xlane.xlu0 %1513
        %v1515 = vmul.f32 %v1514, %v528
        %v1516 = vsub.f32 %v1507, %v1515
        %v1517 = vmul.f32 %v1516, %v1516
        %v1518 = vsel %vm524, %v1517, 0.0
        %1519 = vadd.xlane.f32.xlu0 %v1518
        %v1520 = vpop.xlane.xlu0 %1519
        %v1521 = vmul.f32 %v1520, %v528
        %v1522 = vadd.f32 %v1521, 1e-05
        %v1523 = vrsqrt.pop %v1522
        %v1524 = vmul.f32 %v1516, %v1523
        %v1526 = vlaneseq
        %v1527 = vshrl.u32 %v1526, 7
        %v1528 = vsub.s32 0, %v1527
        %v1529 = vrot.slane %v1509, %v1528
        %v1531 = vmul.f32 %v1524, %v1529
        %v1533 = vlaneseq
        %v1534 = vshrl.u32 %v1533, 7
        %v1535 = vsub.s32 0, %v1534
        %v1536 = vrot.slane %v1511, %v1535
        %v1538 = vadd.f32 %v1531, %v1536
        %v1539 = vpack.c.bf16 %v1538, %v1538
        %s1540 = scalar_lea.vmem %s5, 64
        %v1541 = vld [vmem:[%s1540] sm:$0xff]
        %v1542 = vld [vmem:[%s1540 + $0x8] sm:$0xff]
        %v1543 = vld [vmem:[%s1540 + $0x10] sm:$0xff]
        %v1544 = vld [vmem:[%s1540 + $0x18] sm:$0xff]
        %v1545 = vld [vmem:[%s1540 + $0x20] sm:$0xff]
        %v1546 = vld [vmem:[%s1540 + $0x28] sm:$0xff]
        %v1547 = vld [vmem:[%s1540 + $0x30] sm:$0xff]
        %v1548 = vld [vmem:[%s1540 + $0x38] sm:$0xff]
        %v1557 = vunpack.c.l.b16 %v1541
        %v1558 = vunpack.c.h.b16 %v1541
        %v1559 = vunpack.c.l.b16 %v1542
        %v1560 = vunpack.c.h.b16 %v1542
        %v1561 = vunpack.c.l.b16 %v1543
        %v1562 = vunpack.c.h.b16 %v1543
        %v1563 = vunpack.c.l.b16 %v1544
        %v1564 = vunpack.c.h.b16 %v1544
        %v1565 = vunpack.c.l.b16 %v1545
        %v1566 = vunpack.c.h.b16 %v1545
        %v1567 = vunpack.c.l.b16 %v1546
        %v1568 = vunpack.c.h.b16 %v1546
        %v1569 = vunpack.c.l.b16 %v1547
        %v1570 = vunpack.c.h.b16 %v1547
        %v1571 = vunpack.c.l.b16 %v1548
        %v1572 = vunpack.c.h.b16 %v1548
        %v1573 = vpack.c.b16 %v1559, %v1557
        %v1574 = vpack.c.b16 %v1560, %v1558
        %v1575 = vpack.c.b16 %v1563, %v1561
        %v1576 = vpack.c.b16 %v1564, %v1562
        %v1577 = vpack.c.b16 %v1567, %v1565
        %v1578 = vpack.c.b16 %v1568, %v1566
        %v1579 = vpack.c.b16 %v1571, %v1569
        %v1580 = vpack.c.b16 %v1572, %v1570
        %v1590 = vsel %vm524, %v1539, 0
        %1592 = vmatprep.subr.bf16.mxu0 %v1574
        %1593 = vmatpush1.bf16.msra.mxu0 %v1573
        %1594 = vmatprep.subr.bf16.mxu0 %v1576
        %1595 = vmatpush1.bf16.msra.mxu0 %v1575
        %1596 = vmatprep.subr.bf16.mxu0 %v1578
        %1597 = vmatpush1.bf16.msra.mxu0 %v1577
        %1598 = vmatprep.subr.bf16.mxu0 %v1580
        %1599 = vmatpush1.bf16.msra.mxu0 %v1579
        %1600 = vmatprep.subr.bf16.mxu0 0
        %1601 = vmatpush1.bf16.msra.mxu0 0
        %1602 = vmatprep.subr.bf16.mxu0 0
        %1603 = vmatpush1.bf16.msra.mxu0 0
        %1604 = vmatprep.subr.bf16.mxu0 0
        %1605 = vmatpush1.bf16.msra.mxu0 0
        %1606 = vmatprep.subr.bf16.mxu0 0
        %1607 = vmatpush1.bf16.msra.mxu0 0
        %1608 = vmatprep.subr.bf16.mxu0 0
        %1609 = vmatpush1.bf16.msra.mxu0 0
        %1610 = vmatprep.subr.bf16.mxu0 0
        %1611 = vmatpush1.bf16.msra.mxu0 0
        %1612 = vmatprep.subr.bf16.mxu0 0
        %1613 = vmatpush1.bf16.msra.mxu0 0
        %1614 = vmatprep.subr.bf16.mxu0 0
        %1615 = vmatpush1.bf16.msra.mxu0 0
        %1616 = vmatprep.subr.bf16.mxu0 0
        %1617 = vmatpush1.bf16.msra.mxu0 0
        %1618 = vmatprep.subr.bf16.mxu0 0
        %1619 = vmatpush1.bf16.msra.mxu0 0
        %1620 = vmatprep.subr.bf16.mxu0 0
        %1621 = vmatpush1.bf16.msra.mxu0 0
        %1622 = vmatprep.subr.bf16.mxu0 0
        %1623 = vmatpush1.bf16.msra.mxu0 0
        %1624 = vmatprep.mubr.bf16.mxu0 0
        %1625 = vmatmul.mubr.bf16.gmra.mrb[0].mxu0 %v1590
        %v1626 = vpop.f32.mrb[0].mxu0
        %v1627 = vadd.f32 0.0, %v1626
        %v1628 = vpop.f32.mrb[0].mxu0
        %v1629 = vadd.f32 0.0, %v1628
        %v1630 = vpop.f32.mrb[0].mxu0
        %v1631 = vpop.f32.mrb[0].mxu0
        %1632 = vdwg.mxu0
        %v1633 = vmul.f32 %v1627, 8.0
        %v1634 = vpack.c.bf16 %v1633, %v1633
        %v1635 = vpack.c.bf16 %v1627, %v1627
        %1637 = vrot.lane.b32.xlu0 %v1635, 64
        %v1638 = vpop.permute.xlu0 %1637
        %v1640 = vsel %vm652, %v1634, 0
        %v1643 = vsel %vm652, %v1638, 0
        %1645 = vmatprep.subr.bf16.mxu0 0
        %1646 = vmatpush1.bf16.xpose.msra.mxu0 %v1643
        %1647 = vmatprep.subr.bf16.mxu0 0
        %1648 = vmatpush1.bf16.xpose.msra.mxu0 0
        %1649 = vmatprep.subr.bf16.mxu0 0
        %1650 = vmatpush1.bf16.xpose.msra.mxu0 0
        %1651 = vmatprep.subr.bf16.mxu0 0
        %1652 = vmatpush1.bf16.xpose.msra.mxu0 0
        %1653 = vmatprep.subr.bf16.mxu0 0
        %1654 = vmatpush1.bf16.xpose.msra.mxu0 0
        %1655 = vmatprep.subr.bf16.mxu0 0
        %1656 = vmatpush1.bf16.xpose.msra.mxu0 0
        %1657 = vmatprep.subr.bf16.mxu0 0
        %1658 = vmatpush1.bf16.xpose.msra.mxu0 0
        %1659 = vmatprep.subr.bf16.mxu0 0
        %1660 = vmatpush1.bf16.xpose.msra.mxu0 0
        %1661 = vmatprep.subr.bf16.mxu0 0
        %1662 = vmatpush1.bf16.xpose.msra.mxu0 0
        %1663 = vmatprep.subr.bf16.mxu0 0
        %1664 = vmatpush1.bf16.xpose.msra.mxu0 0
        %1665 = vmatprep.subr.bf16.mxu0 0
        %1666 = vmatpush1.bf16.xpose.msra.mxu0 0
        %1667 = vmatprep.subr.bf16.mxu0 0
        %1668 = vmatpush1.bf16.xpose.msra.mxu0 0
        %1669 = vmatprep.subr.bf16.mxu0 0
        %1670 = vmatpush1.bf16.xpose.msra.mxu0 0
        %1671 = vmatprep.subr.bf16.mxu0 0
        %1672 = vmatpush1.bf16.xpose.msra.mxu0 0
        %1673 = vmatprep.subr.bf16.mxu0 0
        %1674 = vmatpush1.bf16.xpose.msra.mxu0 0
        %1675 = vmatprep.subr.bf16.mxu0 0
        %1676 = vmatpush1.bf16.xpose.msra.mxu0 0
        %1677 = vmatprep.mubr.bf16.mxu0 0
        %1678 = vmatmul.mubr.bf16.gmra.mrb[0].mxu0 %v1640
        %v1679 = vpop.f32.mrb[0].mxu0
        %v1680 = vadd.f32 %v521, %v1679
        %v1681 = vpop.f32.mrb[0].mxu0
        %v1682 = vpop.f32.mrb[0].mxu0
        %v1683 = vpop.f32.mrb[0].mxu0
        %1684 = vdwg.mxu0
        %v1685 = vsel %vm699, %v1680, -inf
        %1686 = vmax.xlane.f32.xlu0 %v1685
        %v1687 = vpop.xlane.xlu0 %1686
        %v1688 = vsub.f32 %v1680, %v1687
        %v1689 = vmul.f32 %v1688, 1.442695
        %v1690 = vpow.pop %v1689
        %v1691 = vsel %vm699, %v1690, 0.0
        %1692 = vadd.xlane.f32.xlu0 %v1691
        %v1693 = vpop.xlane.xlu0 %1692
        %v1694 = vrcp.pop %v1693
        %v1695 = vmul.f32 %v1690, %v1694
        %v1696 = vpack.c.bf16 %v1695, %v1695
        %v1697 = vpack.c.bf16 %v1629, %v1629
        %v1699 = vsel %vm699, %v1696, 0
        %v1702 = vsel %vm716, %v1697, 0
        %1704 = vmatprep.subr.bf16.mxu0 0
        %1705 = vmatpush1.bf16.msra.mxu0 %v1702
        %1706 = vmatprep.subr.bf16.mxu0 0
        %1707 = vmatpush1.bf16.msra.mxu0 0
        %1708 = vmatprep.subr.bf16.mxu0 0
        %1709 = vmatpush1.bf16.msra.mxu0 0
        %1710 = vmatprep.subr.bf16.mxu0 0
        %1711 = vmatpush1.bf16.msra.mxu0 0
        %1712 = vmatprep.subr.bf16.mxu0 0
        %1713 = vmatpush1.bf16.msra.mxu0 0
        %1714 = vmatprep.subr.bf16.mxu0 0
        %1715 = vmatpush1.bf16.msra.mxu0 0
        %1716 = vmatprep.subr.bf16.mxu0 0
        %1717 = vmatpush1.bf16.msra.mxu0 0
        %1718 = vmatprep.subr.bf16.mxu0 0
        %1719 = vmatpush1.bf16.msra.mxu0 0
        %1720 = vmatprep.subr.bf16.mxu0 0
        %1721 = vmatpush1.bf16.msra.mxu0 0
        %1722 = vmatprep.subr.bf16.mxu0 0
        %1723 = vmatpush1.bf16.msra.mxu0 0
        %1724 = vmatprep.subr.bf16.mxu0 0
        %1725 = vmatpush1.bf16.msra.mxu0 0
        %1726 = vmatprep.subr.bf16.mxu0 0
        %1727 = vmatpush1.bf16.msra.mxu0 0
        %1728 = vmatprep.subr.bf16.mxu0 0
        %1729 = vmatpush1.bf16.msra.mxu0 0
        %1730 = vmatprep.subr.bf16.mxu0 0
        %1731 = vmatpush1.bf16.msra.mxu0 0
        %1732 = vmatprep.subr.bf16.mxu0 0
        %1733 = vmatpush1.bf16.msra.mxu0 0
        %1734 = vmatprep.subr.bf16.mxu0 0
        %1735 = vmatpush1.bf16.msra.mxu0 0
        %1736 = vmatprep.mubr.bf16.mxu0 0
        %1737 = vmatmul.mubr.bf16.gmra.mrb[0].mxu0 %v1699
        %v1738 = vpop.f32.mrb[0].mxu0
        %v1739 = vadd.f32 0.0, %v1738
        %v1740 = vpop.f32.mrb[0].mxu0
        %v1741 = vpop.f32.mrb[0].mxu0
        %v1742 = vpop.f32.mrb[0].mxu0
        %1743 = vdwg.mxu0
        %1745 = vrot.lane.b32.xlu0 %v1634, 112
        %v1746 = vpop.permute.xlu0 %1745
        %1747 = vrot.lane.b32.xlu0 %v1635, 48
        %v1748 = vpop.permute.xlu0 %1747
        %v1750 = vsel %vm652, %v1746, 0
        %v1753 = vsel %vm652, %v1748, 0
        %1755 = vmatprep.subr.bf16.mxu0 0
        %1756 = vmatpush1.bf16.xpose.msra.mxu0 %v1753
        %1757 = vmatprep.subr.bf16.mxu0 0
        %1758 = vmatpush1.bf16.xpose.msra.mxu0 0
        %1759 = vmatprep.subr.bf16.mxu0 0
        %1760 = vmatpush1.bf16.xpose.msra.mxu0 0
        %1761 = vmatprep.subr.bf16.mxu0 0
        %1762 = vmatpush1.bf16.xpose.msra.mxu0 0
        %1763 = vmatprep.subr.bf16.mxu0 0
        %1764 = vmatpush1.bf16.xpose.msra.mxu0 0
        %1765 = vmatprep.subr.bf16.mxu0 0
        %1766 = vmatpush1.bf16.xpose.msra.mxu0 0
        %1767 = vmatprep.subr.bf16.mxu0 0
        %1768 = vmatpush1.bf16.xpose.msra.mxu0 0
        %1769 = vmatprep.subr.bf16.mxu0 0
        %1770 = vmatpush1.bf16.xpose.msra.mxu0 0
        %1771 = vmatprep.subr.bf16.mxu0 0
        %1772 = vmatpush1.bf16.xpose.msra.mxu0 0
        %1773 = vmatprep.subr.bf16.mxu0 0
        %1774 = vmatpush1.bf16.xpose.msra.mxu0 0
        %1775 = vmatprep.subr.bf16.mxu0 0
        %1776 = vmatpush1.bf16.xpose.msra.mxu0 0
        %1777 = vmatprep.subr.bf16.mxu0 0
        %1778 = vmatpush1.bf16.xpose.msra.mxu0 0
        %1779 = vmatprep.subr.bf16.mxu0 0
        %1780 = vmatpush1.bf16.xpose.msra.mxu0 0
        %1781 = vmatprep.subr.bf16.mxu0 0
        %1782 = vmatpush1.bf16.xpose.msra.mxu0 0
        %1783 = vmatprep.subr.bf16.mxu0 0
        %1784 = vmatpush1.bf16.xpose.msra.mxu0 0
        %1785 = vmatprep.subr.bf16.mxu0 0
        %1786 = vmatpush1.bf16.xpose.msra.mxu0 0
        %1787 = vmatprep.mubr.bf16.mxu0 0
        %1788 = vmatmul.mubr.bf16.gmra.mrb[0].mxu0 %v1750
        %v1789 = vpop.f32.mrb[0].mxu0
        %v1790 = vadd.f32 %v521, %v1789
        %v1791 = vpop.f32.mrb[0].mxu0
        %v1792 = vpop.f32.mrb[0].mxu0
        %v1793 = vpop.f32.mrb[0].mxu0
        %1794 = vdwg.mxu0
        %v1795 = vsel %vm699, %v1790, -inf
        %1796 = vmax.xlane.f32.xlu0 %v1795
        %v1797 = vpop.xlane.xlu0 %1796
        %v1798 = vsub.f32 %v1790, %v1797
        %v1799 = vmul.f32 %v1798, 1.442695
        %v1800 = vpow.pop %v1799
        %v1801 = vsel %vm699, %v1800, 0.0
        %1802 = vadd.xlane.f32.xlu0 %v1801
        %v1803 = vpop.xlane.xlu0 %1802
        %v1804 = vrcp.pop %v1803
        %v1805 = vmul.f32 %v1800, %v1804
        %v1806 = vpack.c.bf16 %v1805, %v1805
        %1808 = vrot.lane.b32.xlu0 %v1697, 112
        %v1809 = vpop.permute.xlu0 %1808
        %v1811 = vsel %vm699, %v1806, 0
        %v1814 = vsel %vm716, %v1809, 0
        %1816 = vmatprep.subr.bf16.mxu0 0
        %1817 = vmatpush1.bf16.msra.mxu0 %v1814
        %1818 = vmatprep.subr.bf16.mxu0 0
        %1819 = vmatpush1.bf16.msra.mxu0 0
        %1820 = vmatprep.subr.bf16.mxu0 0
        %1821 = vmatpush1.bf16.msra.mxu0 0
        %1822 = vmatprep.subr.bf16.mxu0 0
        %1823 = vmatpush1.bf16.msra.mxu0 0
        %1824 = vmatprep.subr.bf16.mxu0 0
        %1825 = vmatpush1.bf16.msra.mxu0 0
        %1826 = vmatprep.subr.bf16.mxu0 0
        %1827 = vmatpush1.bf16.msra.mxu0 0
        %1828 = vmatprep.subr.bf16.mxu0 0
        %1829 = vmatpush1.bf16.msra.mxu0 0
        %1830 = vmatprep.subr.bf16.mxu0 0
        %1831 = vmatpush1.bf16.msra.mxu0 0
        %1832 = vmatprep.subr.bf16.mxu0 0
        %1833 = vmatpush1.bf16.msra.mxu0 0
        %1834 = vmatprep.subr.bf16.mxu0 0
        %1835 = vmatpush1.bf16.msra.mxu0 0
        %1836 = vmatprep.subr.bf16.mxu0 0
        %1837 = vmatpush1.bf16.msra.mxu0 0
        %1838 = vmatprep.subr.bf16.mxu0 0
        %1839 = vmatpush1.bf16.msra.mxu0 0
        %1840 = vmatprep.subr.bf16.mxu0 0
        %1841 = vmatpush1.bf16.msra.mxu0 0
        %1842 = vmatprep.subr.bf16.mxu0 0
        %1843 = vmatpush1.bf16.msra.mxu0 0
        %1844 = vmatprep.subr.bf16.mxu0 0
        %1845 = vmatpush1.bf16.msra.mxu0 0
        %1846 = vmatprep.subr.bf16.mxu0 0
        %1847 = vmatpush1.bf16.msra.mxu0 0
        %1848 = vmatprep.mubr.bf16.mxu0 0
        %1849 = vmatmul.mubr.bf16.gmra.mrb[0].mxu0 %v1811
        %v1850 = vpop.f32.mrb[0].mxu0
        %v1851 = vadd.f32 0.0, %v1850
        %v1852 = vpop.f32.mrb[0].mxu0
        %v1853 = vpop.f32.mrb[0].mxu0
        %v1854 = vpop.f32.mrb[0].mxu0
        %1855 = vdwg.mxu0
        %1856 = vrot.lane.b32.xlu0 %v1634, 96
        %v1857 = vpop.permute.xlu0 %1856
        %1858 = vrot.lane.b32.xlu0 %v1635, 32
        %v1859 = vpop.permute.xlu0 %1858
        %v1861 = vsel %vm652, %v1857, 0
        %v1864 = vsel %vm652, %v1859, 0
        %1866 = vmatprep.subr.bf16.mxu0 0
        %1867 = vmatpush1.bf16.xpose.msra.mxu0 %v1864
        %1868 = vmatprep.subr.bf16.mxu0 0
        %1869 = vmatpush1.bf16.xpose.msra.mxu0 0
        %1870 = vmatprep.subr.bf16.mxu0 0
        %1871 = vmatpush1.bf16.xpose.msra.mxu0 0
        %1872 = vmatprep.subr.bf16.mxu0 0
        %1873 = vmatpush1.bf16.xpose.msra.mxu0 0
        %1874 = vmatprep.subr.bf16.mxu0 0
        %1875 = vmatpush1.bf16.xpose.msra.mxu0 0
        %1876 = vmatprep.subr.bf16.mxu0 0
        %1877 = vmatpush1.bf16.xpose.msra.mxu0 0
        %1878 = vmatprep.subr.bf16.mxu0 0
        %1879 = vmatpush1.bf16.xpose.msra.mxu0 0
        %1880 = vmatprep.subr.bf16.mxu0 0
        %1881 = vmatpush1.bf16.xpose.msra.mxu0 0
        %1882 = vmatprep.subr.bf16.mxu0 0
        %1883 = vmatpush1.bf16.xpose.msra.mxu0 0
        %1884 = vmatprep.subr.bf16.mxu0 0
        %1885 = vmatpush1.bf16.xpose.msra.mxu0 0
        %1886 = vmatprep.subr.bf16.mxu0 0
        %1887 = vmatpush1.bf16.xpose.msra.mxu0 0
        %1888 = vmatprep.subr.bf16.mxu0 0
        %1889 = vmatpush1.bf16.xpose.msra.mxu0 0
        %1890 = vmatprep.subr.bf16.mxu0 0
        %1891 = vmatpush1.bf16.xpose.msra.mxu0 0
        %1892 = vmatprep.subr.bf16.mxu0 0
        %1893 = vmatpush1.bf16.xpose.msra.mxu0 0
        %1894 = vmatprep.subr.bf16.mxu0 0
        %1895 = vmatpush1.bf16.xpose.msra.mxu0 0
        %1896 = vmatprep.subr.bf16.mxu0 0
        %1897 = vmatpush1.bf16.xpose.msra.mxu0 0
        %1898 = vmatprep.mubr.bf16.mxu0 0
        %1899 = vmatmul.mubr.bf16.gmra.mrb[0].mxu0 %v1861
        %v1900 = vpop.f32.mrb[0].mxu0
        %v1901 = vadd.f32 %v521, %v1900
        %v1902 = vpop.f32.mrb[0].mxu0
        %v1903 = vpop.f32.mrb[0].mxu0
        %v1904 = vpop.f32.mrb[0].mxu0
        %1905 = vdwg.mxu0
        %v1906 = vsel %vm699, %v1901, -inf
        %1907 = vmax.xlane.f32.xlu0 %v1906
        %v1908 = vpop.xlane.xlu0 %1907
        %v1909 = vsub.f32 %v1901, %v1908
        %v1910 = vmul.f32 %v1909, 1.442695
        %v1911 = vpow.pop %v1910
        %v1912 = vsel %vm699, %v1911, 0.0
        %1913 = vadd.xlane.f32.xlu0 %v1912
        %v1914 = vpop.xlane.xlu0 %1913
        %v1915 = vrcp.pop %v1914
        %v1916 = vmul.f32 %v1911, %v1915
        %v1917 = vpack.c.bf16 %v1916, %v1916
        %1918 = vrot.lane.b32.xlu0 %v1697, 96
        %v1919 = vpop.permute.xlu0 %1918
        %v1921 = vsel %vm699, %v1917, 0
        %v1924 = vsel %vm716, %v1919, 0
        %1926 = vmatprep.subr.bf16.mxu0 0
        %1927 = vmatpush1.bf16.msra.mxu0 %v1924
        %1928 = vmatprep.subr.bf16.mxu0 0
        %1929 = vmatpush1.bf16.msra.mxu0 0
        %1930 = vmatprep.subr.bf16.mxu0 0
        %1931 = vmatpush1.bf16.msra.mxu0 0
        %1932 = vmatprep.subr.bf16.mxu0 0
        %1933 = vmatpush1.bf16.msra.mxu0 0
        %1934 = vmatprep.subr.bf16.mxu0 0
        %1935 = vmatpush1.bf16.msra.mxu0 0
        %1936 = vmatprep.subr.bf16.mxu0 0
        %1937 = vmatpush1.bf16.msra.mxu0 0
        %1938 = vmatprep.subr.bf16.mxu0 0
        %1939 = vmatpush1.bf16.msra.mxu0 0
        %1940 = vmatprep.subr.bf16.mxu0 0
        %1941 = vmatpush1.bf16.msra.mxu0 0
        %1942 = vmatprep.subr.bf16.mxu0 0
        %1943 = vmatpush1.bf16.msra.mxu0 0
        %1944 = vmatprep.subr.bf16.mxu0 0
        %1945 = vmatpush1.bf16.msra.mxu0 0
        %1946 = vmatprep.subr.bf16.mxu0 0
        %1947 = vmatpush1.bf16.msra.mxu0 0
        %1948 = vmatprep.subr.bf16.mxu0 0
        %1949 = vmatpush1.bf16.msra.mxu0 0
        %1950 = vmatprep.subr.bf16.mxu0 0
        %1951 = vmatpush1.bf16.msra.mxu0 0
        %1952 = vmatprep.subr.bf16.mxu0 0
        %1953 = vmatpush1.bf16.msra.mxu0 0
        %1954 = vmatprep.subr.bf16.mxu0 0
        %1955 = vmatpush1.bf16.msra.mxu0 0
        %1956 = vmatprep.subr.bf16.mxu0 0
        %1957 = vmatpush1.bf16.msra.mxu0 0
        %1958 = vmatprep.mubr.bf16.mxu0 0
        %1959 = vmatmul.mubr.bf16.gmra.mrb[0].mxu0 %v1921
        %v1960 = vpop.f32.mrb[0].mxu0
        %v1961 = vadd.f32 0.0, %v1960
        %v1962 = vpop.f32.mrb[0].mxu0
        %v1963 = vpop.f32.mrb[0].mxu0
        %v1964 = vpop.f32.mrb[0].mxu0
        %1965 = vdwg.mxu0
        %1966 = vrot.lane.b32.xlu0 %v1634, 80
        %v1967 = vpop.permute.xlu0 %1966
        %1968 = vrot.lane.b32.xlu0 %v1635, 16
        %v1969 = vpop.permute.xlu0 %1968
        %v1971 = vsel %vm652, %v1967, 0
        %v1974 = vsel %vm652, %v1969, 0
        %1976 = vmatprep.subr.bf16.mxu0 0
        %1977 = vmatpush1.bf16.xpose.msra.mxu0 %v1974
        %1978 = vmatprep.subr.bf16.mxu0 0
        %1979 = vmatpush1.bf16.xpose.msra.mxu0 0
        %1980 = vmatprep.subr.bf16.mxu0 0
        %1981 = vmatpush1.bf16.xpose.msra.mxu0 0
        %1982 = vmatprep.subr.bf16.mxu0 0
        %1983 = vmatpush1.bf16.xpose.msra.mxu0 0
        %1984 = vmatprep.subr.bf16.mxu0 0
        %1985 = vmatpush1.bf16.xpose.msra.mxu0 0
        %1986 = vmatprep.subr.bf16.mxu0 0
        %1987 = vmatpush1.bf16.xpose.msra.mxu0 0
        %1988 = vmatprep.subr.bf16.mxu0 0
        %1989 = vmatpush1.bf16.xpose.msra.mxu0 0
        %1990 = vmatprep.subr.bf16.mxu0 0
        %1991 = vmatpush1.bf16.xpose.msra.mxu0 0
        %1992 = vmatprep.subr.bf16.mxu0 0
        %1993 = vmatpush1.bf16.xpose.msra.mxu0 0
        %1994 = vmatprep.subr.bf16.mxu0 0
        %1995 = vmatpush1.bf16.xpose.msra.mxu0 0
        %1996 = vmatprep.subr.bf16.mxu0 0
        %1997 = vmatpush1.bf16.xpose.msra.mxu0 0
        %1998 = vmatprep.subr.bf16.mxu0 0
        %1999 = vmatpush1.bf16.xpose.msra.mxu0 0
        %2000 = vmatprep.subr.bf16.mxu0 0
        %2001 = vmatpush1.bf16.xpose.msra.mxu0 0
        %2002 = vmatprep.subr.bf16.mxu0 0
        %2003 = vmatpush1.bf16.xpose.msra.mxu0 0
        %2004 = vmatprep.subr.bf16.mxu0 0
        %2005 = vmatpush1.bf16.xpose.msra.mxu0 0
        %2006 = vmatprep.subr.bf16.mxu0 0
        %2007 = vmatpush1.bf16.xpose.msra.mxu0 0
        %2008 = vmatprep.mubr.bf16.mxu0 0
        %2009 = vmatmul.mubr.bf16.gmra.mrb[0].mxu0 %v1971
        %v2010 = vpop.f32.mrb[0].mxu0
        %v2011 = vadd.f32 %v521, %v2010
        %v2012 = vpop.f32.mrb[0].mxu0
        %v2013 = vpop.f32.mrb[0].mxu0
        %v2014 = vpop.f32.mrb[0].mxu0
        %2015 = vdwg.mxu0
        %v2016 = vsel %vm699, %v2011, -inf
        %2017 = vmax.xlane.f32.xlu0 %v2016
        %v2018 = vpop.xlane.xlu0 %2017
        %v2019 = vsub.f32 %v2011, %v2018
        %v2020 = vmul.f32 %v2019, 1.442695
        %v2021 = vpow.pop %v2020
        %v2022 = vsel %vm699, %v2021, 0.0
        %2023 = vadd.xlane.f32.xlu0 %v2022
        %v2024 = vpop.xlane.xlu0 %2023
        %v2025 = vrcp.pop %v2024
        %v2026 = vmul.f32 %v2021, %v2025
        %v2027 = vpack.c.bf16 %v2026, %v2026
        %2028 = vrot.lane.b32.xlu0 %v1697, 80
        %v2029 = vpop.permute.xlu0 %2028
        %v2031 = vsel %vm699, %v2027, 0
        %v2034 = vsel %vm716, %v2029, 0
        %2036 = vmatprep.subr.bf16.mxu0 0
        %2037 = vmatpush1.bf16.msra.mxu0 %v2034
        %2038 = vmatprep.subr.bf16.mxu0 0
        %2039 = vmatpush1.bf16.msra.mxu0 0
        %2040 = vmatprep.subr.bf16.mxu0 0
        %2041 = vmatpush1.bf16.msra.mxu0 0
        %2042 = vmatprep.subr.bf16.mxu0 0
        %2043 = vmatpush1.bf16.msra.mxu0 0
        %2044 = vmatprep.subr.bf16.mxu0 0
        %2045 = vmatpush1.bf16.msra.mxu0 0
        %2046 = vmatprep.subr.bf16.mxu0 0
        %2047 = vmatpush1.bf16.msra.mxu0 0
        %2048 = vmatprep.subr.bf16.mxu0 0
        %2049 = vmatpush1.bf16.msra.mxu0 0
        %2050 = vmatprep.subr.bf16.mxu0 0
        %2051 = vmatpush1.bf16.msra.mxu0 0
        %2052 = vmatprep.subr.bf16.mxu0 0
        %2053 = vmatpush1.bf16.msra.mxu0 0
        %2054 = vmatprep.subr.bf16.mxu0 0
        %2055 = vmatpush1.bf16.msra.mxu0 0
        %2056 = vmatprep.subr.bf16.mxu0 0
        %2057 = vmatpush1.bf16.msra.mxu0 0
        %2058 = vmatprep.subr.bf16.mxu0 0
        %2059 = vmatpush1.bf16.msra.mxu0 0
        %2060 = vmatprep.subr.bf16.mxu0 0
        %2061 = vmatpush1.bf16.msra.mxu0 0
        %2062 = vmatprep.subr.bf16.mxu0 0
        %2063 = vmatpush1.bf16.msra.mxu0 0
        %2064 = vmatprep.subr.bf16.mxu0 0
        %2065 = vmatpush1.bf16.msra.mxu0 0
        %2066 = vmatprep.subr.bf16.mxu0 0
        %2067 = vmatpush1.bf16.msra.mxu0 0
        %2068 = vmatprep.mubr.bf16.mxu0 0
        %2069 = vmatmul.mubr.bf16.gmra.mrb[0].mxu0 %v2031
        %v2070 = vpop.f32.mrb[0].mxu0
        %v2071 = vadd.f32 0.0, %v2070
        %v2072 = vpop.f32.mrb[0].mxu0
        %v2073 = vpop.f32.mrb[0].mxu0
        %v2074 = vpop.f32.mrb[0].mxu0
        %2075 = vdwg.mxu0
        %2077 = vrot.lane.b32.xlu0 %v1851, 16
        %v2078 = vpop.permute.xlu0 %2077
        %2081 = vrot.lane.b32.xlu0 %v1961, 32
        %v2082 = vpop.permute.xlu0 %2081
        %2085 = vrot.lane.b32.xlu0 %v2071, 48
        %v2086 = vpop.permute.xlu0 %2085
        %v2088 = vsel %vm652, %v1739, %v2078
        %v2089 = vsel %vm1105, %v2088, %v2082
        %v2090 = vsel %vm1107, %v2089, %v2086
        %v2091 = vpack.c.bf16 %v2090, %v2090
        %s2092 = scalar_lea.vmem %s6, 32
        %v2093 = vld [vmem:[%s2092] sm:$0xf]
        %v2094 = vld [vmem:[%s2092 + $0x4] sm:$0xf]
        %v2095 = vld [vmem:[%s2092 + $0x8] sm:$0xf]
        %v2096 = vld [vmem:[%s2092 + $0xc] sm:$0xf]
        %v2097 = vld [vmem:[%s2092 + $0x10] sm:$0xf]
        %v2098 = vld [vmem:[%s2092 + $0x14] sm:$0xf]
        %v2099 = vld [vmem:[%s2092 + $0x18] sm:$0xf]
        %v2100 = vld [vmem:[%s2092 + $0x1c] sm:$0xf]
        %s2101 = scalar_lea.vmem %s7, 1
        %v2102 = vld [vmem:[%s2101] sm:$0x1]
        %v2104 = vlaneseq
        %v2105 = vshrl.u32 %v2104, 7
        %v2106 = vsub.s32 0, %v2105
        %v2107 = vrot.slane %v2102, %v2106
        %v2117 = vunpack.c.l.b16 %v2093
        %v2118 = vunpack.c.l.b16 %v2094
        %v2119 = vunpack.c.l.b16 %v2095
        %v2120 = vunpack.c.l.b16 %v2096
        %v2121 = vunpack.c.l.b16 %v2097
        %v2122 = vunpack.c.l.b16 %v2098
        %v2123 = vunpack.c.l.b16 %v2099
        %v2124 = vunpack.c.l.b16 %v2100
        %v2125 = vpack.c.b16 %v2118, %v2117
        %v2126 = vpack.c.b16 %v2120, %v2119
        %v2127 = vpack.c.b16 %v2122, %v2121
        %v2128 = vpack.c.b16 %v2124, %v2123
        %v2134 = vsel %vm524, %v2091, 0
        %2136 = vmatprep.subr.bf16.mxu0 0
        %2137 = vmatpush1.bf16.msra.mxu0 %v2125
        %2138 = vmatprep.subr.bf16.mxu0 0
        %2139 = vmatpush1.bf16.msra.mxu0 %v2126
        %2140 = vmatprep.subr.bf16.mxu0 0
        %2141 = vmatpush1.bf16.msra.mxu0 %v2127
        %2142 = vmatprep.subr.bf16.mxu0 0
        %2143 = vmatpush1.bf16.msra.mxu0 %v2128
        %2144 = vmatprep.subr.bf16.mxu0 0
        %2145 = vmatpush1.bf16.msra.mxu0 0
        %2146 = vmatprep.subr.bf16.mxu0 0
        %2147 = vmatpush1.bf16.msra.mxu0 0
        %2148 = vmatprep.subr.bf16.mxu0 0
        %2149 = vmatpush1.bf16.msra.mxu0 0
        %2150 = vmatprep.subr.bf16.mxu0 0
        %2151 = vmatpush1.bf16.msra.mxu0 0
        %2152 = vmatprep.subr.bf16.mxu0 0
        %2153 = vmatpush1.bf16.msra.mxu0 0
        %2154 = vmatprep.subr.bf16.mxu0 0
        %2155 = vmatpush1.bf16.msra.mxu0 0
        %2156 = vmatprep.subr.bf16.mxu0 0
        %2157 = vmatpush1.bf16.msra.mxu0 0
        %2158 = vmatprep.subr.bf16.mxu0 0
        %2159 = vmatpush1.bf16.msra.mxu0 0
        %2160 = vmatprep.subr.bf16.mxu0 0
        %2161 = vmatpush1.bf16.msra.mxu0 0
        %2162 = vmatprep.subr.bf16.mxu0 0
        %2163 = vmatpush1.bf16.msra.mxu0 0
        %2164 = vmatprep.subr.bf16.mxu0 0
        %2165 = vmatpush1.bf16.msra.mxu0 0
        %2166 = vmatprep.subr.bf16.mxu0 0
        %2167 = vmatpush1.bf16.msra.mxu0 0
        %2168 = vmatprep.mubr.bf16.mxu0 0
        %2169 = vmatmul.mubr.bf16.gmra.mrb[0].mxu0 %v2134
        %v2170 = vpop.f32.mrb[0].mxu0
        %v2171 = vadd.f32 %v2107, %v2170
        %v2172 = vpop.f32.mrb[0].mxu0
        %v2173 = vpop.f32.mrb[0].mxu0
        %v2174 = vpop.f32.mrb[0].mxu0
        %2175 = vdwg.mxu0
        %v2176 = vadd.f32 %v1507, %v2171
        %s2177 = scalar_lea.vmem %s8, 1
        %v2178 = vld [vmem:[%s2177] sm:$0x1]
        %s2179 = scalar_lea.vmem %s9, 1
        %v2180 = vld [vmem:[%s2179] sm:$0x1]
        %v2181 = vsel %vm524, %v2176, 0.0
        %2182 = vadd.xlane.f32.xlu0 %v2181
        %v2183 = vpop.xlane.xlu0 %2182
        %v2184 = vmul.f32 %v2183, %v528
        %v2185 = vsub.f32 %v2176, %v2184
        %v2186 = vmul.f32 %v2185, %v2185
        %v2187 = vsel %vm524, %v2186, 0.0
        %2188 = vadd.xlane.f32.xlu0 %v2187
        %v2189 = vpop.xlane.xlu0 %2188
        %v2190 = vmul.f32 %v2189, %v528
        %v2191 = vadd.f32 %v2190, 1e-05
        %v2192 = vrsqrt.pop %v2191
        %v2193 = vmul.f32 %v2185, %v2192
        %v2195 = vlaneseq
        %v2196 = vshrl.u32 %v2195, 7
        %v2197 = vsub.s32 0, %v2196
        %v2198 = vrot.slane %v2178, %v2197
        %v2200 = vmul.f32 %v2193, %v2198
        %v2202 = vlaneseq
        %v2203 = vshrl.u32 %v2202, 7
        %v2204 = vsub.s32 0, %v2203
        %v2205 = vrot.slane %v2180, %v2204
        %v2207 = vadd.f32 %v2200, %v2205
        %v2208 = vpack.c.bf16 %v2207, %v2207
        %s2209 = scalar_lea.vmem %s10, 64
        %v2210 = vld [vmem:[%s2209] sm:$0xff]
        %v2211 = vld [vmem:[%s2209 + $0x8] sm:$0xff]
        %v2212 = vld [vmem:[%s2209 + $0x10] sm:$0xff]
        %v2213 = vld [vmem:[%s2209 + $0x18] sm:$0xff]
        %v2214 = vld [vmem:[%s2209 + $0x20] sm:$0xff]
        %v2215 = vld [vmem:[%s2209 + $0x28] sm:$0xff]
        %v2216 = vld [vmem:[%s2209 + $0x30] sm:$0xff]
        %v2217 = vld [vmem:[%s2209 + $0x38] sm:$0xff]
        %s2218 = scalar_lea.vmem %s11, 2
        %v2219 = vld [vmem:[%s2218] sm:$0x3]
        %v2221 = vlaneseq
        %v2222 = vshrl.u32 %v2221, 7
        %v2223 = vsub.s32 0, %v2222
        %v2224 = vrot.slane %v2219, %v2223
        %v2225 = vlaneseq
        %v2226 = vshrl.u32 %v2225, 7
        %v2227 = vsub.s32 1, %v2226
        %v2228 = vrot.slane %v2219, %v2227
        %v2239 = vunpack.c.l.b16 %v2210
        %v2240 = vunpack.c.h.b16 %v2210
        %v2241 = vunpack.c.l.b16 %v2211
        %v2242 = vunpack.c.h.b16 %v2211
        %v2243 = vunpack.c.l.b16 %v2212
        %v2244 = vunpack.c.h.b16 %v2212
        %v2245 = vunpack.c.l.b16 %v2213
        %v2246 = vunpack.c.h.b16 %v2213
        %v2247 = vunpack.c.l.b16 %v2214
        %v2248 = vunpack.c.h.b16 %v2214
        %v2249 = vunpack.c.l.b16 %v2215
        %v2250 = vunpack.c.h.b16 %v2215
        %v2251 = vunpack.c.l.b16 %v2216
        %v2252 = vunpack.c.h.b16 %v2216
        %v2253 = vunpack.c.l.b16 %v2217
        %v2254 = vunpack.c.h.b16 %v2217
        %v2255 = vpack.c.b16 %v2241, %v2239
        %v2256 = vpack.c.b16 %v2242, %v2240
        %v2257 = vpack.c.b16 %v2245, %v2243
        %v2258 = vpack.c.b16 %v2246, %v2244
        %v2259 = vpack.c.b16 %v2249, %v2247
        %v2260 = vpack.c.b16 %v2250, %v2248
        %v2261 = vpack.c.b16 %v2253, %v2251
        %v2262 = vpack.c.b16 %v2254, %v2252
        %v2272 = vsel %vm524, %v2208, 0
        %2274 = vmatprep.subr.bf16.mxu0 %v2256
        %2275 = vmatpush1.bf16.msra.mxu0 %v2255
        %2276 = vmatprep.subr.bf16.mxu0 %v2258
        %2277 = vmatpush1.bf16.msra.mxu0 %v2257
        %2278 = vmatprep.subr.bf16.mxu0 %v2260
        %2279 = vmatpush1.bf16.msra.mxu0 %v2259
        %2280 = vmatprep.subr.bf16.mxu0 %v2262
        %2281 = vmatpush1.bf16.msra.mxu0 %v2261
        %2282 = vmatprep.subr.bf16.mxu0 0
        %2283 = vmatpush1.bf16.msra.mxu0 0
        %2284 = vmatprep.subr.bf16.mxu0 0
        %2285 = vmatpush1.bf16.msra.mxu0 0
        %2286 = vmatprep.subr.bf16.mxu0 0
        %2287 = vmatpush1.bf16.msra.mxu0 0
        %2288 = vmatprep.subr.bf16.mxu0 0
        %2289 = vmatpush1.bf16.msra.mxu0 0
        %2290 = vmatprep.subr.bf16.mxu0 0
        %2291 = vmatpush1.bf16.msra.mxu0 0
        %2292 = vmatprep.subr.bf16.mxu0 0
        %2293 = vmatpush1.bf16.msra.mxu0 0
        %2294 = vmatprep.subr.bf16.mxu0 0
        %2295 = vmatpush1.bf16.msra.mxu0 0
        %2296 = vmatprep.subr.bf16.mxu0 0
        %2297 = vmatpush1.bf16.msra.mxu0 0
        %2298 = vmatprep.subr.bf16.mxu0 0
        %2299 = vmatpush1.bf16.msra.mxu0 0
        %2300 = vmatprep.subr.bf16.mxu0 0
        %2301 = vmatpush1.bf16.msra.mxu0 0
        %2302 = vmatprep.subr.bf16.mxu0 0
        %2303 = vmatpush1.bf16.msra.mxu0 0
        %2304 = vmatprep.subr.bf16.mxu0 0
        %2305 = vmatpush1.bf16.msra.mxu0 0
        %2306 = vmatprep.mubr.bf16.mxu0 0
        %2307 = vmatmul.mubr.bf16.gmra.mrb[0].mxu0 %v2272
        %v2308 = vpop.f32.mrb[0].mxu0
        %v2309 = vadd.f32 %v2224, %v2308
        %v2310 = vpop.f32.mrb[0].mxu0
        %v2311 = vadd.f32 %v2228, %v2310
        %v2312 = vpop.f32.mrb[0].mxu0
        %v2313 = vpop.f32.mrb[0].mxu0
        %2314 = vdwg.mxu0
        %v2315 = vmax.f32 %v2309, 0.0
        %v2316 = vmax.f32 %v2311, 0.0
        %v2317 = vpack.c.bf16 %v2315, %v2315
        %v2318 = vpack.c.bf16 %v2316, %v2316
        %s2319 = scalar_lea.vmem %s12, 128
        %v2320 = vld [vmem:[%s2319] sm:$0xf]
        %v2321 = vld [vmem:[%s2319 + $0x4] sm:$0xf]
        %v2322 = vld [vmem:[%s2319 + $0x8] sm:$0xf]
        %v2323 = vld [vmem:[%s2319 + $0xc] sm:$0xf]
        %v2324 = vld [vmem:[%s2319 + $0x10] sm:$0xf]
        %v2325 = vld [vmem:[%s2319 + $0x14] sm:$0xf]
        %v2326 = vld [vmem:[%s2319 + $0x18] sm:$0xf]
        %v2327 = vld [vmem:[%s2319 + $0x1c] sm:$0xf]
        %v2328 = vld [vmem:[%s2319 + $0x20] sm:$0xf]
        %v2329 = vld [vmem:[%s2319 + $0x24] sm:$0xf]
        %v2330 = vld [vmem:[%s2319 + $0x28] sm:$0xf]
        %v2331 = vld [vmem:[%s2319 + $0x2c] sm:$0xf]
        %v2332 = vld [vmem:[%s2319 + $0x30] sm:$0xf]
        %v2333 = vld [vmem:[%s2319 + $0x34] sm:$0xf]
        %v2334 = vld [vmem:[%s2319 + $0x38] sm:$0xf]
        %v2335 = vld [vmem:[%s2319 + $0x3c] sm:$0xf]
        %v2336 = vld [vmem:[%s2319 + $0x40] sm:$0xf]
        %v2337 = vld [vmem:[%s2319 + $0x44] sm:$0xf]
        %v2338 = vld [vmem:[%s2319 + $0x48] sm:$0xf]
        %v2339 = vld [vmem:[%s2319 + $0x4c] sm:$0xf]
        %v2340 = vld [vmem:[%s2319 + $0x50] sm:$0xf]
        %v2341 = vld [vmem:[%s2319 + $0x54] sm:$0xf]
        %v2342 = vld [vmem:[%s2319 + $0x58] sm:$0xf]
        %v2343 = vld [vmem:[%s2319 + $0x5c] sm:$0xf]
        %v2344 = vld [vmem:[%s2319 + $0x60] sm:$0xf]
        %v2345 = vld [vmem:[%s2319 + $0x64] sm:$0xf]
        %v2346 = vld [vmem:[%s2319 + $0x68] sm:$0xf]
        %v2347 = vld [vmem:[%s2319 + $0x6c] sm:$0xf]
        %v2348 = vld [vmem:[%s2319 + $0x70] sm:$0xf]
        %v2349 = vld [vmem:[%s2319 + $0x74] sm:$0xf]
        %v2350 = vld [vmem:[%s2319 + $0x78] sm:$0xf]
        %v2351 = vld [vmem:[%s2319 + $0x7c] sm:$0xf]
        %v2384 = vunpack.c.l.b16 %v2320
        %v2385 = vunpack.c.l.b16 %v2321
        %v2386 = vunpack.c.l.b16 %v2322
        %v2387 = vunpack.c.l.b16 %v2323
        %v2388 = vunpack.c.l.b16 %v2324
        %v2389 = vunpack.c.l.b16 %v2325
        %v2390 = vunpack.c.l.b16 %v2326
        %v2391 = vunpack.c.l.b16 %v2327
        %v2392 = vunpack.c.l.b16 %v2328
        %v2393 = vunpack.c.l.b16 %v2329
        %v2394 = vunpack.c.l.b16 %v2330
        %v2395 = vunpack.c.l.b16 %v2331
        %v2396 = vunpack.c.l.b16 %v2332
        %v2397 = vunpack.c.l.b16 %v2333
        %v2398 = vunpack.c.l.b16 %v2334
        %v2399 = vunpack.c.l.b16 %v2335
        %v2400 = vunpack.c.l.b16 %v2336
        %v2401 = vunpack.c.l.b16 %v2337
        %v2402 = vunpack.c.l.b16 %v2338
        %v2403 = vunpack.c.l.b16 %v2339
        %v2404 = vunpack.c.l.b16 %v2340
        %v2405 = vunpack.c.l.b16 %v2341
        %v2406 = vunpack.c.l.b16 %v2342
        %v2407 = vunpack.c.l.b16 %v2343
        %v2408 = vunpack.c.l.b16 %v2344
        %v2409 = vunpack.c.l.b16 %v2345
        %v2410 = vunpack.c.l.b16 %v2346
        %v2411 = vunpack.c.l.b16 %v2347
        %v2412 = vunpack.c.l.b16 %v2348
        %v2413 = vunpack.c.l.b16 %v2349
        %v2414 = vunpack.c.l.b16 %v2350
        %v2415 = vunpack.c.l.b16 %v2351
        %v2416 = vpack.c.b16 %v2385, %v2384
        %v2417 = vpack.c.b16 %v2387, %v2386
        %v2418 = vpack.c.b16 %v2389, %v2388
        %v2419 = vpack.c.b16 %v2391, %v2390
        %v2420 = vpack.c.b16 %v2393, %v2392
        %v2421 = vpack.c.b16 %v2395, %v2394
        %v2422 = vpack.c.b16 %v2397, %v2396
        %v2423 = vpack.c.b16 %v2399, %v2398
        %v2424 = vpack.c.b16 %v2401, %v2400
        %v2425 = vpack.c.b16 %v2403, %v2402
        %v2426 = vpack.c.b16 %v2405, %v2404
        %v2427 = vpack.c.b16 %v2407, %v2406
        %v2428 = vpack.c.b16 %v2409, %v2408
        %v2429 = vpack.c.b16 %v2411, %v2410
        %v2430 = vpack.c.b16 %v2413, %v2412
        %v2431 = vpack.c.b16 %v2415, %v2414
        %2448 = vmatprep.subr.bf16.mxu0 0
        %2449 = vmatpush1.bf16.msra.mxu0 %v2416
        %2450 = vmatprep.subr.bf16.mxu0 0
        %2451 = vmatpush1.bf16.msra.mxu0 %v2417
        %2452 = vmatprep.subr.bf16.mxu0 0
        %2453 = vmatpush1.bf16.msra.mxu0 %v2418
        %2454 = vmatprep.subr.bf16.mxu0 0
        %2455 = vmatpush1.bf16.msra.mxu0 %v2419
        %2456 = vmatprep.subr.bf16.mxu0 0
        %2457 = vmatpush1.bf16.msra.mxu0 %v2420
        %2458 = vmatprep.subr.bf16.mxu0 0
        %2459 = vmatpush1.bf16.msra.mxu0 %v2421
        %2460 = vmatprep.subr.bf16.mxu0 0
        %2461 = vmatpush1.bf16.msra.mxu0 %v2422
        %2462 = vmatprep.subr.bf16.mxu0 0
        %2463 = vmatpush1.bf16.msra.mxu0 %v2423
        %2464 = vmatprep.subr.bf16.mxu0 0
        %2465 = vmatpush1.bf16.msra.mxu0 %v2424
        %2466 = vmatprep.subr.bf16.mxu0 0
        %2467 = vmatpush1.bf16.msra.mxu0 %v2425
        %2468 = vmatprep.subr.bf16.mxu0 0
        %2469 = vmatpush1.bf16.msra.mxu0 %v2426
        %2470 = vmatprep.subr.bf16.mxu0 0
        %2471 = vmatpush1.bf16.msra.mxu0 %v2427
        %2472 = vmatprep.subr.bf16.mxu0 0
        %2473 = vmatpush1.bf16.msra.mxu0 %v2428
        %2474 = vmatprep.subr.bf16.mxu0 0
        %2475 = vmatpush1.bf16.msra.mxu0 %v2429
        %2476 = vmatprep.subr.bf16.mxu0 0
        %2477 = vmatpush1.bf16.msra.mxu0 %v2430
        %2478 = vmatprep.subr.bf16.mxu0 0
        %2479 = vmatpush1.bf16.msra.mxu0 %v2431
        %2480 = vmatprep.mubr.bf16.mxu0 %v2318
        %2481 = vmatmul.mubr.bf16.gmra.mrb[0].mxu0 %v2317
        %v2482 = vpop.f32.mrb[0].mxu0
        %v2483 = vadd.f32 0.0, %v2482
        %v2484 = vpop.f32.mrb[0].mxu0
        %v2485 = vpop.f32.mrb[0].mxu0
        %v2486 = vpop.f32.mrb[0].mxu0
        %2487 = vdwg.mxu0
        %v2488 = vadd.f32 %v2176, %v2483
        %s2489 = scalar_lea.vmem %s13, 1
        %v2490 = vld [vmem:[%s2489] sm:$0x1]
        %v2492 = vlaneseq
        %v2493 = vshrl.u32 %v2492, 7
        %v2494 = vsub.s32 0, %v2493
        %v2495 = vrot.slane %v2490, %v2494
        %v2497 = vadd.f32 %v2488, %v2495
        %s2498 = scalar_lea.vmem %s3, 2
        %v2499 = vld [vmem:[%s2498] sm:$0x1]
        %s2500 = scalar_lea.vmem %s4, 2
        %v2501 = vld [vmem:[%s2500] sm:$0x1]
        %v2502 = vsel %vm524, %v2497, 0.0
        %2503 = vadd.xlane.f32.xlu0 %v2502
        %v2504 = vpop.xlane.xlu0 %2503
        %v2505 = vmul.f32 %v2504, %v528
        %v2506 = vsub.f32 %v2497, %v2505
        %v2507 = vmul.f32 %v2506, %v2506
        %v2508 = vsel %vm524, %v2507, 0.0
        %2509 = vadd.xlane.f32.xlu0 %v2508
        %v2510 = vpop.xlane.xlu0 %2509
        %v2511 = vmul.f32 %v2510, %v528
        %v2512 = vadd.f32 %v2511, 1e-05
        %v2513 = vrsqrt.pop %v2512
        %v2514 = vmul.f32 %v2506, %v2513
        %v2516 = vlaneseq
        %v2517 = vshrl.u32 %v2516, 7
        %v2518 = vsub.s32 0, %v2517
        %v2519 = vrot.slane %v2499, %v2518
        %v2521 = vmul.f32 %v2514, %v2519
        %v2523 = vlaneseq
        %v2524 = vshrl.u32 %v2523, 7
        %v2525 = vsub.s32 0, %v2524
        %v2526 = vrot.slane %v2501, %v2525
        %v2528 = vadd.f32 %v2521, %v2526
        %v2529 = vpack.c.bf16 %v2528, %v2528
        %s2530 = scalar_lea.vmem %s5, 128
        %v2531 = vld [vmem:[%s2530] sm:$0xff]
        %v2532 = vld [vmem:[%s2530 + $0x8] sm:$0xff]
        %v2533 = vld [vmem:[%s2530 + $0x10] sm:$0xff]
        %v2534 = vld [vmem:[%s2530 + $0x18] sm:$0xff]
        %v2535 = vld [vmem:[%s2530 + $0x20] sm:$0xff]
        %v2536 = vld [vmem:[%s2530 + $0x28] sm:$0xff]
        %v2537 = vld [vmem:[%s2530 + $0x30] sm:$0xff]
        %v2538 = vld [vmem:[%s2530 + $0x38] sm:$0xff]
        %v2547 = vunpack.c.l.b16 %v2531
        %v2548 = vunpack.c.h.b16 %v2531
        %v2549 = vunpack.c.l.b16 %v2532
        %v2550 = vunpack.c.h.b16 %v2532
        %v2551 = vunpack.c.l.b16 %v2533
        %v2552 = vunpack.c.h.b16 %v2533
        %v2553 = vunpack.c.l.b16 %v2534
        %v2554 = vunpack.c.h.b16 %v2534
        %v2555 = vunpack.c.l.b16 %v2535
        %v2556 = vunpack.c.h.b16 %v2535
        %v2557 = vunpack.c.l.b16 %v2536
        %v2558 = vunpack.c.h.b16 %v2536
        %v2559 = vunpack.c.l.b16 %v2537
        %v2560 = vunpack.c.h.b16 %v2537
        %v2561 = vunpack.c.l.b16 %v2538
        %v2562 = vunpack.c.h.b16 %v2538
        %v2563 = vpack.c.b16 %v2549, %v2547
        %v2564 = vpack.c.b16 %v2550, %v2548
        %v2565 = vpack.c.b16 %v2553, %v2551
        %v2566 = vpack.c.b16 %v2554, %v2552
        %v2567 = vpack.c.b16 %v2557, %v2555
        %v2568 = vpack.c.b16 %v2558, %v2556
        %v2569 = vpack.c.b16 %v2561, %v2559
        %v2570 = vpack.c.b16 %v2562, %v2560
        %v2580 = vsel %vm524, %v2529, 0
        %2582 = vmatprep.subr.bf16.mxu0 %v2564
        %2583 = vmatpush1.bf16.msra.mxu0 %v2563
        %2584 = vmatprep.subr.bf16.mxu0 %v2566
        %2585 = vmatpush1.bf16.msra.mxu0 %v2565
        %2586 = vmatprep.subr.bf16.mxu0 %v2568
        %2587 = vmatpush1.bf16.msra.mxu0 %v2567
        %2588 = vmatprep.subr.bf16.mxu0 %v2570
        %2589 = vmatpush1.bf16.msra.mxu0 %v2569
        %2590 = vmatprep.subr.bf16.mxu0 0
        %2591 = vmatpush1.bf16.msra.mxu0 0
        %2592 = vmatprep.subr.bf16.mxu0 0
        %2593 = vmatpush1.bf16.msra.mxu0 0
        %2594 = vmatprep.subr.bf16.mxu0 0
        %2595 = vmatpush1.bf16.msra.mxu0 0
        %2596 = vmatprep.subr.bf16.mxu0 0
        %2597 = vmatpush1.bf16.msra.mxu0 0
        %2598 = vmatprep.subr.bf16.mxu0 0
        %2599 = vmatpush1.bf16.msra.mxu0 0
        %2600 = vmatprep.subr.bf16.mxu0 0
        %2601 = vmatpush1.bf16.msra.mxu0 0
        %2602 = vmatprep.subr.bf16.mxu0 0
        %2603 = vmatpush1.bf16.msra.mxu0 0
        %2604 = vmatprep.subr.bf16.mxu0 0
        %2605 = vmatpush1.bf16.msra.mxu0 0
        %2606 = vmatprep.subr.bf16.mxu0 0
        %2607 = vmatpush1.bf16.msra.mxu0 0
        %2608 = vmatprep.subr.bf16.mxu0 0
        %2609 = vmatpush1.bf16.msra.mxu0 0
        %2610 = vmatprep.subr.bf16.mxu0 0
        %2611 = vmatpush1.bf16.msra.mxu0 0
        %2612 = vmatprep.subr.bf16.mxu0 0
        %2613 = vmatpush1.bf16.msra.mxu0 0
        %2614 = vmatprep.mubr.bf16.mxu0 0
        %2615 = vmatmul.mubr.bf16.gmra.mrb[0].mxu0 %v2580
        %v2616 = vpop.f32.mrb[0].mxu0
        %v2617 = vadd.f32 0.0, %v2616
        %v2618 = vpop.f32.mrb[0].mxu0
        %v2619 = vadd.f32 0.0, %v2618
        %v2620 = vpop.f32.mrb[0].mxu0
        %v2621 = vpop.f32.mrb[0].mxu0
        %2622 = vdwg.mxu0
        %v2623 = vmul.f32 %v2617, 8.0
        %v2624 = vpack.c.bf16 %v2623, %v2623
        %v2625 = vpack.c.bf16 %v2617, %v2617
        %2627 = vrot.lane.b32.xlu0 %v2625, 64
        %v2628 = vpop.permute.xlu0 %2627
        %v2630 = vsel %vm652, %v2624, 0
        %v2633 = vsel %vm652, %v2628, 0
        %2635 = vmatprep.subr.bf16.mxu0 0
        %2636 = vmatpush1.bf16.xpose.msra.mxu0 %v2633
        %2637 = vmatprep.subr.bf16.mxu0 0
        %2638 = vmatpush1.bf16.xpose.msra.mxu0 0
        %2639 = vmatprep.subr.bf16.mxu0 0
        %2640 = vmatpush1.bf16.xpose.msra.mxu0 0
        %2641 = vmatprep.subr.bf16.mxu0 0
        %2642 = vmatpush1.bf16.xpose.msra.mxu0 0
        %2643 = vmatprep.subr.bf16.mxu0 0
        %2644 = vmatpush1.bf16.xpose.msra.mxu0 0
        %2645 = vmatprep.subr.bf16.mxu0 0
        %2646 = vmatpush1.bf16.xpose.msra.mxu0 0
        %2647 = vmatprep.subr.bf16.mxu0 0
        %2648 = vmatpush1.bf16.xpose.msra.mxu0 0
        %2649 = vmatprep.subr.bf16.mxu0 0
        %2650 = vmatpush1.bf16.xpose.msra.mxu0 0
        %2651 = vmatprep.subr.bf16.mxu0 0
        %2652 = vmatpush1.bf16.xpose.msra.mxu0 0
        %2653 = vmatprep.subr.bf16.mxu0 0
        %2654 = vmatpush1.bf16.xpose.msra.mxu0 0
        %2655 = vmatprep.subr.bf16.mxu0 0
        %2656 = vmatpush1.bf16.xpose.msra.mxu0 0
        %2657 = vmatprep.subr.bf16.mxu0 0
        %2658 = vmatpush1.bf16.xpose.msra.mxu0 0
        %2659 = vmatprep.subr.bf16.mxu0 0
        %2660 = vmatpush1.bf16.xpose.msra.mxu0 0
        %2661 = vmatprep.subr.bf16.mxu0 0
        %2662 = vmatpush1.bf16.xpose.msra.mxu0 0
        %2663 = vmatprep.subr.bf16.mxu0 0
        %2664 = vmatpush1.bf16.xpose.msra.mxu0 0
        %2665 = vmatprep.subr.bf16.mxu0 0
        %2666 = vmatpush1.bf16.xpose.msra.mxu0 0
        %2667 = vmatprep.mubr.bf16.mxu0 0
        %2668 = vmatmul.mubr.bf16.gmra.mrb[0].mxu0 %v2630
        %v2669 = vpop.f32.mrb[0].mxu0
        %v2670 = vadd.f32 %v521, %v2669
        %v2671 = vpop.f32.mrb[0].mxu0
        %v2672 = vpop.f32.mrb[0].mxu0
        %v2673 = vpop.f32.mrb[0].mxu0
        %2674 = vdwg.mxu0
        %v2675 = vsel %vm699, %v2670, -inf
        %2676 = vmax.xlane.f32.xlu0 %v2675
        %v2677 = vpop.xlane.xlu0 %2676
        %v2678 = vsub.f32 %v2670, %v2677
        %v2679 = vmul.f32 %v2678, 1.442695
        %v2680 = vpow.pop %v2679
        %v2681 = vsel %vm699, %v2680, 0.0
        %2682 = vadd.xlane.f32.xlu0 %v2681
        %v2683 = vpop.xlane.xlu0 %2682
        %v2684 = vrcp.pop %v2683
        %v2685 = vmul.f32 %v2680, %v2684
        %v2686 = vpack.c.bf16 %v2685, %v2685
        %v2687 = vpack.c.bf16 %v2619, %v2619
        %v2689 = vsel %vm699, %v2686, 0
        %v2692 = vsel %vm716, %v2687, 0
        %2694 = vmatprep.subr.bf16.mxu0 0
        %2695 = vmatpush1.bf16.msra.mxu0 %v2692
        %2696 = vmatprep.subr.bf16.mxu0 0
        %2697 = vmatpush1.bf16.msra.mxu0 0
        %2698 = vmatprep.subr.bf16.mxu0 0
        %2699 = vmatpush1.bf16.msra.mxu0 0
        %2700 = vmatprep.subr.bf16.mxu0 0
        %2701 = vmatpush1.bf16.msra.mxu0 0
        %2702 = vmatprep.subr.bf16.mxu0 0
        %2703 = vmatpush1.bf16.msra.mxu0 0
        %2704 = vmatprep.subr.bf16.mxu0 0
        %2705 = vmatpush1.bf16.msra.mxu0 0
        %2706 = vmatprep.subr.bf16.mxu0 0
        %2707 = vmatpush1.bf16.msra.mxu0 0
        %2708 = vmatprep.subr.bf16.mxu0 0
        %2709 = vmatpush1.bf16.msra.mxu0 0
        %2710 = vmatprep.subr.bf16.mxu0 0
        %2711 = vmatpush1.bf16.msra.mxu0 0
        %2712 = vmatprep.subr.bf16.mxu0 0
        %2713 = vmatpush1.bf16.msra.mxu0 0
        %2714 = vmatprep.subr.bf16.mxu0 0
        %2715 = vmatpush1.bf16.msra.mxu0 0
        %2716 = vmatprep.subr.bf16.mxu0 0
        %2717 = vmatpush1.bf16.msra.mxu0 0
        %2718 = vmatprep.subr.bf16.mxu0 0
        %2719 = vmatpush1.bf16.msra.mxu0 0
        %2720 = vmatprep.subr.bf16.mxu0 0
        %2721 = vmatpush1.bf16.msra.mxu0 0
        %2722 = vmatprep.subr.bf16.mxu0 0
        %2723 = vmatpush1.bf16.msra.mxu0 0
        %2724 = vmatprep.subr.bf16.mxu0 0
        %2725 = vmatpush1.bf16.msra.mxu0 0
        %2726 = vmatprep.mubr.bf16.mxu0 0
        %2727 = vmatmul.mubr.bf16.gmra.mrb[0].mxu0 %v2689
        %v2728 = vpop.f32.mrb[0].mxu0
        %v2729 = vadd.f32 0.0, %v2728
        %v2730 = vpop.f32.mrb[0].mxu0
        %v2731 = vpop.f32.mrb[0].mxu0
        %v2732 = vpop.f32.mrb[0].mxu0
        %2733 = vdwg.mxu0
        %2735 = vrot.lane.b32.xlu0 %v2624, 112
        %v2736 = vpop.permute.xlu0 %2735
        %2737 = vrot.lane.b32.xlu0 %v2625, 48
        %v2738 = vpop.permute.xlu0 %2737
        %v2740 = vsel %vm652, %v2736, 0
        %v2743 = vsel %vm652, %v2738, 0
        %2745 = vmatprep.subr.bf16.mxu0 0
        %2746 = vmatpush1.bf16.xpose.msra.mxu0 %v2743
        %2747 = vmatprep.subr.bf16.mxu0 0
        %2748 = vmatpush1.bf16.xpose.msra.mxu0 0
        %2749 = vmatprep.subr.bf16.mxu0 0
        %2750 = vmatpush1.bf16.xpose.msra.mxu0 0
        %2751 = vmatprep.subr.bf16.mxu0 0
        %2752 = vmatpush1.bf16.xpose.msra.mxu0 0
        %2753 = vmatprep.subr.bf16.mxu0 0
        %2754 = vmatpush1.bf16.xpose.msra.mxu0 0
        %2755 = vmatprep.subr.bf16.mxu0 0
        %2756 = vmatpush1.bf16.xpose.msra.mxu0 0
        %2757 = vmatprep.subr.bf16.mxu0 0
        %2758 = vmatpush1.bf16.xpose.msra.mxu0 0
        %2759 = vmatprep.subr.bf16.mxu0 0
        %2760 = vmatpush1.bf16.xpose.msra.mxu0 0
        %2761 = vmatprep.subr.bf16.mxu0 0
        %2762 = vmatpush1.bf16.xpose.msra.mxu0 0
        %2763 = vmatprep.subr.bf16.mxu0 0
        %2764 = vmatpush1.bf16.xpose.msra.mxu0 0
        %2765 = vmatprep.subr.bf16.mxu0 0
        %2766 = vmatpush1.bf16.xpose.msra.mxu0 0
        %2767 = vmatprep.subr.bf16.mxu0 0
        %2768 = vmatpush1.bf16.xpose.msra.mxu0 0
        %2769 = vmatprep.subr.bf16.mxu0 0
        %2770 = vmatpush1.bf16.xpose.msra.mxu0 0
        %2771 = vmatprep.subr.bf16.mxu0 0
        %2772 = vmatpush1.bf16.xpose.msra.mxu0 0
        %2773 = vmatprep.subr.bf16.mxu0 0
        %2774 = vmatpush1.bf16.xpose.msra.mxu0 0
        %2775 = vmatprep.subr.bf16.mxu0 0
        %2776 = vmatpush1.bf16.xpose.msra.mxu0 0
        %2777 = vmatprep.mubr.bf16.mxu0 0
        %2778 = vmatmul.mubr.bf16.gmra.mrb[0].mxu0 %v2740
        %v2779 = vpop.f32.mrb[0].mxu0
        %v2780 = vadd.f32 %v521, %v2779
        %v2781 = vpop.f32.mrb[0].mxu0
        %v2782 = vpop.f32.mrb[0].mxu0
        %v2783 = vpop.f32.mrb[0].mxu0
        %2784 = vdwg.mxu0
        %v2785 = vsel %vm699, %v2780, -inf
        %2786 = vmax.xlane.f32.xlu0 %v2785
        %v2787 = vpop.xlane.xlu0 %2786
        %v2788 = vsub.f32 %v2780, %v2787
        %v2789 = vmul.f32 %v2788, 1.442695
        %v2790 = vpow.pop %v2789
        %v2791 = vsel %vm699, %v2790, 0.0
        %2792 = vadd.xlane.f32.xlu0 %v2791
        %v2793 = vpop.xlane.xlu0 %2792
        %v2794 = vrcp.pop %v2793
        %v2795 = vmul.f32 %v2790, %v2794
        %v2796 = vpack.c.bf16 %v2795, %v2795
        %2798 = vrot.lane.b32.xlu0 %v2687, 112
        %v2799 = vpop.permute.xlu0 %2798
        %v2801 = vsel %vm699, %v2796, 0
        %v2804 = vsel %vm716, %v2799, 0
        %2806 = vmatprep.subr.bf16.mxu0 0
        %2807 = vmatpush1.bf16.msra.mxu0 %v2804
        %2808 = vmatprep.subr.bf16.mxu0 0
        %2809 = vmatpush1.bf16.msra.mxu0 0
        %2810 = vmatprep.subr.bf16.mxu0 0
        %2811 = vmatpush1.bf16.msra.mxu0 0
        %2812 = vmatprep.subr.bf16.mxu0 0
        %2813 = vmatpush1.bf16.msra.mxu0 0
        %2814 = vmatprep.subr.bf16.mxu0 0
        %2815 = vmatpush1.bf16.msra.mxu0 0
        %2816 = vmatprep.subr.bf16.mxu0 0
        %2817 = vmatpush1.bf16.msra.mxu0 0
        %2818 = vmatprep.subr.bf16.mxu0 0
        %2819 = vmatpush1.bf16.msra.mxu0 0
        %2820 = vmatprep.subr.bf16.mxu0 0
        %2821 = vmatpush1.bf16.msra.mxu0 0
        %2822 = vmatprep.subr.bf16.mxu0 0
        %2823 = vmatpush1.bf16.msra.mxu0 0
        %2824 = vmatprep.subr.bf16.mxu0 0
        %2825 = vmatpush1.bf16.msra.mxu0 0
        %2826 = vmatprep.subr.bf16.mxu0 0
        %2827 = vmatpush1.bf16.msra.mxu0 0
        %2828 = vmatprep.subr.bf16.mxu0 0
        %2829 = vmatpush1.bf16.msra.mxu0 0
        %2830 = vmatprep.subr.bf16.mxu0 0
        %2831 = vmatpush1.bf16.msra.mxu0 0
        %2832 = vmatprep.subr.bf16.mxu0 0
        %2833 = vmatpush1.bf16.msra.mxu0 0
        %2834 = vmatprep.subr.bf16.mxu0 0
        %2835 = vmatpush1.bf16.msra.mxu0 0
        %2836 = vmatprep.subr.bf16.mxu0 0
        %2837 = vmatpush1.bf16.msra.mxu0 0
        %2838 = vmatprep.mubr.bf16.mxu0 0
        %2839 = vmatmul.mubr.bf16.gmra.mrb[0].mxu0 %v2801
        %v2840 = vpop.f32.mrb[0].mxu0
        %v2841 = vadd.f32 0.0, %v2840
        %v2842 = vpop.f32.mrb[0].mxu0
        %v2843 = vpop.f32.mrb[0].mxu0
        %v2844 = vpop.f32.mrb[0].mxu0
        %2845 = vdwg.mxu0
        %2846 = vrot.lane.b32.xlu0 %v2624, 96
        %v2847 = vpop.permute.xlu0 %2846
        %2848 = vrot.lane.b32.xlu0 %v2625, 32
        %v2849 = vpop.permute.xlu0 %2848
        %v2851 = vsel %vm652, %v2847, 0
        %v2854 = vsel %vm652, %v2849, 0
        %2856 = vmatprep.subr.bf16.mxu0 0
        %2857 = vmatpush1.bf16.xpose.msra.mxu0 %v2854
        %2858 = vmatprep.subr.bf16.mxu0 0
        %2859 = vmatpush1.bf16.xpose.msra.mxu0 0
        %2860 = vmatprep.subr.bf16.mxu0 0
        %2861 = vmatpush1.bf16.xpose.msra.mxu0 0
        %2862 = vmatprep.subr.bf16.mxu0 0
        %2863 = vmatpush1.bf16.xpose.msra.mxu0 0
        %2864 = vmatprep.subr.bf16.mxu0 0
        %2865 = vmatpush1.bf16.xpose.msra.mxu0 0
        %2866 = vmatprep.subr.bf16.mxu0 0
        %2867 = vmatpush1.bf16.xpose.msra.mxu0 0
        %2868 = vmatprep.subr.bf16.mxu0 0
        %2869 = vmatpush1.bf16.xpose.msra.mxu0 0
        %2870 = vmatprep.subr.bf16.mxu0 0
        %2871 = vmatpush1.bf16.xpose.msra.mxu0 0
        %2872 = vmatprep.subr.bf16.mxu0 0
        %2873 = vmatpush1.bf16.xpose.msra.mxu0 0
        %2874 = vmatprep.subr.bf16.mxu0 0
        %2875 = vmatpush1.bf16.xpose.msra.mxu0 0
        %2876 = vmatprep.subr.bf16.mxu0 0
        %2877 = vmatpush1.bf16.xpose.msra.mxu0 0
        %2878 = vmatprep.subr.bf16.mxu0 0
        %2879 = vmatpush1.bf16.xpose.msra.mxu0 0
        %2880 = vmatprep.subr.bf16.mxu0 0
        %2881 = vmatpush1.bf16.xpose.msra.mxu0 0
        %2882 = vmatprep.subr.bf16.mxu0 0
        %2883 = vmatpush1.bf16.xpose.msra.mxu0 0
        %2884 = vmatprep.subr.bf16.mxu0 0
        %2885 = vmatpush1.bf16.xpose.msra.mxu0 0
        %2886 = vmatprep.subr.bf16.mxu0 0
        %2887 = vmatpush1.bf16.xpose.msra.mxu0 0
        %2888 = vmatprep.mubr.bf16.mxu0 0
        %2889 = vmatmul.mubr.bf16.gmra.mrb[0].mxu0 %v2851
        %v2890 = vpop.f32.mrb[0].mxu0
        %v2891 = vadd.f32 %v521, %v2890
        %v2892 = vpop.f32.mrb[0].mxu0
        %v2893 = vpop.f32.mrb[0].mxu0
        %v2894 = vpop.f32.mrb[0].mxu0
        %2895 = vdwg.mxu0
        %v2896 = vsel %vm699, %v2891, -inf
        %2897 = vmax.xlane.f32.xlu0 %v2896
        %v2898 = vpop.xlane.xlu0 %2897
        %v2899 = vsub.f32 %v2891, %v2898
        %v2900 = vmul.f32 %v2899, 1.442695
        %v2901 = vpow.pop %v2900
        %v2902 = vsel %vm699, %v2901, 0.0
        %2903 = vadd.xlane.f32.xlu0 %v2902
        %v2904 = vpop.xlane.xlu0 %2903
        %v2905 = vrcp.pop %v2904
        %v2906 = vmul.f32 %v2901, %v2905
        %v2907 = vpack.c.bf16 %v2906, %v2906
        %2908 = vrot.lane.b32.xlu0 %v2687, 96
        %v2909 = vpop.permute.xlu0 %2908
        %v2911 = vsel %vm699, %v2907, 0
        %v2914 = vsel %vm716, %v2909, 0
        %2916 = vmatprep.subr.bf16.mxu0 0
        %2917 = vmatpush1.bf16.msra.mxu0 %v2914
        %2918 = vmatprep.subr.bf16.mxu0 0
        %2919 = vmatpush1.bf16.msra.mxu0 0
        %2920 = vmatprep.subr.bf16.mxu0 0
        %2921 = vmatpush1.bf16.msra.mxu0 0
        %2922 = vmatprep.subr.bf16.mxu0 0
        %2923 = vmatpush1.bf16.msra.mxu0 0
        %2924 = vmatprep.subr.bf16.mxu0 0
        %2925 = vmatpush1.bf16.msra.mxu0 0
        %2926 = vmatprep.subr.bf16.mxu0 0
        %2927 = vmatpush1.bf16.msra.mxu0 0
        %2928 = vmatprep.subr.bf16.mxu0 0
        %2929 = vmatpush1.bf16.msra.mxu0 0
        %2930 = vmatprep.subr.bf16.mxu0 0
        %2931 = vmatpush1.bf16.msra.mxu0 0
        %2932 = vmatprep.subr.bf16.mxu0 0
        %2933 = vmatpush1.bf16.msra.mxu0 0
        %2934 = vmatprep.subr.bf16.mxu0 0
        %2935 = vmatpush1.bf16.msra.mxu0 0
        %2936 = vmatprep.subr.bf16.mxu0 0
        %2937 = vmatpush1.bf16.msra.mxu0 0
        %2938 = vmatprep.subr.bf16.mxu0 0
        %2939 = vmatpush1.bf16.msra.mxu0 0
        %2940 = vmatprep.subr.bf16.mxu0 0
        %2941 = vmatpush1.bf16.msra.mxu0 0
        %2942 = vmatprep.subr.bf16.mxu0 0
        %2943 = vmatpush1.bf16.msra.mxu0 0
        %2944 = vmatprep.subr.bf16.mxu0 0
        %2945 = vmatpush1.bf16.msra.mxu0 0
        %2946 = vmatprep.subr.bf16.mxu0 0
        %2947 = vmatpush1.bf16.msra.mxu0 0
        %2948 = vmatprep.mubr.bf16.mxu0 0
        %2949 = vmatmul.mubr.bf16.gmra.mrb[0].mxu0 %v2911
        %v2950 = vpop.f32.mrb[0].mxu0
        %v2951 = vadd.f32 0.0, %v2950
        %v2952 = vpop.f32.mrb[0].mxu0
        %v2953 = vpop.f32.mrb[0].mxu0
        %v2954 = vpop.f32.mrb[0].mxu0
        %2955 = vdwg.mxu0
        %2956 = vrot.lane.b32.xlu0 %v2624, 80
        %v2957 = vpop.permute.xlu0 %2956
        %2958 = vrot.lane.b32.xlu0 %v2625, 16
        %v2959 = vpop.permute.xlu0 %2958
        %v2961 = vsel %vm652, %v2957, 0
        %v2964 = vsel %vm652, %v2959, 0
        %2966 = vmatprep.subr.bf16.mxu0 0
        %2967 = vmatpush1.bf16.xpose.msra.mxu0 %v2964
        %2968 = vmatprep.subr.bf16.mxu0 0
        %2969 = vmatpush1.bf16.xpose.msra.mxu0 0
        %2970 = vmatprep.subr.bf16.mxu0 0
        %2971 = vmatpush1.bf16.xpose.msra.mxu0 0
        %2972 = vmatprep.subr.bf16.mxu0 0
        %2973 = vmatpush1.bf16.xpose.msra.mxu0 0
        %2974 = vmatprep.subr.bf16.mxu0 0
        %2975 = vmatpush1.bf16.xpose.msra.mxu0 0
        %2976 = vmatprep.subr.bf16.mxu0 0
        %2977 = vmatpush1.bf16.xpose.msra.mxu0 0
        %2978 = vmatprep.subr.bf16.mxu0 0
        %2979 = vmatpush1.bf16.xpose.msra.mxu0 0
        %2980 = vmatprep.subr.bf16.mxu0 0
        %2981 = vmatpush1.bf16.xpose.msra.mxu0 0
        %2982 = vmatprep.subr.bf16.mxu0 0
        %2983 = vmatpush1.bf16.xpose.msra.mxu0 0
        %2984 = vmatprep.subr.bf16.mxu0 0
        %2985 = vmatpush1.bf16.xpose.msra.mxu0 0
        %2986 = vmatprep.subr.bf16.mxu0 0
        %2987 = vmatpush1.bf16.xpose.msra.mxu0 0
        %2988 = vmatprep.subr.bf16.mxu0 0
        %2989 = vmatpush1.bf16.xpose.msra.mxu0 0
        %2990 = vmatprep.subr.bf16.mxu0 0
        %2991 = vmatpush1.bf16.xpose.msra.mxu0 0
        %2992 = vmatprep.subr.bf16.mxu0 0
        %2993 = vmatpush1.bf16.xpose.msra.mxu0 0
        %2994 = vmatprep.subr.bf16.mxu0 0
        %2995 = vmatpush1.bf16.xpose.msra.mxu0 0
        %2996 = vmatprep.subr.bf16.mxu0 0
        %2997 = vmatpush1.bf16.xpose.msra.mxu0 0
        %2998 = vmatprep.mubr.bf16.mxu0 0
        %2999 = vmatmul.mubr.bf16.gmra.mrb[0].mxu0 %v2961
        %v3000 = vpop.f32.mrb[0].mxu0
        %v3001 = vadd.f32 %v521, %v3000
        %v3002 = vpop.f32.mrb[0].mxu0
        %v3003 = vpop.f32.mrb[0].mxu0
        %v3004 = vpop.f32.mrb[0].mxu0
        %3005 = vdwg.mxu0
        %v3006 = vsel %vm699, %v3001, -inf
        %3007 = vmax.xlane.f32.xlu0 %v3006
        %v3008 = vpop.xlane.xlu0 %3007
        %v3009 = vsub.f32 %v3001, %v3008
        %v3010 = vmul.f32 %v3009, 1.442695
        %v3011 = vpow.pop %v3010
        %v3012 = vsel %vm699, %v3011, 0.0
        %3013 = vadd.xlane.f32.xlu0 %v3012
        %v3014 = vpop.xlane.xlu0 %3013
        %v3015 = vrcp.pop %v3014
        %v3016 = vmul.f32 %v3011, %v3015
        %v3017 = vpack.c.bf16 %v3016, %v3016
        %3018 = vrot.lane.b32.xlu0 %v2687, 80
        %v3019 = vpop.permute.xlu0 %3018
        %v3021 = vsel %vm699, %v3017, 0
        %v3024 = vsel %vm716, %v3019, 0
        %3026 = vmatprep.subr.bf16.mxu0 0
        %3027 = vmatpush1.bf16.msra.mxu0 %v3024
        %3028 = vmatprep.subr.bf16.mxu0 0
        %3029 = vmatpush1.bf16.msra.mxu0 0
        %3030 = vmatprep.subr.bf16.mxu0 0
        %3031 = vmatpush1.bf16.msra.mxu0 0
        %3032 = vmatprep.subr.bf16.mxu0 0
        %3033 = vmatpush1.bf16.msra.mxu0 0
        %3034 = vmatprep.subr.bf16.mxu0 0
        %3035 = vmatpush1.bf16.msra.mxu0 0
        %3036 = vmatprep.subr.bf16.mxu0 0
        %3037 = vmatpush1.bf16.msra.mxu0 0
        %3038 = vmatprep.subr.bf16.mxu0 0
        %3039 = vmatpush1.bf16.msra.mxu0 0
        %3040 = vmatprep.subr.bf16.mxu0 0
        %3041 = vmatpush1.bf16.msra.mxu0 0
        %3042 = vmatprep.subr.bf16.mxu0 0
        %3043 = vmatpush1.bf16.msra.mxu0 0
        %3044 = vmatprep.subr.bf16.mxu0 0
        %3045 = vmatpush1.bf16.msra.mxu0 0
        %3046 = vmatprep.subr.bf16.mxu0 0
        %3047 = vmatpush1.bf16.msra.mxu0 0
        %3048 = vmatprep.subr.bf16.mxu0 0
        %3049 = vmatpush1.bf16.msra.mxu0 0
        %3050 = vmatprep.subr.bf16.mxu0 0
        %3051 = vmatpush1.bf16.msra.mxu0 0
        %3052 = vmatprep.subr.bf16.mxu0 0
        %3053 = vmatpush1.bf16.msra.mxu0 0
        %3054 = vmatprep.subr.bf16.mxu0 0
        %3055 = vmatpush1.bf16.msra.mxu0 0
        %3056 = vmatprep.subr.bf16.mxu0 0
        %3057 = vmatpush1.bf16.msra.mxu0 0
        %3058 = vmatprep.mubr.bf16.mxu0 0
        %3059 = vmatmul.mubr.bf16.gmra.mrb[0].mxu0 %v3021
        %v3060 = vpop.f32.mrb[0].mxu0
        %v3061 = vadd.f32 0.0, %v3060
        %v3062 = vpop.f32.mrb[0].mxu0
        %v3063 = vpop.f32.mrb[0].mxu0
        %v3064 = vpop.f32.mrb[0].mxu0
        %3065 = vdwg.mxu0
        %3067 = vrot.lane.b32.xlu0 %v2841, 16
        %v3068 = vpop.permute.xlu0 %3067
        %3071 = vrot.lane.b32.xlu0 %v2951, 32
        %v3072 = vpop.permute.xlu0 %3071
        %3075 = vrot.lane.b32.xlu0 %v3061, 48
        %v3076 = vpop.permute.xlu0 %3075
        %v3078 = vsel %vm652, %v2729, %v3068
        %v3079 = vsel %vm1105, %v3078, %v3072
        %v3080 = vsel %vm1107, %v3079, %v3076
        %v3081 = vpack.c.bf16 %v3080, %v3080
        %s3082 = scalar_lea.vmem %s6, 64
        %v3083 = vld [vmem:[%s3082] sm:$0xf]
        %v3084 = vld [vmem:[%s3082 + $0x4] sm:$0xf]
        %v3085 = vld [vmem:[%s3082 + $0x8] sm:$0xf]
        %v3086 = vld [vmem:[%s3082 + $0xc] sm:$0xf]
        %v3087 = vld [vmem:[%s3082 + $0x10] sm:$0xf]
        %v3088 = vld [vmem:[%s3082 + $0x14] sm:$0xf]
        %v3089 = vld [vmem:[%s3082 + $0x18] sm:$0xf]
        %v3090 = vld [vmem:[%s3082 + $0x1c] sm:$0xf]
        %s3091 = scalar_lea.vmem %s7, 2
        %v3092 = vld [vmem:[%s3091] sm:$0x1]
        %v3094 = vlaneseq
        %v3095 = vshrl.u32 %v3094, 7
        %v3096 = vsub.s32 0, %v3095
        %v3097 = vrot.slane %v3092, %v3096
        %v3107 = vunpack.c.l.b16 %v3083
        %v3108 = vunpack.c.l.b16 %v3084
        %v3109 = vunpack.c.l.b16 %v3085
        %v3110 = vunpack.c.l.b16 %v3086
        %v3111 = vunpack.c.l.b16 %v3087
        %v3112 = vunpack.c.l.b16 %v3088
        %v3113 = vunpack.c.l.b16 %v3089
        %v3114 = vunpack.c.l.b16 %v3090
        %v3115 = vpack.c.b16 %v3108, %v3107
        %v3116 = vpack.c.b16 %v3110, %v3109
        %v3117 = vpack.c.b16 %v3112, %v3111
        %v3118 = vpack.c.b16 %v3114, %v3113
        %v3124 = vsel %vm524, %v3081, 0
        %3126 = vmatprep.subr.bf16.mxu0 0
        %3127 = vmatpush1.bf16.msra.mxu0 %v3115
        %3128 = vmatprep.subr.bf16.mxu0 0
        %3129 = vmatpush1.bf16.msra.mxu0 %v3116
        %3130 = vmatprep.subr.bf16.mxu0 0
        %3131 = vmatpush1.bf16.msra.mxu0 %v3117
        %3132 = vmatprep.subr.bf16.mxu0 0
        %3133 = vmatpush1.bf16.msra.mxu0 %v3118
        %3134 = vmatprep.subr.bf16.mxu0 0
        %3135 = vmatpush1.bf16.msra.mxu0 0
        %3136 = vmatprep.subr.bf16.mxu0 0
        %3137 = vmatpush1.bf16.msra.mxu0 0
        %3138 = vmatprep.subr.bf16.mxu0 0
        %3139 = vmatpush1.bf16.msra.mxu0 0
        %3140 = vmatprep.subr.bf16.mxu0 0
        %3141 = vmatpush1.bf16.msra.mxu0 0
        %3142 = vmatprep.subr.bf16.mxu0 0
        %3143 = vmatpush1.bf16.msra.mxu0 0
        %3144 = vmatprep.subr.bf16.mxu0 0
        %3145 = vmatpush1.bf16.msra.mxu0 0
        %3146 = vmatprep.subr.bf16.mxu0 0
        %3147 = vmatpush1.bf16.msra.mxu0 0
        %3148 = vmatprep.subr.bf16.mxu0 0
        %3149 = vmatpush1.bf16.msra.mxu0 0
        %3150 = vmatprep.subr.bf16.mxu0 0
        %3151 = vmatpush1.bf16.msra.mxu0 0
        %3152 = vmatprep.subr.bf16.mxu0 0
        %3153 = vmatpush1.bf16.msra.mxu0 0
        %3154 = vmatprep.subr.bf16.mxu0 0
        %3155 = vmatpush1.bf16.msra.mxu0 0
        %3156 = vmatprep.subr.bf16.mxu0 0
        %3157 = vmatpush1.bf16.msra.mxu0 0
        %3158 = vmatprep.mubr.bf16.mxu0 0
        %3159 = vmatmul.mubr.bf16.gmra.mrb[0].mxu0 %v3124
        %v3160 = vpop.f32.mrb[0].mxu0
        %v3161 = vadd.f32 %v3097, %v3160
        %v3162 = vpop.f32.mrb[0].mxu0
        %v3163 = vpop.f32.mrb[0].mxu0
        %v3164 = vpop.f32.mrb[0].mxu0
        %3165 = vdwg.mxu0
        %v3166 = vadd.f32 %v2497, %v3161
        %s3167 = scalar_lea.vmem %s8, 2
        %v3168 = vld [vmem:[%s3167] sm:$0x1]
        %s3169 = scalar_lea.vmem %s9, 2
        %v3170 = vld [vmem:[%s3169] sm:$0x1]
        %v3171 = vsel %vm524, %v3166, 0.0
        %3172 = vadd.xlane.f32.xlu0 %v3171
        %v3173 = vpop.xlane.xlu0 %3172
        %v3174 = vmul.f32 %v3173, %v528
        %v3175 = vsub.f32 %v3166, %v3174
        %v3176 = vmul.f32 %v3175, %v3175
        %v3177 = vsel %vm524, %v3176, 0.0
        %3178 = vadd.xlane.f32.xlu0 %v3177
        %v3179 = vpop.xlane.xlu0 %3178
        %v3180 = vmul.f32 %v3179, %v528
        %v3181 = vadd.f32 %v3180, 1e-05
        %v3182 = vrsqrt.pop %v3181
        %v3183 = vmul.f32 %v3175, %v3182
        %v3185 = vlaneseq
        %v3186 = vshrl.u32 %v3185, 7
        %v3187 = vsub.s32 0, %v3186
        %v3188 = vrot.slane %v3168, %v3187
        %v3190 = vmul.f32 %v3183, %v3188
        %v3192 = vlaneseq
        %v3193 = vshrl.u32 %v3192, 7
        %v3194 = vsub.s32 0, %v3193
        %v3195 = vrot.slane %v3170, %v3194
        %v3197 = vadd.f32 %v3190, %v3195
        %v3198 = vpack.c.bf16 %v3197, %v3197
        %s3199 = scalar_lea.vmem %s10, 128
        %v3200 = vld [vmem:[%s3199] sm:$0xff]
        %v3201 = vld [vmem:[%s3199 + $0x8] sm:$0xff]
        %v3202 = vld [vmem:[%s3199 + $0x10] sm:$0xff]
        %v3203 = vld [vmem:[%s3199 + $0x18] sm:$0xff]
        %v3204 = vld [vmem:[%s3199 + $0x20] sm:$0xff]
        %v3205 = vld [vmem:[%s3199 + $0x28] sm:$0xff]
        %v3206 = vld [vmem:[%s3199 + $0x30] sm:$0xff]
        %v3207 = vld [vmem:[%s3199 + $0x38] sm:$0xff]
        %s3208 = scalar_lea.vmem %s11, 4
        %v3209 = vld [vmem:[%s3208] sm:$0x3]
        %v3211 = vlaneseq
        %v3212 = vshrl.u32 %v3211, 7
        %v3213 = vsub.s32 0, %v3212
        %v3214 = vrot.slane %v3209, %v3213
        %v3215 = vlaneseq
        %v3216 = vshrl.u32 %v3215, 7
        %v3217 = vsub.s32 1, %v3216
        %v3218 = vrot.slane %v3209, %v3217
        %v3229 = vunpack.c.l.b16 %v3200
        %v3230 = vunpack.c.h.b16 %v3200
        %v3231 = vunpack.c.l.b16 %v3201
        %v3232 = vunpack.c.h.b16 %v3201
        %v3233 = vunpack.c.l.b16 %v3202
        %v3234 = vunpack.c.h.b16 %v3202
        %v3235 = vunpack.c.l.b16 %v3203
        %v3236 = vunpack.c.h.b16 %v3203
        %v3237 = vunpack.c.l.b16 %v3204
        %v3238 = vunpack.c.h.b16 %v3204
        %v3239 = vunpack.c.l.b16 %v3205
        %v3240 = vunpack.c.h.b16 %v3205
        %v3241 = vunpack.c.l.b16 %v3206
        %v3242 = vunpack.c.h.b16 %v3206
        %v3243 = vunpack.c.l.b16 %v3207
        %v3244 = vunpack.c.h.b16 %v3207
        %v3245 = vpack.c.b16 %v3231, %v3229
        %v3246 = vpack.c.b16 %v3232, %v3230
        %v3247 = vpack.c.b16 %v3235, %v3233
        %v3248 = vpack.c.b16 %v3236, %v3234
        %v3249 = vpack.c.b16 %v3239, %v3237
        %v3250 = vpack.c.b16 %v3240, %v3238
        %v3251 = vpack.c.b16 %v3243, %v3241
        %v3252 = vpack.c.b16 %v3244, %v3242
        %v3262 = vsel %vm524, %v3198, 0
        %3264 = vmatprep.subr.bf16.mxu0 %v3246
        %3265 = vmatpush1.bf16.msra.mxu0 %v3245
        %3266 = vmatprep.subr.bf16.mxu0 %v3248
        %3267 = vmatpush1.bf16.msra.mxu0 %v3247
        %3268 = vmatprep.subr.bf16.mxu0 %v3250
        %3269 = vmatpush1.bf16.msra.mxu0 %v3249
        %3270 = vmatprep.subr.bf16.mxu0 %v3252
        %3271 = vmatpush1.bf16.msra.mxu0 %v3251
        %3272 = vmatprep.subr.bf16.mxu0 0
        %3273 = vmatpush1.bf16.msra.mxu0 0
        %3274 = vmatprep.subr.bf16.mxu0 0
        %3275 = vmatpush1.bf16.msra.mxu0 0
        %3276 = vmatprep.subr.bf16.mxu0 0
        %3277 = vmatpush1.bf16.msra.mxu0 0
        %3278 = vmatprep.subr.bf16.mxu0 0
        %3279 = vmatpush1.bf16.msra.mxu0 0
        %3280 = vmatprep.subr.bf16.mxu0 0
        %3281 = vmatpush1.bf16.msra.mxu0 0
        %3282 = vmatprep.subr.bf16.mxu0 0
        %3283 = vmatpush1.bf16.msra.mxu0 0
        %3284 = vmatprep.subr.bf16.mxu0 0
        %3285 = vmatpush1.bf16.msra.mxu0 0
        %3286 = vmatprep.subr.bf16.mxu0 0
        %3287 = vmatpush1.bf16.msra.mxu0 0
        %3288 = vmatprep.subr.bf16.mxu0 0
        %3289 = vmatpush1.bf16.msra.mxu0 0
        %3290 = vmatprep.subr.bf16.mxu0 0
        %3291 = vmatpush1.bf16.msra.mxu0 0
        %3292 = vmatprep.subr.bf16.mxu0 0
        %3293 = vmatpush1.bf16.msra.mxu0 0
        %3294 = vmatprep.subr.bf16.mxu0 0
        %3295 = vmatpush1.bf16.msra.mxu0 0
        %3296 = vmatprep.mubr.bf16.mxu0 0
        %3297 = vmatmul.mubr.bf16.gmra.mrb[0].mxu0 %v3262
        %v3298 = vpop.f32.mrb[0].mxu0
        %v3299 = vadd.f32 %v3214, %v3298
        %v3300 = vpop.f32.mrb[0].mxu0
        %v3301 = vadd.f32 %v3218, %v3300
        %v3302 = vpop.f32.mrb[0].mxu0
        %v3303 = vpop.f32.mrb[0].mxu0
        %3304 = vdwg.mxu0
        %v3305 = vmax.f32 %v3299, 0.0
        %v3306 = vmax.f32 %v3301, 0.0
        %v3307 = vpack.c.bf16 %v3305, %v3305
        %v3308 = vpack.c.bf16 %v3306, %v3306
        %s3309 = scalar_lea.vmem %s12, 256
        %v3310 = vld [vmem:[%s3309] sm:$0xf]
        %v3311 = vld [vmem:[%s3309 + $0x4] sm:$0xf]
        %v3312 = vld [vmem:[%s3309 + $0x8] sm:$0xf]
        %v3313 = vld [vmem:[%s3309 + $0xc] sm:$0xf]
        %v3314 = vld [vmem:[%s3309 + $0x10] sm:$0xf]
        %v3315 = vld [vmem:[%s3309 + $0x14] sm:$0xf]
        %v3316 = vld [vmem:[%s3309 + $0x18] sm:$0xf]
        %v3317 = vld [vmem:[%s3309 + $0x1c] sm:$0xf]
        %v3318 = vld [vmem:[%s3309 + $0x20] sm:$0xf]
        %v3319 = vld [vmem:[%s3309 + $0x24] sm:$0xf]
        %v3320 = vld [vmem:[%s3309 + $0x28] sm:$0xf]
        %v3321 = vld [vmem:[%s3309 + $0x2c] sm:$0xf]
        %v3322 = vld [vmem:[%s3309 + $0x30] sm:$0xf]
        %v3323 = vld [vmem:[%s3309 + $0x34] sm:$0xf]
        %v3324 = vld [vmem:[%s3309 + $0x38] sm:$0xf]
        %v3325 = vld [vmem:[%s3309 + $0x3c] sm:$0xf]
        %v3326 = vld [vmem:[%s3309 + $0x40] sm:$0xf]
        %v3327 = vld [vmem:[%s3309 + $0x44] sm:$0xf]
        %v3328 = vld [vmem:[%s3309 + $0x48] sm:$0xf]
        %v3329 = vld [vmem:[%s3309 + $0x4c] sm:$0xf]
        %v3330 = vld [vmem:[%s3309 + $0x50] sm:$0xf]
        %v3331 = vld [vmem:[%s3309 + $0x54] sm:$0xf]
        %v3332 = vld [vmem:[%s3309 + $0x58] sm:$0xf]
        %v3333 = vld [vmem:[%s3309 + $0x5c] sm:$0xf]
        %v3334 = vld [vmem:[%s3309 + $0x60] sm:$0xf]
        %v3335 = vld [vmem:[%s3309 + $0x64] sm:$0xf]
        %v3336 = vld [vmem:[%s3309 + $0x68] sm:$0xf]
        %v3337 = vld [vmem:[%s3309 + $0x6c] sm:$0xf]
        %v3338 = vld [vmem:[%s3309 + $0x70] sm:$0xf]
        %v3339 = vld [vmem:[%s3309 + $0x74] sm:$0xf]
        %v3340 = vld [vmem:[%s3309 + $0x78] sm:$0xf]
        %v3341 = vld [vmem:[%s3309 + $0x7c] sm:$0xf]
        %v3374 = vunpack.c.l.b16 %v3310
        %v3375 = vunpack.c.l.b16 %v3311
        %v3376 = vunpack.c.l.b16 %v3312
        %v3377 = vunpack.c.l.b16 %v3313
        %v3378 = vunpack.c.l.b16 %v3314
        %v3379 = vunpack.c.l.b16 %v3315
        %v3380 = vunpack.c.l.b16 %v3316
        %v3381 = vunpack.c.l.b16 %v3317
        %v3382 = vunpack.c.l.b16 %v3318
        %v3383 = vunpack.c.l.b16 %v3319
        %v3384 = vunpack.c.l.b16 %v3320
        %v3385 = vunpack.c.l.b16 %v3321
        %v3386 = vunpack.c.l.b16 %v3322
        %v3387 = vunpack.c.l.b16 %v3323
        %v3388 = vunpack.c.l.b16 %v3324
        %v3389 = vunpack.c.l.b16 %v3325
        %v3390 = vunpack.c.l.b16 %v3326
        %v3391 = vunpack.c.l.b16 %v3327
        %v3392 = vunpack.c.l.b16 %v3328
        %v3393 = vunpack.c.l.b16 %v3329
        %v3394 = vunpack.c.l.b16 %v3330
        %v3395 = vunpack.c.l.b16 %v3331
        %v3396 = vunpack.c.l.b16 %v3332
        %v3397 = vunpack.c.l.b16 %v3333
        %v3398 = vunpack.c.l.b16 %v3334
        %v3399 = vunpack.c.l.b16 %v3335
        %v3400 = vunpack.c.l.b16 %v3336
        %v3401 = vunpack.c.l.b16 %v3337
        %v3402 = vunpack.c.l.b16 %v3338
        %v3403 = vunpack.c.l.b16 %v3339
        %v3404 = vunpack.c.l.b16 %v3340
        %v3405 = vunpack.c.l.b16 %v3341
        %v3406 = vpack.c.b16 %v3375, %v3374
        %v3407 = vpack.c.b16 %v3377, %v3376
        %v3408 = vpack.c.b16 %v3379, %v3378
        %v3409 = vpack.c.b16 %v3381, %v3380
        %v3410 = vpack.c.b16 %v3383, %v3382
        %v3411 = vpack.c.b16 %v3385, %v3384
        %v3412 = vpack.c.b16 %v3387, %v3386
        %v3413 = vpack.c.b16 %v3389, %v3388
        %v3414 = vpack.c.b16 %v3391, %v3390
        %v3415 = vpack.c.b16 %v3393, %v3392
        %v3416 = vpack.c.b16 %v3395, %v3394
        %v3417 = vpack.c.b16 %v3397, %v3396
        %v3418 = vpack.c.b16 %v3399, %v3398
        %v3419 = vpack.c.b16 %v3401, %v3400
        %v3420 = vpack.c.b16 %v3403, %v3402
        %v3421 = vpack.c.b16 %v3405, %v3404
        %3438 = vmatprep.subr.bf16.mxu0 0
        %3439 = vmatpush1.bf16.msra.mxu0 %v3406
        %3440 = vmatprep.subr.bf16.mxu0 0
        %3441 = vmatpush1.bf16.msra.mxu0 %v3407
        %3442 = vmatprep.subr.bf16.mxu0 0
        %3443 = vmatpush1.bf16.msra.mxu0 %v3408
        %3444 = vmatprep.subr.bf16.mxu0 0
        %3445 = vmatpush1.bf16.msra.mxu0 %v3409
        %3446 = vmatprep.subr.bf16.mxu0 0
        %3447 = vmatpush1.bf16.msra.mxu0 %v3410
        %3448 = vmatprep.subr.bf16.mxu0 0
        %3449 = vmatpush1.bf16.msra.mxu0 %v3411
        %3450 = vmatprep.subr.bf16.mxu0 0
        %3451 = vmatpush1.bf16.msra.mxu0 %v3412
        %3452 = vmatprep.subr.bf16.mxu0 0
        %3453 = vmatpush1.bf16.msra.mxu0 %v3413
        %3454 = vmatprep.subr.bf16.mxu0 0
        %3455 = vmatpush1.bf16.msra.mxu0 %v3414
        %3456 = vmatprep.subr.bf16.mxu0 0
        %3457 = vmatpush1.bf16.msra.mxu0 %v3415
        %3458 = vmatprep.subr.bf16.mxu0 0
        %3459 = vmatpush1.bf16.msra.mxu0 %v3416
        %3460 = vmatprep.subr.bf16.mxu0 0
        %3461 = vmatpush1.bf16.msra.mxu0 %v3417
        %3462 = vmatprep.subr.bf16.mxu0 0
        %3463 = vmatpush1.bf16.msra.mxu0 %v3418
        %3464 = vmatprep.subr.bf16.mxu0 0
        %3465 = vmatpush1.bf16.msra.mxu0 %v3419
        %3466 = vmatprep.subr.bf16.mxu0 0
        %3467 = vmatpush1.bf16.msra.mxu0 %v3420
        %3468 = vmatprep.subr.bf16.mxu0 0
        %3469 = vmatpush1.bf16.msra.mxu0 %v3421
        %3470 = vmatprep.mubr.bf16.mxu0 %v3308
        %3471 = vmatmul.mubr.bf16.gmra.mrb[0].mxu0 %v3307
        %v3472 = vpop.f32.mrb[0].mxu0
        %v3473 = vadd.f32 0.0, %v3472
        %v3474 = vpop.f32.mrb[0].mxu0
        %v3475 = vpop.f32.mrb[0].mxu0
        %v3476 = vpop.f32.mrb[0].mxu0
        %3477 = vdwg.mxu0
        %v3478 = vadd.f32 %v3166, %v3473
        %s3479 = scalar_lea.vmem %s13, 2
        %v3480 = vld [vmem:[%s3479] sm:$0x1]
        %v3482 = vlaneseq
        %v3483 = vshrl.u32 %v3482, 7
        %v3484 = vsub.s32 0, %v3483
        %v3485 = vrot.slane %v3480, %v3484
        %v3487 = vadd.f32 %v3478, %v3485
        %s3488 = scalar_lea.vmem %s3, 3
        %v3489 = vld [vmem:[%s3488] sm:$0x1]
        %s3490 = scalar_lea.vmem %s4, 3
        %v3491 = vld [vmem:[%s3490] sm:$0x1]
        %v3492 = vsel %vm524, %v3487, 0.0
        %3493 = vadd.xlane.f32.xlu0 %v3492
        %v3494 = vpop.xlane.xlu0 %3493
        %v3495 = vmul.f32 %v3494, %v528
        %v3496 = vsub.f32 %v3487, %v3495
        %v3497 = vmul.f32 %v3496, %v3496
        %v3498 = vsel %vm524, %v3497, 0.0
        %3499 = vadd.xlane.f32.xlu0 %v3498
        %v3500 = vpop.xlane.xlu0 %3499
        %v3501 = vmul.f32 %v3500, %v528
        %v3502 = vadd.f32 %v3501, 1e-05
        %v3503 = vrsqrt.pop %v3502
        %v3504 = vmul.f32 %v3496, %v3503
        %v3506 = vlaneseq
        %v3507 = vshrl.u32 %v3506, 7
        %v3508 = vsub.s32 0, %v3507
        %v3509 = vrot.slane %v3489, %v3508
        %v3511 = vmul.f32 %v3504, %v3509
        %v3513 = vlaneseq
        %v3514 = vshrl.u32 %v3513, 7
        %v3515 = vsub.s32 0, %v3514
        %v3516 = vrot.slane %v3491, %v3515
        %v3518 = vadd.f32 %v3511, %v3516
        %v3519 = vpack.c.bf16 %v3518, %v3518
        %s3520 = scalar_lea.vmem %s5, 192
        %v3521 = vld [vmem:[%s3520] sm:$0xff]
        %v3522 = vld [vmem:[%s3520 + $0x8] sm:$0xff]
        %v3523 = vld [vmem:[%s3520 + $0x10] sm:$0xff]
        %v3524 = vld [vmem:[%s3520 + $0x18] sm:$0xff]
        %v3525 = vld [vmem:[%s3520 + $0x20] sm:$0xff]
        %v3526 = vld [vmem:[%s3520 + $0x28] sm:$0xff]
        %v3527 = vld [vmem:[%s3520 + $0x30] sm:$0xff]
        %v3528 = vld [vmem:[%s3520 + $0x38] sm:$0xff]
        %v3537 = vunpack.c.l.b16 %v3521
        %v3538 = vunpack.c.h.b16 %v3521
        %v3539 = vunpack.c.l.b16 %v3522
        %v3540 = vunpack.c.h.b16 %v3522
        %v3541 = vunpack.c.l.b16 %v3523
        %v3542 = vunpack.c.h.b16 %v3523
        %v3543 = vunpack.c.l.b16 %v3524
        %v3544 = vunpack.c.h.b16 %v3524
        %v3545 = vunpack.c.l.b16 %v3525
        %v3546 = vunpack.c.h.b16 %v3525
        %v3547 = vunpack.c.l.b16 %v3526
        %v3548 = vunpack.c.h.b16 %v3526
        %v3549 = vunpack.c.l.b16 %v3527
        %v3550 = vunpack.c.h.b16 %v3527
        %v3551 = vunpack.c.l.b16 %v3528
        %v3552 = vunpack.c.h.b16 %v3528
        %v3553 = vpack.c.b16 %v3539, %v3537
        %v3554 = vpack.c.b16 %v3540, %v3538
        %v3555 = vpack.c.b16 %v3543, %v3541
        %v3556 = vpack.c.b16 %v3544, %v3542
        %v3557 = vpack.c.b16 %v3547, %v3545
        %v3558 = vpack.c.b16 %v3548, %v3546
        %v3559 = vpack.c.b16 %v3551, %v3549
        %v3560 = vpack.c.b16 %v3552, %v3550
        %v3570 = vsel %vm524, %v3519, 0
        %3572 = vmatprep.subr.bf16.mxu0 %v3554
        %3573 = vmatpush1.bf16.msra.mxu0 %v3553
        %3574 = vmatprep.subr.bf16.mxu0 %v3556
        %3575 = vmatpush1.bf16.msra.mxu0 %v3555
        %3576 = vmatprep.subr.bf16.mxu0 %v3558
        %3577 = vmatpush1.bf16.msra.mxu0 %v3557
        %3578 = vmatprep.subr.bf16.mxu0 %v3560
        %3579 = vmatpush1.bf16.msra.mxu0 %v3559
        %3580 = vmatprep.subr.bf16.mxu0 0
        %3581 = vmatpush1.bf16.msra.mxu0 0
        %3582 = vmatprep.subr.bf16.mxu0 0
        %3583 = vmatpush1.bf16.msra.mxu0 0
        %3584 = vmatprep.subr.bf16.mxu0 0
        %3585 = vmatpush1.bf16.msra.mxu0 0
        %3586 = vmatprep.subr.bf16.mxu0 0
        %3587 = vmatpush1.bf16.msra.mxu0 0
        %3588 = vmatprep.subr.bf16.mxu0 0
        %3589 = vmatpush1.bf16.msra.mxu0 0
        %3590 = vmatprep.subr.bf16.mxu0 0
        %3591 = vmatpush1.bf16.msra.mxu0 0
        %3592 = vmatprep.subr.bf16.mxu0 0
        %3593 = vmatpush1.bf16.msra.mxu0 0
        %3594 = vmatprep.subr.bf16.mxu0 0
        %3595 = vmatpush1.bf16.msra.mxu0 0
        %3596 = vmatprep.subr.bf16.mxu0 0
        %3597 = vmatpush1.bf16.msra.mxu0 0
        %3598 = vmatprep.subr.bf16.mxu0 0
        %3599 = vmatpush1.bf16.msra.mxu0 0
        %3600 = vmatprep.subr.bf16.mxu0 0
        %3601 = vmatpush1.bf16.msra.mxu0 0
        %3602 = vmatprep.subr.bf16.mxu0 0
        %3603 = vmatpush1.bf16.msra.mxu0 0
        %3604 = vmatprep.mubr.bf16.mxu0 0
        %3605 = vmatmul.mubr.bf16.gmra.mrb[0].mxu0 %v3570
        %v3606 = vpop.f32.mrb[0].mxu0
        %v3607 = vadd.f32 0.0, %v3606
        %v3608 = vpop.f32.mrb[0].mxu0
        %v3609 = vadd.f32 0.0, %v3608
        %v3610 = vpop.f32.mrb[0].mxu0
        %v3611 = vpop.f32.mrb[0].mxu0
        %3612 = vdwg.mxu0
        %v3613 = vmul.f32 %v3607, 8.0
        %v3614 = vpack.c.bf16 %v3613, %v3613
        %v3615 = vpack.c.bf16 %v3607, %v3607
        %3617 = vrot.lane.b32.xlu0 %v3615, 64
        %v3618 = vpop.permute.xlu0 %3617
        %v3620 = vsel %vm652, %v3614, 0
        %v3623 = vsel %vm652, %v3618, 0
        %3625 = vmatprep.subr.bf16.mxu0 0
        %3626 = vmatpush1.bf16.xpose.msra.mxu0 %v3623
        %3627 = vmatprep.subr.bf16.mxu0 0
        %3628 = vmatpush1.bf16.xpose.msra.mxu0 0
        %3629 = vmatprep.subr.bf16.mxu0 0
        %3630 = vmatpush1.bf16.xpose.msra.mxu0 0
        %3631 = vmatprep.subr.bf16.mxu0 0
        %3632 = vmatpush1.bf16.xpose.msra.mxu0 0
        %3633 = vmatprep.subr.bf16.mxu0 0
        %3634 = vmatpush1.bf16.xpose.msra.mxu0 0
        %3635 = vmatprep.subr.bf16.mxu0 0
        %3636 = vmatpush1.bf16.xpose.msra.mxu0 0
        %3637 = vmatprep.subr.bf16.mxu0 0
        %3638 = vmatpush1.bf16.xpose.msra.mxu0 0
        %3639 = vmatprep.subr.bf16.mxu0 0
        %3640 = vmatpush1.bf16.xpose.msra.mxu0 0
        %3641 = vmatprep.subr.bf16.mxu0 0
        %3642 = vmatpush1.bf16.xpose.msra.mxu0 0
        %3643 = vmatprep.subr.bf16.mxu0 0
        %3644 = vmatpush1.bf16.xpose.msra.mxu0 0
        %3645 = vmatprep.subr.bf16.mxu0 0
        %3646 = vmatpush1.bf16.xpose.msra.mxu0 0
        %3647 = vmatprep.subr.bf16.mxu0 0
        %3648 = vmatpush1.bf16.xpose.msra.mxu0 0
        %3649 = vmatprep.subr.bf16.mxu0 0
        %3650 = vmatpush1.bf16.xpose.msra.mxu0 0
        %3651 = vmatprep.subr.bf16.mxu0 0
        %3652 = vmatpush1.bf16.xpose.msra.mxu0 0
        %3653 = vmatprep.subr.bf16.mxu0 0
        %3654 = vmatpush1.bf16.xpose.msra.mxu0 0
        %3655 = vmatprep.subr.bf16.mxu0 0
        %3656 = vmatpush1.bf16.xpose.msra.mxu0 0
        %3657 = vmatprep.mubr.bf16.mxu0 0
        %3658 = vmatmul.mubr.bf16.gmra.mrb[0].mxu0 %v3620
        %v3659 = vpop.f32.mrb[0].mxu0
        %v3660 = vadd.f32 %v521, %v3659
        %v3661 = vpop.f32.mrb[0].mxu0
        %v3662 = vpop.f32.mrb[0].mxu0
        %v3663 = vpop.f32.mrb[0].mxu0
        %3664 = vdwg.mxu0
        %v3665 = vsel %vm699, %v3660, -inf
        %3666 = vmax.xlane.f32.xlu0 %v3665
        %v3667 = vpop.xlane.xlu0 %3666
        %v3668 = vsub.f32 %v3660, %v3667
        %v3669 = vmul.f32 %v3668, 1.442695
        %v3670 = vpow.pop %v3669
        %v3671 = vsel %vm699, %v3670, 0.0
        %3672 = vadd.xlane.f32.xlu0 %v3671
        %v3673 = vpop.xlane.xlu0 %3672
        %v3674 = vrcp.pop %v3673
        %v3675 = vmul.f32 %v3670, %v3674
        %v3676 = vpack.c.bf16 %v3675, %v3675
        %v3677 = vpack.c.bf16 %v3609, %v3609
        %v3679 = vsel %vm699, %v3676, 0
        %v3682 = vsel %vm716, %v3677, 0
        %3684 = vmatprep.subr.bf16.mxu0 0
        %3685 = vmatpush1.bf16.msra.mxu0 %v3682
        %3686 = vmatprep.subr.bf16.mxu0 0
        %3687 = vmatpush1.bf16.msra.mxu0 0
        %3688 = vmatprep.subr.bf16.mxu0 0
        %3689 = vmatpush1.bf16.msra.mxu0 0
        %3690 = vmatprep.subr.bf16.mxu0 0
        %3691 = vmatpush1.bf16.msra.mxu0 0
        %3692 = vmatprep.subr.bf16.mxu0 0
        %3693 = vmatpush1.bf16.msra.mxu0 0
        %3694 = vmatprep.subr.bf16.mxu0 0
        %3695 = vmatpush1.bf16.msra.mxu0 0
        %3696 = vmatprep.subr.bf16.mxu0 0
        %3697 = vmatpush1.bf16.msra.mxu0 0
        %3698 = vmatprep.subr.bf16.mxu0 0
        %3699 = vmatpush1.bf16.msra.mxu0 0
        %3700 = vmatprep.subr.bf16.mxu0 0
        %3701 = vmatpush1.bf16.msra.mxu0 0
        %3702 = vmatprep.subr.bf16.mxu0 0
        %3703 = vmatpush1.bf16.msra.mxu0 0
        %3704 = vmatprep.subr.bf16.mxu0 0
        %3705 = vmatpush1.bf16.msra.mxu0 0
        %3706 = vmatprep.subr.bf16.mxu0 0
        %3707 = vmatpush1.bf16.msra.mxu0 0
        %3708 = vmatprep.subr.bf16.mxu0 0
        %3709 = vmatpush1.bf16.msra.mxu0 0
        %3710 = vmatprep.subr.bf16.mxu0 0
        %3711 = vmatpush1.bf16.msra.mxu0 0
        %3712 = vmatprep.subr.bf16.mxu0 0
        %3713 = vmatpush1.bf16.msra.mxu0 0
        %3714 = vmatprep.subr.bf16.mxu0 0
        %3715 = vmatpush1.bf16.msra.mxu0 0
        %3716 = vmatprep.mubr.bf16.mxu0 0
        %3717 = vmatmul.mubr.bf16.gmra.mrb[0].mxu0 %v3679
        %v3718 = vpop.f32.mrb[0].mxu0
        %v3719 = vadd.f32 0.0, %v3718
        %v3720 = vpop.f32.mrb[0].mxu0
        %v3721 = vpop.f32.mrb[0].mxu0
        %v3722 = vpop.f32.mrb[0].mxu0
        %3723 = vdwg.mxu0
        %3725 = vrot.lane.b32.xlu0 %v3614, 112
        %v3726 = vpop.permute.xlu0 %3725
        %3727 = vrot.lane.b32.xlu0 %v3615, 48
        %v3728 = vpop.permute.xlu0 %3727
        %v3730 = vsel %vm652, %v3726, 0
        %v3733 = vsel %vm652, %v3728, 0
        %3735 = vmatprep.subr.bf16.mxu0 0
        %3736 = vmatpush1.bf16.xpose.msra.mxu0 %v3733
        %3737 = vmatprep.subr.bf16.mxu0 0
        %3738 = vmatpush1.bf16.xpose.msra.mxu0 0
        %3739 = vmatprep.subr.bf16.mxu0 0
        %3740 = vmatpush1.bf16.xpose.msra.mxu0 0
        %3741 = vmatprep.subr.bf16.mxu0 0
        %3742 = vmatpush1.bf16.xpose.msra.mxu0 0
        %3743 = vmatprep.subr.bf16.mxu0 0
        %3744 = vmatpush1.bf16.xpose.msra.mxu0 0
        %3745 = vmatprep.subr.bf16.mxu0 0
        %3746 = vmatpush1.bf16.xpose.msra.mxu0 0
        %3747 = vmatprep.subr.bf16.mxu0 0
        %3748 = vmatpush1.bf16.xpose.msra.mxu0 0
        %3749 = vmatprep.subr.bf16.mxu0 0
        %3750 = vmatpush1.bf16.xpose.msra.mxu0 0
        %3751 = vmatprep.subr.bf16.mxu0 0
        %3752 = vmatpush1.bf16.xpose.msra.mxu0 0
        %3753 = vmatprep.subr.bf16.mxu0 0
        %3754 = vmatpush1.bf16.xpose.msra.mxu0 0
        %3755 = vmatprep.subr.bf16.mxu0 0
        %3756 = vmatpush1.bf16.xpose.msra.mxu0 0
        %3757 = vmatprep.subr.bf16.mxu0 0
        %3758 = vmatpush1.bf16.xpose.msra.mxu0 0
        %3759 = vmatprep.subr.bf16.mxu0 0
        %3760 = vmatpush1.bf16.xpose.msra.mxu0 0
        %3761 = vmatprep.subr.bf16.mxu0 0
        %3762 = vmatpush1.bf16.xpose.msra.mxu0 0
        %3763 = vmatprep.subr.bf16.mxu0 0
        %3764 = vmatpush1.bf16.xpose.msra.mxu0 0
        %3765 = vmatprep.subr.bf16.mxu0 0
        %3766 = vmatpush1.bf16.xpose.msra.mxu0 0
        %3767 = vmatprep.mubr.bf16.mxu0 0
        %3768 = vmatmul.mubr.bf16.gmra.mrb[0].mxu0 %v3730
        %v3769 = vpop.f32.mrb[0].mxu0
        %v3770 = vadd.f32 %v521, %v3769
        %v3771 = vpop.f32.mrb[0].mxu0
        %v3772 = vpop.f32.mrb[0].mxu0
        %v3773 = vpop.f32.mrb[0].mxu0
        %3774 = vdwg.mxu0
        %v3775 = vsel %vm699, %v3770, -inf
        %3776 = vmax.xlane.f32.xlu0 %v3775
        %v3777 = vpop.xlane.xlu0 %3776
        %v3778 = vsub.f32 %v3770, %v3777
        %v3779 = vmul.f32 %v3778, 1.442695
        %v3780 = vpow.pop %v3779
        %v3781 = vsel %vm699, %v3780, 0.0
        %3782 = vadd.xlane.f32.xlu0 %v3781
        %v3783 = vpop.xlane.xlu0 %3782
        %v3784 = vrcp.pop %v3783
        %v3785 = vmul.f32 %v3780, %v3784
        %v3786 = vpack.c.bf16 %v3785, %v3785
        %3788 = vrot.lane.b32.xlu0 %v3677, 112
        %v3789 = vpop.permute.xlu0 %3788
        %v3791 = vsel %vm699, %v3786, 0
        %v3794 = vsel %vm716, %v3789, 0
        %3796 = vmatprep.subr.bf16.mxu0 0
        %3797 = vmatpush1.bf16.msra.mxu0 %v3794
        %3798 = vmatprep.subr.bf16.mxu0 0
        %3799 = vmatpush1.bf16.msra.mxu0 0
        %3800 = vmatprep.subr.bf16.mxu0 0
        %3801 = vmatpush1.bf16.msra.mxu0 0
        %3802 = vmatprep.subr.bf16.mxu0 0
        %3803 = vmatpush1.bf16.msra.mxu0 0
        %3804 = vmatprep.subr.bf16.mxu0 0
        %3805 = vmatpush1.bf16.msra.mxu0 0
        %3806 = vmatprep.subr.bf16.mxu0 0
        %3807 = vmatpush1.bf16.msra.mxu0 0
        %3808 = vmatprep.subr.bf16.mxu0 0
        %3809 = vmatpush1.bf16.msra.mxu0 0
        %3810 = vmatprep.subr.bf16.mxu0 0
        %3811 = vmatpush1.bf16.msra.mxu0 0
        %3812 = vmatprep.subr.bf16.mxu0 0
        %3813 = vmatpush1.bf16.msra.mxu0 0
        %3814 = vmatprep.subr.bf16.mxu0 0
        %3815 = vmatpush1.bf16.msra.mxu0 0
        %3816 = vmatprep.subr.bf16.mxu0 0
        %3817 = vmatpush1.bf16.msra.mxu0 0
        %3818 = vmatprep.subr.bf16.mxu0 0
        %3819 = vmatpush1.bf16.msra.mxu0 0
        %3820 = vmatprep.subr.bf16.mxu0 0
        %3821 = vmatpush1.bf16.msra.mxu0 0
        %3822 = vmatprep.subr.bf16.mxu0 0
        %3823 = vmatpush1.bf16.msra.mxu0 0
        %3824 = vmatprep.subr.bf16.mxu0 0
        %3825 = vmatpush1.bf16.msra.mxu0 0
        %3826 = vmatprep.subr.bf16.mxu0 0
        %3827 = vmatpush1.bf16.msra.mxu0 0
        %3828 = vmatprep.mubr.bf16.mxu0 0
        %3829 = vmatmul.mubr.bf16.gmra.mrb[0].mxu0 %v3791
        %v3830 = vpop.f32.mrb[0].mxu0
        %v3831 = vadd.f32 0.0, %v3830
        %v3832 = vpop.f32.mrb[0].mxu0
        %v3833 = vpop.f32.mrb[0].mxu0
        %v3834 = vpop.f32.mrb[0].mxu0
        %3835 = vdwg.mxu0
        %3836 = vrot.lane.b32.xlu0 %v3614, 96
        %v3837 = vpop.permute.xlu0 %3836
        %3838 = vrot.lane.b32.xlu0 %v3615, 32
        %v3839 = vpop.permute.xlu0 %3838
        %v3841 = vsel %vm652, %v3837, 0
        %v3844 = vsel %vm652, %v3839, 0
        %3846 = vmatprep.subr.bf16.mxu0 0
        %3847 = vmatpush1.bf16.xpose.msra.mxu0 %v3844
        %3848 = vmatprep.subr.bf16.mxu0 0
        %3849 = vmatpush1.bf16.xpose.msra.mxu0 0
        %3850 = vmatprep.subr.bf16.mxu0 0
        %3851 = vmatpush1.bf16.xpose.msra.mxu0 0
        %3852 = vmatprep.subr.bf16.mxu0 0
        %3853 = vmatpush1.bf16.xpose.msra.mxu0 0
        %3854 = vmatprep.subr.bf16.mxu0 0
        %3855 = vmatpush1.bf16.xpose.msra.mxu0 0
        %3856 = vmatprep.subr.bf16.mxu0 0
        %3857 = vmatpush1.bf16.xpose.msra.mxu0 0
        %3858 = vmatprep.subr.bf16.mxu0 0
        %3859 = vmatpush1.bf16.xpose.msra.mxu0 0
        %3860 = vmatprep.subr.bf16.mxu0 0
        %3861 = vmatpush1.bf16.xpose.msra.mxu0 0
        %3862 = vmatprep.subr.bf16.mxu0 0
        %3863 = vmatpush1.bf16.xpose.msra.mxu0 0
        %3864 = vmatprep.subr.bf16.mxu0 0
        %3865 = vmatpush1.bf16.xpose.msra.mxu0 0
        %3866 = vmatprep.subr.bf16.mxu0 0
        %3867 = vmatpush1.bf16.xpose.msra.mxu0 0
        %3868 = vmatprep.subr.bf16.mxu0 0
        %3869 = vmatpush1.bf16.xpose.msra.mxu0 0
        %3870 = vmatprep.subr.bf16.mxu0 0
        %3871 = vmatpush1.bf16.xpose.msra.mxu0 0
        %3872 = vmatprep.subr.bf16.mxu0 0
        %3873 = vmatpush1.bf16.xpose.msra.mxu0 0
        %3874 = vmatprep.subr.bf16.mxu0 0
        %3875 = vmatpush1.bf16.xpose.msra.mxu0 0
        %3876 = vmatprep.subr.bf16.mxu0 0
        %3877 = vmatpush1.bf16.xpose.msra.mxu0 0
        %3878 = vmatprep.mubr.bf16.mxu0 0
        %3879 = vmatmul.mubr.bf16.gmra.mrb[0].mxu0 %v3841
        %v3880 = vpop.f32.mrb[0].mxu0
        %v3881 = vadd.f32 %v521, %v3880
        %v3882 = vpop.f32.mrb[0].mxu0
        %v3883 = vpop.f32.mrb[0].mxu0
        %v3884 = vpop.f32.mrb[0].mxu0
        %3885 = vdwg.mxu0
        %v3886 = vsel %vm699, %v3881, -inf
        %3887 = vmax.xlane.f32.xlu0 %v3886
        %v3888 = vpop.xlane.xlu0 %3887
        %v3889 = vsub.f32 %v3881, %v3888
        %v3890 = vmul.f32 %v3889, 1.442695
        %v3891 = vpow.pop %v3890
        %v3892 = vsel %vm699, %v3891, 0.0
        %3893 = vadd.xlane.f32.xlu0 %v3892
        %v3894 = vpop.xlane.xlu0 %3893
        %v3895 = vrcp.pop %v3894
        %v3896 = vmul.f32 %v3891, %v3895
        %v3897 = vpack.c.bf16 %v3896, %v3896
        %3898 = vrot.lane.b32.xlu0 %v3677, 96
        %v3899 = vpop.permute.xlu0 %3898
        %v3901 = vsel %vm699, %v3897, 0
        %v3904 = vsel %vm716, %v3899, 0
        %3906 = vmatprep.subr.bf16.mxu0 0
        %3907 = vmatpush1.bf16.msra.mxu0 %v3904
        %3908 = vmatprep.subr.bf16.mxu0 0
        %3909 = vmatpush1.bf16.msra.mxu0 0
        %3910 = vmatprep.subr.bf16.mxu0 0
        %3911 = vmatpush1.bf16.msra.mxu0 0
        %3912 = vmatprep.subr.bf16.mxu0 0
        %3913 = vmatpush1.bf16.msra.mxu0 0
        %3914 = vmatprep.subr.bf16.mxu0 0
        %3915 = vmatpush1.bf16.msra.mxu0 0
        %3916 = vmatprep.subr.bf16.mxu0 0
        %3917 = vmatpush1.bf16.msra.mxu0 0
        %3918 = vmatprep.subr.bf16.mxu0 0
        %3919 = vmatpush1.bf16.msra.mxu0 0
        %3920 = vmatprep.subr.bf16.mxu0 0
        %3921 = vmatpush1.bf16.msra.mxu0 0
        %3922 = vmatprep.subr.bf16.mxu0 0
        %3923 = vmatpush1.bf16.msra.mxu0 0
        %3924 = vmatprep.subr.bf16.mxu0 0
        %3925 = vmatpush1.bf16.msra.mxu0 0
        %3926 = vmatprep.subr.bf16.mxu0 0
        %3927 = vmatpush1.bf16.msra.mxu0 0
        %3928 = vmatprep.subr.bf16.mxu0 0
        %3929 = vmatpush1.bf16.msra.mxu0 0
        %3930 = vmatprep.subr.bf16.mxu0 0
        %3931 = vmatpush1.bf16.msra.mxu0 0
        %3932 = vmatprep.subr.bf16.mxu0 0
        %3933 = vmatpush1.bf16.msra.mxu0 0
        %3934 = vmatprep.subr.bf16.mxu0 0
        %3935 = vmatpush1.bf16.msra.mxu0 0
        %3936 = vmatprep.subr.bf16.mxu0 0
        %3937 = vmatpush1.bf16.msra.mxu0 0
        %3938 = vmatprep.mubr.bf16.mxu0 0
        %3939 = vmatmul.mubr.bf16.gmra.mrb[0].mxu0 %v3901
        %v3940 = vpop.f32.mrb[0].mxu0
        %v3941 = vadd.f32 0.0, %v3940
        %v3942 = vpop.f32.mrb[0].mxu0
        %v3943 = vpop.f32.mrb[0].mxu0
        %v3944 = vpop.f32.mrb[0].mxu0
        %3945 = vdwg.mxu0
        %3946 = vrot.lane.b32.xlu0 %v3614, 80
        %v3947 = vpop.permute.xlu0 %3946
        %3948 = vrot.lane.b32.xlu0 %v3615, 16
        %v3949 = vpop.permute.xlu0 %3948
        %v3951 = vsel %vm652, %v3947, 0
        %v3954 = vsel %vm652, %v3949, 0
        %3956 = vmatprep.subr.bf16.mxu0 0
        %3957 = vmatpush1.bf16.xpose.msra.mxu0 %v3954
        %3958 = vmatprep.subr.bf16.mxu0 0
        %3959 = vmatpush1.bf16.xpose.msra.mxu0 0
        %3960 = vmatprep.subr.bf16.mxu0 0
        %3961 = vmatpush1.bf16.xpose.msra.mxu0 0
        %3962 = vmatprep.subr.bf16.mxu0 0
        %3963 = vmatpush1.bf16.xpose.msra.mxu0 0
        %3964 = vmatprep.subr.bf16.mxu0 0
        %3965 = vmatpush1.bf16.xpose.msra.mxu0 0
        %3966 = vmatprep.subr.bf16.mxu0 0
        %3967 = vmatpush1.bf16.xpose.msra.mxu0 0
        %3968 = vmatprep.subr.bf16.mxu0 0
        %3969 = vmatpush1.bf16.xpose.msra.mxu0 0
        %3970 = vmatprep.subr.bf16.mxu0 0
        %3971 = vmatpush1.bf16.xpose.msra.mxu0 0
        %3972 = vmatprep.subr.bf16.mxu0 0
        %3973 = vmatpush1.bf16.xpose.msra.mxu0 0
        %3974 = vmatprep.subr.bf16.mxu0 0
        %3975 = vmatpush1.bf16.xpose.msra.mxu0 0
        %3976 = vmatprep.subr.bf16.mxu0 0
        %3977 = vmatpush1.bf16.xpose.msra.mxu0 0
        %3978 = vmatprep.subr.bf16.mxu0 0
        %3979 = vmatpush1.bf16.xpose.msra.mxu0 0
        %3980 = vmatprep.subr.bf16.mxu0 0
        %3981 = vmatpush1.bf16.xpose.msra.mxu0 0
        %3982 = vmatprep.subr.bf16.mxu0 0
        %3983 = vmatpush1.bf16.xpose.msra.mxu0 0
        %3984 = vmatprep.subr.bf16.mxu0 0
        %3985 = vmatpush1.bf16.xpose.msra.mxu0 0
        %3986 = vmatprep.subr.bf16.mxu0 0
        %3987 = vmatpush1.bf16.xpose.msra.mxu0 0
        %3988 = vmatprep.mubr.bf16.mxu0 0
        %3989 = vmatmul.mubr.bf16.gmra.mrb[0].mxu0 %v3951
        %v3990 = vpop.f32.mrb[0].mxu0
        %v3991 = vadd.f32 %v521, %v3990
        %v3992 = vpop.f32.mrb[0].mxu0
        %v3993 = vpop.f32.mrb[0].mxu0
        %v3994 = vpop.f32.mrb[0].mxu0
        %3995 = vdwg.mxu0
        %v3996 = vsel %vm699, %v3991, -inf
        %3997 = vmax.xlane.f32.xlu0 %v3996
        %v3998 = vpop.xlane.xlu0 %3997
        %v3999 = vsub.f32 %v3991, %v3998
        %v4000 = vmul.f32 %v3999, 1.442695
        %v4001 = vpow.pop %v4000
        %v4002 = vsel %vm699, %v4001, 0.0
        %4003 = vadd.xlane.f32.xlu0 %v4002
        %v4004 = vpop.xlane.xlu0 %4003
        %v4005 = vrcp.pop %v4004
        %v4006 = vmul.f32 %v4001, %v4005
        %v4007 = vpack.c.bf16 %v4006, %v4006
        %4008 = vrot.lane.b32.xlu0 %v3677, 80
        %v4009 = vpop.permute.xlu0 %4008
        %v4011 = vsel %vm699, %v4007, 0
        %v4014 = vsel %vm716, %v4009, 0
        %4016 = vmatprep.subr.bf16.mxu0 0
        %4017 = vmatpush1.bf16.msra.mxu0 %v4014
        %4018 = vmatprep.subr.bf16.mxu0 0
        %4019 = vmatpush1.bf16.msra.mxu0 0
        %4020 = vmatprep.subr.bf16.mxu0 0
        %4021 = vmatpush1.bf16.msra.mxu0 0
        %4022 = vmatprep.subr.bf16.mxu0 0
        %4023 = vmatpush1.bf16.msra.mxu0 0
        %4024 = vmatprep.subr.bf16.mxu0 0
        %4025 = vmatpush1.bf16.msra.mxu0 0
        %4026 = vmatprep.subr.bf16.mxu0 0
        %4027 = vmatpush1.bf16.msra.mxu0 0
        %4028 = vmatprep.subr.bf16.mxu0 0
        %4029 = vmatpush1.bf16.msra.mxu0 0
        %4030 = vmatprep.subr.bf16.mxu0 0
        %4031 = vmatpush1.bf16.msra.mxu0 0
        %4032 = vmatprep.subr.bf16.mxu0 0
        %4033 = vmatpush1.bf16.msra.mxu0 0
        %4034 = vmatprep.subr.bf16.mxu0 0
        %4035 = vmatpush1.bf16.msra.mxu0 0
        %4036 = vmatprep.subr.bf16.mxu0 0
        %4037 = vmatpush1.bf16.msra.mxu0 0
        %4038 = vmatprep.subr.bf16.mxu0 0
        %4039 = vmatpush1.bf16.msra.mxu0 0
        %4040 = vmatprep.subr.bf16.mxu0 0
        %4041 = vmatpush1.bf16.msra.mxu0 0
        %4042 = vmatprep.subr.bf16.mxu0 0
        %4043 = vmatpush1.bf16.msra.mxu0 0
        %4044 = vmatprep.subr.bf16.mxu0 0
        %4045 = vmatpush1.bf16.msra.mxu0 0
        %4046 = vmatprep.subr.bf16.mxu0 0
        %4047 = vmatpush1.bf16.msra.mxu0 0
        %4048 = vmatprep.mubr.bf16.mxu0 0
        %4049 = vmatmul.mubr.bf16.gmra.mrb[0].mxu0 %v4011
        %v4050 = vpop.f32.mrb[0].mxu0
        %v4051 = vadd.f32 0.0, %v4050
        %v4052 = vpop.f32.mrb[0].mxu0
        %v4053 = vpop.f32.mrb[0].mxu0
        %v4054 = vpop.f32.mrb[0].mxu0
        %4055 = vdwg.mxu0
        %4057 = vrot.lane.b32.xlu0 %v3831, 16
        %v4058 = vpop.permute.xlu0 %4057
        %4061 = vrot.lane.b32.xlu0 %v3941, 32
        %v4062 = vpop.permute.xlu0 %4061
        %4065 = vrot.lane.b32.xlu0 %v4051, 48
        %v4066 = vpop.permute.xlu0 %4065
        %v4068 = vsel %vm652, %v3719, %v4058
        %v4069 = vsel %vm1105, %v4068, %v4062
        %v4070 = vsel %vm1107, %v4069, %v4066
        %v4071 = vpack.c.bf16 %v4070, %v4070
        %s4072 = scalar_lea.vmem %s6, 96
        %v4073 = vld [vmem:[%s4072] sm:$0xf]
        %v4074 = vld [vmem:[%s4072 + $0x4] sm:$0xf]
        %v4075 = vld [vmem:[%s4072 + $0x8] sm:$0xf]
        %v4076 = vld [vmem:[%s4072 + $0xc] sm:$0xf]
        %v4077 = vld [vmem:[%s4072 + $0x10] sm:$0xf]
        %v4078 = vld [vmem:[%s4072 + $0x14] sm:$0xf]
        %v4079 = vld [vmem:[%s4072 + $0x18] sm:$0xf]
        %v4080 = vld [vmem:[%s4072 + $0x1c] sm:$0xf]
        %s4081 = scalar_lea.vmem %s7, 3
        %v4082 = vld [vmem:[%s4081] sm:$0x1]
        %v4084 = vlaneseq
        %v4085 = vshrl.u32 %v4084, 7
        %v4086 = vsub.s32 0, %v4085
        %v4087 = vrot.slane %v4082, %v4086
        %v4097 = vunpack.c.l.b16 %v4073
        %v4098 = vunpack.c.l.b16 %v4074
        %v4099 = vunpack.c.l.b16 %v4075
        %v4100 = vunpack.c.l.b16 %v4076
        %v4101 = vunpack.c.l.b16 %v4077
        %v4102 = vunpack.c.l.b16 %v4078
        %v4103 = vunpack.c.l.b16 %v4079
        %v4104 = vunpack.c.l.b16 %v4080
        %v4105 = vpack.c.b16 %v4098, %v4097
        %v4106 = vpack.c.b16 %v4100, %v4099
        %v4107 = vpack.c.b16 %v4102, %v4101
        %v4108 = vpack.c.b16 %v4104, %v4103
        %v4114 = vsel %vm524, %v4071, 0
        %4116 = vmatprep.subr.bf16.mxu0 0
        %4117 = vmatpush1.bf16.msra.mxu0 %v4105
        %4118 = vmatprep.subr.bf16.mxu0 0
        %4119 = vmatpush1.bf16.msra.mxu0 %v4106
        %4120 = vmatprep.subr.bf16.mxu0 0
        %4121 = vmatpush1.bf16.msra.mxu0 %v4107
        %4122 = vmatprep.subr.bf16.mxu0 0
        %4123 = vmatpush1.bf16.msra.mxu0 %v4108
        %4124 = vmatprep.subr.bf16.mxu0 0
        %4125 = vmatpush1.bf16.msra.mxu0 0
        %4126 = vmatprep.subr.bf16.mxu0 0
        %4127 = vmatpush1.bf16.msra.mxu0 0
        %4128 = vmatprep.subr.bf16.mxu0 0
        %4129 = vmatpush1.bf16.msra.mxu0 0
        %4130 = vmatprep.subr.bf16.mxu0 0
        %4131 = vmatpush1.bf16.msra.mxu0 0
        %4132 = vmatprep.subr.bf16.mxu0 0
        %4133 = vmatpush1.bf16.msra.mxu0 0
        %4134 = vmatprep.subr.bf16.mxu0 0
        %4135 = vmatpush1.bf16.msra.mxu0 0
        %4136 = vmatprep.subr.bf16.mxu0 0
        %4137 = vmatpush1.bf16.msra.mxu0 0
        %4138 = vmatprep.subr.bf16.mxu0 0
        %4139 = vmatpush1.bf16.msra.mxu0 0
        %4140 = vmatprep.subr.bf16.mxu0 0
        %4141 = vmatpush1.bf16.msra.mxu0 0
        %4142 = vmatprep.subr.bf16.mxu0 0
        %4143 = vmatpush1.bf16.msra.mxu0 0
        %4144 = vmatprep.subr.bf16.mxu0 0
        %4145 = vmatpush1.bf16.msra.mxu0 0
        %4146 = vmatprep.subr.bf16.mxu0 0
        %4147 = vmatpush1.bf16.msra.mxu0 0
        %4148 = vmatprep.mubr.bf16.mxu0 0
        %4149 = vmatmul.mubr.bf16.gmra.mrb[0].mxu0 %v4114
        %v4150 = vpop.f32.mrb[0].mxu0
        %v4151 = vadd.f32 %v4087, %v4150
        %v4152 = vpop.f32.mrb[0].mxu0
        %v4153 = vpop.f32.mrb[0].mxu0
        %v4154 = vpop.f32.mrb[0].mxu0
        %4155 = vdwg.mxu0
        %v4156 = vadd.f32 %v3487, %v4151
        %s4157 = scalar_lea.vmem %s8, 3
        %v4158 = vld [vmem:[%s4157] sm:$0x1]
        %s4159 = scalar_lea.vmem %s9, 3
        %v4160 = vld [vmem:[%s4159] sm:$0x1]
        %v4161 = vsel %vm524, %v4156, 0.0
        %4162 = vadd.xlane.f32.xlu0 %v4161
        %v4163 = vpop.xlane.xlu0 %4162
        %v4164 = vmul.f32 %v4163, %v528
        %v4165 = vsub.f32 %v4156, %v4164
        %v4166 = vmul.f32 %v4165, %v4165
        %v4167 = vsel %vm524, %v4166, 0.0
        %4168 = vadd.xlane.f32.xlu0 %v4167
        %v4169 = vpop.xlane.xlu0 %4168
        %v4170 = vmul.f32 %v4169, %v528
        %v4171 = vadd.f32 %v4170, 1e-05
        %v4172 = vrsqrt.pop %v4171
        %v4173 = vmul.f32 %v4165, %v4172
        %v4175 = vlaneseq
        %v4176 = vshrl.u32 %v4175, 7
        %v4177 = vsub.s32 0, %v4176
        %v4178 = vrot.slane %v4158, %v4177
        %v4180 = vmul.f32 %v4173, %v4178
        %v4182 = vlaneseq
        %v4183 = vshrl.u32 %v4182, 7
        %v4184 = vsub.s32 0, %v4183
        %v4185 = vrot.slane %v4160, %v4184
        %v4187 = vadd.f32 %v4180, %v4185
        %v4188 = vpack.c.bf16 %v4187, %v4187
        %s4189 = scalar_lea.vmem %s10, 192
        %v4190 = vld [vmem:[%s4189] sm:$0xff]
        %v4191 = vld [vmem:[%s4189 + $0x8] sm:$0xff]
        %v4192 = vld [vmem:[%s4189 + $0x10] sm:$0xff]
        %v4193 = vld [vmem:[%s4189 + $0x18] sm:$0xff]
        %v4194 = vld [vmem:[%s4189 + $0x20] sm:$0xff]
        %v4195 = vld [vmem:[%s4189 + $0x28] sm:$0xff]
        %v4196 = vld [vmem:[%s4189 + $0x30] sm:$0xff]
        %v4197 = vld [vmem:[%s4189 + $0x38] sm:$0xff]
        %s4198 = scalar_lea.vmem %s11, 6
        %v4199 = vld [vmem:[%s4198] sm:$0x3]
        %v4201 = vlaneseq
        %v4202 = vshrl.u32 %v4201, 7
        %v4203 = vsub.s32 0, %v4202
        %v4204 = vrot.slane %v4199, %v4203
        %v4205 = vlaneseq
        %v4206 = vshrl.u32 %v4205, 7
        %v4207 = vsub.s32 1, %v4206
        %v4208 = vrot.slane %v4199, %v4207
        %v4219 = vunpack.c.l.b16 %v4190
        %v4220 = vunpack.c.h.b16 %v4190
        %v4221 = vunpack.c.l.b16 %v4191
        %v4222 = vunpack.c.h.b16 %v4191
        %v4223 = vunpack.c.l.b16 %v4192
        %v4224 = vunpack.c.h.b16 %v4192
        %v4225 = vunpack.c.l.b16 %v4193
        %v4226 = vunpack.c.h.b16 %v4193
        %v4227 = vunpack.c.l.b16 %v4194
        %v4228 = vunpack.c.h.b16 %v4194
        %v4229 = vunpack.c.l.b16 %v4195
        %v4230 = vunpack.c.h.b16 %v4195
        %v4231 = vunpack.c.l.b16 %v4196
        %v4232 = vunpack.c.h.b16 %v4196
        %v4233 = vunpack.c.l.b16 %v4197
        %v4234 = vunpack.c.h.b16 %v4197
        %v4235 = vpack.c.b16 %v4221, %v4219
        %v4236 = vpack.c.b16 %v4222, %v4220
        %v4237 = vpack.c.b16 %v4225, %v4223
        %v4238 = vpack.c.b16 %v4226, %v4224
        %v4239 = vpack.c.b16 %v4229, %v4227
        %v4240 = vpack.c.b16 %v4230, %v4228
        %v4241 = vpack.c.b16 %v4233, %v4231
        %v4242 = vpack.c.b16 %v4234, %v4232
        %v4252 = vsel %vm524, %v4188, 0
        %4254 = vmatprep.subr.bf16.mxu0 %v4236
        %4255 = vmatpush1.bf16.msra.mxu0 %v4235
        %4256 = vmatprep.subr.bf16.mxu0 %v4238
        %4257 = vmatpush1.bf16.msra.mxu0 %v4237
        %4258 = vmatprep.subr.bf16.mxu0 %v4240
        %4259 = vmatpush1.bf16.msra.mxu0 %v4239
        %4260 = vmatprep.subr.bf16.mxu0 %v4242
        %4261 = vmatpush1.bf16.msra.mxu0 %v4241
        %4262 = vmatprep.subr.bf16.mxu0 0
        %4263 = vmatpush1.bf16.msra.mxu0 0
        %4264 = vmatprep.subr.bf16.mxu0 0
        %4265 = vmatpush1.bf16.msra.mxu0 0
        %4266 = vmatprep.subr.bf16.mxu0 0
        %4267 = vmatpush1.bf16.msra.mxu0 0
        %4268 = vmatprep.subr.bf16.mxu0 0
        %4269 = vmatpush1.bf16.msra.mxu0 0
        %4270 = vmatprep.subr.bf16.mxu0 0
        %4271 = vmatpush1.bf16.msra.mxu0 0
        %4272 = vmatprep.subr.bf16.mxu0 0
        %4273 = vmatpush1.bf16.msra.mxu0 0
        %4274 = vmatprep.subr.bf16.mxu0 0
        %4275 = vmatpush1.bf16.msra.mxu0 0
        %4276 = vmatprep.subr.bf16.mxu0 0
        %4277 = vmatpush1.bf16.msra.mxu0 0
        %4278 = vmatprep.subr.bf16.mxu0 0
        %4279 = vmatpush1.bf16.msra.mxu0 0
        %4280 = vmatprep.subr.bf16.mxu0 0
        %4281 = vmatpush1.bf16.msra.mxu0 0
        %4282 = vmatprep.subr.bf16.mxu0 0
        %4283 = vmatpush1.bf16.msra.mxu0 0
        %4284 = vmatprep.subr.bf16.mxu0 0
        %4285 = vmatpush1.bf16.msra.mxu0 0
        %4286 = vmatprep.mubr.bf16.mxu0 0
        %4287 = vmatmul.mubr.bf16.gmra.mrb[0].mxu0 %v4252
        %v4288 = vpop.f32.mrb[0].mxu0
        %v4289 = vadd.f32 %v4204, %v4288
        %v4290 = vpop.f32.mrb[0].mxu0
        %v4291 = vadd.f32 %v4208, %v4290
        %v4292 = vpop.f32.mrb[0].mxu0
        %v4293 = vpop.f32.mrb[0].mxu0
        %4294 = vdwg.mxu0
        %v4295 = vmax.f32 %v4289, 0.0
        %v4296 = vmax.f32 %v4291, 0.0
        %v4297 = vpack.c.bf16 %v4295, %v4295
        %v4298 = vpack.c.bf16 %v4296, %v4296
        %s4299 = scalar_lea.vmem %s12, 384
        %v4300 = vld [vmem:[%s4299] sm:$0xf]
        %v4301 = vld [vmem:[%s4299 + $0x4] sm:$0xf]
        %v4302 = vld [vmem:[%s4299 + $0x8] sm:$0xf]
        %v4303 = vld [vmem:[%s4299 + $0xc] sm:$0xf]
        %v4304 = vld [vmem:[%s4299 + $0x10] sm:$0xf]
        %v4305 = vld [vmem:[%s4299 + $0x14] sm:$0xf]
        %v4306 = vld [vmem:[%s4299 + $0x18] sm:$0xf]
        %v4307 = vld [vmem:[%s4299 + $0x1c] sm:$0xf]
        %v4308 = vld [vmem:[%s4299 + $0x20] sm:$0xf]
        %v4309 = vld [vmem:[%s4299 + $0x24] sm:$0xf]
        %v4310 = vld [vmem:[%s4299 + $0x28] sm:$0xf]
        %v4311 = vld [vmem:[%s4299 + $0x2c] sm:$0xf]
        %v4312 = vld [vmem:[%s4299 + $0x30] sm:$0xf]
        %v4313 = vld [vmem:[%s4299 + $0x34] sm:$0xf]
        %v4314 = vld [vmem:[%s4299 + $0x38] sm:$0xf]
        %v4315 = vld [vmem:[%s4299 + $0x3c] sm:$0xf]
        %v4316 = vld [vmem:[%s4299 + $0x40] sm:$0xf]
        %v4317 = vld [vmem:[%s4299 + $0x44] sm:$0xf]
        %v4318 = vld [vmem:[%s4299 + $0x48] sm:$0xf]
        %v4319 = vld [vmem:[%s4299 + $0x4c] sm:$0xf]
        %v4320 = vld [vmem:[%s4299 + $0x50] sm:$0xf]
        %v4321 = vld [vmem:[%s4299 + $0x54] sm:$0xf]
        %v4322 = vld [vmem:[%s4299 + $0x58] sm:$0xf]
        %v4323 = vld [vmem:[%s4299 + $0x5c] sm:$0xf]
        %v4324 = vld [vmem:[%s4299 + $0x60] sm:$0xf]
        %v4325 = vld [vmem:[%s4299 + $0x64] sm:$0xf]
        %v4326 = vld [vmem:[%s4299 + $0x68] sm:$0xf]
        %v4327 = vld [vmem:[%s4299 + $0x6c] sm:$0xf]
        %v4328 = vld [vmem:[%s4299 + $0x70] sm:$0xf]
        %v4329 = vld [vmem:[%s4299 + $0x74] sm:$0xf]
        %v4330 = vld [vmem:[%s4299 + $0x78] sm:$0xf]
        %v4331 = vld [vmem:[%s4299 + $0x7c] sm:$0xf]
        %v4364 = vunpack.c.l.b16 %v4300
        %v4365 = vunpack.c.l.b16 %v4301
        %v4366 = vunpack.c.l.b16 %v4302
        %v4367 = vunpack.c.l.b16 %v4303
        %v4368 = vunpack.c.l.b16 %v4304
        %v4369 = vunpack.c.l.b16 %v4305
        %v4370 = vunpack.c.l.b16 %v4306
        %v4371 = vunpack.c.l.b16 %v4307
        %v4372 = vunpack.c.l.b16 %v4308
        %v4373 = vunpack.c.l.b16 %v4309
        %v4374 = vunpack.c.l.b16 %v4310
        %v4375 = vunpack.c.l.b16 %v4311
        %v4376 = vunpack.c.l.b16 %v4312
        %v4377 = vunpack.c.l.b16 %v4313
        %v4378 = vunpack.c.l.b16 %v4314
        %v4379 = vunpack.c.l.b16 %v4315
        %v4380 = vunpack.c.l.b16 %v4316
        %v4381 = vunpack.c.l.b16 %v4317
        %v4382 = vunpack.c.l.b16 %v4318
        %v4383 = vunpack.c.l.b16 %v4319
        %v4384 = vunpack.c.l.b16 %v4320
        %v4385 = vunpack.c.l.b16 %v4321
        %v4386 = vunpack.c.l.b16 %v4322
        %v4387 = vunpack.c.l.b16 %v4323
        %v4388 = vunpack.c.l.b16 %v4324
        %v4389 = vunpack.c.l.b16 %v4325
        %v4390 = vunpack.c.l.b16 %v4326
        %v4391 = vunpack.c.l.b16 %v4327
        %v4392 = vunpack.c.l.b16 %v4328
        %v4393 = vunpack.c.l.b16 %v4329
        %v4394 = vunpack.c.l.b16 %v4330
        %v4395 = vunpack.c.l.b16 %v4331
        %v4396 = vpack.c.b16 %v4365, %v4364
        %v4397 = vpack.c.b16 %v4367, %v4366
        %v4398 = vpack.c.b16 %v4369, %v4368
        %v4399 = vpack.c.b16 %v4371, %v4370
        %v4400 = vpack.c.b16 %v4373, %v4372
        %v4401 = vpack.c.b16 %v4375, %v4374
        %v4402 = vpack.c.b16 %v4377, %v4376
        %v4403 = vpack.c.b16 %v4379, %v4378
        %v4404 = vpack.c.b16 %v4381, %v4380
        %v4405 = vpack.c.b16 %v4383, %v4382
        %v4406 = vpack.c.b16 %v4385, %v4384
        %v4407 = vpack.c.b16 %v4387, %v4386
        %v4408 = vpack.c.b16 %v4389, %v4388
        %v4409 = vpack.c.b16 %v4391, %v4390
        %v4410 = vpack.c.b16 %v4393, %v4392
        %v4411 = vpack.c.b16 %v4395, %v4394
        %4428 = vmatprep.subr.bf16.mxu0 0
        %4429 = vmatpush1.bf16.msra.mxu0 %v4396
        %4430 = vmatprep.subr.bf16.mxu0 0
        %4431 = vmatpush1.bf16.msra.mxu0 %v4397
        %4432 = vmatprep.subr.bf16.mxu0 0
        %4433 = vmatpush1.bf16.msra.mxu0 %v4398
        %4434 = vmatprep.subr.bf16.mxu0 0
        %4435 = vmatpush1.bf16.msra.mxu0 %v4399
        %4436 = vmatprep.subr.bf16.mxu0 0
        %4437 = vmatpush1.bf16.msra.mxu0 %v4400
        %4438 = vmatprep.subr.bf16.mxu0 0
        %4439 = vmatpush1.bf16.msra.mxu0 %v4401
        %4440 = vmatprep.subr.bf16.mxu0 0
        %4441 = vmatpush1.bf16.msra.mxu0 %v4402
        %4442 = vmatprep.subr.bf16.mxu0 0
        %4443 = vmatpush1.bf16.msra.mxu0 %v4403
        %4444 = vmatprep.subr.bf16.mxu0 0
        %4445 = vmatpush1.bf16.msra.mxu0 %v4404
        %4446 = vmatprep.subr.bf16.mxu0 0
        %4447 = vmatpush1.bf16.msra.mxu0 %v4405
        %4448 = vmatprep.subr.bf16.mxu0 0
        %4449 = vmatpush1.bf16.msra.mxu0 %v4406
        %4450 = vmatprep.subr.bf16.mxu0 0
        %4451 = vmatpush1.bf16.msra.mxu0 %v4407
        %4452 = vmatprep.subr.bf16.mxu0 0
        %4453 = vmatpush1.bf16.msra.mxu0 %v4408
        %4454 = vmatprep.subr.bf16.mxu0 0
        %4455 = vmatpush1.bf16.msra.mxu0 %v4409
        %4456 = vmatprep.subr.bf16.mxu0 0
        %4457 = vmatpush1.bf16.msra.mxu0 %v4410
        %4458 = vmatprep.subr.bf16.mxu0 0
        %4459 = vmatpush1.bf16.msra.mxu0 %v4411
        %4460 = vmatprep.mubr.bf16.mxu0 %v4298
        %4461 = vmatmul.mubr.bf16.gmra.mrb[0].mxu0 %v4297
        %v4462 = vpop.f32.mrb[0].mxu0
        %v4463 = vadd.f32 0.0, %v4462
        %v4464 = vpop.f32.mrb[0].mxu0
        %v4465 = vpop.f32.mrb[0].mxu0
        %v4466 = vpop.f32.mrb[0].mxu0
        %4467 = vdwg.mxu0
        %v4468 = vadd.f32 %v4156, %v4463
        %s4469 = scalar_lea.vmem %s13, 3
        %v4470 = vld [vmem:[%s4469] sm:$0x1]
        %v4472 = vlaneseq
        %v4473 = vshrl.u32 %v4472, 7
        %v4474 = vsub.s32 0, %v4473
        %v4475 = vrot.slane %v4470, %v4474
        %v4477 = vadd.f32 %v4468, %v4475
        %s4478 = scalar_lea.vmem %s3, 4
        %v4479 = vld [vmem:[%s4478] sm:$0x1]
        %s4480 = scalar_lea.vmem %s4, 4
        %v4481 = vld [vmem:[%s4480] sm:$0x1]
        %v4482 = vsel %vm524, %v4477, 0.0
        %4483 = vadd.xlane.f32.xlu0 %v4482
        %v4484 = vpop.xlane.xlu0 %4483
        %v4485 = vmul.f32 %v4484, %v528
        %v4486 = vsub.f32 %v4477, %v4485
        %v4487 = vmul.f32 %v4486, %v4486
        %v4488 = vsel %vm524, %v4487, 0.0
        %4489 = vadd.xlane.f32.xlu0 %v4488
        %v4490 = vpop.xlane.xlu0 %4489
        %v4491 = vmul.f32 %v4490, %v528
        %v4492 = vadd.f32 %v4491, 1e-05
        %v4493 = vrsqrt.pop %v4492
        %v4494 = vmul.f32 %v4486, %v4493
        %v4496 = vlaneseq
        %v4497 = vshrl.u32 %v4496, 7
        %v4498 = vsub.s32 0, %v4497
        %v4499 = vrot.slane %v4479, %v4498
        %v4501 = vmul.f32 %v4494, %v4499
        %v4503 = vlaneseq
        %v4504 = vshrl.u32 %v4503, 7
        %v4505 = vsub.s32 0, %v4504
        %v4506 = vrot.slane %v4481, %v4505
        %v4508 = vadd.f32 %v4501, %v4506
        %v4509 = vpack.c.bf16 %v4508, %v4508
        %s4510 = scalar_lea.vmem %s5, 256
        %v4511 = vld [vmem:[%s4510] sm:$0xff]
        %v4512 = vld [vmem:[%s4510 + $0x8] sm:$0xff]
        %v4513 = vld [vmem:[%s4510 + $0x10] sm:$0xff]
        %v4514 = vld [vmem:[%s4510 + $0x18] sm:$0xff]
        %v4515 = vld [vmem:[%s4510 + $0x20] sm:$0xff]
        %v4516 = vld [vmem:[%s4510 + $0x28] sm:$0xff]
        %v4517 = vld [vmem:[%s4510 + $0x30] sm:$0xff]
        %v4518 = vld [vmem:[%s4510 + $0x38] sm:$0xff]
        %v4527 = vunpack.c.l.b16 %v4511
        %v4528 = vunpack.c.h.b16 %v4511
        %v4529 = vunpack.c.l.b16 %v4512
        %v4530 = vunpack.c.h.b16 %v4512
        %v4531 = vunpack.c.l.b16 %v4513
        %v4532 = vunpack.c.h.b16 %v4513
        %v4533 = vunpack.c.l.b16 %v4514
        %v4534 = vunpack.c.h.b16 %v4514
        %v4535 = vunpack.c.l.b16 %v4515
        %v4536 = vunpack.c.h.b16 %v4515
        %v4537 = vunpack.c.l.b16 %v4516
        %v4538 = vunpack.c.h.b16 %v4516
        %v4539 = vunpack.c.l.b16 %v4517
        %v4540 = vunpack.c.h.b16 %v4517
        %v4541 = vunpack.c.l.b16 %v4518
        %v4542 = vunpack.c.h.b16 %v4518
        %v4543 = vpack.c.b16 %v4529, %v4527
        %v4544 = vpack.c.b16 %v4530, %v4528
        %v4545 = vpack.c.b16 %v4533, %v4531
        %v4546 = vpack.c.b16 %v4534, %v4532
        %v4547 = vpack.c.b16 %v4537, %v4535
        %v4548 = vpack.c.b16 %v4538, %v4536
        %v4549 = vpack.c.b16 %v4541, %v4539
        %v4550 = vpack.c.b16 %v4542, %v4540
        %v4560 = vsel %vm524, %v4509, 0
        %4562 = vmatprep.subr.bf16.mxu0 %v4544
        %4563 = vmatpush1.bf16.msra.mxu0 %v4543
        %4564 = vmatprep.subr.bf16.mxu0 %v4546
        %4565 = vmatpush1.bf16.msra.mxu0 %v4545
        %4566 = vmatprep.subr.bf16.mxu0 %v4548
        %4567 = vmatpush1.bf16.msra.mxu0 %v4547
        %4568 = vmatprep.subr.bf16.mxu0 %v4550
        %4569 = vmatpush1.bf16.msra.mxu0 %v4549
        %4570 = vmatprep.subr.bf16.mxu0 0
        %4571 = vmatpush1.bf16.msra.mxu0 0
        %4572 = vmatprep.subr.bf16.mxu0 0
        %4573 = vmatpush1.bf16.msra.mxu0 0
        %4574 = vmatprep.subr.bf16.mxu0 0
        %4575 = vmatpush1.bf16.msra.mxu0 0
        %4576 = vmatprep.subr.bf16.mxu0 0
        %4577 = vmatpush1.bf16.msra.mxu0 0
        %4578 = vmatprep.subr.bf16.mxu0 0
        %4579 = vmatpush1.bf16.msra.mxu0 0
        %4580 = vmatprep.subr.bf16.mxu0 0
        %4581 = vmatpush1.bf16.msra.mxu0 0
        %4582 = vmatprep.subr.bf16.mxu0 0
        %4583 = vmatpush1.bf16.msra.mxu0 0
        %4584 = vmatprep.subr.bf16.mxu0 0
        %4585 = vmatpush1.bf16.msra.mxu0 0
        %4586 = vmatprep.subr.bf16.mxu0 0
        %4587 = vmatpush1.bf16.msra.mxu0 0
        %4588 = vmatprep.subr.bf16.mxu0 0
        %4589 = vmatpush1.bf16.msra.mxu0 0
        %4590 = vmatprep.subr.bf16.mxu0 0
        %4591 = vmatpush1.bf16.msra.mxu0 0
        %4592 = vmatprep.subr.bf16.mxu0 0
        %4593 = vmatpush1.bf16.msra.mxu0 0
        %4594 = vmatprep.mubr.bf16.mxu0 0
        %4595 = vmatmul.mubr.bf16.gmra.mrb[0].mxu0 %v4560
        %v4596 = vpop.f32.mrb[0].mxu0
        %v4597 = vadd.f32 0.0, %v4596
        %v4598 = vpop.f32.mrb[0].mxu0
        %v4599 = vadd.f32 0.0, %v4598
        %v4600 = vpop.f32.mrb[0].mxu0
        %v4601 = vpop.f32.mrb[0].mxu0
        %4602 = vdwg.mxu0
        %v4603 = vmul.f32 %v4597, 8.0
        %v4604 = vpack.c.bf16 %v4603, %v4603
        %v4605 = vpack.c.bf16 %v4597, %v4597
        %4607 = vrot.lane.b32.xlu0 %v4605, 64
        %v4608 = vpop.permute.xlu0 %4607
        %v4610 = vsel %vm652, %v4604, 0
        %v4613 = vsel %vm652, %v4608, 0
        %4615 = vmatprep.subr.bf16.mxu0 0
        %4616 = vmatpush1.bf16.xpose.msra.mxu0 %v4613
        %4617 = vmatprep.subr.bf16.mxu0 0
        %4618 = vmatpush1.bf16.xpose.msra.mxu0 0
        %4619 = vmatprep.subr.bf16.mxu0 0
        %4620 = vmatpush1.bf16.xpose.msra.mxu0 0
        %4621 = vmatprep.subr.bf16.mxu0 0
        %4622 = vmatpush1.bf16.xpose.msra.mxu0 0
        %4623 = vmatprep.subr.bf16.mxu0 0
        %4624 = vmatpush1.bf16.xpose.msra.mxu0 0
        %4625 = vmatprep.subr.bf16.mxu0 0
        %4626 = vmatpush1.bf16.xpose.msra.mxu0 0
        %4627 = vmatprep.subr.bf16.mxu0 0
        %4628 = vmatpush1.bf16.xpose.msra.mxu0 0
        %4629 = vmatprep.subr.bf16.mxu0 0
        %4630 = vmatpush1.bf16.xpose.msra.mxu0 0
        %4631 = vmatprep.subr.bf16.mxu0 0
        %4632 = vmatpush1.bf16.xpose.msra.mxu0 0
        %4633 = vmatprep.subr.bf16.mxu0 0
        %4634 = vmatpush1.bf16.xpose.msra.mxu0 0
        %4635 = vmatprep.subr.bf16.mxu0 0
        %4636 = vmatpush1.bf16.xpose.msra.mxu0 0
        %4637 = vmatprep.subr.bf16.mxu0 0
        %4638 = vmatpush1.bf16.xpose.msra.mxu0 0
        %4639 = vmatprep.subr.bf16.mxu0 0
        %4640 = vmatpush1.bf16.xpose.msra.mxu0 0
        %4641 = vmatprep.subr.bf16.mxu0 0
        %4642 = vmatpush1.bf16.xpose.msra.mxu0 0
        %4643 = vmatprep.subr.bf16.mxu0 0
        %4644 = vmatpush1.bf16.xpose.msra.mxu0 0
        %4645 = vmatprep.subr.bf16.mxu0 0
        %4646 = vmatpush1.bf16.xpose.msra.mxu0 0
        %4647 = vmatprep.mubr.bf16.mxu0 0
        %4648 = vmatmul.mubr.bf16.gmra.mrb[0].mxu0 %v4610
        %v4649 = vpop.f32.mrb[0].mxu0
        %v4650 = vadd.f32 %v521, %v4649
        %v4651 = vpop.f32.mrb[0].mxu0
        %v4652 = vpop.f32.mrb[0].mxu0
        %v4653 = vpop.f32.mrb[0].mxu0
        %4654 = vdwg.mxu0
        %v4655 = vsel %vm699, %v4650, -inf
        %4656 = vmax.xlane.f32.xlu0 %v4655
        %v4657 = vpop.xlane.xlu0 %4656
        %v4658 = vsub.f32 %v4650, %v4657
        %v4659 = vmul.f32 %v4658, 1.442695
        %v4660 = vpow.pop %v4659
        %v4661 = vsel %vm699, %v4660, 0.0
        %4662 = vadd.xlane.f32.xlu0 %v4661
        %v4663 = vpop.xlane.xlu0 %4662
        %v4664 = vrcp.pop %v4663
        %v4665 = vmul.f32 %v4660, %v4664
        %v4666 = vpack.c.bf16 %v4665, %v4665
        %v4667 = vpack.c.bf16 %v4599, %v4599
        %v4669 = vsel %vm699, %v4666, 0
        %v4672 = vsel %vm716, %v4667, 0
        %4674 = vmatprep.subr.bf16.mxu0 0
        %4675 = vmatpush1.bf16.msra.mxu0 %v4672
        %4676 = vmatprep.subr.bf16.mxu0 0
        %4677 = vmatpush1.bf16.msra.mxu0 0
        %4678 = vmatprep.subr.bf16.mxu0 0
        %4679 = vmatpush1.bf16.msra.mxu0 0
        %4680 = vmatprep.subr.bf16.mxu0 0
        %4681 = vmatpush1.bf16.msra.mxu0 0
        %4682 = vmatprep.subr.bf16.mxu0 0
        %4683 = vmatpush1.bf16.msra.mxu0 0
        %4684 = vmatprep.subr.bf16.mxu0 0
        %4685 = vmatpush1.bf16.msra.mxu0 0
        %4686 = vmatprep.subr.bf16.mxu0 0
        %4687 = vmatpush1.bf16.msra.mxu0 0
        %4688 = vmatprep.subr.bf16.mxu0 0
        %4689 = vmatpush1.bf16.msra.mxu0 0
        %4690 = vmatprep.subr.bf16.mxu0 0
        %4691 = vmatpush1.bf16.msra.mxu0 0
        %4692 = vmatprep.subr.bf16.mxu0 0
        %4693 = vmatpush1.bf16.msra.mxu0 0
        %4694 = vmatprep.subr.bf16.mxu0 0
        %4695 = vmatpush1.bf16.msra.mxu0 0
        %4696 = vmatprep.subr.bf16.mxu0 0
        %4697 = vmatpush1.bf16.msra.mxu0 0
        %4698 = vmatprep.subr.bf16.mxu0 0
        %4699 = vmatpush1.bf16.msra.mxu0 0
        %4700 = vmatprep.subr.bf16.mxu0 0
        %4701 = vmatpush1.bf16.msra.mxu0 0
        %4702 = vmatprep.subr.bf16.mxu0 0
        %4703 = vmatpush1.bf16.msra.mxu0 0
        %4704 = vmatprep.subr.bf16.mxu0 0
        %4705 = vmatpush1.bf16.msra.mxu0 0
        %4706 = vmatprep.mubr.bf16.mxu0 0
        %4707 = vmatmul.mubr.bf16.gmra.mrb[0].mxu0 %v4669
        %v4708 = vpop.f32.mrb[0].mxu0
        %v4709 = vadd.f32 0.0, %v4708
        %v4710 = vpop.f32.mrb[0].mxu0
        %v4711 = vpop.f32.mrb[0].mxu0
        %v4712 = vpop.f32.mrb[0].mxu0
        %4713 = vdwg.mxu0
        %4715 = vrot.lane.b32.xlu0 %v4604, 112
        %v4716 = vpop.permute.xlu0 %4715
        %4717 = vrot.lane.b32.xlu0 %v4605, 48
        %v4718 = vpop.permute.xlu0 %4717
        %v4720 = vsel %vm652, %v4716, 0
        %v4723 = vsel %vm652, %v4718, 0
        %4725 = vmatprep.subr.bf16.mxu0 0
        %4726 = vmatpush1.bf16.xpose.msra.mxu0 %v4723
        %4727 = vmatprep.subr.bf16.mxu0 0
        %4728 = vmatpush1.bf16.xpose.msra.mxu0 0
        %4729 = vmatprep.subr.bf16.mxu0 0
        %4730 = vmatpush1.bf16.xpose.msra.mxu0 0
        %4731 = vmatprep.subr.bf16.mxu0 0
        %4732 = vmatpush1.bf16.xpose.msra.mxu0 0
        %4733 = vmatprep.subr.bf16.mxu0 0
        %4734 = vmatpush1.bf16.xpose.msra.mxu0 0
        %4735 = vmatprep.subr.bf16.mxu0 0
        %4736 = vmatpush1.bf16.xpose.msra.mxu0 0
        %4737 = vmatprep.subr.bf16.mxu0 0
        %4738 = vmatpush1.bf16.xpose.msra.mxu0 0
        %4739 = vmatprep.subr.bf16.mxu0 0
        %4740 = vmatpush1.bf16.xpose.msra.mxu0 0
        %4741 = vmatprep.subr.bf16.mxu0 0
        %4742 = vmatpush1.bf16.xpose.msra.mxu0 0
        %4743 = vmatprep.subr.bf16.mxu0 0
        %4744 = vmatpush1.bf16.xpose.msra.mxu0 0
        %4745 = vmatprep.subr.bf16.mxu0 0
        %4746 = vmatpush1.bf16.xpose.msra.mxu0 0
        %4747 = vmatprep.subr.bf16.mxu0 0
        %4748 = vmatpush1.bf16.xpose.msra.mxu0 0
        %4749 = vmatprep.subr.bf16.mxu0 0
        %4750 = vmatpush1.bf16.xpose.msra.mxu0 0
        %4751 = vmatprep.subr.bf16.mxu0 0
        %4752 = vmatpush1.bf16.xpose.msra.mxu0 0
        %4753 = vmatprep.subr.bf16.mxu0 0
        %4754 = vmatpush1.bf16.xpose.msra.mxu0 0
        %4755 = vmatprep.subr.bf16.mxu0 0
        %4756 = vmatpush1.bf16.xpose.msra.mxu0 0
        %4757 = vmatprep.mubr.bf16.mxu0 0
        %4758 = vmatmul.mubr.bf16.gmra.mrb[0].mxu0 %v4720
        %v4759 = vpop.f32.mrb[0].mxu0
        %v4760 = vadd.f32 %v521, %v4759
        %v4761 = vpop.f32.mrb[0].mxu0
        %v4762 = vpop.f32.mrb[0].mxu0
        %v4763 = vpop.f32.mrb[0].mxu0
        %4764 = vdwg.mxu0
        %v4765 = vsel %vm699, %v4760, -inf
        %4766 = vmax.xlane.f32.xlu0 %v4765
        %v4767 = vpop.xlane.xlu0 %4766
        %v4768 = vsub.f32 %v4760, %v4767
        %v4769 = vmul.f32 %v4768, 1.442695
        %v4770 = vpow.pop %v4769
        %v4771 = vsel %vm699, %v4770, 0.0
        %4772 = vadd.xlane.f32.xlu0 %v4771
        %v4773 = vpop.xlane.xlu0 %4772
        %v4774 = vrcp.pop %v4773
        %v4775 = vmul.f32 %v4770, %v4774
        %v4776 = vpack.c.bf16 %v4775, %v4775
        %4778 = vrot.lane.b32.xlu0 %v4667, 112
        %v4779 = vpop.permute.xlu0 %4778
        %v4781 = vsel %vm699, %v4776, 0
        %v4784 = vsel %vm716, %v4779, 0
        %4786 = vmatprep.subr.bf16.mxu0 0
        %4787 = vmatpush1.bf16.msra.mxu0 %v4784
        %4788 = vmatprep.subr.bf16.mxu0 0
        %4789 = vmatpush1.bf16.msra.mxu0 0
        %4790 = vmatprep.subr.bf16.mxu0 0
        %4791 = vmatpush1.bf16.msra.mxu0 0
        %4792 = vmatprep.subr.bf16.mxu0 0
        %4793 = vmatpush1.bf16.msra.mxu0 0
        %4794 = vmatprep.subr.bf16.mxu0 0
        %4795 = vmatpush1.bf16.msra.mxu0 0
        %4796 = vmatprep.subr.bf16.mxu0 0
        %4797 = vmatpush1.bf16.msra.mxu0 0
        %4798 = vmatprep.subr.bf16.mxu0 0
        %4799 = vmatpush1.bf16.msra.mxu0 0
        %4800 = vmatprep.subr.bf16.mxu0 0
        %4801 = vmatpush1.bf16.msra.mxu0 0
        %4802 = vmatprep.subr.bf16.mxu0 0
        %4803 = vmatpush1.bf16.msra.mxu0 0
        %4804 = vmatprep.subr.bf16.mxu0 0
        %4805 = vmatpush1.bf16.msra.mxu0 0
        %4806 = vmatprep.subr.bf16.mxu0 0
        %4807 = vmatpush1.bf16.msra.mxu0 0
        %4808 = vmatprep.subr.bf16.mxu0 0
        %4809 = vmatpush1.bf16.msra.mxu0 0
        %4810 = vmatprep.subr.bf16.mxu0 0
        %4811 = vmatpush1.bf16.msra.mxu0 0
        %4812 = vmatprep.subr.bf16.mxu0 0
        %4813 = vmatpush1.bf16.msra.mxu0 0
        %4814 = vmatprep.subr.bf16.mxu0 0
        %4815 = vmatpush1.bf16.msra.mxu0 0
        %4816 = vmatprep.subr.bf16.mxu0 0
        %4817 = vmatpush1.bf16.msra.mxu0 0
        %4818 = vmatprep.mubr.bf16.mxu0 0
        %4819 = vmatmul.mubr.bf16.gmra.mrb[0].mxu0 %v4781
        %v4820 = vpop.f32.mrb[0].mxu0
        %v4821 = vadd.f32 0.0, %v4820
        %v4822 = vpop.f32.mrb[0].mxu0
        %v4823 = vpop.f32.mrb[0].mxu0
        %v4824 = vpop.f32.mrb[0].mxu0
        %4825 = vdwg.mxu0
        %4826 = vrot.lane.b32.xlu0 %v4604, 96
        %v4827 = vpop.permute.xlu0 %4826
        %4828 = vrot.lane.b32.xlu0 %v4605, 32
        %v4829 = vpop.permute.xlu0 %4828
        %v4831 = vsel %vm652, %v4827, 0
        %v4834 = vsel %vm652, %v4829, 0
        %4836 = vmatprep.subr.bf16.mxu0 0
        %4837 = vmatpush1.bf16.xpose.msra.mxu0 %v4834
        %4838 = vmatprep.subr.bf16.mxu0 0
        %4839 = vmatpush1.bf16.xpose.msra.mxu0 0
        %4840 = vmatprep.subr.bf16.mxu0 0
        %4841 = vmatpush1.bf16.xpose.msra.mxu0 0
        %4842 = vmatprep.subr.bf16.mxu0 0
        %4843 = vmatpush1.bf16.xpose.msra.mxu0 0
        %4844 = vmatprep.subr.bf16.mxu0 0
        %4845 = vmatpush1.bf16.xpose.msra.mxu0 0
        %4846 = vmatprep.subr.bf16.mxu0 0
        %4847 = vmatpush1.bf16.xpose.msra.mxu0 0
        %4848 = vmatprep.subr.bf16.mxu0 0
        %4849 = vmatpush1.bf16.xpose.msra.mxu0 0
        %4850 = vmatprep.subr.bf16.mxu0 0
        %4851 = vmatpush1.bf16.xpose.msra.mxu0 0
        %4852 = vmatprep.subr.bf16.mxu0 0
        %4853 = vmatpush1.bf16.xpose.msra.mxu0 0
        %4854 = vmatprep.subr.bf16.mxu0 0
        %4855 = vmatpush1.bf16.xpose.msra.mxu0 0
        %4856 = vmatprep.subr.bf16.mxu0 0
        %4857 = vmatpush1.bf16.xpose.msra.mxu0 0
        %4858 = vmatprep.subr.bf16.mxu0 0
        %4859 = vmatpush1.bf16.xpose.msra.mxu0 0
        %4860 = vmatprep.subr.bf16.mxu0 0
        %4861 = vmatpush1.bf16.xpose.msra.mxu0 0
        %4862 = vmatprep.subr.bf16.mxu0 0
        %4863 = vmatpush1.bf16.xpose.msra.mxu0 0
        %4864 = vmatprep.subr.bf16.mxu0 0
        %4865 = vmatpush1.bf16.xpose.msra.mxu0 0
        %4866 = vmatprep.subr.bf16.mxu0 0
        %4867 = vmatpush1.bf16.xpose.msra.mxu0 0
        %4868 = vmatprep.mubr.bf16.mxu0 0
        %4869 = vmatmul.mubr.bf16.gmra.mrb[0].mxu0 %v4831
        %v4870 = vpop.f32.mrb[0].mxu0
        %v4871 = vadd.f32 %v521, %v4870
        %v4872 = vpop.f32.mrb[0].mxu0
        %v4873 = vpop.f32.mrb[0].mxu0
        %v4874 = vpop.f32.mrb[0].mxu0
        %4875 = vdwg.mxu0
        %v4876 = vsel %vm699, %v4871, -inf
        %4877 = vmax.xlane.f32.xlu0 %v4876
        %v4878 = vpop.xlane.xlu0 %4877
        %v4879 = vsub.f32 %v4871, %v4878
        %v4880 = vmul.f32 %v4879, 1.442695
        %v4881 = vpow.pop %v4880
        %v4882 = vsel %vm699, %v4881, 0.0
        %4883 = vadd.xlane.f32.xlu0 %v4882
        %v4884 = vpop.xlane.xlu0 %4883
        %v4885 = vrcp.pop %v4884
        %v4886 = vmul.f32 %v4881, %v4885
        %v4887 = vpack.c.bf16 %v4886, %v4886
        %4888 = vrot.lane.b32.xlu0 %v4667, 96
        %v4889 = vpop.permute.xlu0 %4888
        %v4891 = vsel %vm699, %v4887, 0
        %v4894 = vsel %vm716, %v4889, 0
        %4896 = vmatprep.subr.bf16.mxu0 0
        %4897 = vmatpush1.bf16.msra.mxu0 %v4894
        %4898 = vmatprep.subr.bf16.mxu0 0
        %4899 = vmatpush1.bf16.msra.mxu0 0
        %4900 = vmatprep.subr.bf16.mxu0 0
        %4901 = vmatpush1.bf16.msra.mxu0 0
        %4902 = vmatprep.subr.bf16.mxu0 0
        %4903 = vmatpush1.bf16.msra.mxu0 0
        %4904 = vmatprep.subr.bf16.mxu0 0
        %4905 = vmatpush1.bf16.msra.mxu0 0
        %4906 = vmatprep.subr.bf16.mxu0 0
        %4907 = vmatpush1.bf16.msra.mxu0 0
        %4908 = vmatprep.subr.bf16.mxu0 0
        %4909 = vmatpush1.bf16.msra.mxu0 0
        %4910 = vmatprep.subr.bf16.mxu0 0
        %4911 = vmatpush1.bf16.msra.mxu0 0
        %4912 = vmatprep.subr.bf16.mxu0 0
        %4913 = vmatpush1.bf16.msra.mxu0 0
        %4914 = vmatprep.subr.bf16.mxu0 0
        %4915 = vmatpush1.bf16.msra.mxu0 0
        %4916 = vmatprep.subr.bf16.mxu0 0
        %4917 = vmatpush1.bf16.msra.mxu0 0
        %4918 = vmatprep.subr.bf16.mxu0 0
        %4919 = vmatpush1.bf16.msra.mxu0 0
        %4920 = vmatprep.subr.bf16.mxu0 0
        %4921 = vmatpush1.bf16.msra.mxu0 0
        %4922 = vmatprep.subr.bf16.mxu0 0
        %4923 = vmatpush1.bf16.msra.mxu0 0
        %4924 = vmatprep.subr.bf16.mxu0 0
        %4925 = vmatpush1.bf16.msra.mxu0 0
        %4926 = vmatprep.subr.bf16.mxu0 0
        %4927 = vmatpush1.bf16.msra.mxu0 0
        %4928 = vmatprep.mubr.bf16.mxu0 0
        %4929 = vmatmul.mubr.bf16.gmra.mrb[0].mxu0 %v4891
        %v4930 = vpop.f32.mrb[0].mxu0
        %v4931 = vadd.f32 0.0, %v4930
        %v4932 = vpop.f32.mrb[0].mxu0
        %v4933 = vpop.f32.mrb[0].mxu0
        %v4934 = vpop.f32.mrb[0].mxu0
        %4935 = vdwg.mxu0
        %4936 = vrot.lane.b32.xlu0 %v4604, 80
        %v4937 = vpop.permute.xlu0 %4936
        %4938 = vrot.lane.b32.xlu0 %v4605, 16
        %v4939 = vpop.permute.xlu0 %4938
        %v4941 = vsel %vm652, %v4937, 0
        %v4944 = vsel %vm652, %v4939, 0
        %4946 = vmatprep.subr.bf16.mxu0 0
        %4947 = vmatpush1.bf16.xpose.msra.mxu0 %v4944
        %4948 = vmatprep.subr.bf16.mxu0 0
        %4949 = vmatpush1.bf16.xpose.msra.mxu0 0
        %4950 = vmatprep.subr.bf16.mxu0 0
        %4951 = vmatpush1.bf16.xpose.msra.mxu0 0
        %4952 = vmatprep.subr.bf16.mxu0 0
        %4953 = vmatpush1.bf16.xpose.msra.mxu0 0
        %4954 = vmatprep.subr.bf16.mxu0 0
        %4955 = vmatpush1.bf16.xpose.msra.mxu0 0
        %4956 = vmatprep.subr.bf16.mxu0 0
        %4957 = vmatpush1.bf16.xpose.msra.mxu0 0
        %4958 = vmatprep.subr.bf16.mxu0 0
        %4959 = vmatpush1.bf16.xpose.msra.mxu0 0
        %4960 = vmatprep.subr.bf16.mxu0 0
        %4961 = vmatpush1.bf16.xpose.msra.mxu0 0
        %4962 = vmatprep.subr.bf16.mxu0 0
        %4963 = vmatpush1.bf16.xpose.msra.mxu0 0
        %4964 = vmatprep.subr.bf16.mxu0 0
        %4965 = vmatpush1.bf16.xpose.msra.mxu0 0
        %4966 = vmatprep.subr.bf16.mxu0 0
        %4967 = vmatpush1.bf16.xpose.msra.mxu0 0
        %4968 = vmatprep.subr.bf16.mxu0 0
        %4969 = vmatpush1.bf16.xpose.msra.mxu0 0
        %4970 = vmatprep.subr.bf16.mxu0 0
        %4971 = vmatpush1.bf16.xpose.msra.mxu0 0
        %4972 = vmatprep.subr.bf16.mxu0 0
        %4973 = vmatpush1.bf16.xpose.msra.mxu0 0
        %4974 = vmatprep.subr.bf16.mxu0 0
        %4975 = vmatpush1.bf16.xpose.msra.mxu0 0
        %4976 = vmatprep.subr.bf16.mxu0 0
        %4977 = vmatpush1.bf16.xpose.msra.mxu0 0
        %4978 = vmatprep.mubr.bf16.mxu0 0
        %4979 = vmatmul.mubr.bf16.gmra.mrb[0].mxu0 %v4941
        %v4980 = vpop.f32.mrb[0].mxu0
        %v4981 = vadd.f32 %v521, %v4980
        %v4982 = vpop.f32.mrb[0].mxu0
        %v4983 = vpop.f32.mrb[0].mxu0
        %v4984 = vpop.f32.mrb[0].mxu0
        %4985 = vdwg.mxu0
        %v4986 = vsel %vm699, %v4981, -inf
        %4987 = vmax.xlane.f32.xlu0 %v4986
        %v4988 = vpop.xlane.xlu0 %4987
        %v4989 = vsub.f32 %v4981, %v4988
        %v4990 = vmul.f32 %v4989, 1.442695
        %v4991 = vpow.pop %v4990
        %v4992 = vsel %vm699, %v4991, 0.0
        %4993 = vadd.xlane.f32.xlu0 %v4992
        %v4994 = vpop.xlane.xlu0 %4993
        %v4995 = vrcp.pop %v4994
        %v4996 = vmul.f32 %v4991, %v4995
        %v4997 = vpack.c.bf16 %v4996, %v4996
        %4998 = vrot.lane.b32.xlu0 %v4667, 80
        %v4999 = vpop.permute.xlu0 %4998
        %v5001 = vsel %vm699, %v4997, 0
        %v5004 = vsel %vm716, %v4999, 0
        %5006 = vmatprep.subr.bf16.mxu0 0
        %5007 = vmatpush1.bf16.msra.mxu0 %v5004
        %5008 = vmatprep.subr.bf16.mxu0 0
        %5009 = vmatpush1.bf16.msra.mxu0 0
        %5010 = vmatprep.subr.bf16.mxu0 0
        %5011 = vmatpush1.bf16.msra.mxu0 0
        %5012 = vmatprep.subr.bf16.mxu0 0
        %5013 = vmatpush1.bf16.msra.mxu0 0
        %5014 = vmatprep.subr.bf16.mxu0 0
        %5015 = vmatpush1.bf16.msra.mxu0 0
        %5016 = vmatprep.subr.bf16.mxu0 0
        %5017 = vmatpush1.bf16.msra.mxu0 0
        %5018 = vmatprep.subr.bf16.mxu0 0
        %5019 = vmatpush1.bf16.msra.mxu0 0
        %5020 = vmatprep.subr.bf16.mxu0 0
        %5021 = vmatpush1.bf16.msra.mxu0 0
        %5022 = vmatprep.subr.bf16.mxu0 0
        %5023 = vmatpush1.bf16.msra.mxu0 0
        %5024 = vmatprep.subr.bf16.mxu0 0
        %5025 = vmatpush1.bf16.msra.mxu0 0
        %5026 = vmatprep.subr.bf16.mxu0 0
        %5027 = vmatpush1.bf16.msra.mxu0 0
        %5028 = vmatprep.subr.bf16.mxu0 0
        %5029 = vmatpush1.bf16.msra.mxu0 0
        %5030 = vmatprep.subr.bf16.mxu0 0
        %5031 = vmatpush1.bf16.msra.mxu0 0
        %5032 = vmatprep.subr.bf16.mxu0 0
        %5033 = vmatpush1.bf16.msra.mxu0 0
        %5034 = vmatprep.subr.bf16.mxu0 0
        %5035 = vmatpush1.bf16.msra.mxu0 0
        %5036 = vmatprep.subr.bf16.mxu0 0
        %5037 = vmatpush1.bf16.msra.mxu0 0
        %5038 = vmatprep.mubr.bf16.mxu0 0
        %5039 = vmatmul.mubr.bf16.gmra.mrb[0].mxu0 %v5001
        %v5040 = vpop.f32.mrb[0].mxu0
        %v5041 = vadd.f32 0.0, %v5040
        %v5042 = vpop.f32.mrb[0].mxu0
        %v5043 = vpop.f32.mrb[0].mxu0
        %v5044 = vpop.f32.mrb[0].mxu0
        %5045 = vdwg.mxu0
        %5047 = vrot.lane.b32.xlu0 %v4821, 16
        %v5048 = vpop.permute.xlu0 %5047
        %5051 = vrot.lane.b32.xlu0 %v4931, 32
        %v5052 = vpop.permute.xlu0 %5051
        %5055 = vrot.lane.b32.xlu0 %v5041, 48
        %v5056 = vpop.permute.xlu0 %5055
        %v5058 = vsel %vm652, %v4709, %v5048
        %v5059 = vsel %vm1105, %v5058, %v5052
        %v5060 = vsel %vm1107, %v5059, %v5056
        %v5061 = vpack.c.bf16 %v5060, %v5060
        %s5062 = scalar_lea.vmem %s6, 128
        %v5063 = vld [vmem:[%s5062] sm:$0xf]
        %v5064 = vld [vmem:[%s5062 + $0x4] sm:$0xf]
        %v5065 = vld [vmem:[%s5062 + $0x8] sm:$0xf]
        %v5066 = vld [vmem:[%s5062 + $0xc] sm:$0xf]
        %v5067 = vld [vmem:[%s5062 + $0x10] sm:$0xf]
        %v5068 = vld [vmem:[%s5062 + $0x14] sm:$0xf]
        %v5069 = vld [vmem:[%s5062 + $0x18] sm:$0xf]
        %v5070 = vld [vmem:[%s5062 + $0x1c] sm:$0xf]
        %s5071 = scalar_lea.vmem %s7, 4
        %v5072 = vld [vmem:[%s5071] sm:$0x1]
        %v5074 = vlaneseq
        %v5075 = vshrl.u32 %v5074, 7
        %v5076 = vsub.s32 0, %v5075
        %v5077 = vrot.slane %v5072, %v5076
        %v5087 = vunpack.c.l.b16 %v5063
        %v5088 = vunpack.c.l.b16 %v5064
        %v5089 = vunpack.c.l.b16 %v5065
        %v5090 = vunpack.c.l.b16 %v5066
        %v5091 = vunpack.c.l.b16 %v5067
        %v5092 = vunpack.c.l.b16 %v5068
        %v5093 = vunpack.c.l.b16 %v5069
        %v5094 = vunpack.c.l.b16 %v5070
        %v5095 = vpack.c.b16 %v5088, %v5087
        %v5096 = vpack.c.b16 %v5090, %v5089
        %v5097 = vpack.c.b16 %v5092, %v5091
        %v5098 = vpack.c.b16 %v5094, %v5093
        %v5104 = vsel %vm524, %v5061, 0
        %5106 = vmatprep.subr.bf16.mxu0 0
        %5107 = vmatpush1.bf16.msra.mxu0 %v5095
        %5108 = vmatprep.subr.bf16.mxu0 0
        %5109 = vmatpush1.bf16.msra.mxu0 %v5096
        %5110 = vmatprep.subr.bf16.mxu0 0
        %5111 = vmatpush1.bf16.msra.mxu0 %v5097
        %5112 = vmatprep.subr.bf16.mxu0 0
        %5113 = vmatpush1.bf16.msra.mxu0 %v5098
        %5114 = vmatprep.subr.bf16.mxu0 0
        %5115 = vmatpush1.bf16.msra.mxu0 0
        %5116 = vmatprep.subr.bf16.mxu0 0
        %5117 = vmatpush1.bf16.msra.mxu0 0
        %5118 = vmatprep.subr.bf16.mxu0 0
        %5119 = vmatpush1.bf16.msra.mxu0 0
        %5120 = vmatprep.subr.bf16.mxu0 0
        %5121 = vmatpush1.bf16.msra.mxu0 0
        %5122 = vmatprep.subr.bf16.mxu0 0
        %5123 = vmatpush1.bf16.msra.mxu0 0
        %5124 = vmatprep.subr.bf16.mxu0 0
        %5125 = vmatpush1.bf16.msra.mxu0 0
        %5126 = vmatprep.subr.bf16.mxu0 0
        %5127 = vmatpush1.bf16.msra.mxu0 0
        %5128 = vmatprep.subr.bf16.mxu0 0
        %5129 = vmatpush1.bf16.msra.mxu0 0
        %5130 = vmatprep.subr.bf16.mxu0 0
        %5131 = vmatpush1.bf16.msra.mxu0 0
        %5132 = vmatprep.subr.bf16.mxu0 0
        %5133 = vmatpush1.bf16.msra.mxu0 0
        %5134 = vmatprep.subr.bf16.mxu0 0
        %5135 = vmatpush1.bf16.msra.mxu0 0
        %5136 = vmatprep.subr.bf16.mxu0 0
        %5137 = vmatpush1.bf16.msra.mxu0 0
        %5138 = vmatprep.mubr.bf16.mxu0 0
        %5139 = vmatmul.mubr.bf16.gmra.mrb[0].mxu0 %v5104
        %v5140 = vpop.f32.mrb[0].mxu0
        %v5141 = vadd.f32 %v5077, %v5140
        %v5142 = vpop.f32.mrb[0].mxu0
        %v5143 = vpop.f32.mrb[0].mxu0
        %v5144 = vpop.f32.mrb[0].mxu0
        %5145 = vdwg.mxu0
        %v5146 = vadd.f32 %v4477, %v5141
        %s5147 = scalar_lea.vmem %s8, 4
        %v5148 = vld [vmem:[%s5147] sm:$0x1]
        %s5149 = scalar_lea.vmem %s9, 4
        %v5150 = vld [vmem:[%s5149] sm:$0x1]
        %v5151 = vsel %vm524, %v5146, 0.0
        %5152 = vadd.xlane.f32.xlu0 %v5151
        %v5153 = vpop.xlane.xlu0 %5152
        %v5154 = vmul.f32 %v5153, %v528
        %v5155 = vsub.f32 %v5146, %v5154
        %v5156 = vmul.f32 %v5155, %v5155
        %v5157 = vsel %vm524, %v5156, 0.0
        %5158 = vadd.xlane.f32.xlu0 %v5157
        %v5159 = vpop.xlane.xlu0 %5158
        %v5160 = vmul.f32 %v5159, %v528
        %v5161 = vadd.f32 %v5160, 1e-05
        %v5162 = vrsqrt.pop %v5161
        %v5163 = vmul.f32 %v5155, %v5162
        %v5165 = vlaneseq
        %v5166 = vshrl.u32 %v5165, 7
        %v5167 = vsub.s32 0, %v5166
        %v5168 = vrot.slane %v5148, %v5167
        %v5170 = vmul.f32 %v5163, %v5168
        %v5172 = vlaneseq
        %v5173 = vshrl.u32 %v5172, 7
        %v5174 = vsub.s32 0, %v5173
        %v5175 = vrot.slane %v5150, %v5174
        %v5177 = vadd.f32 %v5170, %v5175
        %v5178 = vpack.c.bf16 %v5177, %v5177
        %s5179 = scalar_lea.vmem %s10, 256
        %v5180 = vld [vmem:[%s5179] sm:$0xff]
        %v5181 = vld [vmem:[%s5179 + $0x8] sm:$0xff]
        %v5182 = vld [vmem:[%s5179 + $0x10] sm:$0xff]
        %v5183 = vld [vmem:[%s5179 + $0x18] sm:$0xff]
        %v5184 = vld [vmem:[%s5179 + $0x20] sm:$0xff]
        %v5185 = vld [vmem:[%s5179 + $0x28] sm:$0xff]
        %v5186 = vld [vmem:[%s5179 + $0x30] sm:$0xff]
        %v5187 = vld [vmem:[%s5179 + $0x38] sm:$0xff]
        %s5188 = scalar_lea.vmem %s11, 8
        %v5189 = vld [vmem:[%s5188] sm:$0x3]
        %v5191 = vlaneseq
        %v5192 = vshrl.u32 %v5191, 7
        %v5193 = vsub.s32 0, %v5192
        %v5194 = vrot.slane %v5189, %v5193
        %v5195 = vlaneseq
        %v5196 = vshrl.u32 %v5195, 7
        %v5197 = vsub.s32 1, %v5196
        %v5198 = vrot.slane %v5189, %v5197
        %v5209 = vunpack.c.l.b16 %v5180
        %v5210 = vunpack.c.h.b16 %v5180
        %v5211 = vunpack.c.l.b16 %v5181
        %v5212 = vunpack.c.h.b16 %v5181
        %v5213 = vunpack.c.l.b16 %v5182
        %v5214 = vunpack.c.h.b16 %v5182
        %v5215 = vunpack.c.l.b16 %v5183
        %v5216 = vunpack.c.h.b16 %v5183
        %v5217 = vunpack.c.l.b16 %v5184
        %v5218 = vunpack.c.h.b16 %v5184
        %v5219 = vunpack.c.l.b16 %v5185
        %v5220 = vunpack.c.h.b16 %v5185
        %v5221 = vunpack.c.l.b16 %v5186
        %v5222 = vunpack.c.h.b16 %v5186
        %v5223 = vunpack.c.l.b16 %v5187
        %v5224 = vunpack.c.h.b16 %v5187
        %v5225 = vpack.c.b16 %v5211, %v5209
        %v5226 = vpack.c.b16 %v5212, %v5210
        %v5227 = vpack.c.b16 %v5215, %v5213
        %v5228 = vpack.c.b16 %v5216, %v5214
        %v5229 = vpack.c.b16 %v5219, %v5217
        %v5230 = vpack.c.b16 %v5220, %v5218
        %v5231 = vpack.c.b16 %v5223, %v5221
        %v5232 = vpack.c.b16 %v5224, %v5222
        %v5242 = vsel %vm524, %v5178, 0
        %5244 = vmatprep.subr.bf16.mxu0 %v5226
        %5245 = vmatpush1.bf16.msra.mxu0 %v5225
        %5246 = vmatprep.subr.bf16.mxu0 %v5228
        %5247 = vmatpush1.bf16.msra.mxu0 %v5227
        %5248 = vmatprep.subr.bf16.mxu0 %v5230
        %5249 = vmatpush1.bf16.msra.mxu0 %v5229
        %5250 = vmatprep.subr.bf16.mxu0 %v5232
        %5251 = vmatpush1.bf16.msra.mxu0 %v5231
        %5252 = vmatprep.subr.bf16.mxu0 0
        %5253 = vmatpush1.bf16.msra.mxu0 0
        %5254 = vmatprep.subr.bf16.mxu0 0
        %5255 = vmatpush1.bf16.msra.mxu0 0
        %5256 = vmatprep.subr.bf16.mxu0 0
        %5257 = vmatpush1.bf16.msra.mxu0 0
        %5258 = vmatprep.subr.bf16.mxu0 0
        %5259 = vmatpush1.bf16.msra.mxu0 0
        %5260 = vmatprep.subr.bf16.mxu0 0
        %5261 = vmatpush1.bf16.msra.mxu0 0
        %5262 = vmatprep.subr.bf16.mxu0 0
        %5263 = vmatpush1.bf16.msra.mxu0 0
        %5264 = vmatprep.subr.bf16.mxu0 0
        %5265 = vmatpush1.bf16.msra.mxu0 0
        %5266 = vmatprep.subr.bf16.mxu0 0
        %5267 = vmatpush1.bf16.msra.mxu0 0
        %5268 = vmatprep.subr.bf16.mxu0 0
        %5269 = vmatpush1.bf16.msra.mxu0 0
        %5270 = vmatprep.subr.bf16.mxu0 0
        %5271 = vmatpush1.bf16.msra.mxu0 0
        %5272 = vmatprep.subr.bf16.mxu0 0
        %5273 = vmatpush1.bf16.msra.mxu0 0
        %5274 = vmatprep.subr.bf16.mxu0 0
        %5275 = vmatpush1.bf16.msra.mxu0 0
        %5276 = vmatprep.mubr.bf16.mxu0 0
        %5277 = vmatmul.mubr.bf16.gmra.mrb[0].mxu0 %v5242
        %v5278 = vpop.f32.mrb[0].mxu0
        %v5279 = vadd.f32 %v5194, %v5278
        %v5280 = vpop.f32.mrb[0].mxu0
        %v5281 = vadd.f32 %v5198, %v5280
        %v5282 = vpop.f32.mrb[0].mxu0
        %v5283 = vpop.f32.mrb[0].mxu0
        %5284 = vdwg.mxu0
        %v5285 = vmax.f32 %v5279, 0.0
        %v5286 = vmax.f32 %v5281, 0.0
        %v5287 = vpack.c.bf16 %v5285, %v5285
        %v5288 = vpack.c.bf16 %v5286, %v5286
        %s5289 = scalar_lea.vmem %s12, 512
        %v5290 = vld [vmem:[%s5289] sm:$0xf]
        %v5291 = vld [vmem:[%s5289 + $0x4] sm:$0xf]
        %v5292 = vld [vmem:[%s5289 + $0x8] sm:$0xf]
        %v5293 = vld [vmem:[%s5289 + $0xc] sm:$0xf]
        %v5294 = vld [vmem:[%s5289 + $0x10] sm:$0xf]
        %v5295 = vld [vmem:[%s5289 + $0x14] sm:$0xf]
        %v5296 = vld [vmem:[%s5289 + $0x18] sm:$0xf]
        %v5297 = vld [vmem:[%s5289 + $0x1c] sm:$0xf]
        %v5298 = vld [vmem:[%s5289 + $0x20] sm:$0xf]
        %v5299 = vld [vmem:[%s5289 + $0x24] sm:$0xf]
        %v5300 = vld [vmem:[%s5289 + $0x28] sm:$0xf]
        %v5301 = vld [vmem:[%s5289 + $0x2c] sm:$0xf]
        %v5302 = vld [vmem:[%s5289 + $0x30] sm:$0xf]
        %v5303 = vld [vmem:[%s5289 + $0x34] sm:$0xf]
        %v5304 = vld [vmem:[%s5289 + $0x38] sm:$0xf]
        %v5305 = vld [vmem:[%s5289 + $0x3c] sm:$0xf]
        %v5306 = vld [vmem:[%s5289 + $0x40] sm:$0xf]
        %v5307 = vld [vmem:[%s5289 + $0x44] sm:$0xf]
        %v5308 = vld [vmem:[%s5289 + $0x48] sm:$0xf]
        %v5309 = vld [vmem:[%s5289 + $0x4c] sm:$0xf]
        %v5310 = vld [vmem:[%s5289 + $0x50] sm:$0xf]
        %v5311 = vld [vmem:[%s5289 + $0x54] sm:$0xf]
        %v5312 = vld [vmem:[%s5289 + $0x58] sm:$0xf]
        %v5313 = vld [vmem:[%s5289 + $0x5c] sm:$0xf]
        %v5314 = vld [vmem:[%s5289 + $0x60] sm:$0xf]
        %v5315 = vld [vmem:[%s5289 + $0x64] sm:$0xf]
        %v5316 = vld [vmem:[%s5289 + $0x68] sm:$0xf]
        %v5317 = vld [vmem:[%s5289 + $0x6c] sm:$0xf]
        %v5318 = vld [vmem:[%s5289 + $0x70] sm:$0xf]
        %v5319 = vld [vmem:[%s5289 + $0x74] sm:$0xf]
        %v5320 = vld [vmem:[%s5289 + $0x78] sm:$0xf]
        %v5321 = vld [vmem:[%s5289 + $0x7c] sm:$0xf]
        %v5354 = vunpack.c.l.b16 %v5290
        %v5355 = vunpack.c.l.b16 %v5291
        %v5356 = vunpack.c.l.b16 %v5292
        %v5357 = vunpack.c.l.b16 %v5293
        %v5358 = vunpack.c.l.b16 %v5294
        %v5359 = vunpack.c.l.b16 %v5295
        %v5360 = vunpack.c.l.b16 %v5296
        %v5361 = vunpack.c.l.b16 %v5297
        %v5362 = vunpack.c.l.b16 %v5298
        %v5363 = vunpack.c.l.b16 %v5299
        %v5364 = vunpack.c.l.b16 %v5300
        %v5365 = vunpack.c.l.b16 %v5301
        %v5366 = vunpack.c.l.b16 %v5302
        %v5367 = vunpack.c.l.b16 %v5303
        %v5368 = vunpack.c.l.b16 %v5304
        %v5369 = vunpack.c.l.b16 %v5305
        %v5370 = vunpack.c.l.b16 %v5306
        %v5371 = vunpack.c.l.b16 %v5307
        %v5372 = vunpack.c.l.b16 %v5308
        %v5373 = vunpack.c.l.b16 %v5309
        %v5374 = vunpack.c.l.b16 %v5310
        %v5375 = vunpack.c.l.b16 %v5311
        %v5376 = vunpack.c.l.b16 %v5312
        %v5377 = vunpack.c.l.b16 %v5313
        %v5378 = vunpack.c.l.b16 %v5314
        %v5379 = vunpack.c.l.b16 %v5315
        %v5380 = vunpack.c.l.b16 %v5316
        %v5381 = vunpack.c.l.b16 %v5317
        %v5382 = vunpack.c.l.b16 %v5318
        %v5383 = vunpack.c.l.b16 %v5319
        %v5384 = vunpack.c.l.b16 %v5320
        %v5385 = vunpack.c.l.b16 %v5321
        %v5386 = vpack.c.b16 %v5355, %v5354
        %v5387 = vpack.c.b16 %v5357, %v5356
        %v5388 = vpack.c.b16 %v5359, %v5358
        %v5389 = vpack.c.b16 %v5361, %v5360
        %v5390 = vpack.c.b16 %v5363, %v5362
        %v5391 = vpack.c.b16 %v5365, %v5364
        %v5392 = vpack.c.b16 %v5367, %v5366
        %v5393 = vpack.c.b16 %v5369, %v5368
        %v5394 = vpack.c.b16 %v5371, %v5370
        %v5395 = vpack.c.b16 %v5373, %v5372
        %v5396 = vpack.c.b16 %v5375, %v5374
        %v5397 = vpack.c.b16 %v5377, %v5376
        %v5398 = vpack.c.b16 %v5379, %v5378
        %v5399 = vpack.c.b16 %v5381, %v5380
        %v5400 = vpack.c.b16 %v5383, %v5382
        %v5401 = vpack.c.b16 %v5385, %v5384
        %5418 = vmatprep.subr.bf16.mxu0 0
        %5419 = vmatpush1.bf16.msra.mxu0 %v5386
        %5420 = vmatprep.subr.bf16.mxu0 0
        %5421 = vmatpush1.bf16.msra.mxu0 %v5387
        %5422 = vmatprep.subr.bf16.mxu0 0
        %5423 = vmatpush1.bf16.msra.mxu0 %v5388
        %5424 = vmatprep.subr.bf16.mxu0 0
        %5425 = vmatpush1.bf16.msra.mxu0 %v5389
        %5426 = vmatprep.subr.bf16.mxu0 0
        %5427 = vmatpush1.bf16.msra.mxu0 %v5390
        %5428 = vmatprep.subr.bf16.mxu0 0
        %5429 = vmatpush1.bf16.msra.mxu0 %v5391
        %5430 = vmatprep.subr.bf16.mxu0 0
        %5431 = vmatpush1.bf16.msra.mxu0 %v5392
        %5432 = vmatprep.subr.bf16.mxu0 0
        %5433 = vmatpush1.bf16.msra.mxu0 %v5393
        %5434 = vmatprep.subr.bf16.mxu0 0
        %5435 = vmatpush1.bf16.msra.mxu0 %v5394
        %5436 = vmatprep.subr.bf16.mxu0 0
        %5437 = vmatpush1.bf16.msra.mxu0 %v5395
        %5438 = vmatprep.subr.bf16.mxu0 0
        %5439 = vmatpush1.bf16.msra.mxu0 %v5396
        %5440 = vmatprep.subr.bf16.mxu0 0
        %5441 = vmatpush1.bf16.msra.mxu0 %v5397
        %5442 = vmatprep.subr.bf16.mxu0 0
        %5443 = vmatpush1.bf16.msra.mxu0 %v5398
        %5444 = vmatprep.subr.bf16.mxu0 0
        %5445 = vmatpush1.bf16.msra.mxu0 %v5399
        %5446 = vmatprep.subr.bf16.mxu0 0
        %5447 = vmatpush1.bf16.msra.mxu0 %v5400
        %5448 = vmatprep.subr.bf16.mxu0 0
        %5449 = vmatpush1.bf16.msra.mxu0 %v5401
        %5450 = vmatprep.mubr.bf16.mxu0 %v5288
        %5451 = vmatmul.mubr.bf16.gmra.mrb[0].mxu0 %v5287
        %v5452 = vpop.f32.mrb[0].mxu0
        %v5453 = vadd.f32 0.0, %v5452
        %v5454 = vpop.f32.mrb[0].mxu0
        %v5455 = vpop.f32.mrb[0].mxu0
        %v5456 = vpop.f32.mrb[0].mxu0
        %5457 = vdwg.mxu0
        %v5458 = vadd.f32 %v5146, %v5453
        %s5459 = scalar_lea.vmem %s13, 4
        %v5460 = vld [vmem:[%s5459] sm:$0x1]
        %v5462 = vlaneseq
        %v5463 = vshrl.u32 %v5462, 7
        %v5464 = vsub.s32 0, %v5463
        %v5465 = vrot.slane %v5460, %v5464
        %v5467 = vadd.f32 %v5458, %v5465
        %v5468 = vpack.c.bf16 %v5467, %v5467
        %v5469 = vld [vmem:[%s14] sm:$0xf]
        %v5470 = vld [vmem:[%s14 + $0x4] sm:$0xf]
        %v5471 = vld [vmem:[%s14 + $0x8] sm:$0xf]
        %v5472 = vld [vmem:[%s14 + $0xc] sm:$0xf]
        %v5473 = vld [vmem:[%s14 + $0x10] sm:$0xf]
        %v5474 = vld [vmem:[%s14 + $0x14] sm:$0xf]
        %v5475 = vld [vmem:[%s14 + $0x18] sm:$0xf]
        %v5476 = vld [vmem:[%s14 + $0x1c] sm:$0xf]
        %v5477 = vld [vmem:[%s15] sm:$0x1]
        %v5479 = vlaneseq
        %v5480 = vshrl.u32 %v5479, 7
        %v5481 = vsub.s32 0, %v5480
        %v5482 = vrot.slane %v5477, %v5481
        %v5492 = vunpack.c.l.b16 %v5469
        %v5493 = vunpack.c.l.b16 %v5470
        %v5494 = vunpack.c.l.b16 %v5471
        %v5495 = vunpack.c.l.b16 %v5472
        %v5496 = vunpack.c.l.b16 %v5473
        %v5497 = vunpack.c.l.b16 %v5474
        %v5498 = vunpack.c.l.b16 %v5475
        %v5499 = vunpack.c.l.b16 %v5476
        %v5500 = vpack.c.b16 %v5493, %v5492
        %v5501 = vpack.c.b16 %v5495, %v5494
        %v5502 = vpack.c.b16 %v5497, %v5496
        %v5503 = vpack.c.b16 %v5499, %v5498
        %v5509 = vsel %vm524, %v5468, 0
        %5511 = vmatprep.subr.bf16.mxu0 0
        %5512 = vmatpush1.bf16.msra.mxu0 %v5500
        %5513 = vmatprep.subr.bf16.mxu0 0
        %5514 = vmatpush1.bf16.msra.mxu0 %v5501
        %5515 = vmatprep.subr.bf16.mxu0 0
        %5516 = vmatpush1.bf16.msra.mxu0 %v5502
        %5517 = vmatprep.subr.bf16.mxu0 0
        %5518 = vmatpush1.bf16.msra.mxu0 %v5503
        %5519 = vmatprep.subr.bf16.mxu0 0
        %5520 = vmatpush1.bf16.msra.mxu0 0
        %5521 = vmatprep.subr.bf16.mxu0 0
        %5522 = vmatpush1.bf16.msra.mxu0 0
        %5523 = vmatprep.subr.bf16.mxu0 0
        %5524 = vmatpush1.bf16.msra.mxu0 0
        %5525 = vmatprep.subr.bf16.mxu0 0
        %5526 = vmatpush1.bf16.msra.mxu0 0
        %5527 = vmatprep.subr.bf16.mxu0 0
        %5528 = vmatpush1.bf16.msra.mxu0 0
        %5529 = vmatprep.subr.bf16.mxu0 0
        %5530 = vmatpush1.bf16.msra.mxu0 0
        %5531 = vmatprep.subr.bf16.mxu0 0
        %5532 = vmatpush1.bf16.msra.mxu0 0
        %5533 = vmatprep.subr.bf16.mxu0 0
        %5534 = vmatpush1.bf16.msra.mxu0 0
        %5535 = vmatprep.subr.bf16.mxu0 0
        %5536 = vmatpush1.bf16.msra.mxu0 0
        %5537 = vmatprep.subr.bf16.mxu0 0
        %5538 = vmatpush1.bf16.msra.mxu0 0
        %5539 = vmatprep.subr.bf16.mxu0 0
        %5540 = vmatpush1.bf16.msra.mxu0 0
        %5541 = vmatprep.subr.bf16.mxu0 0
        %5542 = vmatpush1.bf16.msra.mxu0 0
        %5543 = vmatprep.mubr.bf16.mxu0 0
        %5544 = vmatmul.mubr.bf16.gmra.mrb[0].mxu0 %v5509
        %v5545 = vpop.f32.mrb[0].mxu0
        %v5546 = vadd.f32 %v5482, %v5545
        %v5547 = vpop.f32.mrb[0].mxu0
        %v5548 = vpop.f32.mrb[0].mxu0
        %v5549 = vpop.f32.mrb[0].mxu0
        %5550 = vdwg.mxu0
        %5551 = vst [vmem:[%s512] sm:$0xff] %v5546
        %s5552 = sand.u32 %s379, 1
        %s5553 = scalar_lea.sflag [#allocation3], %s5552
        %s5554 = sand.u32 %s379, 1
        %s5555 = smul.addr %s5554, 8
        %s5556 = scalar_lea.vmem [#allocation2], %s5555
        // Predicated region
        $region85: #{mtg_forward.1} parent=83 // pred_check
          %p5557 = pneg %p389
        $region86: #{mtg_forward.1} parent=83 // pred_check_branch
          %5559 = sbr.rel (%p5557) target = $region88
        $region87: #{mtg_forward.1} parent=83 // pred_region
          %s5561 = ssub.s32 128, 128
          %5562 = vsyncadd %s5553, %s5561
          %s5563 = smul.addr %s30, 128
          %s5564 = scalar_lea.hbm %s16, %s5563
          %s5566 = sshll.u32 %s5556, 4
          %s5567 = int_to_ptr.vmem [resolvable:$true] %s5566
          %5569 = dma.vmem_to_hbm [thread:$0]  %s5567, 128, %s5564, %s5553
        $region88: #{mtg_forward.1} parent=83 // pred_fallthru
          _
      $region84: #{mtg_forward.1} parent=5 // pred_fallthru
        _
      %p5570 = scmp.le.s32.totalorder 2, %s25
      // Predicated region
      $region89: #{mtg_forward.1} parent=5 // pred_check
        %p5571 = pneg %p5570
      $region90: #{mtg_forward.1} parent=5 // pred_check_branch
        %5573 = sbr.rel (%p5571) target = $region92
      $region91: #{mtg_forward.1} parent=5 // pred_region
        %s5574 = ssub.s32 %s25, 2
        // Predicated region
        $region93: #{mtg_forward.1} parent=91 // pred_check
          %p5575 = pneg %p395
        $region94: #{mtg_forward.1} parent=91 // pred_check_branch
          %5577 = sbr.rel (%p5575) target = $region96
        $region95: #{mtg_forward.1} parent=91 // pred_region
          %s5578 = sand.u32 %s380, 1
          %s5579 = scalar_lea.sflag [#allocation3], %s5578
          %s5580 = sand.u32 %s380, 1
          %s5581 = smul.addr %s5580, 8
          %s5582 = scalar_lea.vmem [#allocation2], %s5581
          %5583 = dma.done %s5579, 128
        $region96: #{mtg_forward.1} parent=91 // pred_fallthru
          _
      $region92: #{mtg_forward.1} parent=5 // pred_fallthru
        _
    $region6: #{mtg_forward.1} parent=1 // loop_footer
      %s29 = sadd.s32 1, %s25
    $region7: #{mtg_forward.1} parent=1 // loop_footer_branch
      %24 = sbr.rel target = $region3
    $region8: #{mtg_forward.1} parent=1 // loop_exit
      _
    %5584 = vsyncpa [#allocation3], 1
    %s5585 = scalar_lea.sflag [#allocation3], 1
    %5586 = vsyncpa %s5585, 1

</llo_original>
